<compile_context>
chip_gen: v7x
topology: tpu7x:2x2x1
jax: 0.10.0
libtpu: 0.0.40
codegen_flags: <defaults>
</compile_context>

<pallas_src>
import functools

import jax
import jax.numpy as jnp
from jax import lax
from jax.experimental import pallas as pl
from jax.experimental.pallas import tpu as pltpu


# ---------------------------------------------------------------------------
# Fused PoseDecoder kernel (one grid step == one batch element, fully in VMEM).
# ---------------------------------------------------------------------------
def _pose_decoder_kernel(x_ref, wsq_ref, bsq_ref, w0_ref, b0_ref,
                         w1_ref, b1_ref, w2_ref, b2_ref,
                         o_ref, pad0_ref, pad1_ref, *, H, W, nif):
    HW = H * W
    C = 256

    def mm(a, w):
        # Cast activations to the weight dtype (f32 or bf16); accumulate in f32.
        return jnp.dot(a.astype(w.dtype), w, preferred_element_type=jnp.float32)

    # Zero the padded scratch buffers (borders stay zero; interiors overwritten).
    # Done every grid step so it is correct under megacore "parallel" splitting.
    pad0_ref[...] = jnp.zeros_like(pad0_ref)
    pad1_ref[...] = jnp.zeros_like(pad1_ref)

    # --- 1) squeeze 1x1 conv + ReLU, all nif features in one MXU pass ---------
    # x_ref[0]: (nif*H*W, Csq_in), rows ordered (feature, y, x).
    hsq = jnp.maximum(mm(x_ref[0], wsq_ref[...]) + bsq_ref[...], 0.0)
    # "torch.cat(dim=1)" == write each feature's 256 channels at its channel
    # offset inside the padded concat buffer (free concat + in-VMEM padding).
    for f in range(nif):
        pad0_ref[1:H + 1, 1:W + 1, f * C:(f + 1) * C] = (
            hsq[f * HW:(f + 1) * HW].reshape(H, W, C).astype(pad0_ref.dtype))

    # --- 2) pose0: 3x3 conv (pad=1, stride=1) + ReLU ---------------------------
    # One sublane-shifted column load per dx (3 total), dy is a free leading-dim
    # slice; 9 accumulating MXU dots.  Bias folded into the accumulator init.
    acc = jnp.broadcast_to(b0_ref[...], (HW, C)).astype(jnp.float32)
    for dx in range(3):
        col = pad0_ref[:, dx:dx + W, :]                     # (H+2, W, nif*C)
        for dy in range(3):
            patch = col[dy:dy + H].reshape(HW, nif * C)
            acc = acc + mm(patch, w0_ref[dy, dx])
    acc = jnp.maximum(acc, 0.0)
    pad1_ref[1:H + 1, 1:W + 1, :] = acc.reshape(H, W, C).astype(pad1_ref.dtype)

    # --- 3) pose1: 3x3 conv (pad=1, stride=1) + ReLU ---------------------------
    acc = jnp.broadcast_to(b1_ref[...], (HW, C)).astype(jnp.float32)
    for dx in range(3):
        col = pad1_ref[:, dx:dx + W, :]                     # (H+2, W, C)
        for dy in range(3):
            patch = col[dy:dy + H].reshape(HW, C)
            acc = acc + mm(patch, w1_ref[dy, dx])
    acc = jnp.maximum(acc, 0.0)

    # --- 4) head: mean commuted with the linear 1x1 conv, then * 0.01 ---------
    # mean_p(W x_p + b) == W mean_p(x_p) + b  (exact).
    xm = jnp.mean(acc, axis=0, keepdims=True)                      # (1, 256)
    o_ref[0] = 0.01 * (mm(xm, w2_ref[...]) + b2_ref[...])          # (1, Cout)


def pose_decoder_forward(input_features_nchw, params, *, matmul_dtype=jnp.float32):
    """Fused PoseDecoder forward. input_features_nchw: list of (B, Csq_in, H, W)."""
    nif = len(input_features_nchw)
    B, Csq, H, W = input_features_nchw[0].shape
    Cout = params["pose2_w"].shape[-1]

    # NCHW -> channels-last, fold (feature, y, x) into the matmul M dimension.
    x = jnp.stack(input_features_nchw, axis=1)                 # (B, nif, C, H, W)
    x = jnp.transpose(x, (0, 1, 3, 4, 2)).reshape(B, nif * H * W, Csq)

    # matmul_dtype=jnp.bfloat16 halves weight + activation-scratch VMEM/HBM
    # traffic on v6e/v7x (accumulation + bias/ReLU stay f32); default f32
    # matches PyTorch numerics exactly.
    wsq = params["squeeze_w"].astype(matmul_dtype)
    w0 = params["pose0_w"].astype(matmul_dtype)
    w1 = params["pose1_w"].astype(matmul_dtype)
    w2 = params["pose2_w"].astype(matmul_dtype)
    bsq, b0, b1, b2 = (params["squeeze_b"], params["pose0_b"],
                       params["pose1_b"], params["pose2_b"])

    kern = functools.partial(_pose_decoder_kernel, H=H, W=W, nif=nif)
    out = pl.pallas_call(
        kern,
        out_shape=jax.ShapeDtypeStruct((B, 1, Cout), jnp.float32),
        grid=(B,),
        in_specs=[
            pl.BlockSpec((1, nif * H * W, Csq), lambda b: (b, 0, 0)),
            pl.BlockSpec((Csq, 256), lambda b: (0, 0)),
            pl.BlockSpec((1, 256), lambda b: (0, 0)),
            pl.BlockSpec((3, 3, nif * 256, 256), lambda b: (0, 0, 0, 0)),
            pl.BlockSpec((1, 256), lambda b: (0, 0)),
            pl.BlockSpec((3, 3, 256, 256), lambda b: (0, 0, 0, 0)),
            pl.BlockSpec((1, 256), lambda b: (0, 0)),
            pl.BlockSpec((256, Cout), lambda b: (0, 0)),
            pl.BlockSpec((1, Cout), lambda b: (0, 0)),
        ],
        out_specs=pl.BlockSpec((1, 1, Cout), lambda b: (b, 0, 0)),
        scratch_shapes=[
            pltpu.VMEM((H + 2, W + 2, nif * 256), matmul_dtype),  # padded concat
            pltpu.VMEM((H + 2, W + 2, 256), matmul_dtype),        # padded pose0 out
        ],
        # "parallel" grid over B feeds both TensorCores on v7x.
        # TODO(synk): at production resolutions on v7x (64 MiB VMEM), re-derive
        # tiling (spatial-block the convs) instead of whole-image blocks.
        compiler_params=pltpu.CompilerParams(
            dimension_semantics=("parallel",),
            vmem_limit_bytes=64 * 1024 * 1024),
    )(x, wsq, bsq, w0, b0, w1, b1, w2, b2)

    # (B, 1, 6*nf) -> (B*nf, 6), matching `0.01 * out.view(-1, 6)` (scale in-kernel).
    return out.reshape(-1, 6)


# ---------------------------------------------------------------------------
# Pure-JAX reference (same math as the PyTorch module) for a sanity check.
# ---------------------------------------------------------------------------
def _reference_forward(input_features_nchw, params):
    hi = lax.Precision.HIGHEST
    feats = [jnp.transpose(f, (0, 2, 3, 1)) for f in input_features_nchw]
    cats = [jax.nn.relu(jnp.einsum("bhwc,cd->bhwd", f, params["squeeze_w"],
                                   precision=hi) + params["squeeze_b"][0])
            for f in feats]
    out = jnp.concatenate(cats, axis=-1)
    for wk, bk in (("pose0_w", "pose0_b"), ("pose1_w", "pose1_b")):
        out = lax.conv_general_dilated(
            out, params[wk], (1, 1), "SAME",
            dimension_numbers=("NHWC", "HWIO", "NHWC"), precision=hi)
        out = jax.nn.relu(out + params[bk][0])
    out = jnp.einsum("bhwc,cd->bhwd", out, params["pose2_w"],
                     precision=hi) + params["pose2_b"][0]
    out = out.mean(axis=(1, 2))
    return 0.01 * out.reshape(-1, 6)


def init_params(key, num_ch_enc_last, num_input_features, num_frames_to_predict_for):
    ks = jax.random.split(key, 8)

    def winit(k, shape, fan_in):
        return jax.random.normal(k, shape, jnp.float32) / jnp.sqrt(float(fan_in))

    c_sq_in = num_ch_enc_last * 2
    c_pose0_in = num_input_features * 256
    c_out = 6 * num_frames_to_predict_for
    return {
        "squeeze_w": winit(ks[0], (c_sq_in, 256), c_sq_in),
        "squeeze_b": winit(ks[1], (1, 256), 256),
        "pose0_w": winit(ks[2], (3, 3, c_pose0_in, 256), 9 * c_pose0_in),
        "pose0_b": winit(ks[3], (1, 256), 256),
        "pose1_w": winit(ks[4], (3, 3, 256, 256), 9 * 256),
        "pose1_b": winit(ks[5], (1, 256), 256),
        "pose2_w": winit(ks[6], (256, c_out), 256),
        "pose2_b": winit(ks[7], (1, c_out), 256),
    }


if __name__ == "__main__":
    key = jax.random.PRNGKey(0)
    k_params, k_x0, k_x1 = jax.random.split(key, 3)

    num_ch_enc = (4, 8, 16)            # last encoder channels = 16
    num_input_features = 2             # exercises the channel-concat path
    num_frames_to_predict_for = 2      # head output = 12 channels
    B, H, W = 2, 8, 8
    c_in = num_ch_enc[-1] * 2          # squeeze conv input channels = 32

    params = init_params(k_params, num_ch_enc[-1], num_input_features,
                         num_frames_to_predict_for)
    # num_input_features feature maps, NCHW like PyTorch.
    input_features = [jax.random.normal(k_x0, (B, c_in, H, W), jnp.float32),
                      jax.random.normal(k_x1, (B, c_in, H, W), jnp.float32)]

    pose = pose_decoder_forward(input_features, params)   # f32 == exact semantics
    pose = jax.block_until_ready(pose)

    assert pose.shape == (B * num_frames_to_predict_for, 6), pose.shape
    assert pose.dtype == jnp.float32

    ref = jax.block_until_ready(_reference_forward(input_features, params))
    assert jnp.allclose(pose, ref, rtol=5e-3, atol=2e-5), (pose, ref)

    print("KERNEL_OK")
</pallas_src>

<mosaic_0001>
module attributes {stable_mosaic.version = 11 : i64} {
  func.func @_pose_decoder_kernel(%arg0: i32, %arg1: memref<1x128x32xf32, #tpu.memory_space<vmem>>, %arg2: memref<32x256xf32, #tpu.memory_space<vmem>>, %arg3: memref<1x256xf32, #tpu.memory_space<vmem>>, %arg4: memref<3x3x512x256xf32, #tpu.memory_space<vmem>>, %arg5: memref<1x256xf32, #tpu.memory_space<vmem>>, %arg6: memref<3x3x256x256xf32, #tpu.memory_space<vmem>>, %arg7: memref<1x256xf32, #tpu.memory_space<vmem>>, %arg8: memref<256x12xf32, #tpu.memory_space<vmem>>, %arg9: memref<1x12xf32, #tpu.memory_space<vmem>>, %arg10: memref<1x1x12xf32, #tpu.memory_space<vmem>>, %arg11: memref<10x10x512xf32, #tpu.memory_space<vmem>>, %arg12: memref<10x10x256xf32, #tpu.memory_space<vmem>>) attributes {dimension_semantics = [#tpu.dimension_semantics<parallel>], iteration_bounds = array<i64: 2>, scalar_prefetch = 0 : i64, scratch_operands = 2 : i64, tpu.core_type = #tpu.core_type<tc>, window_params = [{transform_indices = @transform_0, window_bounds = array<i64: 1, 128, 32>}, {pipeline_mode = #tpu.pipeline_mode<synchronous>, transform_indices = @transform_1, window_bounds = array<i64: 32, 256>}, {pipeline_mode = #tpu.pipeline_mode<synchronous>, transform_indices = @transform_2, window_bounds = array<i64: 1, 256>}, {pipeline_mode = #tpu.pipeline_mode<synchronous>, transform_indices = @transform_3, window_bounds = array<i64: 3, 3, 512, 256>}, {pipeline_mode = #tpu.pipeline_mode<synchronous>, transform_indices = @transform_4, window_bounds = array<i64: 1, 256>}, {pipeline_mode = #tpu.pipeline_mode<synchronous>, transform_indices = @transform_5, window_bounds = array<i64: 3, 3, 256, 256>}, {pipeline_mode = #tpu.pipeline_mode<synchronous>, transform_indices = @transform_6, window_bounds = array<i64: 1, 256>}, {pipeline_mode = #tpu.pipeline_mode<synchronous>, transform_indices = @transform_7, window_bounds = array<i64: 256, 12>}, {pipeline_mode = #tpu.pipeline_mode<synchronous>, transform_indices = @transform_8, window_bounds = array<i64: 1, 12>}, {transform_indices = @transform_9, window_bounds = array<i64: 1, 1, 12>}]} {
    %cst = arith.constant 0.000000e+00 : f32
    %0 = vector.broadcast %cst : f32 to vector<10x10x512xf32>
    %c0 = arith.constant 0 : index
    %c0_0 = arith.constant 0 : index
    %c0_1 = arith.constant 0 : index
    %1 = vector.load %arg11[%c0, %c0_0, %c0_1] : memref<10x10x512xf32, #tpu.memory_space<vmem>>, vector<10x10x512xf32>
    tpu.vector_store %arg11[%c0, %c0_0, %c0_1], %0 {strides = array<i32>} : memref<10x10x512xf32, #tpu.memory_space<vmem>>, vector<10x10x512xf32>,
    %cst_2 = arith.constant 0.000000e+00 : f32
    %2 = vector.broadcast %cst_2 : f32 to vector<10x10x256xf32>
    %c0_3 = arith.constant 0 : index
    %c0_4 = arith.constant 0 : index
    %c0_5 = arith.constant 0 : index
    %3 = vector.load %arg12[%c0_3, %c0_4, %c0_5] : memref<10x10x256xf32, #tpu.memory_space<vmem>>, vector<10x10x256xf32>
    tpu.vector_store %arg12[%c0_3, %c0_4, %c0_5], %2 {strides = array<i32>} : memref<10x10x256xf32, #tpu.memory_space<vmem>>, vector<10x10x256xf32>,
    %c0_6 = arith.constant 0 : index
    %c0_7 = arith.constant 0 : index
    %c0_8 = arith.constant 0 : index
    %4 = vector.load %arg1[%c0_6, %c0_7, %c0_8] : memref<1x128x32xf32, #tpu.memory_space<vmem>>, vector<1x128x32xf32>
    %5 = vector.shape_cast %4 : vector<1x128x32xf32> to vector<128x32xf32>
    %c0_9 = arith.constant 0 : index
    %c0_10 = arith.constant 0 : index
    %6 = vector.load %arg2[%c0_9, %c0_10] : memref<32x256xf32, #tpu.memory_space<vmem>>, vector<32x256xf32>
    %cst_11 = arith.constant dense<0.000000e+00> : vector<128x256xf32>
    %7 = tpu.matmul %5, %6, %cst_11 {dimension_numbers = #tpu.dot_dimension_numbers<[1], [0], [0], [1], [0, 0, 1, 1], [], []>} : vector<128x32xf32>, vector<32x256xf32>, vector<128x256xf32> -> vector<128x256xf32>
    %c0_12 = arith.constant 0 : index
    %c0_13 = arith.constant 0 : index
    %8 = vector.load %arg3[%c0_12, %c0_13] : memref<1x256xf32, #tpu.memory_space<vmem>>, vector<1x256xf32>
    %9 = vector.broadcast %8 : vector<1x256xf32> to vector<128x256xf32>
    %10 = arith.addf %7, %9 : vector<128x256xf32>
    %cst_14 = arith.constant 0.000000e+00 : f32
    %11 = vector.broadcast %cst_14 : f32 to vector<128x256xf32>
    %12 = arith.maximumf %10, %11 : vector<128x256xf32>
    %13 = vector.extract_strided_slice %12 {offsets = [0, 0], sizes = [64, 256], strides = [1, 1]} : vector<128x256xf32> to vector<64x256xf32>
    %14 = vector.shape_cast %13 : vector<64x256xf32> to vector<8x8x256xf32>
    %c1 = arith.constant 1 : index
    %c1_15 = arith.constant 1 : index
    %c0_16 = arith.constant 0 : index
    %15 = vector.load %arg11[%c1, %c1_15, %c0_16] : memref<10x10x512xf32, #tpu.memory_space<vmem>>, vector<8x8x256xf32>
    tpu.vector_store %arg11[%c1, %c1_15, %c0_16], %14 {strides = array<i32>} : memref<10x10x512xf32, #tpu.memory_space<vmem>>, vector<8x8x256xf32>,
    %16 = vector.extract_strided_slice %12 {offsets = [64, 0], sizes = [64, 256], strides = [1, 1]} : vector<128x256xf32> to vector<64x256xf32>
    %17 = vector.shape_cast %16 : vector<64x256xf32> to vector<8x8x256xf32>
    %c1_17 = arith.constant 1 : index
    %c1_18 = arith.constant 1 : index
    %c256 = arith.constant 256 : index
    %18 = vector.load %arg11[%c1_17, %c1_18, %c256] : memref<10x10x512xf32, #tpu.memory_space<vmem>>, vector<8x8x256xf32>
    tpu.vector_store %arg11[%c1_17, %c1_18, %c256], %17 {strides = array<i32>} : memref<10x10x512xf32, #tpu.memory_space<vmem>>, vector<8x8x256xf32>,
    %c0_19 = arith.constant 0 : index
    %c0_20 = arith.constant 0 : index
    %19 = vector.load %arg5[%c0_19, %c0_20] : memref<1x256xf32, #tpu.memory_space<vmem>>, vector<1x256xf32>
    %20 = vector.shape_cast %19 : vector<1x256xf32> to vector<1x256xf32>
    %21 = vector.broadcast %20 : vector<1x256xf32> to vector<64x256xf32>
    %c0_21 = arith.constant 0 : index
    %c0_22 = arith.constant 0 : index
    %c0_23 = arith.constant 0 : index
    %22 = vector.load %arg11[%c0_21, %c0_22, %c0_23] : memref<10x10x512xf32, #tpu.memory_space<vmem>>, vector<10x8x512xf32>
    %23 = vector.extract_strided_slice %22 {offsets = [0, 0, 0], sizes = [8, 8, 512], strides = [1, 1, 1]} : vector<10x8x512xf32> to vector<8x8x512xf32>
    %24 = vector.shape_cast %23 : vector<8x8x512xf32> to vector<64x512xf32>
    %c0_24 = arith.constant 0 : index
    %c0_25 = arith.constant 0 : index
    %c0_26 = arith.constant 0 : index
    %c0_27 = arith.constant 0 : index
    %25 = vector.load %arg4[%c0_24, %c0_25, %c0_26, %c0_27] : memref<3x3x512x256xf32, #tpu.memory_space<vmem>>, vector<1x1x512x256xf32>
    %26 = vector.shape_cast %25 : vector<1x1x512x256xf32> to vector<512x256xf32>
    %cst_28 = arith.constant dense<0.000000e+00> : vector<64x256xf32>
    %27 = tpu.matmul %24, %26, %cst_28 {dimension_numbers = #tpu.dot_dimension_numbers<[1], [0], [0], [1], [0, 0, 1, 1], [], []>} : vector<64x512xf32>, vector<512x256xf32>, vector<64x256xf32> -> vector<64x256xf32>
    %28 = arith.addf %21, %27 : vector<64x256xf32>
    %29 = vector.extract_strided_slice %22 {offsets = [1, 0, 0], sizes = [8, 8, 512], strides = [1, 1, 1]} : vector<10x8x512xf32> to vector<8x8x512xf32>
    %30 = vector.shape_cast %29 : vector<8x8x512xf32> to vector<64x512xf32>
    %c1_29 = arith.constant 1 : index
    %c0_30 = arith.constant 0 : index
    %c0_31 = arith.constant 0 : index
    %c0_32 = arith.constant 0 : index
    %31 = vector.load %arg4[%c1_29, %c0_30, %c0_31, %c0_32] : memref<3x3x512x256xf32, #tpu.memory_space<vmem>>, vector<1x1x512x256xf32>
    %32 = vector.shape_cast %31 : vector<1x1x512x256xf32> to vector<512x256xf32>
    %cst_33 = arith.constant dense<0.000000e+00> : vector<64x256xf32>
    %33 = tpu.matmul %30, %32, %cst_33 {dimension_numbers = #tpu.dot_dimension_numbers<[1], [0], [0], [1], [0, 0, 1, 1], [], []>} : vector<64x512xf32>, vector<512x256xf32>, vector<64x256xf32> -> vector<64x256xf32>
    %34 = arith.addf %28, %33 : vector<64x256xf32>
    %35 = vector.extract_strided_slice %22 {offsets = [2, 0, 0], sizes = [8, 8, 512], strides = [1, 1, 1]} : vector<10x8x512xf32> to vector<8x8x512xf32>
    %36 = vector.shape_cast %35 : vector<8x8x512xf32> to vector<64x512xf32>
    %c2 = arith.constant 2 : index
    %c0_34 = arith.constant 0 : index
    %c0_35 = arith.constant 0 : index
    %c0_36 = arith.constant 0 : index
    %37 = vector.load %arg4[%c2, %c0_34, %c0_35, %c0_36] : memref<3x3x512x256xf32, #tpu.memory_space<vmem>>, vector<1x1x512x256xf32>
    %38 = vector.shape_cast %37 : vector<1x1x512x256xf32> to vector<512x256xf32>
    %cst_37 = arith.constant dense<0.000000e+00> : vector<64x256xf32>
    %39 = tpu.matmul %36, %38, %cst_37 {dimension_numbers = #tpu.dot_dimension_numbers<[1], [0], [0], [1], [0, 0, 1, 1], [], []>} : vector<64x512xf32>, vector<512x256xf32>, vector<64x256xf32> -> vector<64x256xf32>
    %40 = arith.addf %34, %39 : vector<64x256xf32>
    %c0_38 = arith.constant 0 : index
    %c1_39 = arith.constant 1 : index
    %c0_40 = arith.constant 0 : index
    %41 = vector.load %arg11[%c0_38, %c1_39, %c0_40] : memref<10x10x512xf32, #tpu.memory_space<vmem>>, vector<10x8x512xf32>
    %42 = vector.extract_strided_slice %41 {offsets = [0, 0, 0], sizes = [8, 8, 512], strides = [1, 1, 1]} : vector<10x8x512xf32> to vector<8x8x512xf32>
    %43 = vector.shape_cast %42 : vector<8x8x512xf32> to vector<64x512xf32>
    %c0_41 = arith.constant 0 : index
    %c1_42 = arith.constant 1 : index
    %c0_43 = arith.constant 0 : index
    %c0_44 = arith.constant 0 : index
    %44 = vector.load %arg4[%c0_41, %c1_42, %c0_43, %c0_44] : memref<3x3x512x256xf32, #tpu.memory_space<vmem>>, vector<1x1x512x256xf32>
    %45 = vector.shape_cast %44 : vector<1x1x512x256xf32> to vector<512x256xf32>
    %cst_45 = arith.constant dense<0.000000e+00> : vector<64x256xf32>
    %46 = tpu.matmul %43, %45, %cst_45 {dimension_numbers = #tpu.dot_dimension_numbers<[1], [0], [0], [1], [0, 0, 1, 1], [], []>} : vector<64x512xf32>, vector<512x256xf32>, vector<64x256xf32> -> vector<64x256xf32>
    %47 = arith.addf %40, %46 : vector<64x256xf32>
    %48 = vector.extract_strided_slice %41 {offsets = [1, 0, 0], sizes = [8, 8, 512], strides = [1, 1, 1]} : vector<10x8x512xf32> to vector<8x8x512xf32>
    %49 = vector.shape_cast %48 : vector<8x8x512xf32> to vector<64x512xf32>
    %c1_46 = arith.constant 1 : index
    %c1_47 = arith.constant 1 : index
    %c0_48 = arith.constant 0 : index
    %c0_49 = arith.constant 0 : index
    %50 = vector.load %arg4[%c1_46, %c1_47, %c0_48, %c0_49] : memref<3x3x512x256xf32, #tpu.memory_space<vmem>>, vector<1x1x512x256xf32>
    %51 = vector.shape_cast %50 : vector<1x1x512x256xf32> to vector<512x256xf32>
    %cst_50 = arith.constant dense<0.000000e+00> : vector<64x256xf32>
    %52 = tpu.matmul %49, %51, %cst_50 {dimension_numbers = #tpu.dot_dimension_numbers<[1], [0], [0], [1], [0, 0, 1, 1], [], []>} : vector<64x512xf32>, vector<512x256xf32>, vector<64x256xf32> -> vector<64x256xf32>
    %53 = arith.addf %47, %52 : vector<64x256xf32>
    %54 = vector.extract_strided_slice %41 {offsets = [2, 0, 0], sizes = [8, 8, 512], strides = [1, 1, 1]} : vector<10x8x512xf32> to vector<8x8x512xf32>
    %55 = vector.shape_cast %54 : vector<8x8x512xf32> to vector<64x512xf32>
    %c2_51 = arith.constant 2 : index
    %c1_52 = arith.constant 1 : index
    %c0_53 = arith.constant 0 : index
    %c0_54 = arith.constant 0 : index
    %56 = vector.load %arg4[%c2_51, %c1_52, %c0_53, %c0_54] : memref<3x3x512x256xf32, #tpu.memory_space<vmem>>, vector<1x1x512x256xf32>
    %57 = vector.shape_cast %56 : vector<1x1x512x256xf32> to vector<512x256xf32>
    %cst_55 = arith.constant dense<0.000000e+00> : vector<64x256xf32>
    %58 = tpu.matmul %55, %57, %cst_55 {dimension_numbers = #tpu.dot_dimension_numbers<[1], [0], [0], [1], [0, 0, 1, 1], [], []>} : vector<64x512xf32>, vector<512x256xf32>, vector<64x256xf32> -> vector<64x256xf32>
    %59 = arith.addf %53, %58 : vector<64x256xf32>
    %c0_56 = arith.constant 0 : index
    %c2_57 = arith.constant 2 : index
    %c0_58 = arith.constant 0 : index
    %60 = vector.load %arg11[%c0_56, %c2_57, %c0_58] : memref<10x10x512xf32, #tpu.memory_space<vmem>>, vector<10x8x512xf32>
    %61 = vector.extract_strided_slice %60 {offsets = [0, 0, 0], sizes = [8, 8, 512], strides = [1, 1, 1]} : vector<10x8x512xf32> to vector<8x8x512xf32>
    %62 = vector.shape_cast %61 : vector<8x8x512xf32> to vector<64x512xf32>
    %c0_59 = arith.constant 0 : index
    %c2_60 = arith.constant 2 : index
    %c0_61 = arith.constant 0 : index
    %c0_62 = arith.constant 0 : index
    %63 = vector.load %arg4[%c0_59, %c2_60, %c0_61, %c0_62] : memref<3x3x512x256xf32, #tpu.memory_space<vmem>>, vector<1x1x512x256xf32>
    %64 = vector.shape_cast %63 : vector<1x1x512x256xf32> to vector<512x256xf32>
    %cst_63 = arith.constant dense<0.000000e+00> : vector<64x256xf32>
    %65 = tpu.matmul %62, %64, %cst_63 {dimension_numbers = #tpu.dot_dimension_numbers<[1], [0], [0], [1], [0, 0, 1, 1], [], []>} : vector<64x512xf32>, vector<512x256xf32>, vector<64x256xf32> -> vector<64x256xf32>
    %66 = arith.addf %59, %65 : vector<64x256xf32>
    %67 = vector.extract_strided_slice %60 {offsets = [1, 0, 0], sizes = [8, 8, 512], strides = [1, 1, 1]} : vector<10x8x512xf32> to vector<8x8x512xf32>
    %68 = vector.shape_cast %67 : vector<8x8x512xf32> to vector<64x512xf32>
    %c1_64 = arith.constant 1 : index
    %c2_65 = arith.constant 2 : index
    %c0_66 = arith.constant 0 : index
    %c0_67 = arith.constant 0 : index
    %69 = vector.load %arg4[%c1_64, %c2_65, %c0_66, %c0_67] : memref<3x3x512x256xf32, #tpu.memory_space<vmem>>, vector<1x1x512x256xf32>
    %70 = vector.shape_cast %69 : vector<1x1x512x256xf32> to vector<512x256xf32>
    %cst_68 = arith.constant dense<0.000000e+00> : vector<64x256xf32>
    %71 = tpu.matmul %68, %70, %cst_68 {dimension_numbers = #tpu.dot_dimension_numbers<[1], [0], [0], [1], [0, 0, 1, 1], [], []>} : vector<64x512xf32>, vector<512x256xf32>, vector<64x256xf32> -> vector<64x256xf32>
    %72 = arith.addf %66, %71 : vector<64x256xf32>
    %73 = vector.extract_strided_slice %60 {offsets = [2, 0, 0], sizes = [8, 8, 512], strides = [1, 1, 1]} : vector<10x8x512xf32> to vector<8x8x512xf32>
    %74 = vector.shape_cast %73 : vector<8x8x512xf32> to vector<64x512xf32>
    %c2_69 = arith.constant 2 : index
    %c2_70 = arith.constant 2 : index
    %c0_71 = arith.constant 0 : index
    %c0_72 = arith.constant 0 : index
    %75 = vector.load %arg4[%c2_69, %c2_70, %c0_71, %c0_72] : memref<3x3x512x256xf32, #tpu.memory_space<vmem>>, vector<1x1x512x256xf32>
    %76 = vector.shape_cast %75 : vector<1x1x512x256xf32> to vector<512x256xf32>
    %cst_73 = arith.constant dense<0.000000e+00> : vector<64x256xf32>
    %77 = tpu.matmul %74, %76, %cst_73 {dimension_numbers = #tpu.dot_dimension_numbers<[1], [0], [0], [1], [0, 0, 1, 1], [], []>} : vector<64x512xf32>, vector<512x256xf32>, vector<64x256xf32> -> vector<64x256xf32>
    %78 = arith.addf %72, %77 : vector<64x256xf32>
    %cst_74 = arith.constant 0.000000e+00 : f32
    %79 = vector.broadcast %cst_74 : f32 to vector<64x256xf32>
    %80 = arith.maximumf %78, %79 : vector<64x256xf32>
    %81 = vector.shape_cast %80 : vector<64x256xf32> to vector<8x8x256xf32>
    %c1_75 = arith.constant 1 : index
    %c1_76 = arith.constant 1 : index
    %c0_77 = arith.constant 0 : index
    %82 = vector.load %arg12[%c1_75, %c1_76, %c0_77] : memref<10x10x256xf32, #tpu.memory_space<vmem>>, vector<8x8x256xf32>
    tpu.vector_store %arg12[%c1_75, %c1_76, %c0_77], %81 {strides = array<i32>} : memref<10x10x256xf32, #tpu.memory_space<vmem>>, vector<8x8x256xf32>,
    %c0_78 = arith.constant 0 : index
    %c0_79 = arith.constant 0 : index
    %83 = vector.load %arg7[%c0_78, %c0_79] : memref<1x256xf32, #tpu.memory_space<vmem>>, vector<1x256xf32>
    %84 = vector.shape_cast %83 : vector<1x256xf32> to vector<1x256xf32>
    %85 = vector.broadcast %84 : vector<1x256xf32> to vector<64x256xf32>
    %c0_80 = arith.constant 0 : index
    %c0_81 = arith.constant 0 : index
    %c0_82 = arith.constant 0 : index
    %86 = vector.load %arg12[%c0_80, %c0_81, %c0_82] : memref<10x10x256xf32, #tpu.memory_space<vmem>>, vector<10x8x256xf32>
    %87 = vector.extract_strided_slice %86 {offsets = [0, 0, 0], sizes = [8, 8, 256], strides = [1, 1, 1]} : vector<10x8x256xf32> to vector<8x8x256xf32>
    %88 = vector.shape_cast %87 : vector<8x8x256xf32> to vector<64x256xf32>
    %c0_83 = arith.constant 0 : index
    %c0_84 = arith.constant 0 : index
    %c0_85 = arith.constant 0 : index
    %c0_86 = arith.constant 0 : index
    %89 = vector.load %arg6[%c0_83, %c0_84, %c0_85, %c0_86] : memref<3x3x256x256xf32, #tpu.memory_space<vmem>>, vector<1x1x256x256xf32>
    %90 = vector.shape_cast %89 : vector<1x1x256x256xf32> to vector<256x256xf32>
    %cst_87 = arith.constant dense<0.000000e+00> : vector<64x256xf32>
    %91 = tpu.matmul %88, %90, %cst_87 {dimension_numbers = #tpu.dot_dimension_numbers<[1], [0], [0], [1], [0, 0, 1, 1], [], []>} : vector<64x256xf32>, vector<256x256xf32>, vector<64x256xf32> -> vector<64x256xf32>
    %92 = arith.addf %85, %91 : vector<64x256xf32>
    %93 = vector.extract_strided_slice %86 {offsets = [1, 0, 0], sizes = [8, 8, 256], strides = [1, 1, 1]} : vector<10x8x256xf32> to vector<8x8x256xf32>
    %94 = vector.shape_cast %93 : vector<8x8x256xf32> to vector<64x256xf32>
    %c1_88 = arith.constant 1 : index
    %c0_89 = arith.constant 0 : index
    %c0_90 = arith.constant 0 : index
    %c0_91 = arith.constant 0 : index
    %95 = vector.load %arg6[%c1_88, %c0_89, %c0_90, %c0_91] : memref<3x3x256x256xf32, #tpu.memory_space<vmem>>, vector<1x1x256x256xf32>
    %96 = vector.shape_cast %95 : vector<1x1x256x256xf32> to vector<256x256xf32>
    %cst_92 = arith.constant dense<0.000000e+00> : vector<64x256xf32>
    %97 = tpu.matmul %94, %96, %cst_92 {dimension_numbers = #tpu.dot_dimension_numbers<[1], [0], [0], [1], [0, 0, 1, 1], [], []>} : vector<64x256xf32>, vector<256x256xf32>, vector<64x256xf32> -> vector<64x256xf32>
    %98 = arith.addf %92, %97 : vector<64x256xf32>
    %99 = vector.extract_strided_slice %86 {offsets = [2, 0, 0], sizes = [8, 8, 256], strides = [1, 1, 1]} : vector<10x8x256xf32> to vector<8x8x256xf32>
    %100 = vector.shape_cast %99 : vector<8x8x256xf32> to vector<64x256xf32>
    %c2_93 = arith.constant 2 : index
    %c0_94 = arith.constant 0 : index
    %c0_95 = arith.constant 0 : index
    %c0_96 = arith.constant 0 : index
    %101 = vector.load %arg6[%c2_93, %c0_94, %c0_95, %c0_96] : memref<3x3x256x256xf32, #tpu.memory_space<vmem>>, vector<1x1x256x256xf32>
    %102 = vector.shape_cast %101 : vector<1x1x256x256xf32> to vector<256x256xf32>
    %cst_97 = arith.constant dense<0.000000e+00> : vector<64x256xf32>
    %103 = tpu.matmul %100, %102, %cst_97 {dimension_numbers = #tpu.dot_dimension_numbers<[1], [0], [0], [1], [0, 0, 1, 1], [], []>} : vector<64x256xf32>, vector<256x256xf32>, vector<64x256xf32> -> vector<64x256xf32>
    %104 = arith.addf %98, %103 : vector<64x256xf32>
    %c0_98 = arith.constant 0 : index
    %c1_99 = arith.constant 1 : index
    %c0_100 = arith.constant 0 : index
    %105 = vector.load %arg12[%c0_98, %c1_99, %c0_100] : memref<10x10x256xf32, #tpu.memory_space<vmem>>, vector<10x8x256xf32>
    %106 = vector.extract_strided_slice %105 {offsets = [0, 0, 0], sizes = [8, 8, 256], strides = [1, 1, 1]} : vector<10x8x256xf32> to vector<8x8x256xf32>
    %107 = vector.shape_cast %106 : vector<8x8x256xf32> to vector<64x256xf32>
    %c0_101 = arith.constant 0 : index
    %c1_102 = arith.constant 1 : index
    %c0_103 = arith.constant 0 : index
    %c0_104 = arith.constant 0 : index
    %108 = vector.load %arg6[%c0_101, %c1_102, %c0_103, %c0_104] : memref<3x3x256x256xf32, #tpu.memory_space<vmem>>, vector<1x1x256x256xf32>
    %109 = vector.shape_cast %108 : vector<1x1x256x256xf32> to vector<256x256xf32>
    %cst_105 = arith.constant dense<0.000000e+00> : vector<64x256xf32>
    %110 = tpu.matmul %107, %109, %cst_105 {dimension_numbers = #tpu.dot_dimension_numbers<[1], [0], [0], [1], [0, 0, 1, 1], [], []>} : vector<64x256xf32>, vector<256x256xf32>, vector<64x256xf32> -> vector<64x256xf32>
    %111 = arith.addf %104, %110 : vector<64x256xf32>
    %112 = vector.extract_strided_slice %105 {offsets = [1, 0, 0], sizes = [8, 8, 256], strides = [1, 1, 1]} : vector<10x8x256xf32> to vector<8x8x256xf32>
    %113 = vector.shape_cast %112 : vector<8x8x256xf32> to vector<64x256xf32>
    %c1_106 = arith.constant 1 : index
    %c1_107 = arith.constant 1 : index
    %c0_108 = arith.constant 0 : index
    %c0_109 = arith.constant 0 : index
    %114 = vector.load %arg6[%c1_106, %c1_107, %c0_108, %c0_109] : memref<3x3x256x256xf32, #tpu.memory_space<vmem>>, vector<1x1x256x256xf32>
    %115 = vector.shape_cast %114 : vector<1x1x256x256xf32> to vector<256x256xf32>
    %cst_110 = arith.constant dense<0.000000e+00> : vector<64x256xf32>
    %116 = tpu.matmul %113, %115, %cst_110 {dimension_numbers = #tpu.dot_dimension_numbers<[1], [0], [0], [1], [0, 0, 1, 1], [], []>} : vector<64x256xf32>, vector<256x256xf32>, vector<64x256xf32> -> vector<64x256xf32>
    %117 = arith.addf %111, %116 : vector<64x256xf32>
    %118 = vector.extract_strided_slice %105 {offsets = [2, 0, 0], sizes = [8, 8, 256], strides = [1, 1, 1]} : vector<10x8x256xf32> to vector<8x8x256xf32>
    %119 = vector.shape_cast %118 : vector<8x8x256xf32> to vector<64x256xf32>
    %c2_111 = arith.constant 2 : index
    %c1_112 = arith.constant 1 : index
    %c0_113 = arith.constant 0 : index
    %c0_114 = arith.constant 0 : index
    %120 = vector.load %arg6[%c2_111, %c1_112, %c0_113, %c0_114] : memref<3x3x256x256xf32, #tpu.memory_space<vmem>>, vector<1x1x256x256xf32>
    %121 = vector.shape_cast %120 : vector<1x1x256x256xf32> to vector<256x256xf32>
    %cst_115 = arith.constant dense<0.000000e+00> : vector<64x256xf32>
    %122 = tpu.matmul %119, %121, %cst_115 {dimension_numbers = #tpu.dot_dimension_numbers<[1], [0], [0], [1], [0, 0, 1, 1], [], []>} : vector<64x256xf32>, vector<256x256xf32>, vector<64x256xf32> -> vector<64x256xf32>
    %123 = arith.addf %117, %122 : vector<64x256xf32>
    %c0_116 = arith.constant 0 : index
    %c2_117 = arith.constant 2 : index
    %c0_118 = arith.constant 0 : index
    %124 = vector.load %arg12[%c0_116, %c2_117, %c0_118] : memref<10x10x256xf32, #tpu.memory_space<vmem>>, vector<10x8x256xf32>
    %125 = vector.extract_strided_slice %124 {offsets = [0, 0, 0], sizes = [8, 8, 256], strides = [1, 1, 1]} : vector<10x8x256xf32> to vector<8x8x256xf32>
    %126 = vector.shape_cast %125 : vector<8x8x256xf32> to vector<64x256xf32>
    %c0_119 = arith.constant 0 : index
    %c2_120 = arith.constant 2 : index
    %c0_121 = arith.constant 0 : index
    %c0_122 = arith.constant 0 : index
    %127 = vector.load %arg6[%c0_119, %c2_120, %c0_121, %c0_122] : memref<3x3x256x256xf32, #tpu.memory_space<vmem>>, vector<1x1x256x256xf32>
    %128 = vector.shape_cast %127 : vector<1x1x256x256xf32> to vector<256x256xf32>
    %cst_123 = arith.constant dense<0.000000e+00> : vector<64x256xf32>
    %129 = tpu.matmul %126, %128, %cst_123 {dimension_numbers = #tpu.dot_dimension_numbers<[1], [0], [0], [1], [0, 0, 1, 1], [], []>} : vector<64x256xf32>, vector<256x256xf32>, vector<64x256xf32> -> vector<64x256xf32>
    %130 = arith.addf %123, %129 : vector<64x256xf32>
    %131 = vector.extract_strided_slice %124 {offsets = [1, 0, 0], sizes = [8, 8, 256], strides = [1, 1, 1]} : vector<10x8x256xf32> to vector<8x8x256xf32>
    %132 = vector.shape_cast %131 : vector<8x8x256xf32> to vector<64x256xf32>
    %c1_124 = arith.constant 1 : index
    %c2_125 = arith.constant 2 : index
    %c0_126 = arith.constant 0 : index
    %c0_127 = arith.constant 0 : index
    %133 = vector.load %arg6[%c1_124, %c2_125, %c0_126, %c0_127] : memref<3x3x256x256xf32, #tpu.memory_space<vmem>>, vector<1x1x256x256xf32>
    %134 = vector.shape_cast %133 : vector<1x1x256x256xf32> to vector<256x256xf32>
    %cst_128 = arith.constant dense<0.000000e+00> : vector<64x256xf32>
    %135 = tpu.matmul %132, %134, %cst_128 {dimension_numbers = #tpu.dot_dimension_numbers<[1], [0], [0], [1], [0, 0, 1, 1], [], []>} : vector<64x256xf32>, vector<256x256xf32>, vector<64x256xf32> -> vector<64x256xf32>
    %136 = arith.addf %130, %135 : vector<64x256xf32>
    %137 = vector.extract_strided_slice %124 {offsets = [2, 0, 0], sizes = [8, 8, 256], strides = [1, 1, 1]} : vector<10x8x256xf32> to vector<8x8x256xf32>
    %138 = vector.shape_cast %137 : vector<8x8x256xf32> to vector<64x256xf32>
    %c2_129 = arith.constant 2 : index
    %c2_130 = arith.constant 2 : index
    %c0_131 = arith.constant 0 : index
    %c0_132 = arith.constant 0 : index
    %139 = vector.load %arg6[%c2_129, %c2_130, %c0_131, %c0_132] : memref<3x3x256x256xf32, #tpu.memory_space<vmem>>, vector<1x1x256x256xf32>
    %140 = vector.shape_cast %139 : vector<1x1x256x256xf32> to vector<256x256xf32>
    %cst_133 = arith.constant dense<0.000000e+00> : vector<64x256xf32>
    %141 = tpu.matmul %138, %140, %cst_133 {dimension_numbers = #tpu.dot_dimension_numbers<[1], [0], [0], [1], [0, 0, 1, 1], [], []>} : vector<64x256xf32>, vector<256x256xf32>, vector<64x256xf32> -> vector<64x256xf32>
    %142 = arith.addf %136, %141 : vector<64x256xf32>
    %cst_134 = arith.constant 0.000000e+00 : f32
    %143 = vector.broadcast %cst_134 : f32 to vector<64x256xf32>
    %144 = arith.maximumf %142, %143 : vector<64x256xf32>
    %cst_135 = arith.constant dense<0.000000e+00> : vector<256xf32>
    %145 = vector.multi_reduction <add>, %144, %cst_135 [0] : vector<64x256xf32> to vector<256xf32>
    %146 = vector.shape_cast %145 : vector<256xf32> to vector<1x256xf32>
    %cst_136 = arith.constant 6.400000e+01 : f32
    %147 = vector.broadcast %cst_136 : f32 to vector<1x256xf32>
    %148 = arith.divf %146, %147 : vector<1x256xf32>
    %c0_137 = arith.constant 0 : index
    %c0_138 = arith.constant 0 : index
    %149 = vector.load %arg8[%c0_137, %c0_138] : memref<256x12xf32, #tpu.memory_space<vmem>>, vector<256x12xf32>
    %cst_139 = arith.constant dense<0.000000e+00> : vector<1x12xf32>
    %150 = tpu.matmul %148, %149, %cst_139 {dimension_numbers = #tpu.dot_dimension_numbers<[1], [0], [0], [1], [0, 0, 1, 1], [], []>} : vector<1x256xf32>, vector<256x12xf32>, vector<1x12xf32> -> vector<1x12xf32>
    %c0_140 = arith.constant 0 : index
    %c0_141 = arith.constant 0 : index
    %151 = vector.load %arg9[%c0_140, %c0_141] : memref<1x12xf32, #tpu.memory_space<vmem>>, vector<1x12xf32>
    %152 = arith.addf %150, %151 : vector<1x12xf32>
    %cst_142 = arith.constant 0.00999999977 : f32
    %153 = vector.broadcast %cst_142 : f32 to vector<1x12xf32>
    %154 = arith.mulf %153, %152 : vector<1x12xf32>
    %c0_143 = arith.constant 0 : index
    %c0_144 = arith.constant 0 : index
    %c0_145 = arith.constant 0 : index
    %155 = vector.load %arg10[%c0_143, %c0_144, %c0_145] : memref<1x1x12xf32, #tpu.memory_space<vmem>>, vector<1x1x12xf32>
    %156 = vector.shape_cast %155 : vector<1x1x12xf32> to vector<1x12xf32>
    %157 = vector.shape_cast %154 : vector<1x12xf32> to vector<1x1x12xf32>
    tpu.vector_store %arg10[%c0_143, %c0_144, %c0_145], %157 {strides = array<i32>} : memref<1x1x12xf32, #tpu.memory_space<vmem>>, vector<1x1x12xf32>,
    return
  }
  func.func @transform_0(%arg0: i32) -> (i32, i32, i32) {
    %c0_i32 = arith.constant 0 : i32
    %c0_i32_0 = arith.constant 0 : i32
    %c0_i32_1 = arith.constant 0 : i32
    return %arg0, %c0_i32, %c0_i32_0 : i32, i32, i32
  }
  func.func @transform_1(%arg0: i32) -> (i32, i32) {
    %c0_i32 = arith.constant 0 : i32
    %c0_i32_0 = arith.constant 0 : i32
    %c0_i32_1 = arith.constant 0 : i32
    return %c0_i32, %c0_i32_0 : i32, i32
  }
  func.func @transform_2(%arg0: i32) -> (i32, i32) {
    %c0_i32 = arith.constant 0 : i32
    %c0_i32_0 = arith.constant 0 : i32
    %c0_i32_1 = arith.constant 0 : i32
    return %c0_i32, %c0_i32_0 : i32, i32
  }
  func.func @transform_3(%arg0: i32) -> (i32, i32, i32, i32) {
    %c0_i32 = arith.constant 0 : i32
    %c0_i32_0 = arith.constant 0 : i32
    %c0_i32_1 = arith.constant 0 : i32
    %c0_i32_2 = arith.constant 0 : i32
    %c0_i32_3 = arith.constant 0 : i32
    return %c0_i32, %c0_i32_0, %c0_i32_1, %c0_i32_2 : i32, i32, i32, i32
  }
  func.func @transform_4(%arg0: i32) -> (i32, i32) {
    %c0_i32 = arith.constant 0 : i32
    %c0_i32_0 = arith.constant 0 : i32
    %c0_i32_1 = arith.constant 0 : i32
    return %c0_i32, %c0_i32_0 : i32, i32
  }
  func.func @transform_5(%arg0: i32) -> (i32, i32, i32, i32) {
    %c0_i32 = arith.constant 0 : i32
    %c0_i32_0 = arith.constant 0 : i32
    %c0_i32_1 = arith.constant 0 : i32
    %c0_i32_2 = arith.constant 0 : i32
    %c0_i32_3 = arith.constant 0 : i32
    return %c0_i32, %c0_i32_0, %c0_i32_1, %c0_i32_2 : i32, i32, i32, i32
  }
  func.func @transform_6(%arg0: i32) -> (i32, i32) {
    %c0_i32 = arith.constant 0 : i32
    %c0_i32_0 = arith.constant 0 : i32
    %c0_i32_1 = arith.constant 0 : i32
    return %c0_i32, %c0_i32_0 : i32, i32
  }
  func.func @transform_7(%arg0: i32) -> (i32, i32) {
    %c0_i32 = arith.constant 0 : i32
    %c0_i32_0 = arith.constant 0 : i32
    %c0_i32_1 = arith.constant 0 : i32
    return %c0_i32, %c0_i32_0 : i32, i32
  }
  func.func @transform_8(%arg0: i32) -> (i32, i32) {
    %c0_i32 = arith.constant 0 : i32
    %c0_i32_0 = arith.constant 0 : i32
    %c0_i32_1 = arith.constant 0 : i32
    return %c0_i32, %c0_i32_0 : i32, i32
  }
  func.func @transform_9(%arg0: i32) -> (i32, i32, i32) {
    %c0_i32 = arith.constant 0 : i32
    %c0_i32_0 = arith.constant 0 : i32
    %c0_i32_1 = arith.constant 0 : i32
    return %arg0, %c0_i32, %c0_i32_0 : i32, i32, i32
  }
}

</mosaic_0001>

<llo_original>
// kernel: tpu_custom_call.1
$region0: #{tpu_custom_call.1}
  #allocation0 [shape = 'u32[]', space=smem, size = 0x4, offset = 0x4, fixed_abs, tag = 'smem constant byte address 0x4 - core index']
  #allocation1 [shape = 'u32[144,128]{1,0:T(1,128)}', space=vmem, size = 0x12000, scoped, tag = 'internal scratch']
  #allocation2 [shape = 'f32[10,10,512]{2,1,0:T(8,128)}', space=vmem, size = 0x50000, scoped, tag = 'scratch operand']
  #allocation3 [shape = 'f32[10,10,256]{2,1,0:T(8,128)}', space=vmem, size = 0x28000, scoped, tag = 'scratch operand']
  %s0 = inlined_call_operand.hbm [shape: f32[2,128,32], index: 0, kind: input, shape index: {}]
  %s1 = inlined_call_operand.hbm [shape: f32[32,256], index: 1, kind: input, shape index: {}]
  %s2 = inlined_call_operand.hbm [shape: f32[1,256], index: 2, kind: input, shape index: {}]
  %s3 = inlined_call_operand.hbm [shape: f32[3,3,512,256], index: 3, kind: input, shape index: {}]
  %s4 = inlined_call_operand.hbm [shape: f32[1,256], index: 4, kind: input, shape index: {}]
  %s5 = inlined_call_operand.hbm [shape: f32[3,3,256,256], index: 5, kind: input, shape index: {}]
  %s6 = inlined_call_operand.hbm [shape: f32[1,256], index: 6, kind: input, shape index: {}]
  %s7 = inlined_call_operand.hbm [shape: f32[256,12], index: 7, kind: input, shape index: {}]
  %s8 = inlined_call_operand.hbm [shape: f32[1,12], index: 8, kind: input, shape index: {}]
  %s9 = inlined_call_operand.hbm [shape: f32[2,1,12], index: 9, kind: output, shape index: {}]
  %s10 = sld [smem:[#allocation0]]
  $region105: #{tpu_custom_call.1} parent=0
    _
  %s12 = ssub.s32 1, %s10
  %s13 = scalar_select 0, %s12, %s10
  $region1: #{tpu_custom_call.1} parent=0
    #allocation4 [shape = 'u8[131072]{0}', space=vmem, size = 0x20000, scoped, tag = 'input window, operand 0']
    #allocation5 [shape = 's32[2]{0}', space=sflag, size = 0x8, scoped, tag = 'scoped memory for tpu_custom_call.1']
    #allocation6 [shape = 's32[2]{0}', space=sflag, size = 0x8, scoped, tag = 'scoped memory for tpu_custom_call.1']
    #allocation7 [shape = 'u8[32768]{0}', space=vmem, size = 0x8000, scoped, tag = 'input window, operand 1, single buffered']
    #allocation8 [shape = 's32[1]{0}', space=sflag, size = 0x4, scoped, tag = 'scoped memory for tpu_custom_call.1']
    #allocation9 [shape = 'u8[1024]{0}', space=vmem, size = 0x400, scoped, tag = 'input window, operand 2, single buffered']
    #allocation10 [shape = 'u8[4718592]{0}', space=vmem, size = 0x480000, scoped, tag = 'input window, operand 3, single buffered']
    #allocation11 [shape = 's32[1]{0}', space=sflag, size = 0x4, scoped, tag = 'scoped memory for tpu_custom_call.1']
    #allocation12 [shape = 'u8[1024]{0}', space=vmem, size = 0x400, scoped, tag = 'input window, operand 4, single buffered']
    #allocation13 [shape = 'u8[2359296]{0}', space=vmem, size = 0x240000, scoped, tag = 'input window, operand 5, single buffered']
    #allocation14 [shape = 's32[1]{0}', space=sflag, size = 0x4, scoped, tag = 'scoped memory for tpu_custom_call.1']
    #allocation15 [shape = 'u8[1024]{0}', space=vmem, size = 0x400, scoped, tag = 'input window, operand 6, single buffered']
    #allocation16 [shape = 'u8[131072]{0}', space=vmem, size = 0x20000, scoped, tag = 'input window, operand 7, single buffered']
    #allocation17 [shape = 's32[1]{0}', space=sflag, size = 0x4, scoped, tag = 'scoped memory for tpu_custom_call.1']
    #allocation18 [shape = 'u8[512]{0}', space=vmem, size = 0x400, scoped, tag = 'input window, operand 8, single buffered']
    #allocation19 [shape = 'u8[1024]{0}', space=vmem, size = 0x400, scoped, tag = 'output window, operand 0']
    %14 = vsyncpa [#allocation5], 0
    %s15 = scalar_lea.sflag [#allocation5], 1
    %16 = vsyncpa %s15, 0
    %17 = vsyncpa [#allocation8], 0
    %18 = vsyncpa [#allocation11], 0
    %19 = vsyncpa [#allocation14], 0
    %20 = vsyncpa [#allocation17], 0
    %21 = vsyncpa [#allocation6], 0
    %s22 = scalar_lea.sflag [#allocation6], 1
    %23 = vsyncpa %s22, 0
    loop: start=0, step=1, limit=4
    $region2: #{tpu_custom_call.1} parent=1 // loop_pre_header
      _
    $region3: #{tpu_custom_call.1} parent=1 // loop_header
      %s25 = sphi 0, %s29
      %p26 = scmp.ge.s32.totalorder %s25, 4
      %s35 = sphi 0, %s37
      %s38 = sphi 0, %s35
      %s39 = sphi 0, %s38
      %s55 = sphi 0, %s39
      %s59 = sphi 0, %s59
      %s61 = sphi 0, %s59
      %s62 = sphi 0, %s61
      %s76 = sphi 0, %s62
      %s80 = sphi 0, %s80
      %s82 = sphi 0, %s80
      %s83 = sphi 0, %s82
      %s97 = sphi 0, %s83
      %s101 = sphi 0, %s101
      %s103 = sphi 0, %s101
      %s104 = sphi 0, %s103
      %s118 = sphi 0, %s104
      %s122 = sphi 0, %s122
      %s124 = sphi 0, %s122
      %s125 = sphi 0, %s124
      %s139 = sphi 0, %s125
      %s143 = sphi 0, %s143
      %s145 = sphi 0, %s143
      %s146 = sphi 0, %s145
      %s160 = sphi 0, %s146
      %s164 = sphi 0, %s164
      %s166 = sphi 0, %s164
      %s167 = sphi 0, %s166
      %s181 = sphi 0, %s167
      %s185 = sphi 0, %s185
      %s187 = sphi 0, %s185
      %s188 = sphi 0, %s187
      %s202 = sphi 0, %s188
      %s206 = sphi 0, %s206
      %s208 = sphi 0, %s206
      %s209 = sphi 0, %s208
      %s223 = sphi 0, %s209
      %s229 = sphi 0, %s231
      %s232 = sphi 0, %s229
      %s233 = sphi 0, %s232
      %s249 = sphi 0, %s233
    $region4: #{tpu_custom_call.1} parent=1 // loop_header_branch
      %28 = sbr.rel (%p26) target = $region8
    $region5: #{tpu_custom_call.1} parent=1 // loop_body
      %s30 = ssub.s32 %s25, 1
      %s31 = ssub.s32 %s25, 2
      %s32 = sadd.s32 %s25, 1
      %s33 = ssub.s32 %s25, %s32
      %p34 = scmp.eq.s32.totalorder %s33, 0
      %s36 = sadd.s32 %s35, 1
      %s37 = scalar_select %p34, %s35, %s36
      %p40 = pneg %p34
      %p41 = scmp.eq.s32.totalorder %s25, 1
      %p42 = por %p40, %p41
      %p43 = scmp.ne.s32.totalorder %s35, %s38
      %p44 = scmp.eq.s32.totalorder %s25, 0
      %p45 = por %p43, %p44
      %p46 = scmp.ne.s32.totalorder %s35, %s38
      %p47 = scmp.eq.s32.totalorder %s30, 1
      %p48 = por %p46, %p47
      %p49 = scmp.ne.s32.totalorder %s38, %s39
      %p50 = scmp.eq.s32.totalorder %s30, 0
      %p51 = por %p49, %p50
      %p52 = scmp.ne.s32.totalorder %s38, %s39
      %p53 = scmp.eq.s32.totalorder %s31, 1
      %p54 = por %p52, %p53
      %p56 = scmp.ne.s32.totalorder %s39, %s55
      %p57 = scmp.eq.s32.totalorder %s31, 0
      %p58 = por %p56, %p57
      %s60 = sadd.s32 %s59, 1
      %p63 = scmp.eq.s32.totalorder %s25, 1
      %p64 = scmp.ne.s32.totalorder %s59, %s61
      %p65 = scmp.eq.s32.totalorder %s25, 0
      %p66 = por %p64, %p65
      %p67 = scmp.ne.s32.totalorder %s59, %s61
      %p68 = scmp.eq.s32.totalorder %s30, 1
      %p69 = por %p67, %p68
      %p70 = scmp.ne.s32.totalorder %s61, %s62
      %p71 = scmp.eq.s32.totalorder %s30, 0
      %p72 = por %p70, %p71
      %p73 = scmp.ne.s32.totalorder %s61, %s62
      %p74 = scmp.eq.s32.totalorder %s31, 1
      %p75 = por %p73, %p74
      %p77 = scmp.ne.s32.totalorder %s62, %s76
      %p78 = scmp.eq.s32.totalorder %s31, 0
      %p79 = por %p77, %p78
      %s81 = sadd.s32 %s80, 1
      %p84 = scmp.eq.s32.totalorder %s25, 1
      %p85 = scmp.ne.s32.totalorder %s80, %s82
      %p86 = scmp.eq.s32.totalorder %s25, 0
      %p87 = por %p85, %p86
      %p88 = scmp.ne.s32.totalorder %s80, %s82
      %p89 = scmp.eq.s32.totalorder %s30, 1
      %p90 = por %p88, %p89
      %p91 = scmp.ne.s32.totalorder %s82, %s83
      %p92 = scmp.eq.s32.totalorder %s30, 0
      %p93 = por %p91, %p92
      %p94 = scmp.ne.s32.totalorder %s82, %s83
      %p95 = scmp.eq.s32.totalorder %s31, 1
      %p96 = por %p94, %p95
      %p98 = scmp.ne.s32.totalorder %s83, %s97
      %p99 = scmp.eq.s32.totalorder %s31, 0
      %p100 = por %p98, %p99
      %s102 = sadd.s32 %s101, 1
      %p105 = scmp.eq.s32.totalorder %s25, 1
      %p106 = scmp.ne.s32.totalorder %s101, %s103
      %p107 = scmp.eq.s32.totalorder %s25, 0
      %p108 = por %p106, %p107
      %p109 = scmp.ne.s32.totalorder %s101, %s103
      %p110 = scmp.eq.s32.totalorder %s30, 1
      %p111 = por %p109, %p110
      %p112 = scmp.ne.s32.totalorder %s103, %s104
      %p113 = scmp.eq.s32.totalorder %s30, 0
      %p114 = por %p112, %p113
      %p115 = scmp.ne.s32.totalorder %s103, %s104
      %p116 = scmp.eq.s32.totalorder %s31, 1
      %p117 = por %p115, %p116
      %p119 = scmp.ne.s32.totalorder %s104, %s118
      %p120 = scmp.eq.s32.totalorder %s31, 0
      %p121 = por %p119, %p120
      %s123 = sadd.s32 %s122, 1
      %p126 = scmp.eq.s32.totalorder %s25, 1
      %p127 = scmp.ne.s32.totalorder %s122, %s124
      %p128 = scmp.eq.s32.totalorder %s25, 0
      %p129 = por %p127, %p128
      %p130 = scmp.ne.s32.totalorder %s122, %s124
      %p131 = scmp.eq.s32.totalorder %s30, 1
      %p132 = por %p130, %p131
      %p133 = scmp.ne.s32.totalorder %s124, %s125
      %p134 = scmp.eq.s32.totalorder %s30, 0
      %p135 = por %p133, %p134
      %p136 = scmp.ne.s32.totalorder %s124, %s125
      %p137 = scmp.eq.s32.totalorder %s31, 1
      %p138 = por %p136, %p137
      %p140 = scmp.ne.s32.totalorder %s125, %s139
      %p141 = scmp.eq.s32.totalorder %s31, 0
      %p142 = por %p140, %p141
      %s144 = sadd.s32 %s143, 1
      %p147 = scmp.eq.s32.totalorder %s25, 1
      %p148 = scmp.ne.s32.totalorder %s143, %s145
      %p149 = scmp.eq.s32.totalorder %s25, 0
      %p150 = por %p148, %p149
      %p151 = scmp.ne.s32.totalorder %s143, %s145
      %p152 = scmp.eq.s32.totalorder %s30, 1
      %p153 = por %p151, %p152
      %p154 = scmp.ne.s32.totalorder %s145, %s146
      %p155 = scmp.eq.s32.totalorder %s30, 0
      %p156 = por %p154, %p155
      %p157 = scmp.ne.s32.totalorder %s145, %s146
      %p158 = scmp.eq.s32.totalorder %s31, 1
      %p159 = por %p157, %p158
      %p161 = scmp.ne.s32.totalorder %s146, %s160
      %p162 = scmp.eq.s32.totalorder %s31, 0
      %p163 = por %p161, %p162
      %s165 = sadd.s32 %s164, 1
      %p168 = scmp.eq.s32.totalorder %s25, 1
      %p169 = scmp.ne.s32.totalorder %s164, %s166
      %p170 = scmp.eq.s32.totalorder %s25, 0
      %p171 = por %p169, %p170
      %p172 = scmp.ne.s32.totalorder %s164, %s166
      %p173 = scmp.eq.s32.totalorder %s30, 1
      %p174 = por %p172, %p173
      %p175 = scmp.ne.s32.totalorder %s166, %s167
      %p176 = scmp.eq.s32.totalorder %s30, 0
      %p177 = por %p175, %p176
      %p178 = scmp.ne.s32.totalorder %s166, %s167
      %p179 = scmp.eq.s32.totalorder %s31, 1
      %p180 = por %p178, %p179
      %p182 = scmp.ne.s32.totalorder %s167, %s181
      %p183 = scmp.eq.s32.totalorder %s31, 0
      %p184 = por %p182, %p183
      %s186 = sadd.s32 %s185, 1
      %p189 = scmp.eq.s32.totalorder %s25, 1
      %p190 = scmp.ne.s32.totalorder %s185, %s187
      %p191 = scmp.eq.s32.totalorder %s25, 0
      %p192 = por %p190, %p191
      %p193 = scmp.ne.s32.totalorder %s185, %s187
      %p194 = scmp.eq.s32.totalorder %s30, 1
      %p195 = por %p193, %p194
      %p196 = scmp.ne.s32.totalorder %s187, %s188
      %p197 = scmp.eq.s32.totalorder %s30, 0
      %p198 = por %p196, %p197
      %p199 = scmp.ne.s32.totalorder %s187, %s188
      %p200 = scmp.eq.s32.totalorder %s31, 1
      %p201 = por %p199, %p200
      %p203 = scmp.ne.s32.totalorder %s188, %s202
      %p204 = scmp.eq.s32.totalorder %s31, 0
      %p205 = por %p203, %p204
      %s207 = sadd.s32 %s206, 1
      %p210 = scmp.eq.s32.totalorder %s25, 1
      %p211 = scmp.ne.s32.totalorder %s206, %s208
      %p212 = scmp.eq.s32.totalorder %s25, 0
      %p213 = por %p211, %p212
      %p214 = scmp.ne.s32.totalorder %s206, %s208
      %p215 = scmp.eq.s32.totalorder %s30, 1
      %p216 = por %p214, %p215
      %p217 = scmp.ne.s32.totalorder %s208, %s209
      %p218 = scmp.eq.s32.totalorder %s30, 0
      %p219 = por %p217, %p218
      %p220 = scmp.ne.s32.totalorder %s208, %s209
      %p221 = scmp.eq.s32.totalorder %s31, 1
      %p222 = por %p220, %p221
      %p224 = scmp.ne.s32.totalorder %s209, %s223
      %p225 = scmp.eq.s32.totalorder %s31, 0
      %p226 = por %p224, %p225
      %s227 = ssub.s32 %s25, %s32
      %p228 = scmp.eq.s32.totalorder %s227, 0
      %s230 = sadd.s32 %s229, 1
      %s231 = scalar_select %p228, %s229, %s230
      %p234 = pneg %p228
      %p235 = scmp.eq.s32.totalorder %s25, 1
      %p236 = por %p234, %p235
      %p237 = scmp.ne.s32.totalorder %s229, %s232
      %p238 = scmp.eq.s32.totalorder %s25, 0
      %p239 = por %p237, %p238
      %p240 = scmp.ne.s32.totalorder %s229, %s232
      %p241 = scmp.eq.s32.totalorder %s30, 1
      %p242 = por %p240, %p241
      %p243 = scmp.ne.s32.totalorder %s232, %s233
      %p244 = scmp.eq.s32.totalorder %s30, 0
      %p245 = por %p243, %p244
      %p246 = scmp.ne.s32.totalorder %s232, %s233
      %p247 = scmp.eq.s32.totalorder %s31, 1
      %p248 = por %p246, %p247
      %p250 = scmp.ne.s32.totalorder %s233, %s249
      %p251 = scmp.eq.s32.totalorder %s31, 0
      %p252 = por %p250, %p251
      %p253 = scmp.le.s32.totalorder 1, %s25
      %p254 = scmp.lt.s32.totalorder %s25, 3
      %p255 = pnand %p253, %p254
      %p256 = pneg %p255
      // Predicated region
      $region9: #{tpu_custom_call.1} parent=5 // pred_check
        _
      $region10: #{tpu_custom_call.1} parent=5 // pred_check_branch
        %258 = sbr.rel (%p255) target = $region12
      $region11: #{tpu_custom_call.1} parent=5 // pred_region
        %s259 = ssub.s32 %s25, 1
        // Predicated region
        $region13: #{tpu_custom_call.1} parent=11 // pred_check
          %p260 = pneg %p72
        $region14: #{tpu_custom_call.1} parent=11 // pred_check_branch
          %262 = sbr.rel (%p260) target = $region16
        $region15: #{tpu_custom_call.1} parent=11 // pred_region
          %s264 = ssub.s32 1024, 1024
          %265 = vsyncadd [#allocation8], %s264
          %s266 = sshll.u32 [#allocation7], 4
          %s267 = int_to_ptr.vmem [resolvable:$true] %s266
          %272 = dma.hbm_to_vmem [thread:$0]  %s1, 1024, %s267, [#allocation8], 256, 256, 16
        $region16: #{tpu_custom_call.1} parent=11 // pred_fallthru
          _
        // Predicated region
        $region17: #{tpu_custom_call.1} parent=11 // pred_check
          %p273 = pneg %p93
        $region18: #{tpu_custom_call.1} parent=11 // pred_check_branch
          %275 = sbr.rel (%p273) target = $region20
        $region19: #{tpu_custom_call.1} parent=11 // pred_region
          %s277 = ssub.s32 32, 32
          %278 = vsyncadd [#allocation8], %s277
          %s280 = sshll.u32 [#allocation9], 4
          %s281 = int_to_ptr.vmem [resolvable:$true] %s280
          %283 = dma.hbm_to_vmem [thread:$0]  %s2, 32, %s281, [#allocation8]
        $region20: #{tpu_custom_call.1} parent=11 // pred_fallthru
          _
        // Predicated region
        $region21: #{tpu_custom_call.1} parent=11 // pred_check
          %p284 = pneg %p114
        $region22: #{tpu_custom_call.1} parent=11 // pred_check_branch
          %286 = sbr.rel (%p284) target = $region24
        $region23: #{tpu_custom_call.1} parent=11 // pred_region
          %s288 = ssub.s32 147456, 147456
          %289 = vsyncadd [#allocation11], %s288
          %s290 = sshll.u32 [#allocation10], 4
          %s291 = int_to_ptr.vmem [resolvable:$true] %s290
          %296 = dma.hbm_to_vmem [thread:$0]  %s3, 147456, %s291, [#allocation11], 256, 256, 16
        $region24: #{tpu_custom_call.1} parent=11 // pred_fallthru
          _
        // Predicated region
        $region25: #{tpu_custom_call.1} parent=11 // pred_check
          %p297 = pneg %p135
        $region26: #{tpu_custom_call.1} parent=11 // pred_check_branch
          %299 = sbr.rel (%p297) target = $region28
        $region27: #{tpu_custom_call.1} parent=11 // pred_region
          %s301 = ssub.s32 32, 32
          %302 = vsyncadd [#allocation11], %s301
          %s304 = sshll.u32 [#allocation12], 4
          %s305 = int_to_ptr.vmem [resolvable:$true] %s304
          %307 = dma.hbm_to_vmem [thread:$0]  %s4, 32, %s305, [#allocation11]
        $region28: #{tpu_custom_call.1} parent=11 // pred_fallthru
          _
        // Predicated region
        $region29: #{tpu_custom_call.1} parent=11 // pred_check
          %p308 = pneg %p156
        $region30: #{tpu_custom_call.1} parent=11 // pred_check_branch
          %310 = sbr.rel (%p308) target = $region32
        $region31: #{tpu_custom_call.1} parent=11 // pred_region
          %s312 = ssub.s32 73728, 73728
          %313 = vsyncadd [#allocation14], %s312
          %s314 = sshll.u32 [#allocation13], 4
          %s315 = int_to_ptr.vmem [resolvable:$true] %s314
          %320 = dma.hbm_to_vmem [thread:$0]  %s5, 73728, %s315, [#allocation14], 256, 256, 16
        $region32: #{tpu_custom_call.1} parent=11 // pred_fallthru
          _
        // Predicated region
        $region33: #{tpu_custom_call.1} parent=11 // pred_check
          %p321 = pneg %p177
        $region34: #{tpu_custom_call.1} parent=11 // pred_check_branch
          %323 = sbr.rel (%p321) target = $region36
        $region35: #{tpu_custom_call.1} parent=11 // pred_region
          %s325 = ssub.s32 32, 32
          %326 = vsyncadd [#allocation14], %s325
          %s328 = sshll.u32 [#allocation15], 4
          %s329 = int_to_ptr.vmem [resolvable:$true] %s328
          %331 = dma.hbm_to_vmem [thread:$0]  %s6, 32, %s329, [#allocation14]
        $region36: #{tpu_custom_call.1} parent=11 // pred_fallthru
          _
        // Predicated region
        $region37: #{tpu_custom_call.1} parent=11 // pred_check
          %p332 = pneg %p198
        $region38: #{tpu_custom_call.1} parent=11 // pred_check_branch
          %334 = sbr.rel (%p332) target = $region40
        $region39: #{tpu_custom_call.1} parent=11 // pred_region
          %s336 = ssub.s32 4096, 4096
          %337 = vsyncadd [#allocation17], %s336
          %s338 = sshll.u32 [#allocation16], 4
          %s339 = int_to_ptr.vmem [resolvable:$true] %s338
          %344 = dma.hbm_to_vmem [thread:$0]  %s7, 4096, %s339, [#allocation17], 128, 128, 8
        $region40: #{tpu_custom_call.1} parent=11 // pred_fallthru
          _
        // Predicated region
        $region41: #{tpu_custom_call.1} parent=11 // pred_check
          %p345 = pneg %p219
        $region42: #{tpu_custom_call.1} parent=11 // pred_check_branch
          %347 = sbr.rel (%p345) target = $region44
        $region43: #{tpu_custom_call.1} parent=11 // pred_region
          %s349 = ssub.s32 16, 16
          %350 = vsyncadd [#allocation17], %s349
          %s352 = sshll.u32 [#allocation18], 4
          %s353 = int_to_ptr.vmem [resolvable:$true] %s352
          %355 = dma.hbm_to_vmem [thread:$0]  %s8, 16, %s353, [#allocation17]
        $region44: #{tpu_custom_call.1} parent=11 // pred_fallthru
          _
      $region12: #{tpu_custom_call.1} parent=5 // pred_fallthru
        _
      %p356 = scmp.lt.s32.totalorder %s25, 2
      // Predicated region
      $region45: #{tpu_custom_call.1} parent=5 // pred_check
        %p357 = pneg %p356
      $region46: #{tpu_custom_call.1} parent=5 // pred_check_branch
        %359 = sbr.rel (%p357) target = $region48
      $region47: #{tpu_custom_call.1} parent=5 // pred_region
        // Predicated region
        $region49: #{tpu_custom_call.1} parent=47 // pred_check
          %p360 = pneg %p45
        $region50: #{tpu_custom_call.1} parent=47 // pred_check_branch
          %362 = sbr.rel (%p360) target = $region52
        $region51: #{tpu_custom_call.1} parent=47 // pred_region
          %s363 = sand.u32 %s35, 1
          %s364 = scalar_lea.sflag [#allocation5], %s363
          %s365 = sand.u32 %s35, 1
          %s366 = smul.addr %s365, 128
          %s367 = scalar_lea.vmem [#allocation4], %s366
          %s369 = ssub.s32 2048, 2048
          %370 = vsyncadd %s364, %s369
          %s371 = smul.addr %s25, 16
          %s372 = smul.addr %s371, 128
          %s373 = scalar_lea.hbm %s0, %s372
          %s374 = sshll.u32 %s367, 4
          %s375 = int_to_ptr.vmem [resolvable:$true] %s374
          %380 = dma.hbm_to_vmem [thread:$0]  %s373, 2048, %s375, %s364, 128, 128, 8
        $region52: #{tpu_custom_call.1} parent=47 // pred_fallthru
          _
      $region48: #{tpu_custom_call.1} parent=5 // pred_fallthru
        _
      %p381 = scmp.le.s32.totalorder 1, %s25
      %p382 = scmp.lt.s32.totalorder %s25, 3
      %p383 = pnand %p381, %p382
      %p384 = pneg %p383
      // Predicated region
      $region53: #{tpu_custom_call.1} parent=5 // pred_check
        _
      $region54: #{tpu_custom_call.1} parent=5 // pred_check_branch
        %386 = sbr.rel (%p383) target = $region56
      $region55: #{tpu_custom_call.1} parent=5 // pred_region
        %s387 = ssub.s32 %s25, 1
        %s388 = sand.u32 %s38, 1
        %s389 = scalar_lea.sflag [#allocation5], %s388
        %s390 = sand.u32 %s38, 1
        %s391 = smul.addr %s390, 128
        %s392 = scalar_lea.vmem [#allocation4], %s391
        // Predicated region
        $region57: #{tpu_custom_call.1} parent=55 // pred_check
          %p393 = pneg %p51
        $region58: #{tpu_custom_call.1} parent=55 // pred_check_branch
          %395 = sbr.rel (%p393) target = $region60
        $region59: #{tpu_custom_call.1} parent=55 // pred_region
          %396 = dma.done %s389, 2048
        $region60: #{tpu_custom_call.1} parent=55 // pred_fallthru
          _
        // Predicated region
        $region61: #{tpu_custom_call.1} parent=55 // pred_check
          %p397 = pneg %p72
        $region62: #{tpu_custom_call.1} parent=55 // pred_check_branch
          %399 = sbr.rel (%p397) target = $region64
        $region63: #{tpu_custom_call.1} parent=55 // pred_region
          %400 = dma.done [#allocation8], 1024
        $region64: #{tpu_custom_call.1} parent=55 // pred_fallthru
          _
        // Predicated region
        $region65: #{tpu_custom_call.1} parent=55 // pred_check
          %p401 = pneg %p93
        $region66: #{tpu_custom_call.1} parent=55 // pred_check_branch
          %403 = sbr.rel (%p401) target = $region68
        $region67: #{tpu_custom_call.1} parent=55 // pred_region
          %404 = dma.done [#allocation8], 32
        $region68: #{tpu_custom_call.1} parent=55 // pred_fallthru
          _
        // Predicated region
        $region69: #{tpu_custom_call.1} parent=55 // pred_check
          %p405 = pneg %p114
        $region70: #{tpu_custom_call.1} parent=55 // pred_check_branch
          %407 = sbr.rel (%p405) target = $region72
        $region71: #{tpu_custom_call.1} parent=55 // pred_region
          %408 = dma.done [#allocation11], 147456
        $region72: #{tpu_custom_call.1} parent=55 // pred_fallthru
          _
        // Predicated region
        $region73: #{tpu_custom_call.1} parent=55 // pred_check
          %p409 = pneg %p135
        $region74: #{tpu_custom_call.1} parent=55 // pred_check_branch
          %411 = sbr.rel (%p409) target = $region76
        $region75: #{tpu_custom_call.1} parent=55 // pred_region
          %412 = dma.done [#allocation11], 32
        $region76: #{tpu_custom_call.1} parent=55 // pred_fallthru
          _
        // Predicated region
        $region77: #{tpu_custom_call.1} parent=55 // pred_check
          %p413 = pneg %p156
        $region78: #{tpu_custom_call.1} parent=55 // pred_check_branch
          %415 = sbr.rel (%p413) target = $region80
        $region79: #{tpu_custom_call.1} parent=55 // pred_region
          %416 = dma.done [#allocation14], 73728
        $region80: #{tpu_custom_call.1} parent=55 // pred_fallthru
          _
        // Predicated region
        $region81: #{tpu_custom_call.1} parent=55 // pred_check
          %p417 = pneg %p177
        $region82: #{tpu_custom_call.1} parent=55 // pred_check_branch
          %419 = sbr.rel (%p417) target = $region84
        $region83: #{tpu_custom_call.1} parent=55 // pred_region
          %420 = dma.done [#allocation14], 32
        $region84: #{tpu_custom_call.1} parent=55 // pred_fallthru
          _
        // Predicated region
        $region85: #{tpu_custom_call.1} parent=55 // pred_check
          %p421 = pneg %p198
        $region86: #{tpu_custom_call.1} parent=55 // pred_check_branch
          %423 = sbr.rel (%p421) target = $region88
        $region87: #{tpu_custom_call.1} parent=55 // pred_region
          %424 = dma.done [#allocation17], 4096
        $region88: #{tpu_custom_call.1} parent=55 // pred_fallthru
          _
        // Predicated region
        $region89: #{tpu_custom_call.1} parent=55 // pred_check
          %p425 = pneg %p219
        $region90: #{tpu_custom_call.1} parent=55 // pred_check_branch
          %427 = sbr.rel (%p425) target = $region92
        $region91: #{tpu_custom_call.1} parent=55 // pred_region
          %428 = dma.done [#allocation17], 16
        $region92: #{tpu_custom_call.1} parent=55 // pred_fallthru
          _
        %s429 = sand.u32 %s38, 1
        %s430 = scalar_lea.sflag [#allocation5], %s429
        %s431 = sand.u32 %s38, 1
        %s432 = smul.addr %s431, 128
        %s433 = scalar_lea.vmem [#allocation4], %s432
        %p434 = pneg %p51
        %p435 = pneg %p48
        %p436 = pneg %p72
        %p437 = pneg %p69
        %p438 = pneg %p93
        %p439 = pneg %p90
        %p440 = pneg %p114
        %p441 = pneg %p111
        %p442 = pneg %p135
        %p443 = pneg %p132
        %p444 = pneg %p156
        %p445 = pneg %p153
        %p446 = pneg %p177
        %p447 = pneg %p174
        %p448 = pneg %p198
        %p449 = pneg %p195
        %p450 = pneg %p219
        %p451 = pneg %p216
        %p452 = pneg %p245
        %p453 = pneg %p242
        %s454 = sand.u32 %s232, 1
        %s455 = scalar_lea.sflag [#allocation6], %s454
        %s456 = sand.u32 %s232, 1
        %s457 = scalar_lea.vmem [#allocation19], %s456
        %458 = vst [vmem:[#allocation2] sm:$0xff] 0.0
        %459 = vst [vmem:[#allocation2 + $0x8] sm:$0xff] 0.0
        %460 = vst [vmem:[#allocation2 + $0x10] sm:$0xff] 0.0
        %461 = vst [vmem:[#allocation2 + $0x18] sm:$0xff] 0.0
        %462 = vst [vmem:[#allocation2 + $0x20] sm:$0x3] 0.0
        %463 = vst [vmem:[#allocation2 + $0x28] sm:$0x3] 0.0
        %464 = vst [vmem:[#allocation2 + $0x30] sm:$0x3] 0.0
        %465 = vst [vmem:[#allocation2 + $0x38] sm:$0x3] 0.0
        %466 = vst [vmem:[#allocation2 + $0x40] sm:$0xff] 0.0
        %467 = vst [vmem:[#allocation2 + $0x48] sm:$0xff] 0.0
        %468 = vst [vmem:[#allocation2 + $0x50] sm:$0xff] 0.0
        %469 = vst [vmem:[#allocation2 + $0x58] sm:$0xff] 0.0
        %470 = vst [vmem:[#allocation2 + $0x60] sm:$0x3] 0.0
        %471 = vst [vmem:[#allocation2 + $0x68] sm:$0x3] 0.0
        %472 = vst [vmem:[#allocation2 + $0x70] sm:$0x3] 0.0
        %473 = vst [vmem:[#allocation2 + $0x78] sm:$0x3] 0.0
        %474 = vst [vmem:[#allocation2 + $0x80] sm:$0xff] 0.0
        %475 = vst [vmem:[#allocation2 + $0x88] sm:$0xff] 0.0
        %476 = vst [vmem:[#allocation2 + $0x90] sm:$0xff] 0.0
        %477 = vst [vmem:[#allocation2 + $0x98] sm:$0xff] 0.0
        %478 = vst [vmem:[#allocation2 + $0xa0] sm:$0x3] 0.0
        %479 = vst [vmem:[#allocation2 + $0xa8] sm:$0x3] 0.0
        %480 = vst [vmem:[#allocation2 + $0xb0] sm:$0x3] 0.0
        %481 = vst [vmem:[#allocation2 + $0xb8] sm:$0x3] 0.0
        %482 = vst [vmem:[#allocation2 + $0xc0] sm:$0xff] 0.0
        %483 = vst [vmem:[#allocation2 + $0xc8] sm:$0xff] 0.0
        %484 = vst [vmem:[#allocation2 + $0xd0] sm:$0xff] 0.0
        %485 = vst [vmem:[#allocation2 + $0xd8] sm:$0xff] 0.0
        %486 = vst [vmem:[#allocation2 + $0xe0] sm:$0x3] 0.0
        %487 = vst [vmem:[#allocation2 + $0xe8] sm:$0x3] 0.0
        %488 = vst [vmem:[#allocation2 + $0xf0] sm:$0x3] 0.0
        %489 = vst [vmem:[#allocation2 + $0xf8] sm:$0x3] 0.0
        %490 = vst [vmem:[#allocation2 + $0x100] sm:$0xff] 0.0
        %491 = vst [vmem:[#allocation2 + $0x108] sm:$0xff] 0.0
        %492 = vst [vmem:[#allocation2 + $0x110] sm:$0xff] 0.0
        %493 = vst [vmem:[#allocation2 + $0x118] sm:$0xff] 0.0
        %494 = vst [vmem:[#allocation2 + $0x120] sm:$0x3] 0.0
        %495 = vst [vmem:[#allocation2 + $0x128] sm:$0x3] 0.0
        %496 = vst [vmem:[#allocation2 + $0x130] sm:$0x3] 0.0
        %497 = vst [vmem:[#allocation2 + $0x138] sm:$0x3] 0.0
        %498 = vst [vmem:[#allocation2 + $0x140] sm:$0xff] 0.0
        %499 = vst [vmem:[#allocation2 + $0x148] sm:$0xff] 0.0
        %500 = vst [vmem:[#allocation2 + $0x150] sm:$0xff] 0.0
        %501 = vst [vmem:[#allocation2 + $0x158] sm:$0xff] 0.0
        %502 = vst [vmem:[#allocation2 + $0x160] sm:$0x3] 0.0
        %503 = vst [vmem:[#allocation2 + $0x168] sm:$0x3] 0.0
        %504 = vst [vmem:[#allocation2 + $0x170] sm:$0x3] 0.0
        %505 = vst [vmem:[#allocation2 + $0x178] sm:$0x3] 0.0
        %506 = vst [vmem:[#allocation2 + $0x180] sm:$0xff] 0.0
        %507 = vst [vmem:[#allocation2 + $0x188] sm:$0xff] 0.0
        %508 = vst [vmem:[#allocation2 + $0x190] sm:$0xff] 0.0
        %509 = vst [vmem:[#allocation2 + $0x198] sm:$0xff] 0.0
        %510 = vst [vmem:[#allocation2 + $0x1a0] sm:$0x3] 0.0
        %511 = vst [vmem:[#allocation2 + $0x1a8] sm:$0x3] 0.0
        %512 = vst [vmem:[#allocation2 + $0x1b0] sm:$0x3] 0.0
        %513 = vst [vmem:[#allocation2 + $0x1b8] sm:$0x3] 0.0
        %514 = vst [vmem:[#allocation2 + $0x1c0] sm:$0xff] 0.0
        %515 = vst [vmem:[#allocation2 + $0x1c8] sm:$0xff] 0.0
        %516 = vst [vmem:[#allocation2 + $0x1d0] sm:$0xff] 0.0
        %517 = vst [vmem:[#allocation2 + $0x1d8] sm:$0xff] 0.0
        %518 = vst [vmem:[#allocation2 + $0x1e0] sm:$0x3] 0.0
        %519 = vst [vmem:[#allocation2 + $0x1e8] sm:$0x3] 0.0
        %520 = vst [vmem:[#allocation2 + $0x1f0] sm:$0x3] 0.0
        %521 = vst [vmem:[#allocation2 + $0x1f8] sm:$0x3] 0.0
        %522 = vst [vmem:[#allocation2 + $0x200] sm:$0xff] 0.0
        %523 = vst [vmem:[#allocation2 + $0x208] sm:$0xff] 0.0
        %524 = vst [vmem:[#allocation2 + $0x210] sm:$0xff] 0.0
        %525 = vst [vmem:[#allocation2 + $0x218] sm:$0xff] 0.0
        %526 = vst [vmem:[#allocation2 + $0x220] sm:$0x3] 0.0
        %527 = vst [vmem:[#allocation2 + $0x228] sm:$0x3] 0.0
        %528 = vst [vmem:[#allocation2 + $0x230] sm:$0x3] 0.0
        %529 = vst [vmem:[#allocation2 + $0x238] sm:$0x3] 0.0
        %530 = vst [vmem:[#allocation2 + $0x240] sm:$0xff] 0.0
        %531 = vst [vmem:[#allocation2 + $0x248] sm:$0xff] 0.0
        %532 = vst [vmem:[#allocation2 + $0x250] sm:$0xff] 0.0
        %533 = vst [vmem:[#allocation2 + $0x258] sm:$0xff] 0.0
        %534 = vst [vmem:[#allocation2 + $0x260] sm:$0x3] 0.0
        %535 = vst [vmem:[#allocation2 + $0x268] sm:$0x3] 0.0
        %536 = vst [vmem:[#allocation2 + $0x270] sm:$0x3] 0.0
        %537 = vst [vmem:[#allocation2 + $0x278] sm:$0x3] 0.0
        %538 = vst [vmem:[#allocation3] sm:$0xff] 0.0
        %539 = vst [vmem:[#allocation3 + $0x8] sm:$0xff] 0.0
        %540 = vst [vmem:[#allocation3 + $0x10] sm:$0x3] 0.0
        %541 = vst [vmem:[#allocation3 + $0x18] sm:$0x3] 0.0
        %542 = vst [vmem:[#allocation3 + $0x20] sm:$0xff] 0.0
        %543 = vst [vmem:[#allocation3 + $0x28] sm:$0xff] 0.0
        %544 = vst [vmem:[#allocation3 + $0x30] sm:$0x3] 0.0
        %545 = vst [vmem:[#allocation3 + $0x38] sm:$0x3] 0.0
        %546 = vst [vmem:[#allocation3 + $0x40] sm:$0xff] 0.0
        %547 = vst [vmem:[#allocation3 + $0x48] sm:$0xff] 0.0
        %548 = vst [vmem:[#allocation3 + $0x50] sm:$0x3] 0.0
        %549 = vst [vmem:[#allocation3 + $0x58] sm:$0x3] 0.0
        %550 = vst [vmem:[#allocation3 + $0x60] sm:$0xff] 0.0
        %551 = vst [vmem:[#allocation3 + $0x68] sm:$0xff] 0.0
        %552 = vst [vmem:[#allocation3 + $0x70] sm:$0x3] 0.0
        %553 = vst [vmem:[#allocation3 + $0x78] sm:$0x3] 0.0
        %554 = vst [vmem:[#allocation3 + $0x80] sm:$0xff] 0.0
        %555 = vst [vmem:[#allocation3 + $0x88] sm:$0xff] 0.0
        %556 = vst [vmem:[#allocation3 + $0x90] sm:$0x3] 0.0
        %557 = vst [vmem:[#allocation3 + $0x98] sm:$0x3] 0.0
        %558 = vst [vmem:[#allocation3 + $0xa0] sm:$0xff] 0.0
        %559 = vst [vmem:[#allocation3 + $0xa8] sm:$0xff] 0.0
        %560 = vst [vmem:[#allocation3 + $0xb0] sm:$0x3] 0.0
        %561 = vst [vmem:[#allocation3 + $0xb8] sm:$0x3] 0.0
        %562 = vst [vmem:[#allocation3 + $0xc0] sm:$0xff] 0.0
        %563 = vst [vmem:[#allocation3 + $0xc8] sm:$0xff] 0.0
        %564 = vst [vmem:[#allocation3 + $0xd0] sm:$0x3] 0.0
        %565 = vst [vmem:[#allocation3 + $0xd8] sm:$0x3] 0.0
        %566 = vst [vmem:[#allocation3 + $0xe0] sm:$0xff] 0.0
        %567 = vst [vmem:[#allocation3 + $0xe8] sm:$0xff] 0.0
        %568 = vst [vmem:[#allocation3 + $0xf0] sm:$0x3] 0.0
        %569 = vst [vmem:[#allocation3 + $0xf8] sm:$0x3] 0.0
        %570 = vst [vmem:[#allocation3 + $0x100] sm:$0xff] 0.0
        %571 = vst [vmem:[#allocation3 + $0x108] sm:$0xff] 0.0
        %572 = vst [vmem:[#allocation3 + $0x110] sm:$0x3] 0.0
        %573 = vst [vmem:[#allocation3 + $0x118] sm:$0x3] 0.0
        %574 = vst [vmem:[#allocation3 + $0x120] sm:$0xff] 0.0
        %575 = vst [vmem:[#allocation3 + $0x128] sm:$0xff] 0.0
        %576 = vst [vmem:[#allocation3 + $0x130] sm:$0x3] 0.0
        %577 = vst [vmem:[#allocation3 + $0x138] sm:$0x3] 0.0
        %v578 = vld [vmem:[%s392] sm:$0xff]
        %v579 = vld [vmem:[%s392 + $0x8] sm:$0xff]
        %v580 = vld [vmem:[%s392 + $0x10] sm:$0xff]
        %v581 = vld [vmem:[%s392 + $0x18] sm:$0xff]
        %v582 = vld [vmem:[%s392 + $0x20] sm:$0xff]
        %v583 = vld [vmem:[%s392 + $0x28] sm:$0xff]
        %v584 = vld [vmem:[%s392 + $0x30] sm:$0xff]
        %v585 = vld [vmem:[%s392 + $0x38] sm:$0xff]
        %v586 = vld [vmem:[%s392 + $0x40] sm:$0xff]
        %v587 = vld [vmem:[%s392 + $0x48] sm:$0xff]
        %v588 = vld [vmem:[%s392 + $0x50] sm:$0xff]
        %v589 = vld [vmem:[%s392 + $0x58] sm:$0xff]
        %v590 = vld [vmem:[%s392 + $0x60] sm:$0xff]
        %v591 = vld [vmem:[%s392 + $0x68] sm:$0xff]
        %v592 = vld [vmem:[%s392 + $0x70] sm:$0xff]
        %v593 = vld [vmem:[%s392 + $0x78] sm:$0xff]
        %v594 = vld [vmem:[#allocation7] sm:$0xff]
        %v595 = vld [vmem:[#allocation7 + $0x8] sm:$0xff]
        %v596 = vld [vmem:[#allocation7 + $0x10] sm:$0xff]
        %v597 = vld [vmem:[#allocation7 + $0x18] sm:$0xff]
        %v598 = vld [vmem:[#allocation7 + $0x20] sm:$0xff]
        %v599 = vld [vmem:[#allocation7 + $0x28] sm:$0xff]
        %v600 = vld [vmem:[#allocation7 + $0x30] sm:$0xff]
        %v601 = vld [vmem:[#allocation7 + $0x38] sm:$0xff]
        %v602 = vld [vmem:[#allocation9] sm:$0x3]
        %v604 = vlaneseq
        %v605 = vshrl.u32 %v604, 7
        %v606 = vsub.s32 0, %v605
        %v607 = vrot.slane %v602, %v606
        %v608 = vlaneseq
        %v609 = vshrl.u32 %v608, 7
        %v610 = vsub.s32 1, %v609
        %v611 = vrot.slane %v602, %v610
        %vm614 = vcmask 261120
        %v616 = vsel %vm614, %v578, 0
        %v619 = vsel %vm614, %v579, 0
        %v622 = vsel %vm614, %v580, 0
        %v625 = vsel %vm614, %v581, 0
        %v628 = vsel %vm614, %v582, 0
        %v631 = vsel %vm614, %v583, 0
        %v634 = vsel %vm614, %v584, 0
        %v637 = vsel %vm614, %v585, 0
        %v640 = vsel %vm614, %v586, 0
        %v643 = vsel %vm614, %v587, 0
        %v646 = vsel %vm614, %v588, 0
        %v649 = vsel %vm614, %v589, 0
        %v652 = vsel %vm614, %v590, 0
        %v655 = vsel %vm614, %v591, 0
        %v658 = vsel %vm614, %v592, 0
        %v661 = vsel %vm614, %v593, 0
        %663 = vmatprep.subr.mxu0 %v595
        %664 = vmatpush1.msra.mxu0 %v594
        %665 = vmatprep.subr.mxu0 %v597
        %666 = vmatpush1.msra.mxu0 %v596
        %667 = vmatprep.subr.mxu0 %v599
        %668 = vmatpush1.msra.mxu0 %v598
        %669 = vmatprep.subr.mxu0 %v601
        %670 = vmatpush1.msra.mxu0 %v600
        %671 = vmatprep.subr.mxu0 0.0
        %672 = vmatpush1.msra.mxu0 0.0
        %673 = vmatprep.subr.mxu0 0.0
        %674 = vmatpush1.msra.mxu0 0.0
        %675 = vmatprep.subr.mxu0 0.0
        %676 = vmatpush1.msra.mxu0 0.0
        %677 = vmatprep.subr.mxu0 0.0
        %678 = vmatpush1.msra.mxu0 0.0
        %679 = vmatprep.subr.mxu0 0.0
        %680 = vmatpush1.msra.mxu0 0.0
        %681 = vmatprep.subr.mxu0 0.0
        %682 = vmatpush1.msra.mxu0 0.0
        %683 = vmatprep.subr.mxu0 0.0
        %684 = vmatpush1.msra.mxu0 0.0
        %685 = vmatprep.subr.mxu0 0.0
        %686 = vmatpush1.msra.mxu0 0.0
        %687 = vmatprep.subr.mxu0 0.0
        %688 = vmatpush1.msra.mxu0 0.0
        %689 = vmatprep.subr.mxu0 0.0
        %690 = vmatpush1.msra.mxu0 0.0
        %691 = vmatprep.subr.mxu0 0.0
        %692 = vmatpush1.msra.mxu0 0.0
        %693 = vmatprep.subr.mxu0 0.0
        %694 = vmatpush1.msra.mxu0 0.0
        %695 = vmatprep.subr.mxu0 0.0
        %696 = vmatpush1.msra.mxu0 0.0
        %697 = vmatprep.subr.mxu0 0.0
        %698 = vmatpush1.msra.mxu0 0.0
        %699 = vmatprep.subr.mxu0 0.0
        %700 = vmatpush1.msra.mxu0 0.0
        %701 = vmatprep.subr.mxu0 0.0
        %702 = vmatpush1.msra.mxu0 0.0
        %703 = vmatprep.subr.mxu0 0.0
        %704 = vmatpush1.msra.mxu0 0.0
        %705 = vmatprep.subr.mxu0 0.0
        %706 = vmatpush1.msra.mxu0 0.0
        %707 = vmatprep.subr.mxu0 0.0
        %708 = vmatpush1.msra.mxu0 0.0
        %709 = vmatprep.subr.mxu0 0.0
        %710 = vmatpush1.msra.mxu0 0.0
        %711 = vmatprep.subr.mxu0 0.0
        %712 = vmatpush1.msra.mxu0 0.0
        %713 = vmatprep.subr.mxu0 0.0
        %714 = vmatpush1.msra.mxu0 0.0
        %715 = vmatprep.subr.mxu0 0.0
        %716 = vmatpush1.msra.mxu0 0.0
        %717 = vmatprep.subr.mxu0 0.0
        %718 = vmatpush1.msra.mxu0 0.0
        %719 = vmatprep.subr.mxu0 0.0
        %720 = vmatpush1.msra.mxu0 0.0
        %721 = vmatprep.subr.mxu0 0.0
        %722 = vmatpush1.msra.mxu0 0.0
        %723 = vmatprep.subr.mxu0 0.0
        %724 = vmatpush1.msra.mxu0 0.0
        %725 = vmatprep.subr.mxu0 0.0
        %726 = vmatpush1.msra.mxu0 0.0
        %727 = vmatprep.mubr.f32.mxu0 0.0
        %728 = vmatmul.mubr.f32.gmra.mrb[0].mxu0 %v616
        %v729 = vpop.f32.mrb[0].mxu0
        %v730 = vadd.f32 %v607, %v729
        %v731 = vpop.f32.mrb[0].mxu0
        %v732 = vadd.f32 %v611, %v731
        %733 = vmatprep.mubr.f32.mxu0 0.0
        %734 = vmatmul.mubr.f32.gmra.mrb[0].mxu0 %v619
        %v735 = vpop.f32.mrb[0].mxu0
        %v736 = vadd.f32 %v607, %v735
        %v737 = vpop.f32.mrb[0].mxu0
        %v738 = vadd.f32 %v611, %v737
        %739 = vmatprep.mubr.f32.mxu0 0.0
        %740 = vmatmul.mubr.f32.gmra.mrb[0].mxu0 %v622
        %v741 = vpop.f32.mrb[0].mxu0
        %v742 = vadd.f32 %v607, %v741
        %v743 = vpop.f32.mrb[0].mxu0
        %v744 = vadd.f32 %v611, %v743
        %745 = vmatprep.mubr.f32.mxu0 0.0
        %746 = vmatmul.mubr.f32.gmra.mrb[0].mxu0 %v625
        %v747 = vpop.f32.mrb[0].mxu0
        %v748 = vadd.f32 %v607, %v747
        %v749 = vpop.f32.mrb[0].mxu0
        %v750 = vadd.f32 %v611, %v749
        %751 = vmatprep.mubr.f32.mxu0 0.0
        %752 = vmatmul.mubr.f32.gmra.mrb[0].mxu0 %v628
        %v753 = vpop.f32.mrb[0].mxu0
        %v754 = vadd.f32 %v607, %v753
        %v755 = vpop.f32.mrb[0].mxu0
        %v756 = vadd.f32 %v611, %v755
        %757 = vmatprep.mubr.f32.mxu0 0.0
        %758 = vmatmul.mubr.f32.gmra.mrb[0].mxu0 %v631
        %v759 = vpop.f32.mrb[0].mxu0
        %v760 = vadd.f32 %v607, %v759
        %v761 = vpop.f32.mrb[0].mxu0
        %v762 = vadd.f32 %v611, %v761
        %763 = vmatprep.mubr.f32.mxu0 0.0
        %764 = vmatmul.mubr.f32.gmra.mrb[0].mxu0 %v634
        %v765 = vpop.f32.mrb[0].mxu0
        %v766 = vadd.f32 %v607, %v765
        %v767 = vpop.f32.mrb[0].mxu0
        %v768 = vadd.f32 %v611, %v767
        %769 = vmatprep.mubr.f32.mxu0 0.0
        %770 = vmatmul.mubr.f32.gmra.mrb[0].mxu0 %v637
        %v771 = vpop.f32.mrb[0].mxu0
        %v772 = vadd.f32 %v607, %v771
        %v773 = vpop.f32.mrb[0].mxu0
        %v774 = vadd.f32 %v611, %v773
        %775 = vmatprep.mubr.f32.mxu0 0.0
        %776 = vmatmul.mubr.f32.gmra.mrb[0].mxu0 %v640
        %v777 = vpop.f32.mrb[0].mxu0
        %v778 = vadd.f32 %v607, %v777
        %v779 = vpop.f32.mrb[0].mxu0
        %v780 = vadd.f32 %v611, %v779
        %781 = vmatprep.mubr.f32.mxu0 0.0
        %782 = vmatmul.mubr.f32.gmra.mrb[0].mxu0 %v643
        %v783 = vpop.f32.mrb[0].mxu0
        %v784 = vadd.f32 %v607, %v783
        %v785 = vpop.f32.mrb[0].mxu0
        %v786 = vadd.f32 %v611, %v785
        %787 = vmatprep.mubr.f32.mxu0 0.0
        %788 = vmatmul.mubr.f32.gmra.mrb[0].mxu0 %v646
        %v789 = vpop.f32.mrb[0].mxu0
        %v790 = vadd.f32 %v607, %v789
        %v791 = vpop.f32.mrb[0].mxu0
        %v792 = vadd.f32 %v611, %v791
        %793 = vmatprep.mubr.f32.mxu0 0.0
        %794 = vmatmul.mubr.f32.gmra.mrb[0].mxu0 %v649
        %v795 = vpop.f32.mrb[0].mxu0
        %v796 = vadd.f32 %v607, %v795
        %v797 = vpop.f32.mrb[0].mxu0
        %v798 = vadd.f32 %v611, %v797
        %799 = vmatprep.mubr.f32.mxu0 0.0
        %800 = vmatmul.mubr.f32.gmra.mrb[0].mxu0 %v652
        %v801 = vpop.f32.mrb[0].mxu0
        %v802 = vadd.f32 %v607, %v801
        %v803 = vpop.f32.mrb[0].mxu0
        %v804 = vadd.f32 %v611, %v803
        %805 = vmatprep.mubr.f32.mxu0 0.0
        %806 = vmatmul.mubr.f32.gmra.mrb[0].mxu0 %v655
        %v807 = vpop.f32.mrb[0].mxu0
        %v808 = vadd.f32 %v607, %v807
        %v809 = vpop.f32.mrb[0].mxu0
        %v810 = vadd.f32 %v611, %v809
        %811 = vmatprep.mubr.f32.mxu0 0.0
        %812 = vmatmul.mubr.f32.gmra.mrb[0].mxu0 %v658
        %v813 = vpop.f32.mrb[0].mxu0
        %v814 = vadd.f32 %v607, %v813
        %v815 = vpop.f32.mrb[0].mxu0
        %v816 = vadd.f32 %v611, %v815
        %817 = vmatprep.mubr.f32.mxu0 0.0
        %818 = vmatmul.mubr.f32.gmra.mrb[0].mxu0 %v661
        %v819 = vpop.f32.mrb[0].mxu0
        %v820 = vadd.f32 %v607, %v819
        %v821 = vpop.f32.mrb[0].mxu0
        %v822 = vadd.f32 %v611, %v821
        %823 = vdwg.mxu0
        %v824 = vmax.f32 %v730, 0.0
        %v825 = vmax.f32 %v732, 0.0
        %v826 = vmax.f32 %v736, 0.0
        %v827 = vmax.f32 %v738, 0.0
        %v828 = vmax.f32 %v742, 0.0
        %v829 = vmax.f32 %v744, 0.0
        %v830 = vmax.f32 %v748, 0.0
        %v831 = vmax.f32 %v750, 0.0
        %v832 = vmax.f32 %v754, 0.0
        %v833 = vmax.f32 %v756, 0.0
        %v834 = vmax.f32 %v760, 0.0
        %v835 = vmax.f32 %v762, 0.0
        %v836 = vmax.f32 %v766, 0.0
        %v837 = vmax.f32 %v768, 0.0
        %v838 = vmax.f32 %v772, 0.0
        %v839 = vmax.f32 %v774, 0.0
        %v840 = vmax.f32 %v778, 0.0
        %v841 = vmax.f32 %v780, 0.0
        %v842 = vmax.f32 %v784, 0.0
        %v843 = vmax.f32 %v786, 0.0
        %v844 = vmax.f32 %v790, 0.0
        %v845 = vmax.f32 %v792, 0.0
        %v846 = vmax.f32 %v796, 0.0
        %v847 = vmax.f32 %v798, 0.0
        %v848 = vmax.f32 %v802, 0.0
        %v849 = vmax.f32 %v804, 0.0
        %v850 = vmax.f32 %v808, 0.0
        %v851 = vmax.f32 %v810, 0.0
        %v852 = vmax.f32 %v814, 0.0
        %v853 = vmax.f32 %v816, 0.0
        %v854 = vmax.f32 %v820, 0.0
        %v855 = vmax.f32 %v822, 0.0
        %v872 = vrot.slane %v824, 7
        %v873 = vrot.slane %v825, 7
        %v874 = vrot.slane %v826, 7
        %v875 = vrot.slane %v827, 7
        %v876 = vrot.slane %v828, 7
        %v877 = vrot.slane %v829, 7
        %v878 = vrot.slane %v830, 7
        %v879 = vrot.slane %v831, 7
        %v880 = vrot.slane %v832, 7
        %v881 = vrot.slane %v833, 7
        %v882 = vrot.slane %v834, 7
        %v883 = vrot.slane %v835, 7
        %v884 = vrot.slane %v836, 7
        %v885 = vrot.slane %v837, 7
        %v886 = vrot.slane %v838, 7
        %v887 = vrot.slane %v839, 7
        %s904 = scalar_lea.vmem [#allocation2], 64
        %905 = vst [vmem:[%s904] sm:$0xfe] %v872
        %906 = vst [vmem:[%s904 + $0x8] sm:$0xfe] %v873
        %907 = vst [vmem:[%s904 + $0x20] sm:$0x1] %v872
        %908 = vst [vmem:[%s904 + $0x28] sm:$0x1] %v873
        %909 = vst [vmem:[%s904 + $0x40] sm:$0xfe] %v874
        %910 = vst [vmem:[%s904 + $0x48] sm:$0xfe] %v875
        %911 = vst [vmem:[%s904 + $0x60] sm:$0x1] %v874
        %912 = vst [vmem:[%s904 + $0x68] sm:$0x1] %v875
        %913 = vst [vmem:[%s904 + $0x80] sm:$0xfe] %v876
        %914 = vst [vmem:[%s904 + $0x88] sm:$0xfe] %v877
        %915 = vst [vmem:[%s904 + $0xa0] sm:$0x1] %v876
        %916 = vst [vmem:[%s904 + $0xa8] sm:$0x1] %v877
        %917 = vst [vmem:[%s904 + $0xc0] sm:$0xfe] %v878
        %918 = vst [vmem:[%s904 + $0xc8] sm:$0xfe] %v879
        %919 = vst [vmem:[%s904 + $0xe0] sm:$0x1] %v878
        %920 = vst [vmem:[%s904 + $0xe8] sm:$0x1] %v879
        %921 = vst [vmem:[%s904 + $0x100] sm:$0xfe] %v880
        %922 = vst [vmem:[%s904 + $0x108] sm:$0xfe] %v881
        %923 = vst [vmem:[%s904 + $0x120] sm:$0x1] %v880
        %924 = vst [vmem:[%s904 + $0x128] sm:$0x1] %v881
        %925 = vst [vmem:[%s904 + $0x140] sm:$0xfe] %v882
        %926 = vst [vmem:[%s904 + $0x148] sm:$0xfe] %v883
        %927 = vst [vmem:[%s904 + $0x160] sm:$0x1] %v882
        %928 = vst [vmem:[%s904 + $0x168] sm:$0x1] %v883
        %929 = vst [vmem:[%s904 + $0x180] sm:$0xfe] %v884
        %930 = vst [vmem:[%s904 + $0x188] sm:$0xfe] %v885
        %931 = vst [vmem:[%s904 + $0x1a0] sm:$0x1] %v884
        %932 = vst [vmem:[%s904 + $0x1a8] sm:$0x1] %v885
        %933 = vst [vmem:[%s904 + $0x1c0] sm:$0xfe] %v886
        %934 = vst [vmem:[%s904 + $0x1c8] sm:$0xfe] %v887
        %935 = vst [vmem:[%s904 + $0x1e0] sm:$0x1] %v886
        %936 = vst [vmem:[%s904 + $0x1e8] sm:$0x1] %v887
        %v953 = vrot.slane %v840, 7
        %v954 = vrot.slane %v841, 7
        %v955 = vrot.slane %v842, 7
        %v956 = vrot.slane %v843, 7
        %v957 = vrot.slane %v844, 7
        %v958 = vrot.slane %v845, 7
        %v959 = vrot.slane %v846, 7
        %v960 = vrot.slane %v847, 7
        %v961 = vrot.slane %v848, 7
        %v962 = vrot.slane %v849, 7
        %v963 = vrot.slane %v850, 7
        %v964 = vrot.slane %v851, 7
        %v965 = vrot.slane %v852, 7
        %v966 = vrot.slane %v853, 7
        %v967 = vrot.slane %v854, 7
        %v968 = vrot.slane %v855, 7
        %985 = vst [vmem:[%s904 + $0x10] sm:$0xfe] %v953
        %986 = vst [vmem:[%s904 + $0x18] sm:$0xfe] %v954
        %987 = vst [vmem:[%s904 + $0x30] sm:$0x1] %v953
        %988 = vst [vmem:[%s904 + $0x38] sm:$0x1] %v954
        %989 = vst [vmem:[%s904 + $0x50] sm:$0xfe] %v955
        %990 = vst [vmem:[%s904 + $0x58] sm:$0xfe] %v956
        %991 = vst [vmem:[%s904 + $0x70] sm:$0x1] %v955
        %992 = vst [vmem:[%s904 + $0x78] sm:$0x1] %v956
        %993 = vst [vmem:[%s904 + $0x90] sm:$0xfe] %v957
        %994 = vst [vmem:[%s904 + $0x98] sm:$0xfe] %v958
        %995 = vst [vmem:[%s904 + $0xb0] sm:$0x1] %v957
        %996 = vst [vmem:[%s904 + $0xb8] sm:$0x1] %v958
        %997 = vst [vmem:[%s904 + $0xd0] sm:$0xfe] %v959
        %998 = vst [vmem:[%s904 + $0xd8] sm:$0xfe] %v960
        %999 = vst [vmem:[%s904 + $0xf0] sm:$0x1] %v959
        %1000 = vst [vmem:[%s904 + $0xf8] sm:$0x1] %v960
        %1001 = vst [vmem:[%s904 + $0x110] sm:$0xfe] %v961
        %1002 = vst [vmem:[%s904 + $0x118] sm:$0xfe] %v962
        %1003 = vst [vmem:[%s904 + $0x130] sm:$0x1] %v961
        %1004 = vst [vmem:[%s904 + $0x138] sm:$0x1] %v962
        %1005 = vst [vmem:[%s904 + $0x150] sm:$0xfe] %v963
        %1006 = vst [vmem:[%s904 + $0x158] sm:$0xfe] %v964
        %1007 = vst [vmem:[%s904 + $0x170] sm:$0x1] %v963
        %1008 = vst [vmem:[%s904 + $0x178] sm:$0x1] %v964
        %1009 = vst [vmem:[%s904 + $0x190] sm:$0xfe] %v965
        %1010 = vst [vmem:[%s904 + $0x198] sm:$0xfe] %v966
        %1011 = vst [vmem:[%s904 + $0x1b0] sm:$0x1] %v965
        %1012 = vst [vmem:[%s904 + $0x1b8] sm:$0x1] %v966
        %1013 = vst [vmem:[%s904 + $0x1d0] sm:$0xfe] %v967
        %1014 = vst [vmem:[%s904 + $0x1d8] sm:$0xfe] %v968
        %1015 = vst [vmem:[%s904 + $0x1f0] sm:$0x1] %v967
        %1016 = vst [vmem:[%s904 + $0x1f8] sm:$0x1] %v968
        %v1017 = vld [vmem:[#allocation12] sm:$0x3]
        %v1019 = vlaneseq
        %v1020 = vshrl.u32 %v1019, 7
        %v1021 = vsub.s32 0, %v1020
        %v1022 = vrot.slane %v1017, %v1021
        %v1023 = vlaneseq
        %v1024 = vshrl.u32 %v1023, 7
        %v1025 = vsub.s32 1, %v1024
        %v1026 = vrot.slane %v1017, %v1025
        %v1029 = vld [vmem:[#allocation2] sm:$0xff]
        %v1030 = vld [vmem:[#allocation2 + $0x8] sm:$0xff]
        %v1031 = vld [vmem:[#allocation2 + $0x10] sm:$0xff]
        %v1032 = vld [vmem:[#allocation2 + $0x18] sm:$0xff]
        %v1033 = vld [vmem:[#allocation2 + $0x40] sm:$0xff]
        %v1034 = vld [vmem:[#allocation2 + $0x48] sm:$0xff]
        %v1035 = vld [vmem:[#allocation2 + $0x50] sm:$0xff]
        %v1036 = vld [vmem:[#allocation2 + $0x58] sm:$0xff]
        %v1037 = vld [vmem:[#allocation2 + $0x80] sm:$0xff]
        %v1038 = vld [vmem:[#allocation2 + $0x88] sm:$0xff]
        %v1039 = vld [vmem:[#allocation2 + $0x90] sm:$0xff]
        %v1040 = vld [vmem:[#allocation2 + $0x98] sm:$0xff]
        %v1041 = vld [vmem:[#allocation2 + $0xc0] sm:$0xff]
        %v1042 = vld [vmem:[#allocation2 + $0xc8] sm:$0xff]
        %v1043 = vld [vmem:[#allocation2 + $0xd0] sm:$0xff]
        %v1044 = vld [vmem:[#allocation2 + $0xd8] sm:$0xff]
        %v1045 = vld [vmem:[#allocation2 + $0x100] sm:$0xff]
        %v1046 = vld [vmem:[#allocation2 + $0x108] sm:$0xff]
        %v1047 = vld [vmem:[#allocation2 + $0x110] sm:$0xff]
        %v1048 = vld [vmem:[#allocation2 + $0x118] sm:$0xff]
        %v1049 = vld [vmem:[#allocation2 + $0x140] sm:$0xff]
        %v1050 = vld [vmem:[#allocation2 + $0x148] sm:$0xff]
        %v1051 = vld [vmem:[#allocation2 + $0x150] sm:$0xff]
        %v1052 = vld [vmem:[#allocation2 + $0x158] sm:$0xff]
        %v1053 = vld [vmem:[#allocation2 + $0x180] sm:$0xff]
        %v1054 = vld [vmem:[#allocation2 + $0x188] sm:$0xff]
        %v1055 = vld [vmem:[#allocation2 + $0x190] sm:$0xff]
        %v1056 = vld [vmem:[#allocation2 + $0x198] sm:$0xff]
        %v1057 = vld [vmem:[#allocation2 + $0x1c0] sm:$0xff]
        %v1058 = vld [vmem:[#allocation2 + $0x1c8] sm:$0xff]
        %v1059 = vld [vmem:[#allocation2 + $0x1d0] sm:$0xff]
        %v1060 = vld [vmem:[#allocation2 + $0x1d8] sm:$0xff]
        %v1061 = vld [vmem:[#allocation2 + $0x200] sm:$0xff]
        %v1062 = vld [vmem:[#allocation2 + $0x208] sm:$0xff]
        %v1063 = vld [vmem:[#allocation2 + $0x210] sm:$0xff]
        %v1064 = vld [vmem:[#allocation2 + $0x218] sm:$0xff]
        %v1065 = vld [vmem:[#allocation2 + $0x240] sm:$0xff]
        %v1066 = vld [vmem:[#allocation2 + $0x248] sm:$0xff]
        %v1067 = vld [vmem:[#allocation2 + $0x250] sm:$0xff]
        %v1068 = vld [vmem:[#allocation2 + $0x258] sm:$0xff]
        %v1069 = vld [vmem:[#allocation10] sm:$0xff]
        %v1070 = vld [vmem:[#allocation10 + $0x8] sm:$0xff]
        %v1071 = vld [vmem:[#allocation10 + $0x10] sm:$0xff]
        %v1072 = vld [vmem:[#allocation10 + $0x18] sm:$0xff]
        %v1073 = vld [vmem:[#allocation10 + $0x20] sm:$0xff]
        %v1074 = vld [vmem:[#allocation10 + $0x28] sm:$0xff]
        %v1075 = vld [vmem:[#allocation10 + $0x30] sm:$0xff]
        %v1076 = vld [vmem:[#allocation10 + $0x38] sm:$0xff]
        %v1077 = vld [vmem:[#allocation10 + $0x40] sm:$0xff]
        %v1078 = vld [vmem:[#allocation10 + $0x48] sm:$0xff]
        %v1079 = vld [vmem:[#allocation10 + $0x50] sm:$0xff]
        %v1080 = vld [vmem:[#allocation10 + $0x58] sm:$0xff]
        %v1081 = vld [vmem:[#allocation10 + $0x60] sm:$0xff]
        %v1082 = vld [vmem:[#allocation10 + $0x68] sm:$0xff]
        %v1083 = vld [vmem:[#allocation10 + $0x70] sm:$0xff]
        %v1084 = vld [vmem:[#allocation10 + $0x78] sm:$0xff]
        %v1085 = vld [vmem:[#allocation10 + $0x80] sm:$0xff]
        %v1086 = vld [vmem:[#allocation10 + $0x88] sm:$0xff]
        %v1087 = vld [vmem:[#allocation10 + $0x90] sm:$0xff]
        %v1088 = vld [vmem:[#allocation10 + $0x98] sm:$0xff]
        %v1089 = vld [vmem:[#allocation10 + $0xa0] sm:$0xff]
        %v1090 = vld [vmem:[#allocation10 + $0xa8] sm:$0xff]
        %v1091 = vld [vmem:[#allocation10 + $0xb0] sm:$0xff]
        %v1092 = vld [vmem:[#allocation10 + $0xb8] sm:$0xff]
        %v1093 = vld [vmem:[#allocation10 + $0xc0] sm:$0xff]
        %v1094 = vld [vmem:[#allocation10 + $0xc8] sm:$0xff]
        %v1095 = vld [vmem:[#allocation10 + $0xd0] sm:$0xff]
        %v1096 = vld [vmem:[#allocation10 + $0xd8] sm:$0xff]
        %v1097 = vld [vmem:[#allocation10 + $0xe0] sm:$0xff]
        %v1098 = vld [vmem:[#allocation10 + $0xe8] sm:$0xff]
        %v1099 = vld [vmem:[#allocation10 + $0xf0] sm:$0xff]
        %v1100 = vld [vmem:[#allocation10 + $0xf8] sm:$0xff]
        %v1101 = vld [vmem:[#allocation10 + $0x100] sm:$0xff]
        %v1102 = vld [vmem:[#allocation10 + $0x108] sm:$0xff]
        %v1103 = vld [vmem:[#allocation10 + $0x110] sm:$0xff]
        %v1104 = vld [vmem:[#allocation10 + $0x118] sm:$0xff]
        %v1105 = vld [vmem:[#allocation10 + $0x120] sm:$0xff]
        %v1106 = vld [vmem:[#allocation10 + $0x128] sm:$0xff]
        %v1107 = vld [vmem:[#allocation10 + $0x130] sm:$0xff]
        %v1108 = vld [vmem:[#allocation10 + $0x138] sm:$0xff]
        %v1109 = vld [vmem:[#allocation10 + $0x140] sm:$0xff]
        %v1110 = vld [vmem:[#allocation10 + $0x148] sm:$0xff]
        %v1111 = vld [vmem:[#allocation10 + $0x150] sm:$0xff]
        %v1112 = vld [vmem:[#allocation10 + $0x158] sm:$0xff]
        %v1113 = vld [vmem:[#allocation10 + $0x160] sm:$0xff]
        %v1114 = vld [vmem:[#allocation10 + $0x168] sm:$0xff]
        %v1115 = vld [vmem:[#allocation10 + $0x170] sm:$0xff]
        %v1116 = vld [vmem:[#allocation10 + $0x178] sm:$0xff]
        %v1117 = vld [vmem:[#allocation10 + $0x180] sm:$0xff]
        %v1118 = vld [vmem:[#allocation10 + $0x188] sm:$0xff]
        %v1119 = vld [vmem:[#allocation10 + $0x190] sm:$0xff]
        %v1120 = vld [vmem:[#allocation10 + $0x198] sm:$0xff]
        %v1121 = vld [vmem:[#allocation10 + $0x1a0] sm:$0xff]
        %v1122 = vld [vmem:[#allocation10 + $0x1a8] sm:$0xff]
        %v1123 = vld [vmem:[#allocation10 + $0x1b0] sm:$0xff]
        %v1124 = vld [vmem:[#allocation10 + $0x1b8] sm:$0xff]
        %v1125 = vld [vmem:[#allocation10 + $0x1c0] sm:$0xff]
        %v1126 = vld [vmem:[#allocation10 + $0x1c8] sm:$0xff]
        %v1127 = vld [vmem:[#allocation10 + $0x1d0] sm:$0xff]
        %v1128 = vld [vmem:[#allocation10 + $0x1d8] sm:$0xff]
        %v1129 = vld [vmem:[#allocation10 + $0x1e0] sm:$0xff]
        %v1130 = vld [vmem:[#allocation10 + $0x1e8] sm:$0xff]
        %v1131 = vld [vmem:[#allocation10 + $0x1f0] sm:$0xff]
        %v1132 = vld [vmem:[#allocation10 + $0x1f8] sm:$0xff]
        %v1133 = vld [vmem:[#allocation10 + $0x200] sm:$0xff]
        %v1134 = vld [vmem:[#allocation10 + $0x208] sm:$0xff]
        %v1135 = vld [vmem:[#allocation10 + $0x210] sm:$0xff]
        %v1136 = vld [vmem:[#allocation10 + $0x218] sm:$0xff]
        %v1137 = vld [vmem:[#allocation10 + $0x220] sm:$0xff]
        %v1138 = vld [vmem:[#allocation10 + $0x228] sm:$0xff]
        %v1139 = vld [vmem:[#allocation10 + $0x230] sm:$0xff]
        %v1140 = vld [vmem:[#allocation10 + $0x238] sm:$0xff]
        %v1141 = vld [vmem:[#allocation10 + $0x240] sm:$0xff]
        %v1142 = vld [vmem:[#allocation10 + $0x248] sm:$0xff]
        %v1143 = vld [vmem:[#allocation10 + $0x250] sm:$0xff]
        %v1144 = vld [vmem:[#allocation10 + $0x258] sm:$0xff]
        %v1145 = vld [vmem:[#allocation10 + $0x260] sm:$0xff]
        %v1146 = vld [vmem:[#allocation10 + $0x268] sm:$0xff]
        %v1147 = vld [vmem:[#allocation10 + $0x270] sm:$0xff]
        %v1148 = vld [vmem:[#allocation10 + $0x278] sm:$0xff]
        %v1149 = vld [vmem:[#allocation10 + $0x280] sm:$0xff]
        %v1150 = vld [vmem:[#allocation10 + $0x288] sm:$0xff]
        %v1151 = vld [vmem:[#allocation10 + $0x290] sm:$0xff]
        %v1152 = vld [vmem:[#allocation10 + $0x298] sm:$0xff]
        %v1153 = vld [vmem:[#allocation10 + $0x2a0] sm:$0xff]
        %v1154 = vld [vmem:[#allocation10 + $0x2a8] sm:$0xff]
        %v1155 = vld [vmem:[#allocation10 + $0x2b0] sm:$0xff]
        %v1156 = vld [vmem:[#allocation10 + $0x2b8] sm:$0xff]
        %v1157 = vld [vmem:[#allocation10 + $0x2c0] sm:$0xff]
        %v1158 = vld [vmem:[#allocation10 + $0x2c8] sm:$0xff]
        %v1159 = vld [vmem:[#allocation10 + $0x2d0] sm:$0xff]
        %v1160 = vld [vmem:[#allocation10 + $0x2d8] sm:$0xff]
        %v1161 = vld [vmem:[#allocation10 + $0x2e0] sm:$0xff]
        %v1162 = vld [vmem:[#allocation10 + $0x2e8] sm:$0xff]
        %v1163 = vld [vmem:[#allocation10 + $0x2f0] sm:$0xff]
        %v1164 = vld [vmem:[#allocation10 + $0x2f8] sm:$0xff]
        %v1165 = vld [vmem:[#allocation10 + $0x300] sm:$0xff]
        %v1166 = vld [vmem:[#allocation10 + $0x308] sm:$0xff]
        %v1167 = vld [vmem:[#allocation10 + $0x310] sm:$0xff]
        %v1168 = vld [vmem:[#allocation10 + $0x318] sm:$0xff]
        %v1169 = vld [vmem:[#allocation10 + $0x320] sm:$0xff]
        %v1170 = vld [vmem:[#allocation10 + $0x328] sm:$0xff]
        %v1171 = vld [vmem:[#allocation10 + $0x330] sm:$0xff]
        %v1172 = vld [vmem:[#allocation10 + $0x338] sm:$0xff]
        %v1173 = vld [vmem:[#allocation10 + $0x340] sm:$0xff]
        %v1174 = vld [vmem:[#allocation10 + $0x348] sm:$0xff]
        %v1175 = vld [vmem:[#allocation10 + $0x350] sm:$0xff]
        %v1176 = vld [vmem:[#allocation10 + $0x358] sm:$0xff]
        %v1177 = vld [vmem:[#allocation10 + $0x360] sm:$0xff]
        %v1178 = vld [vmem:[#allocation10 + $0x368] sm:$0xff]
        %v1179 = vld [vmem:[#allocation10 + $0x370] sm:$0xff]
        %v1180 = vld [vmem:[#allocation10 + $0x378] sm:$0xff]
        %v1181 = vld [vmem:[#allocation10 + $0x380] sm:$0xff]
        %v1182 = vld [vmem:[#allocation10 + $0x388] sm:$0xff]
        %v1183 = vld [vmem:[#allocation10 + $0x390] sm:$0xff]
        %v1184 = vld [vmem:[#allocation10 + $0x398] sm:$0xff]
        %v1185 = vld [vmem:[#allocation10 + $0x3a0] sm:$0xff]
        %v1186 = vld [vmem:[#allocation10 + $0x3a8] sm:$0xff]
        %v1187 = vld [vmem:[#allocation10 + $0x3b0] sm:$0xff]
        %v1188 = vld [vmem:[#allocation10 + $0x3b8] sm:$0xff]
        %v1189 = vld [vmem:[#allocation10 + $0x3c0] sm:$0xff]
        %v1190 = vld [vmem:[#allocation10 + $0x3c8] sm:$0xff]
        %v1191 = vld [vmem:[#allocation10 + $0x3d0] sm:$0xff]
        %v1192 = vld [vmem:[#allocation10 + $0x3d8] sm:$0xff]
        %v1193 = vld [vmem:[#allocation10 + $0x3e0] sm:$0xff]
        %v1194 = vld [vmem:[#allocation10 + $0x3e8] sm:$0xff]
        %v1195 = vld [vmem:[#allocation10 + $0x3f0] sm:$0xff]
        %v1196 = vld [vmem:[#allocation10 + $0x3f8] sm:$0xff]
        %1197 = vmatprep.subr.mxu0 %v1070
        %1198 = vmatpush1.msra.mxu0 %v1069
        %1199 = vmatprep.subr.mxu0 %v1072
        %1200 = vmatpush1.msra.mxu0 %v1071
        %1201 = vmatprep.subr.mxu0 %v1074
        %1202 = vmatpush1.msra.mxu0 %v1073
        %1203 = vmatprep.subr.mxu0 %v1076
        %1204 = vmatpush1.msra.mxu0 %v1075
        %1205 = vmatprep.subr.mxu0 %v1078
        %1206 = vmatpush1.msra.mxu0 %v1077
        %1207 = vmatprep.subr.mxu0 %v1080
        %1208 = vmatpush1.msra.mxu0 %v1079
        %1209 = vmatprep.subr.mxu0 %v1082
        %1210 = vmatpush1.msra.mxu0 %v1081
        %1211 = vmatprep.subr.mxu0 %v1084
        %1212 = vmatpush1.msra.mxu0 %v1083
        %1213 = vmatprep.subr.mxu0 %v1086
        %1214 = vmatpush1.msra.mxu0 %v1085
        %1215 = vmatprep.subr.mxu0 %v1088
        %1216 = vmatpush1.msra.mxu0 %v1087
        %1217 = vmatprep.subr.mxu0 %v1090
        %1218 = vmatpush1.msra.mxu0 %v1089
        %1219 = vmatprep.subr.mxu0 %v1092
        %1220 = vmatpush1.msra.mxu0 %v1091
        %1221 = vmatprep.subr.mxu0 %v1094
        %1222 = vmatpush1.msra.mxu0 %v1093
        %1223 = vmatprep.subr.mxu0 %v1096
        %1224 = vmatpush1.msra.mxu0 %v1095
        %1225 = vmatprep.subr.mxu0 %v1098
        %1226 = vmatpush1.msra.mxu0 %v1097
        %1227 = vmatprep.subr.mxu0 %v1100
        %1228 = vmatpush1.msra.mxu0 %v1099
        %1229 = vmatprep.subr.mxu0 %v1102
        %1230 = vmatpush1.msra.mxu0 %v1101
        %1231 = vmatprep.subr.mxu0 %v1104
        %1232 = vmatpush1.msra.mxu0 %v1103
        %1233 = vmatprep.subr.mxu0 %v1106
        %1234 = vmatpush1.msra.mxu0 %v1105
        %1235 = vmatprep.subr.mxu0 %v1108
        %1236 = vmatpush1.msra.mxu0 %v1107
        %1237 = vmatprep.subr.mxu0 %v1110
        %1238 = vmatpush1.msra.mxu0 %v1109
        %1239 = vmatprep.subr.mxu0 %v1112
        %1240 = vmatpush1.msra.mxu0 %v1111
        %1241 = vmatprep.subr.mxu0 %v1114
        %1242 = vmatpush1.msra.mxu0 %v1113
        %1243 = vmatprep.subr.mxu0 %v1116
        %1244 = vmatpush1.msra.mxu0 %v1115
        %1245 = vmatprep.subr.mxu0 %v1118
        %1246 = vmatpush1.msra.mxu0 %v1117
        %1247 = vmatprep.subr.mxu0 %v1120
        %1248 = vmatpush1.msra.mxu0 %v1119
        %1249 = vmatprep.subr.mxu0 %v1122
        %1250 = vmatpush1.msra.mxu0 %v1121
        %1251 = vmatprep.subr.mxu0 %v1124
        %1252 = vmatpush1.msra.mxu0 %v1123
        %1253 = vmatprep.subr.mxu0 %v1126
        %1254 = vmatpush1.msra.mxu0 %v1125
        %1255 = vmatprep.subr.mxu0 %v1128
        %1256 = vmatpush1.msra.mxu0 %v1127
        %1257 = vmatprep.subr.mxu0 %v1130
        %1258 = vmatpush1.msra.mxu0 %v1129
        %1259 = vmatprep.subr.mxu0 %v1132
        %1260 = vmatpush1.msra.mxu0 %v1131
        %1261 = vmatprep.mubr.f32.mxu0 %v1030
        %1262 = vmatmul.mubr.f32.gmra.mrb[0].mxu0 %v1029
        %v1263 = vpop.f32.mrb[0].mxu0
        %v1264 = vadd.f32 0.0, %v1263
        %v1265 = vpop.f32.mrb[0].mxu0
        %v1266 = vadd.f32 0.0, %v1265
        %1267 = vmatprep.mubr.f32.mxu0 %v1034
        %1268 = vmatmul.mubr.f32.gmra.mrb[0].mxu0 %v1033
        %v1269 = vpop.f32.mrb[0].mxu0
        %v1270 = vadd.f32 0.0, %v1269
        %v1271 = vpop.f32.mrb[0].mxu0
        %v1272 = vadd.f32 0.0, %v1271
        %1273 = vmatprep.mubr.f32.mxu0 %v1038
        %1274 = vmatmul.mubr.f32.gmra.mrb[0].mxu0 %v1037
        %v1275 = vpop.f32.mrb[0].mxu0
        %v1276 = vadd.f32 0.0, %v1275
        %v1277 = vpop.f32.mrb[0].mxu0
        %v1278 = vadd.f32 0.0, %v1277
        %1279 = vmatprep.mubr.f32.mxu0 %v1042
        %1280 = vmatmul.mubr.f32.gmra.mrb[0].mxu0 %v1041
        %v1281 = vpop.f32.mrb[0].mxu0
        %v1282 = vadd.f32 0.0, %v1281
        %v1283 = vpop.f32.mrb[0].mxu0
        %v1284 = vadd.f32 0.0, %v1283
        %1285 = vmatprep.mubr.f32.mxu0 %v1046
        %1286 = vmatmul.mubr.f32.gmra.mrb[0].mxu0 %v1045
        %v1287 = vpop.f32.mrb[0].mxu0
        %v1288 = vadd.f32 0.0, %v1287
        %v1289 = vpop.f32.mrb[0].mxu0
        %v1290 = vadd.f32 0.0, %v1289
        %1291 = vmatprep.mubr.f32.mxu0 %v1050
        %1292 = vmatmul.mubr.f32.gmra.mrb[0].mxu0 %v1049
        %v1293 = vpop.f32.mrb[0].mxu0
        %v1294 = vadd.f32 0.0, %v1293
        %v1295 = vpop.f32.mrb[0].mxu0
        %v1296 = vadd.f32 0.0, %v1295
        %1297 = vmatprep.mubr.f32.mxu0 %v1054
        %1298 = vmatmul.mubr.f32.gmra.mrb[0].mxu0 %v1053
        %v1299 = vpop.f32.mrb[0].mxu0
        %v1300 = vadd.f32 0.0, %v1299
        %v1301 = vpop.f32.mrb[0].mxu0
        %v1302 = vadd.f32 0.0, %v1301
        %1303 = vmatprep.mubr.f32.mxu0 %v1058
        %1304 = vmatmul.mubr.f32.gmra.mrb[0].mxu0 %v1057
        %v1305 = vpop.f32.mrb[0].mxu0
        %v1306 = vadd.f32 0.0, %v1305
        %v1307 = vpop.f32.mrb[0].mxu0
        %v1308 = vadd.f32 0.0, %v1307
        %1309 = vdwg.mxu0
        %1310 = vmatprep.subr.mxu0 %v1134
        %1311 = vmatpush1.msra.mxu0 %v1133
        %1312 = vmatprep.subr.mxu0 %v1136
        %1313 = vmatpush1.msra.mxu0 %v1135
        %1314 = vmatprep.subr.mxu0 %v1138
        %1315 = vmatpush1.msra.mxu0 %v1137
        %1316 = vmatprep.subr.mxu0 %v1140
        %1317 = vmatpush1.msra.mxu0 %v1139
        %1318 = vmatprep.subr.mxu0 %v1142
        %1319 = vmatpush1.msra.mxu0 %v1141
        %1320 = vmatprep.subr.mxu0 %v1144
        %1321 = vmatpush1.msra.mxu0 %v1143
        %1322 = vmatprep.subr.mxu0 %v1146
        %1323 = vmatpush1.msra.mxu0 %v1145
        %1324 = vmatprep.subr.mxu0 %v1148
        %1325 = vmatpush1.msra.mxu0 %v1147
        %1326 = vmatprep.subr.mxu0 %v1150
        %1327 = vmatpush1.msra.mxu0 %v1149
        %1328 = vmatprep.subr.mxu0 %v1152
        %1329 = vmatpush1.msra.mxu0 %v1151
        %1330 = vmatprep.subr.mxu0 %v1154
        %1331 = vmatpush1.msra.mxu0 %v1153
        %1332 = vmatprep.subr.mxu0 %v1156
        %1333 = vmatpush1.msra.mxu0 %v1155
        %1334 = vmatprep.subr.mxu0 %v1158
        %1335 = vmatpush1.msra.mxu0 %v1157
        %1336 = vmatprep.subr.mxu0 %v1160
        %1337 = vmatpush1.msra.mxu0 %v1159
        %1338 = vmatprep.subr.mxu0 %v1162
        %1339 = vmatpush1.msra.mxu0 %v1161
        %1340 = vmatprep.subr.mxu0 %v1164
        %1341 = vmatpush1.msra.mxu0 %v1163
        %1342 = vmatprep.subr.mxu0 %v1166
        %1343 = vmatpush1.msra.mxu0 %v1165
        %1344 = vmatprep.subr.mxu0 %v1168
        %1345 = vmatpush1.msra.mxu0 %v1167
        %1346 = vmatprep.subr.mxu0 %v1170
        %1347 = vmatpush1.msra.mxu0 %v1169
        %1348 = vmatprep.subr.mxu0 %v1172
        %1349 = vmatpush1.msra.mxu0 %v1171
        %1350 = vmatprep.subr.mxu0 %v1174
        %1351 = vmatpush1.msra.mxu0 %v1173
        %1352 = vmatprep.subr.mxu0 %v1176
        %1353 = vmatpush1.msra.mxu0 %v1175
        %1354 = vmatprep.subr.mxu0 %v1178
        %1355 = vmatpush1.msra.mxu0 %v1177
        %1356 = vmatprep.subr.mxu0 %v1180
        %1357 = vmatpush1.msra.mxu0 %v1179
        %1358 = vmatprep.subr.mxu0 %v1182
        %1359 = vmatpush1.msra.mxu0 %v1181
        %1360 = vmatprep.subr.mxu0 %v1184
        %1361 = vmatpush1.msra.mxu0 %v1183
        %1362 = vmatprep.subr.mxu0 %v1186
        %1363 = vmatpush1.msra.mxu0 %v1185
        %1364 = vmatprep.subr.mxu0 %v1188
        %1365 = vmatpush1.msra.mxu0 %v1187
        %1366 = vmatprep.subr.mxu0 %v1190
        %1367 = vmatpush1.msra.mxu0 %v1189
        %1368 = vmatprep.subr.mxu0 %v1192
        %1369 = vmatpush1.msra.mxu0 %v1191
        %1370 = vmatprep.subr.mxu0 %v1194
        %1371 = vmatpush1.msra.mxu0 %v1193
        %1372 = vmatprep.subr.mxu0 %v1196
        %1373 = vmatpush1.msra.mxu0 %v1195
        %1374 = vmatprep.mubr.f32.mxu0 %v1032
        %1375 = vmatmul.mubr.f32.gmra.mrb[0].mxu0 %v1031
        %v1376 = vpop.f32.mrb[0].mxu0
        %v1377 = vadd.f32 %v1264, %v1376
        %v1378 = vpop.f32.mrb[0].mxu0
        %v1379 = vadd.f32 %v1266, %v1378
        %1380 = vmatprep.mubr.f32.mxu0 %v1036
        %1381 = vmatmul.mubr.f32.gmra.mrb[0].mxu0 %v1035
        %v1382 = vpop.f32.mrb[0].mxu0
        %v1383 = vadd.f32 %v1270, %v1382
        %v1384 = vpop.f32.mrb[0].mxu0
        %v1385 = vadd.f32 %v1272, %v1384
        %1386 = vmatprep.mubr.f32.mxu0 %v1040
        %1387 = vmatmul.mubr.f32.gmra.mrb[0].mxu0 %v1039
        %v1388 = vpop.f32.mrb[0].mxu0
        %v1389 = vadd.f32 %v1276, %v1388
        %v1390 = vpop.f32.mrb[0].mxu0
        %v1391 = vadd.f32 %v1278, %v1390
        %1392 = vmatprep.mubr.f32.mxu0 %v1044
        %1393 = vmatmul.mubr.f32.gmra.mrb[0].mxu0 %v1043
        %v1394 = vpop.f32.mrb[0].mxu0
        %v1395 = vadd.f32 %v1282, %v1394
        %v1396 = vpop.f32.mrb[0].mxu0
        %v1397 = vadd.f32 %v1284, %v1396
        %1398 = vmatprep.mubr.f32.mxu0 %v1048
        %1399 = vmatmul.mubr.f32.gmra.mrb[0].mxu0 %v1047
        %v1400 = vpop.f32.mrb[0].mxu0
        %v1401 = vadd.f32 %v1288, %v1400
        %v1402 = vpop.f32.mrb[0].mxu0
        %v1403 = vadd.f32 %v1290, %v1402
        %1404 = vmatprep.mubr.f32.mxu0 %v1052
        %1405 = vmatmul.mubr.f32.gmra.mrb[0].mxu0 %v1051
        %v1406 = vpop.f32.mrb[0].mxu0
        %v1407 = vadd.f32 %v1294, %v1406
        %v1408 = vpop.f32.mrb[0].mxu0
        %v1409 = vadd.f32 %v1296, %v1408
        %1410 = vmatprep.mubr.f32.mxu0 %v1056
        %1411 = vmatmul.mubr.f32.gmra.mrb[0].mxu0 %v1055
        %v1412 = vpop.f32.mrb[0].mxu0
        %v1413 = vadd.f32 %v1300, %v1412
        %v1414 = vpop.f32.mrb[0].mxu0
        %v1415 = vadd.f32 %v1302, %v1414
        %1416 = vmatprep.mubr.f32.mxu0 %v1060
        %1417 = vmatmul.mubr.f32.gmra.mrb[0].mxu0 %v1059
        %v1418 = vpop.f32.mrb[0].mxu0
        %v1419 = vadd.f32 %v1306, %v1418
        %v1420 = vpop.f32.mrb[0].mxu0
        %v1421 = vadd.f32 %v1308, %v1420
        %1422 = vdwg.mxu0
        %v1423 = vadd.f32 %v1022, %v1377
        %v1424 = vadd.f32 %v1026, %v1379
        %v1425 = vadd.f32 %v1022, %v1383
        %v1426 = vadd.f32 %v1026, %v1385
        %v1427 = vadd.f32 %v1022, %v1389
        %v1428 = vadd.f32 %v1026, %v1391
        %v1429 = vadd.f32 %v1022, %v1395
        %v1430 = vadd.f32 %v1026, %v1397
        %v1431 = vadd.f32 %v1022, %v1401
        %v1432 = vadd.f32 %v1026, %v1403
        %v1433 = vadd.f32 %v1022, %v1407
        %v1434 = vadd.f32 %v1026, %v1409
        %v1435 = vadd.f32 %v1022, %v1413
        %v1436 = vadd.f32 %v1026, %v1415
        %v1437 = vadd.f32 %v1022, %v1419
        %v1438 = vadd.f32 %v1026, %v1421
        %s1439 = scalar_lea.vmem [#allocation10], 3072
        %v1440 = vld [vmem:[%s1439] sm:$0xff]
        %v1441 = vld [vmem:[%s1439 + $0x8] sm:$0xff]
        %v1442 = vld [vmem:[%s1439 + $0x10] sm:$0xff]
        %v1443 = vld [vmem:[%s1439 + $0x18] sm:$0xff]
        %v1444 = vld [vmem:[%s1439 + $0x20] sm:$0xff]
        %v1445 = vld [vmem:[%s1439 + $0x28] sm:$0xff]
        %v1446 = vld [vmem:[%s1439 + $0x30] sm:$0xff]
        %v1447 = vld [vmem:[%s1439 + $0x38] sm:$0xff]
        %v1448 = vld [vmem:[%s1439 + $0x40] sm:$0xff]
        %v1449 = vld [vmem:[%s1439 + $0x48] sm:$0xff]
        %v1450 = vld [vmem:[%s1439 + $0x50] sm:$0xff]
        %v1451 = vld [vmem:[%s1439 + $0x58] sm:$0xff]
        %v1452 = vld [vmem:[%s1439 + $0x60] sm:$0xff]
        %v1453 = vld [vmem:[%s1439 + $0x68] sm:$0xff]
        %v1454 = vld [vmem:[%s1439 + $0x70] sm:$0xff]
        %v1455 = vld [vmem:[%s1439 + $0x78] sm:$0xff]
        %v1456 = vld [vmem:[%s1439 + $0x80] sm:$0xff]
        %v1457 = vld [vmem:[%s1439 + $0x88] sm:$0xff]
        %v1458 = vld [vmem:[%s1439 + $0x90] sm:$0xff]
        %v1459 = vld [vmem:[%s1439 + $0x98] sm:$0xff]
        %v1460 = vld [vmem:[%s1439 + $0xa0] sm:$0xff]
        %v1461 = vld [vmem:[%s1439 + $0xa8] sm:$0xff]
        %v1462 = vld [vmem:[%s1439 + $0xb0] sm:$0xff]
        %v1463 = vld [vmem:[%s1439 + $0xb8] sm:$0xff]
        %v1464 = vld [vmem:[%s1439 + $0xc0] sm:$0xff]
        %v1465 = vld [vmem:[%s1439 + $0xc8] sm:$0xff]
        %v1466 = vld [vmem:[%s1439 + $0xd0] sm:$0xff]
        %v1467 = vld [vmem:[%s1439 + $0xd8] sm:$0xff]
        %v1468 = vld [vmem:[%s1439 + $0xe0] sm:$0xff]
        %v1469 = vld [vmem:[%s1439 + $0xe8] sm:$0xff]
        %v1470 = vld [vmem:[%s1439 + $0xf0] sm:$0xff]
        %v1471 = vld [vmem:[%s1439 + $0xf8] sm:$0xff]
        %v1472 = vld [vmem:[%s1439 + $0x100] sm:$0xff]
        %v1473 = vld [vmem:[%s1439 + $0x108] sm:$0xff]
        %v1474 = vld [vmem:[%s1439 + $0x110] sm:$0xff]
        %v1475 = vld [vmem:[%s1439 + $0x118] sm:$0xff]
        %v1476 = vld [vmem:[%s1439 + $0x120] sm:$0xff]
        %v1477 = vld [vmem:[%s1439 + $0x128] sm:$0xff]
        %v1478 = vld [vmem:[%s1439 + $0x130] sm:$0xff]
        %v1479 = vld [vmem:[%s1439 + $0x138] sm:$0xff]
        %v1480 = vld [vmem:[%s1439 + $0x140] sm:$0xff]
        %v1481 = vld [vmem:[%s1439 + $0x148] sm:$0xff]
        %v1482 = vld [vmem:[%s1439 + $0x150] sm:$0xff]
        %v1483 = vld [vmem:[%s1439 + $0x158] sm:$0xff]
        %v1484 = vld [vmem:[%s1439 + $0x160] sm:$0xff]
        %v1485 = vld [vmem:[%s1439 + $0x168] sm:$0xff]
        %v1486 = vld [vmem:[%s1439 + $0x170] sm:$0xff]
        %v1487 = vld [vmem:[%s1439 + $0x178] sm:$0xff]
        %v1488 = vld [vmem:[%s1439 + $0x180] sm:$0xff]
        %v1489 = vld [vmem:[%s1439 + $0x188] sm:$0xff]
        %v1490 = vld [vmem:[%s1439 + $0x190] sm:$0xff]
        %v1491 = vld [vmem:[%s1439 + $0x198] sm:$0xff]
        %v1492 = vld [vmem:[%s1439 + $0x1a0] sm:$0xff]
        %v1493 = vld [vmem:[%s1439 + $0x1a8] sm:$0xff]
        %v1494 = vld [vmem:[%s1439 + $0x1b0] sm:$0xff]
        %v1495 = vld [vmem:[%s1439 + $0x1b8] sm:$0xff]
        %v1496 = vld [vmem:[%s1439 + $0x1c0] sm:$0xff]
        %v1497 = vld [vmem:[%s1439 + $0x1c8] sm:$0xff]
        %v1498 = vld [vmem:[%s1439 + $0x1d0] sm:$0xff]
        %v1499 = vld [vmem:[%s1439 + $0x1d8] sm:$0xff]
        %v1500 = vld [vmem:[%s1439 + $0x1e0] sm:$0xff]
        %v1501 = vld [vmem:[%s1439 + $0x1e8] sm:$0xff]
        %v1502 = vld [vmem:[%s1439 + $0x1f0] sm:$0xff]
        %v1503 = vld [vmem:[%s1439 + $0x1f8] sm:$0xff]
        %v1504 = vld [vmem:[%s1439 + $0x200] sm:$0xff]
        %v1505 = vld [vmem:[%s1439 + $0x208] sm:$0xff]
        %v1506 = vld [vmem:[%s1439 + $0x210] sm:$0xff]
        %v1507 = vld [vmem:[%s1439 + $0x218] sm:$0xff]
        %v1508 = vld [vmem:[%s1439 + $0x220] sm:$0xff]
        %v1509 = vld [vmem:[%s1439 + $0x228] sm:$0xff]
        %v1510 = vld [vmem:[%s1439 + $0x230] sm:$0xff]
        %v1511 = vld [vmem:[%s1439 + $0x238] sm:$0xff]
        %v1512 = vld [vmem:[%s1439 + $0x240] sm:$0xff]
        %v1513 = vld [vmem:[%s1439 + $0x248] sm:$0xff]
        %v1514 = vld [vmem:[%s1439 + $0x250] sm:$0xff]
        %v1515 = vld [vmem:[%s1439 + $0x258] sm:$0xff]
        %v1516 = vld [vmem:[%s1439 + $0x260] sm:$0xff]
        %v1517 = vld [vmem:[%s1439 + $0x268] sm:$0xff]
        %v1518 = vld [vmem:[%s1439 + $0x270] sm:$0xff]
        %v1519 = vld [vmem:[%s1439 + $0x278] sm:$0xff]
        %v1520 = vld [vmem:[%s1439 + $0x280] sm:$0xff]
        %v1521 = vld [vmem:[%s1439 + $0x288] sm:$0xff]
        %v1522 = vld [vmem:[%s1439 + $0x290] sm:$0xff]
        %v1523 = vld [vmem:[%s1439 + $0x298] sm:$0xff]
        %v1524 = vld [vmem:[%s1439 + $0x2a0] sm:$0xff]
        %v1525 = vld [vmem:[%s1439 + $0x2a8] sm:$0xff]
        %v1526 = vld [vmem:[%s1439 + $0x2b0] sm:$0xff]
        %v1527 = vld [vmem:[%s1439 + $0x2b8] sm:$0xff]
        %v1528 = vld [vmem:[%s1439 + $0x2c0] sm:$0xff]
        %v1529 = vld [vmem:[%s1439 + $0x2c8] sm:$0xff]
        %v1530 = vld [vmem:[%s1439 + $0x2d0] sm:$0xff]
        %v1531 = vld [vmem:[%s1439 + $0x2d8] sm:$0xff]
        %v1532 = vld [vmem:[%s1439 + $0x2e0] sm:$0xff]
        %v1533 = vld [vmem:[%s1439 + $0x2e8] sm:$0xff]
        %v1534 = vld [vmem:[%s1439 + $0x2f0] sm:$0xff]
        %v1535 = vld [vmem:[%s1439 + $0x2f8] sm:$0xff]
        %v1536 = vld [vmem:[%s1439 + $0x300] sm:$0xff]
        %v1537 = vld [vmem:[%s1439 + $0x308] sm:$0xff]
        %v1538 = vld [vmem:[%s1439 + $0x310] sm:$0xff]
        %v1539 = vld [vmem:[%s1439 + $0x318] sm:$0xff]
        %v1540 = vld [vmem:[%s1439 + $0x320] sm:$0xff]
        %v1541 = vld [vmem:[%s1439 + $0x328] sm:$0xff]
        %v1542 = vld [vmem:[%s1439 + $0x330] sm:$0xff]
        %v1543 = vld [vmem:[%s1439 + $0x338] sm:$0xff]
        %v1544 = vld [vmem:[%s1439 + $0x340] sm:$0xff]
        %v1545 = vld [vmem:[%s1439 + $0x348] sm:$0xff]
        %v1546 = vld [vmem:[%s1439 + $0x350] sm:$0xff]
        %v1547 = vld [vmem:[%s1439 + $0x358] sm:$0xff]
        %v1548 = vld [vmem:[%s1439 + $0x360] sm:$0xff]
        %v1549 = vld [vmem:[%s1439 + $0x368] sm:$0xff]
        %v1550 = vld [vmem:[%s1439 + $0x370] sm:$0xff]
        %v1551 = vld [vmem:[%s1439 + $0x378] sm:$0xff]
        %v1552 = vld [vmem:[%s1439 + $0x380] sm:$0xff]
        %v1553 = vld [vmem:[%s1439 + $0x388] sm:$0xff]
        %v1554 = vld [vmem:[%s1439 + $0x390] sm:$0xff]
        %v1555 = vld [vmem:[%s1439 + $0x398] sm:$0xff]
        %v1556 = vld [vmem:[%s1439 + $0x3a0] sm:$0xff]
        %v1557 = vld [vmem:[%s1439 + $0x3a8] sm:$0xff]
        %v1558 = vld [vmem:[%s1439 + $0x3b0] sm:$0xff]
        %v1559 = vld [vmem:[%s1439 + $0x3b8] sm:$0xff]
        %v1560 = vld [vmem:[%s1439 + $0x3c0] sm:$0xff]
        %v1561 = vld [vmem:[%s1439 + $0x3c8] sm:$0xff]
        %v1562 = vld [vmem:[%s1439 + $0x3d0] sm:$0xff]
        %v1563 = vld [vmem:[%s1439 + $0x3d8] sm:$0xff]
        %v1564 = vld [vmem:[%s1439 + $0x3e0] sm:$0xff]
        %v1565 = vld [vmem:[%s1439 + $0x3e8] sm:$0xff]
        %v1566 = vld [vmem:[%s1439 + $0x3f0] sm:$0xff]
        %v1567 = vld [vmem:[%s1439 + $0x3f8] sm:$0xff]
        %1568 = vmatprep.subr.mxu0 %v1441
        %1569 = vmatpush1.msra.mxu0 %v1440
        %1570 = vmatprep.subr.mxu0 %v1443
        %1571 = vmatpush1.msra.mxu0 %v1442
        %1572 = vmatprep.subr.mxu0 %v1445
        %1573 = vmatpush1.msra.mxu0 %v1444
        %1574 = vmatprep.subr.mxu0 %v1447
        %1575 = vmatpush1.msra.mxu0 %v1446
        %1576 = vmatprep.subr.mxu0 %v1449
        %1577 = vmatpush1.msra.mxu0 %v1448
        %1578 = vmatprep.subr.mxu0 %v1451
        %1579 = vmatpush1.msra.mxu0 %v1450
        %1580 = vmatprep.subr.mxu0 %v1453
        %1581 = vmatpush1.msra.mxu0 %v1452
        %1582 = vmatprep.subr.mxu0 %v1455
        %1583 = vmatpush1.msra.mxu0 %v1454
        %1584 = vmatprep.subr.mxu0 %v1457
        %1585 = vmatpush1.msra.mxu0 %v1456
        %1586 = vmatprep.subr.mxu0 %v1459
        %1587 = vmatpush1.msra.mxu0 %v1458
        %1588 = vmatprep.subr.mxu0 %v1461
        %1589 = vmatpush1.msra.mxu0 %v1460
        %1590 = vmatprep.subr.mxu0 %v1463
        %1591 = vmatpush1.msra.mxu0 %v1462
        %1592 = vmatprep.subr.mxu0 %v1465
        %1593 = vmatpush1.msra.mxu0 %v1464
        %1594 = vmatprep.subr.mxu0 %v1467
        %1595 = vmatpush1.msra.mxu0 %v1466
        %1596 = vmatprep.subr.mxu0 %v1469
        %1597 = vmatpush1.msra.mxu0 %v1468
        %1598 = vmatprep.subr.mxu0 %v1471
        %1599 = vmatpush1.msra.mxu0 %v1470
        %1600 = vmatprep.subr.mxu0 %v1473
        %1601 = vmatpush1.msra.mxu0 %v1472
        %1602 = vmatprep.subr.mxu0 %v1475
        %1603 = vmatpush1.msra.mxu0 %v1474
        %1604 = vmatprep.subr.mxu0 %v1477
        %1605 = vmatpush1.msra.mxu0 %v1476
        %1606 = vmatprep.subr.mxu0 %v1479
        %1607 = vmatpush1.msra.mxu0 %v1478
        %1608 = vmatprep.subr.mxu0 %v1481
        %1609 = vmatpush1.msra.mxu0 %v1480
        %1610 = vmatprep.subr.mxu0 %v1483
        %1611 = vmatpush1.msra.mxu0 %v1482
        %1612 = vmatprep.subr.mxu0 %v1485
        %1613 = vmatpush1.msra.mxu0 %v1484
        %1614 = vmatprep.subr.mxu0 %v1487
        %1615 = vmatpush1.msra.mxu0 %v1486
        %1616 = vmatprep.subr.mxu0 %v1489
        %1617 = vmatpush1.msra.mxu0 %v1488
        %1618 = vmatprep.subr.mxu0 %v1491
        %1619 = vmatpush1.msra.mxu0 %v1490
        %1620 = vmatprep.subr.mxu0 %v1493
        %1621 = vmatpush1.msra.mxu0 %v1492
        %1622 = vmatprep.subr.mxu0 %v1495
        %1623 = vmatpush1.msra.mxu0 %v1494
        %1624 = vmatprep.subr.mxu0 %v1497
        %1625 = vmatpush1.msra.mxu0 %v1496
        %1626 = vmatprep.subr.mxu0 %v1499
        %1627 = vmatpush1.msra.mxu0 %v1498
        %1628 = vmatprep.subr.mxu0 %v1501
        %1629 = vmatpush1.msra.mxu0 %v1500
        %1630 = vmatprep.subr.mxu0 %v1503
        %1631 = vmatpush1.msra.mxu0 %v1502
        %1632 = vmatprep.mubr.f32.mxu0 %v1034
        %1633 = vmatmul.mubr.f32.gmra.mrb[0].mxu0 %v1033
        %v1634 = vpop.f32.mrb[0].mxu0
        %v1635 = vadd.f32 0.0, %v1634
        %v1636 = vpop.f32.mrb[0].mxu0
        %v1637 = vadd.f32 0.0, %v1636
        %1638 = vmatprep.mubr.f32.mxu0 %v1038
        %1639 = vmatmul.mubr.f32.gmra.mrb[0].mxu0 %v1037
        %v1640 = vpop.f32.mrb[0].mxu0
        %v1641 = vadd.f32 0.0, %v1640
        %v1642 = vpop.f32.mrb[0].mxu0
        %v1643 = vadd.f32 0.0, %v1642
        %1644 = vmatprep.mubr.f32.mxu0 %v1042
        %1645 = vmatmul.mubr.f32.gmra.mrb[0].mxu0 %v1041
        %v1646 = vpop.f32.mrb[0].mxu0
        %v1647 = vadd.f32 0.0, %v1646
        %v1648 = vpop.f32.mrb[0].mxu0
        %v1649 = vadd.f32 0.0, %v1648
        %1650 = vmatprep.mubr.f32.mxu0 %v1046
        %1651 = vmatmul.mubr.f32.gmra.mrb[0].mxu0 %v1045
        %v1652 = vpop.f32.mrb[0].mxu0
        %v1653 = vadd.f32 0.0, %v1652
        %v1654 = vpop.f32.mrb[0].mxu0
        %v1655 = vadd.f32 0.0, %v1654
        %1656 = vmatprep.mubr.f32.mxu0 %v1050
        %1657 = vmatmul.mubr.f32.gmra.mrb[0].mxu0 %v1049
        %v1658 = vpop.f32.mrb[0].mxu0
        %v1659 = vadd.f32 0.0, %v1658
        %v1660 = vpop.f32.mrb[0].mxu0
        %v1661 = vadd.f32 0.0, %v1660
        %1662 = vmatprep.mubr.f32.mxu0 %v1054
        %1663 = vmatmul.mubr.f32.gmra.mrb[0].mxu0 %v1053
        %v1664 = vpop.f32.mrb[0].mxu0
        %v1665 = vadd.f32 0.0, %v1664
        %v1666 = vpop.f32.mrb[0].mxu0
        %v1667 = vadd.f32 0.0, %v1666
        %1668 = vmatprep.mubr.f32.mxu0 %v1058
        %1669 = vmatmul.mubr.f32.gmra.mrb[0].mxu0 %v1057
        %v1670 = vpop.f32.mrb[0].mxu0
        %v1671 = vadd.f32 0.0, %v1670
        %v1672 = vpop.f32.mrb[0].mxu0
        %v1673 = vadd.f32 0.0, %v1672
        %1674 = vmatprep.mubr.f32.mxu0 %v1062
        %1675 = vmatmul.mubr.f32.gmra.mrb[0].mxu0 %v1061
        %v1676 = vpop.f32.mrb[0].mxu0
        %v1677 = vadd.f32 0.0, %v1676
        %v1678 = vpop.f32.mrb[0].mxu0
        %v1679 = vadd.f32 0.0, %v1678
        %1680 = vdwg.mxu0
        %1681 = vmatprep.subr.mxu0 %v1505
        %1682 = vmatpush1.msra.mxu0 %v1504
        %1683 = vmatprep.subr.mxu0 %v1507
        %1684 = vmatpush1.msra.mxu0 %v1506
        %1685 = vmatprep.subr.mxu0 %v1509
        %1686 = vmatpush1.msra.mxu0 %v1508
        %1687 = vmatprep.subr.mxu0 %v1511
        %1688 = vmatpush1.msra.mxu0 %v1510
        %1689 = vmatprep.subr.mxu0 %v1513
        %1690 = vmatpush1.msra.mxu0 %v1512
        %1691 = vmatprep.subr.mxu0 %v1515
        %1692 = vmatpush1.msra.mxu0 %v1514
        %1693 = vmatprep.subr.mxu0 %v1517
        %1694 = vmatpush1.msra.mxu0 %v1516
        %1695 = vmatprep.subr.mxu0 %v1519
        %1696 = vmatpush1.msra.mxu0 %v1518
        %1697 = vmatprep.subr.mxu0 %v1521
        %1698 = vmatpush1.msra.mxu0 %v1520
        %1699 = vmatprep.subr.mxu0 %v1523
        %1700 = vmatpush1.msra.mxu0 %v1522
        %1701 = vmatprep.subr.mxu0 %v1525
        %1702 = vmatpush1.msra.mxu0 %v1524
        %1703 = vmatprep.subr.mxu0 %v1527
        %1704 = vmatpush1.msra.mxu0 %v1526
        %1705 = vmatprep.subr.mxu0 %v1529
        %1706 = vmatpush1.msra.mxu0 %v1528
        %1707 = vmatprep.subr.mxu0 %v1531
        %1708 = vmatpush1.msra.mxu0 %v1530
        %1709 = vmatprep.subr.mxu0 %v1533
        %1710 = vmatpush1.msra.mxu0 %v1532
        %1711 = vmatprep.subr.mxu0 %v1535
        %1712 = vmatpush1.msra.mxu0 %v1534
        %1713 = vmatprep.subr.mxu0 %v1537
        %1714 = vmatpush1.msra.mxu0 %v1536
        %1715 = vmatprep.subr.mxu0 %v1539
        %1716 = vmatpush1.msra.mxu0 %v1538
        %1717 = vmatprep.subr.mxu0 %v1541
        %1718 = vmatpush1.msra.mxu0 %v1540
        %1719 = vmatprep.subr.mxu0 %v1543
        %1720 = vmatpush1.msra.mxu0 %v1542
        %1721 = vmatprep.subr.mxu0 %v1545
        %1722 = vmatpush1.msra.mxu0 %v1544
        %1723 = vmatprep.subr.mxu0 %v1547
        %1724 = vmatpush1.msra.mxu0 %v1546
        %1725 = vmatprep.subr.mxu0 %v1549
        %1726 = vmatpush1.msra.mxu0 %v1548
        %1727 = vmatprep.subr.mxu0 %v1551
        %1728 = vmatpush1.msra.mxu0 %v1550
        %1729 = vmatprep.subr.mxu0 %v1553
        %1730 = vmatpush1.msra.mxu0 %v1552
        %1731 = vmatprep.subr.mxu0 %v1555
        %1732 = vmatpush1.msra.mxu0 %v1554
        %1733 = vmatprep.subr.mxu0 %v1557
        %1734 = vmatpush1.msra.mxu0 %v1556
        %1735 = vmatprep.subr.mxu0 %v1559
        %1736 = vmatpush1.msra.mxu0 %v1558
        %1737 = vmatprep.subr.mxu0 %v1561
        %1738 = vmatpush1.msra.mxu0 %v1560
        %1739 = vmatprep.subr.mxu0 %v1563
        %1740 = vmatpush1.msra.mxu0 %v1562
        %1741 = vmatprep.subr.mxu0 %v1565
        %1742 = vmatpush1.msra.mxu0 %v1564
        %1743 = vmatprep.subr.mxu0 %v1567
        %1744 = vmatpush1.msra.mxu0 %v1566
        %1745 = vmatprep.mubr.f32.mxu0 %v1036
        %1746 = vmatmul.mubr.f32.gmra.mrb[0].mxu0 %v1035
        %v1747 = vpop.f32.mrb[0].mxu0
        %v1748 = vadd.f32 %v1635, %v1747
        %v1749 = vpop.f32.mrb[0].mxu0
        %v1750 = vadd.f32 %v1637, %v1749
        %1751 = vmatprep.mubr.f32.mxu0 %v1040
        %1752 = vmatmul.mubr.f32.gmra.mrb[0].mxu0 %v1039
        %v1753 = vpop.f32.mrb[0].mxu0
        %v1754 = vadd.f32 %v1641, %v1753
        %v1755 = vpop.f32.mrb[0].mxu0
        %v1756 = vadd.f32 %v1643, %v1755
        %1757 = vmatprep.mubr.f32.mxu0 %v1044
        %1758 = vmatmul.mubr.f32.gmra.mrb[0].mxu0 %v1043
        %v1759 = vpop.f32.mrb[0].mxu0
        %v1760 = vadd.f32 %v1647, %v1759
        %v1761 = vpop.f32.mrb[0].mxu0
        %v1762 = vadd.f32 %v1649, %v1761
        %1763 = vmatprep.mubr.f32.mxu0 %v1048
        %1764 = vmatmul.mubr.f32.gmra.mrb[0].mxu0 %v1047
        %v1765 = vpop.f32.mrb[0].mxu0
        %v1766 = vadd.f32 %v1653, %v1765
        %v1767 = vpop.f32.mrb[0].mxu0
        %v1768 = vadd.f32 %v1655, %v1767
        %1769 = vmatprep.mubr.f32.mxu0 %v1052
        %1770 = vmatmul.mubr.f32.gmra.mrb[0].mxu0 %v1051
        %v1771 = vpop.f32.mrb[0].mxu0
        %v1772 = vadd.f32 %v1659, %v1771
        %v1773 = vpop.f32.mrb[0].mxu0
        %v1774 = vadd.f32 %v1661, %v1773
        %1775 = vmatprep.mubr.f32.mxu0 %v1056
        %1776 = vmatmul.mubr.f32.gmra.mrb[0].mxu0 %v1055
        %v1777 = vpop.f32.mrb[0].mxu0
        %v1778 = vadd.f32 %v1665, %v1777
        %v1779 = vpop.f32.mrb[0].mxu0
        %v1780 = vadd.f32 %v1667, %v1779
        %1781 = vmatprep.mubr.f32.mxu0 %v1060
        %1782 = vmatmul.mubr.f32.gmra.mrb[0].mxu0 %v1059
        %v1783 = vpop.f32.mrb[0].mxu0
        %v1784 = vadd.f32 %v1671, %v1783
        %v1785 = vpop.f32.mrb[0].mxu0
        %v1786 = vadd.f32 %v1673, %v1785
        %1787 = vmatprep.mubr.f32.mxu0 %v1064
        %1788 = vmatmul.mubr.f32.gmra.mrb[0].mxu0 %v1063
        %v1789 = vpop.f32.mrb[0].mxu0
        %v1790 = vadd.f32 %v1677, %v1789
        %v1791 = vpop.f32.mrb[0].mxu0
        %v1792 = vadd.f32 %v1679, %v1791
        %1793 = vdwg.mxu0
        %v1794 = vadd.f32 %v1423, %v1748
        %v1795 = vadd.f32 %v1424, %v1750
        %v1796 = vadd.f32 %v1425, %v1754
        %v1797 = vadd.f32 %v1426, %v1756
        %v1798 = vadd.f32 %v1427, %v1760
        %v1799 = vadd.f32 %v1428, %v1762
        %v1800 = vadd.f32 %v1429, %v1766
        %v1801 = vadd.f32 %v1430, %v1768
        %v1802 = vadd.f32 %v1431, %v1772
        %v1803 = vadd.f32 %v1432, %v1774
        %v1804 = vadd.f32 %v1433, %v1778
        %v1805 = vadd.f32 %v1434, %v1780
        %v1806 = vadd.f32 %v1435, %v1784
        %v1807 = vadd.f32 %v1436, %v1786
        %v1808 = vadd.f32 %v1437, %v1790
        %v1809 = vadd.f32 %v1438, %v1792
        %s1810 = scalar_lea.vmem [#allocation10], 6144
        %v1811 = vld [vmem:[%s1810] sm:$0xff]
        %v1812 = vld [vmem:[%s1810 + $0x8] sm:$0xff]
        %v1813 = vld [vmem:[%s1810 + $0x10] sm:$0xff]
        %v1814 = vld [vmem:[%s1810 + $0x18] sm:$0xff]
        %v1815 = vld [vmem:[%s1810 + $0x20] sm:$0xff]
        %v1816 = vld [vmem:[%s1810 + $0x28] sm:$0xff]
        %v1817 = vld [vmem:[%s1810 + $0x30] sm:$0xff]
        %v1818 = vld [vmem:[%s1810 + $0x38] sm:$0xff]
        %v1819 = vld [vmem:[%s1810 + $0x40] sm:$0xff]
        %v1820 = vld [vmem:[%s1810 + $0x48] sm:$0xff]
        %v1821 = vld [vmem:[%s1810 + $0x50] sm:$0xff]
        %v1822 = vld [vmem:[%s1810 + $0x58] sm:$0xff]
        %v1823 = vld [vmem:[%s1810 + $0x60] sm:$0xff]
        %v1824 = vld [vmem:[%s1810 + $0x68] sm:$0xff]
        %v1825 = vld [vmem:[%s1810 + $0x70] sm:$0xff]
        %v1826 = vld [vmem:[%s1810 + $0x78] sm:$0xff]
        %v1827 = vld [vmem:[%s1810 + $0x80] sm:$0xff]
        %v1828 = vld [vmem:[%s1810 + $0x88] sm:$0xff]
        %v1829 = vld [vmem:[%s1810 + $0x90] sm:$0xff]
        %v1830 = vld [vmem:[%s1810 + $0x98] sm:$0xff]
        %v1831 = vld [vmem:[%s1810 + $0xa0] sm:$0xff]
        %v1832 = vld [vmem:[%s1810 + $0xa8] sm:$0xff]
        %v1833 = vld [vmem:[%s1810 + $0xb0] sm:$0xff]
        %v1834 = vld [vmem:[%s1810 + $0xb8] sm:$0xff]
        %v1835 = vld [vmem:[%s1810 + $0xc0] sm:$0xff]
        %v1836 = vld [vmem:[%s1810 + $0xc8] sm:$0xff]
        %v1837 = vld [vmem:[%s1810 + $0xd0] sm:$0xff]
        %v1838 = vld [vmem:[%s1810 + $0xd8] sm:$0xff]
        %v1839 = vld [vmem:[%s1810 + $0xe0] sm:$0xff]
        %v1840 = vld [vmem:[%s1810 + $0xe8] sm:$0xff]
        %v1841 = vld [vmem:[%s1810 + $0xf0] sm:$0xff]
        %v1842 = vld [vmem:[%s1810 + $0xf8] sm:$0xff]
        %v1843 = vld [vmem:[%s1810 + $0x100] sm:$0xff]
        %v1844 = vld [vmem:[%s1810 + $0x108] sm:$0xff]
        %v1845 = vld [vmem:[%s1810 + $0x110] sm:$0xff]
        %v1846 = vld [vmem:[%s1810 + $0x118] sm:$0xff]
        %v1847 = vld [vmem:[%s1810 + $0x120] sm:$0xff]
        %v1848 = vld [vmem:[%s1810 + $0x128] sm:$0xff]
        %v1849 = vld [vmem:[%s1810 + $0x130] sm:$0xff]
        %v1850 = vld [vmem:[%s1810 + $0x138] sm:$0xff]
        %v1851 = vld [vmem:[%s1810 + $0x140] sm:$0xff]
        %v1852 = vld [vmem:[%s1810 + $0x148] sm:$0xff]
        %v1853 = vld [vmem:[%s1810 + $0x150] sm:$0xff]
        %v1854 = vld [vmem:[%s1810 + $0x158] sm:$0xff]
        %v1855 = vld [vmem:[%s1810 + $0x160] sm:$0xff]
        %v1856 = vld [vmem:[%s1810 + $0x168] sm:$0xff]
        %v1857 = vld [vmem:[%s1810 + $0x170] sm:$0xff]
        %v1858 = vld [vmem:[%s1810 + $0x178] sm:$0xff]
        %v1859 = vld [vmem:[%s1810 + $0x180] sm:$0xff]
        %v1860 = vld [vmem:[%s1810 + $0x188] sm:$0xff]
        %v1861 = vld [vmem:[%s1810 + $0x190] sm:$0xff]
        %v1862 = vld [vmem:[%s1810 + $0x198] sm:$0xff]
        %v1863 = vld [vmem:[%s1810 + $0x1a0] sm:$0xff]
        %v1864 = vld [vmem:[%s1810 + $0x1a8] sm:$0xff]
        %v1865 = vld [vmem:[%s1810 + $0x1b0] sm:$0xff]
        %v1866 = vld [vmem:[%s1810 + $0x1b8] sm:$0xff]
        %v1867 = vld [vmem:[%s1810 + $0x1c0] sm:$0xff]
        %v1868 = vld [vmem:[%s1810 + $0x1c8] sm:$0xff]
        %v1869 = vld [vmem:[%s1810 + $0x1d0] sm:$0xff]
        %v1870 = vld [vmem:[%s1810 + $0x1d8] sm:$0xff]
        %v1871 = vld [vmem:[%s1810 + $0x1e0] sm:$0xff]
        %v1872 = vld [vmem:[%s1810 + $0x1e8] sm:$0xff]
        %v1873 = vld [vmem:[%s1810 + $0x1f0] sm:$0xff]
        %v1874 = vld [vmem:[%s1810 + $0x1f8] sm:$0xff]
        %v1875 = vld [vmem:[%s1810 + $0x200] sm:$0xff]
        %v1876 = vld [vmem:[%s1810 + $0x208] sm:$0xff]
        %v1877 = vld [vmem:[%s1810 + $0x210] sm:$0xff]
        %v1878 = vld [vmem:[%s1810 + $0x218] sm:$0xff]
        %v1879 = vld [vmem:[%s1810 + $0x220] sm:$0xff]
        %v1880 = vld [vmem:[%s1810 + $0x228] sm:$0xff]
        %v1881 = vld [vmem:[%s1810 + $0x230] sm:$0xff]
        %v1882 = vld [vmem:[%s1810 + $0x238] sm:$0xff]
        %v1883 = vld [vmem:[%s1810 + $0x240] sm:$0xff]
        %v1884 = vld [vmem:[%s1810 + $0x248] sm:$0xff]
        %v1885 = vld [vmem:[%s1810 + $0x250] sm:$0xff]
        %v1886 = vld [vmem:[%s1810 + $0x258] sm:$0xff]
        %v1887 = vld [vmem:[%s1810 + $0x260] sm:$0xff]
        %v1888 = vld [vmem:[%s1810 + $0x268] sm:$0xff]
        %v1889 = vld [vmem:[%s1810 + $0x270] sm:$0xff]
        %v1890 = vld [vmem:[%s1810 + $0x278] sm:$0xff]
        %v1891 = vld [vmem:[%s1810 + $0x280] sm:$0xff]
        %v1892 = vld [vmem:[%s1810 + $0x288] sm:$0xff]
        %v1893 = vld [vmem:[%s1810 + $0x290] sm:$0xff]
        %v1894 = vld [vmem:[%s1810 + $0x298] sm:$0xff]
        %v1895 = vld [vmem:[%s1810 + $0x2a0] sm:$0xff]
        %v1896 = vld [vmem:[%s1810 + $0x2a8] sm:$0xff]
        %v1897 = vld [vmem:[%s1810 + $0x2b0] sm:$0xff]
        %v1898 = vld [vmem:[%s1810 + $0x2b8] sm:$0xff]
        %v1899 = vld [vmem:[%s1810 + $0x2c0] sm:$0xff]
        %v1900 = vld [vmem:[%s1810 + $0x2c8] sm:$0xff]
        %v1901 = vld [vmem:[%s1810 + $0x2d0] sm:$0xff]
        %v1902 = vld [vmem:[%s1810 + $0x2d8] sm:$0xff]
        %v1903 = vld [vmem:[%s1810 + $0x2e0] sm:$0xff]
        %v1904 = vld [vmem:[%s1810 + $0x2e8] sm:$0xff]
        %v1905 = vld [vmem:[%s1810 + $0x2f0] sm:$0xff]
        %v1906 = vld [vmem:[%s1810 + $0x2f8] sm:$0xff]
        %v1907 = vld [vmem:[%s1810 + $0x300] sm:$0xff]
        %v1908 = vld [vmem:[%s1810 + $0x308] sm:$0xff]
        %v1909 = vld [vmem:[%s1810 + $0x310] sm:$0xff]
        %v1910 = vld [vmem:[%s1810 + $0x318] sm:$0xff]
        %v1911 = vld [vmem:[%s1810 + $0x320] sm:$0xff]
        %v1912 = vld [vmem:[%s1810 + $0x328] sm:$0xff]
        %v1913 = vld [vmem:[%s1810 + $0x330] sm:$0xff]
        %v1914 = vld [vmem:[%s1810 + $0x338] sm:$0xff]
        %v1915 = vld [vmem:[%s1810 + $0x340] sm:$0xff]
        %v1916 = vld [vmem:[%s1810 + $0x348] sm:$0xff]
        %v1917 = vld [vmem:[%s1810 + $0x350] sm:$0xff]
        %v1918 = vld [vmem:[%s1810 + $0x358] sm:$0xff]
        %v1919 = vld [vmem:[%s1810 + $0x360] sm:$0xff]
        %v1920 = vld [vmem:[%s1810 + $0x368] sm:$0xff]
        %v1921 = vld [vmem:[%s1810 + $0x370] sm:$0xff]
        %v1922 = vld [vmem:[%s1810 + $0x378] sm:$0xff]
        %v1923 = vld [vmem:[%s1810 + $0x380] sm:$0xff]
        %v1924 = vld [vmem:[%s1810 + $0x388] sm:$0xff]
        %v1925 = vld [vmem:[%s1810 + $0x390] sm:$0xff]
        %v1926 = vld [vmem:[%s1810 + $0x398] sm:$0xff]
        %v1927 = vld [vmem:[%s1810 + $0x3a0] sm:$0xff]
        %v1928 = vld [vmem:[%s1810 + $0x3a8] sm:$0xff]
        %v1929 = vld [vmem:[%s1810 + $0x3b0] sm:$0xff]
        %v1930 = vld [vmem:[%s1810 + $0x3b8] sm:$0xff]
        %v1931 = vld [vmem:[%s1810 + $0x3c0] sm:$0xff]
        %v1932 = vld [vmem:[%s1810 + $0x3c8] sm:$0xff]
        %v1933 = vld [vmem:[%s1810 + $0x3d0] sm:$0xff]
        %v1934 = vld [vmem:[%s1810 + $0x3d8] sm:$0xff]
        %v1935 = vld [vmem:[%s1810 + $0x3e0] sm:$0xff]
        %v1936 = vld [vmem:[%s1810 + $0x3e8] sm:$0xff]
        %v1937 = vld [vmem:[%s1810 + $0x3f0] sm:$0xff]
        %v1938 = vld [vmem:[%s1810 + $0x3f8] sm:$0xff]
        %1939 = vmatprep.subr.mxu0 %v1812
        %1940 = vmatpush1.msra.mxu0 %v1811
        %1941 = vmatprep.subr.mxu0 %v1814
        %1942 = vmatpush1.msra.mxu0 %v1813
        %1943 = vmatprep.subr.mxu0 %v1816
        %1944 = vmatpush1.msra.mxu0 %v1815
        %1945 = vmatprep.subr.mxu0 %v1818
        %1946 = vmatpush1.msra.mxu0 %v1817
        %1947 = vmatprep.subr.mxu0 %v1820
        %1948 = vmatpush1.msra.mxu0 %v1819
        %1949 = vmatprep.subr.mxu0 %v1822
        %1950 = vmatpush1.msra.mxu0 %v1821
        %1951 = vmatprep.subr.mxu0 %v1824
        %1952 = vmatpush1.msra.mxu0 %v1823
        %1953 = vmatprep.subr.mxu0 %v1826
        %1954 = vmatpush1.msra.mxu0 %v1825
        %1955 = vmatprep.subr.mxu0 %v1828
        %1956 = vmatpush1.msra.mxu0 %v1827
        %1957 = vmatprep.subr.mxu0 %v1830
        %1958 = vmatpush1.msra.mxu0 %v1829
        %1959 = vmatprep.subr.mxu0 %v1832
        %1960 = vmatpush1.msra.mxu0 %v1831
        %1961 = vmatprep.subr.mxu0 %v1834
        %1962 = vmatpush1.msra.mxu0 %v1833
        %1963 = vmatprep.subr.mxu0 %v1836
        %1964 = vmatpush1.msra.mxu0 %v1835
        %1965 = vmatprep.subr.mxu0 %v1838
        %1966 = vmatpush1.msra.mxu0 %v1837
        %1967 = vmatprep.subr.mxu0 %v1840
        %1968 = vmatpush1.msra.mxu0 %v1839
        %1969 = vmatprep.subr.mxu0 %v1842
        %1970 = vmatpush1.msra.mxu0 %v1841
        %1971 = vmatprep.subr.mxu0 %v1844
        %1972 = vmatpush1.msra.mxu0 %v1843
        %1973 = vmatprep.subr.mxu0 %v1846
        %1974 = vmatpush1.msra.mxu0 %v1845
        %1975 = vmatprep.subr.mxu0 %v1848
        %1976 = vmatpush1.msra.mxu0 %v1847
        %1977 = vmatprep.subr.mxu0 %v1850
        %1978 = vmatpush1.msra.mxu0 %v1849
        %1979 = vmatprep.subr.mxu0 %v1852
        %1980 = vmatpush1.msra.mxu0 %v1851
        %1981 = vmatprep.subr.mxu0 %v1854
        %1982 = vmatpush1.msra.mxu0 %v1853
        %1983 = vmatprep.subr.mxu0 %v1856
        %1984 = vmatpush1.msra.mxu0 %v1855
        %1985 = vmatprep.subr.mxu0 %v1858
        %1986 = vmatpush1.msra.mxu0 %v1857
        %1987 = vmatprep.subr.mxu0 %v1860
        %1988 = vmatpush1.msra.mxu0 %v1859
        %1989 = vmatprep.subr.mxu0 %v1862
        %1990 = vmatpush1.msra.mxu0 %v1861
        %1991 = vmatprep.subr.mxu0 %v1864
        %1992 = vmatpush1.msra.mxu0 %v1863
        %1993 = vmatprep.subr.mxu0 %v1866
        %1994 = vmatpush1.msra.mxu0 %v1865
        %1995 = vmatprep.subr.mxu0 %v1868
        %1996 = vmatpush1.msra.mxu0 %v1867
        %1997 = vmatprep.subr.mxu0 %v1870
        %1998 = vmatpush1.msra.mxu0 %v1869
        %1999 = vmatprep.subr.mxu0 %v1872
        %2000 = vmatpush1.msra.mxu0 %v1871
        %2001 = vmatprep.subr.mxu0 %v1874
        %2002 = vmatpush1.msra.mxu0 %v1873
        %2003 = vmatprep.mubr.f32.mxu0 %v1038
        %2004 = vmatmul.mubr.f32.gmra.mrb[0].mxu0 %v1037
        %v2005 = vpop.f32.mrb[0].mxu0
        %v2006 = vadd.f32 0.0, %v2005
        %v2007 = vpop.f32.mrb[0].mxu0
        %v2008 = vadd.f32 0.0, %v2007
        %2009 = vmatprep.mubr.f32.mxu0 %v1042
        %2010 = vmatmul.mubr.f32.gmra.mrb[0].mxu0 %v1041
        %v2011 = vpop.f32.mrb[0].mxu0
        %v2012 = vadd.f32 0.0, %v2011
        %v2013 = vpop.f32.mrb[0].mxu0
        %v2014 = vadd.f32 0.0, %v2013
        %2015 = vmatprep.mubr.f32.mxu0 %v1046
        %2016 = vmatmul.mubr.f32.gmra.mrb[0].mxu0 %v1045
        %v2017 = vpop.f32.mrb[0].mxu0
        %v2018 = vadd.f32 0.0, %v2017
        %v2019 = vpop.f32.mrb[0].mxu0
        %v2020 = vadd.f32 0.0, %v2019
        %2021 = vmatprep.mubr.f32.mxu0 %v1050
        %2022 = vmatmul.mubr.f32.gmra.mrb[0].mxu0 %v1049
        %v2023 = vpop.f32.mrb[0].mxu0
        %v2024 = vadd.f32 0.0, %v2023
        %v2025 = vpop.f32.mrb[0].mxu0
        %v2026 = vadd.f32 0.0, %v2025
        %2027 = vmatprep.mubr.f32.mxu0 %v1054
        %2028 = vmatmul.mubr.f32.gmra.mrb[0].mxu0 %v1053
        %v2029 = vpop.f32.mrb[0].mxu0
        %v2030 = vadd.f32 0.0, %v2029
        %v2031 = vpop.f32.mrb[0].mxu0
        %v2032 = vadd.f32 0.0, %v2031
        %2033 = vmatprep.mubr.f32.mxu0 %v1058
        %2034 = vmatmul.mubr.f32.gmra.mrb[0].mxu0 %v1057
        %v2035 = vpop.f32.mrb[0].mxu0
        %v2036 = vadd.f32 0.0, %v2035
        %v2037 = vpop.f32.mrb[0].mxu0
        %v2038 = vadd.f32 0.0, %v2037
        %2039 = vmatprep.mubr.f32.mxu0 %v1062
        %2040 = vmatmul.mubr.f32.gmra.mrb[0].mxu0 %v1061
        %v2041 = vpop.f32.mrb[0].mxu0
        %v2042 = vadd.f32 0.0, %v2041
        %v2043 = vpop.f32.mrb[0].mxu0
        %v2044 = vadd.f32 0.0, %v2043
        %2045 = vmatprep.mubr.f32.mxu0 %v1066
        %2046 = vmatmul.mubr.f32.gmra.mrb[0].mxu0 %v1065
        %v2047 = vpop.f32.mrb[0].mxu0
        %v2048 = vadd.f32 0.0, %v2047
        %v2049 = vpop.f32.mrb[0].mxu0
        %v2050 = vadd.f32 0.0, %v2049
        %2051 = vdwg.mxu0
        %2052 = vmatprep.subr.mxu0 %v1876
        %2053 = vmatpush1.msra.mxu0 %v1875
        %2054 = vmatprep.subr.mxu0 %v1878
        %2055 = vmatpush1.msra.mxu0 %v1877
        %2056 = vmatprep.subr.mxu0 %v1880
        %2057 = vmatpush1.msra.mxu0 %v1879
        %2058 = vmatprep.subr.mxu0 %v1882
        %2059 = vmatpush1.msra.mxu0 %v1881
        %2060 = vmatprep.subr.mxu0 %v1884
        %2061 = vmatpush1.msra.mxu0 %v1883
        %2062 = vmatprep.subr.mxu0 %v1886
        %2063 = vmatpush1.msra.mxu0 %v1885
        %2064 = vmatprep.subr.mxu0 %v1888
        %2065 = vmatpush1.msra.mxu0 %v1887
        %2066 = vmatprep.subr.mxu0 %v1890
        %2067 = vmatpush1.msra.mxu0 %v1889
        %2068 = vmatprep.subr.mxu0 %v1892
        %2069 = vmatpush1.msra.mxu0 %v1891
        %2070 = vmatprep.subr.mxu0 %v1894
        %2071 = vmatpush1.msra.mxu0 %v1893
        %2072 = vmatprep.subr.mxu0 %v1896
        %2073 = vmatpush1.msra.mxu0 %v1895
        %2074 = vmatprep.subr.mxu0 %v1898
        %2075 = vmatpush1.msra.mxu0 %v1897
        %2076 = vmatprep.subr.mxu0 %v1900
        %2077 = vmatpush1.msra.mxu0 %v1899
        %2078 = vmatprep.subr.mxu0 %v1902
        %2079 = vmatpush1.msra.mxu0 %v1901
        %2080 = vmatprep.subr.mxu0 %v1904
        %2081 = vmatpush1.msra.mxu0 %v1903
        %2082 = vmatprep.subr.mxu0 %v1906
        %2083 = vmatpush1.msra.mxu0 %v1905
        %2084 = vmatprep.subr.mxu0 %v1908
        %2085 = vmatpush1.msra.mxu0 %v1907
        %2086 = vmatprep.subr.mxu0 %v1910
        %2087 = vmatpush1.msra.mxu0 %v1909
        %2088 = vmatprep.subr.mxu0 %v1912
        %2089 = vmatpush1.msra.mxu0 %v1911
        %2090 = vmatprep.subr.mxu0 %v1914
        %2091 = vmatpush1.msra.mxu0 %v1913
        %2092 = vmatprep.subr.mxu0 %v1916
        %2093 = vmatpush1.msra.mxu0 %v1915
        %2094 = vmatprep.subr.mxu0 %v1918
        %2095 = vmatpush1.msra.mxu0 %v1917
        %2096 = vmatprep.subr.mxu0 %v1920
        %2097 = vmatpush1.msra.mxu0 %v1919
        %2098 = vmatprep.subr.mxu0 %v1922
        %2099 = vmatpush1.msra.mxu0 %v1921
        %2100 = vmatprep.subr.mxu0 %v1924
        %2101 = vmatpush1.msra.mxu0 %v1923
        %2102 = vmatprep.subr.mxu0 %v1926
        %2103 = vmatpush1.msra.mxu0 %v1925
        %2104 = vmatprep.subr.mxu0 %v1928
        %2105 = vmatpush1.msra.mxu0 %v1927
        %2106 = vmatprep.subr.mxu0 %v1930
        %2107 = vmatpush1.msra.mxu0 %v1929
        %2108 = vmatprep.subr.mxu0 %v1932
        %2109 = vmatpush1.msra.mxu0 %v1931
        %2110 = vmatprep.subr.mxu0 %v1934
        %2111 = vmatpush1.msra.mxu0 %v1933
        %2112 = vmatprep.subr.mxu0 %v1936
        %2113 = vmatpush1.msra.mxu0 %v1935
        %2114 = vmatprep.subr.mxu0 %v1938
        %2115 = vmatpush1.msra.mxu0 %v1937
        %2116 = vmatprep.mubr.f32.mxu0 %v1040
        %2117 = vmatmul.mubr.f32.gmra.mrb[0].mxu0 %v1039
        %v2118 = vpop.f32.mrb[0].mxu0
        %v2119 = vadd.f32 %v2006, %v2118
        %v2120 = vpop.f32.mrb[0].mxu0
        %v2121 = vadd.f32 %v2008, %v2120
        %2122 = vmatprep.mubr.f32.mxu0 %v1044
        %2123 = vmatmul.mubr.f32.gmra.mrb[0].mxu0 %v1043
        %v2124 = vpop.f32.mrb[0].mxu0
        %v2125 = vadd.f32 %v2012, %v2124
        %v2126 = vpop.f32.mrb[0].mxu0
        %v2127 = vadd.f32 %v2014, %v2126
        %2128 = vmatprep.mubr.f32.mxu0 %v1048
        %2129 = vmatmul.mubr.f32.gmra.mrb[0].mxu0 %v1047
        %v2130 = vpop.f32.mrb[0].mxu0
        %v2131 = vadd.f32 %v2018, %v2130
        %v2132 = vpop.f32.mrb[0].mxu0
        %v2133 = vadd.f32 %v2020, %v2132
        %2134 = vmatprep.mubr.f32.mxu0 %v1052
        %2135 = vmatmul.mubr.f32.gmra.mrb[0].mxu0 %v1051
        %v2136 = vpop.f32.mrb[0].mxu0
        %v2137 = vadd.f32 %v2024, %v2136
        %v2138 = vpop.f32.mrb[0].mxu0
        %v2139 = vadd.f32 %v2026, %v2138
        %2140 = vmatprep.mubr.f32.mxu0 %v1056
        %2141 = vmatmul.mubr.f32.gmra.mrb[0].mxu0 %v1055
        %v2142 = vpop.f32.mrb[0].mxu0
        %v2143 = vadd.f32 %v2030, %v2142
        %v2144 = vpop.f32.mrb[0].mxu0
        %v2145 = vadd.f32 %v2032, %v2144
        %2146 = vmatprep.mubr.f32.mxu0 %v1060
        %2147 = vmatmul.mubr.f32.gmra.mrb[0].mxu0 %v1059
        %v2148 = vpop.f32.mrb[0].mxu0
        %v2149 = vadd.f32 %v2036, %v2148
        %v2150 = vpop.f32.mrb[0].mxu0
        %v2151 = vadd.f32 %v2038, %v2150
        %2152 = vmatprep.mubr.f32.mxu0 %v1064
        %2153 = vmatmul.mubr.f32.gmra.mrb[0].mxu0 %v1063
        %v2154 = vpop.f32.mrb[0].mxu0
        %v2155 = vadd.f32 %v2042, %v2154
        %v2156 = vpop.f32.mrb[0].mxu0
        %v2157 = vadd.f32 %v2044, %v2156
        %2158 = vmatprep.mubr.f32.mxu0 %v1068
        %2159 = vmatmul.mubr.f32.gmra.mrb[0].mxu0 %v1067
        %v2160 = vpop.f32.mrb[0].mxu0
        %v2161 = vadd.f32 %v2048, %v2160
        %v2162 = vpop.f32.mrb[0].mxu0
        %v2163 = vadd.f32 %v2050, %v2162
        %2164 = vdwg.mxu0
        %v2165 = vadd.f32 %v1794, %v2119
        %v2166 = vadd.f32 %v1795, %v2121
        %v2167 = vadd.f32 %v1796, %v2125
        %v2168 = vadd.f32 %v1797, %v2127
        %v2169 = vadd.f32 %v1798, %v2131
        %v2170 = vadd.f32 %v1799, %v2133
        %v2171 = vadd.f32 %v1800, %v2137
        %v2172 = vadd.f32 %v1801, %v2139
        %v2173 = vadd.f32 %v1802, %v2143
        %v2174 = vadd.f32 %v1803, %v2145
        %v2175 = vadd.f32 %v1804, %v2149
        %v2176 = vadd.f32 %v1805, %v2151
        %v2177 = vadd.f32 %v1806, %v2155
        %v2178 = vadd.f32 %v1807, %v2157
        %v2179 = vadd.f32 %v1808, %v2161
        %v2180 = vadd.f32 %v1809, %v2163
        %v2181 = vld [vmem:[#allocation2] sm:$0xfe]
        %v2182 = vld [vmem:[#allocation2 + $0x8] sm:$0xfe]
        %v2183 = vld [vmem:[#allocation2 + $0x10] sm:$0xfe]
        %v2184 = vld [vmem:[#allocation2 + $0x18] sm:$0xfe]
        %v2185 = vld [vmem:[#allocation2 + $0x20] sm:$0x1]
        %v2186 = vld [vmem:[#allocation2 + $0x28] sm:$0x1]
        %v2187 = vld [vmem:[#allocation2 + $0x30] sm:$0x1]
        %v2188 = vld [vmem:[#allocation2 + $0x38] sm:$0x1]
        %v2189 = vld [vmem:[#allocation2 + $0x40] sm:$0xfe]
        %v2190 = vld [vmem:[#allocation2 + $0x48] sm:$0xfe]
        %v2191 = vld [vmem:[#allocation2 + $0x50] sm:$0xfe]
        %v2192 = vld [vmem:[#allocation2 + $0x58] sm:$0xfe]
        %v2193 = vld [vmem:[#allocation2 + $0x60] sm:$0x1]
        %v2194 = vld [vmem:[#allocation2 + $0x68] sm:$0x1]
        %v2195 = vld [vmem:[#allocation2 + $0x70] sm:$0x1]
        %v2196 = vld [vmem:[#allocation2 + $0x78] sm:$0x1]
        %v2197 = vld [vmem:[#allocation2 + $0x80] sm:$0xfe]
        %v2198 = vld [vmem:[#allocation2 + $0x88] sm:$0xfe]
        %v2199 = vld [vmem:[#allocation2 + $0x90] sm:$0xfe]
        %v2200 = vld [vmem:[#allocation2 + $0x98] sm:$0xfe]
        %v2201 = vld [vmem:[#allocation2 + $0xa0] sm:$0x1]
        %v2202 = vld [vmem:[#allocation2 + $0xa8] sm:$0x1]
        %v2203 = vld [vmem:[#allocation2 + $0xb0] sm:$0x1]
        %v2204 = vld [vmem:[#allocation2 + $0xb8] sm:$0x1]
        %v2205 = vld [vmem:[#allocation2 + $0xc0] sm:$0xfe]
        %v2206 = vld [vmem:[#allocation2 + $0xc8] sm:$0xfe]
        %v2207 = vld [vmem:[#allocation2 + $0xd0] sm:$0xfe]
        %v2208 = vld [vmem:[#allocation2 + $0xd8] sm:$0xfe]
        %v2209 = vld [vmem:[#allocation2 + $0xe0] sm:$0x1]
        %v2210 = vld [vmem:[#allocation2 + $0xe8] sm:$0x1]
        %v2211 = vld [vmem:[#allocation2 + $0xf0] sm:$0x1]
        %v2212 = vld [vmem:[#allocation2 + $0xf8] sm:$0x1]
        %v2213 = vld [vmem:[#allocation2 + $0x100] sm:$0xfe]
        %v2214 = vld [vmem:[#allocation2 + $0x108] sm:$0xfe]
        %v2215 = vld [vmem:[#allocation2 + $0x110] sm:$0xfe]
        %v2216 = vld [vmem:[#allocation2 + $0x118] sm:$0xfe]
        %v2217 = vld [vmem:[#allocation2 + $0x120] sm:$0x1]
        %v2218 = vld [vmem:[#allocation2 + $0x128] sm:$0x1]
        %v2219 = vld [vmem:[#allocation2 + $0x130] sm:$0x1]
        %v2220 = vld [vmem:[#allocation2 + $0x138] sm:$0x1]
        %v2221 = vld [vmem:[#allocation2 + $0x140] sm:$0xfe]
        %v2222 = vld [vmem:[#allocation2 + $0x148] sm:$0xfe]
        %v2223 = vld [vmem:[#allocation2 + $0x150] sm:$0xfe]
        %v2224 = vld [vmem:[#allocation2 + $0x158] sm:$0xfe]
        %v2225 = vld [vmem:[#allocation2 + $0x160] sm:$0x1]
        %v2226 = vld [vmem:[#allocation2 + $0x168] sm:$0x1]
        %v2227 = vld [vmem:[#allocation2 + $0x170] sm:$0x1]
        %v2228 = vld [vmem:[#allocation2 + $0x178] sm:$0x1]
        %v2229 = vld [vmem:[#allocation2 + $0x180] sm:$0xfe]
        %v2230 = vld [vmem:[#allocation2 + $0x188] sm:$0xfe]
        %v2231 = vld [vmem:[#allocation2 + $0x190] sm:$0xfe]
        %v2232 = vld [vmem:[#allocation2 + $0x198] sm:$0xfe]
        %v2233 = vld [vmem:[#allocation2 + $0x1a0] sm:$0x1]
        %v2234 = vld [vmem:[#allocation2 + $0x1a8] sm:$0x1]
        %v2235 = vld [vmem:[#allocation2 + $0x1b0] sm:$0x1]
        %v2236 = vld [vmem:[#allocation2 + $0x1b8] sm:$0x1]
        %v2237 = vld [vmem:[#allocation2 + $0x1c0] sm:$0xfe]
        %v2238 = vld [vmem:[#allocation2 + $0x1c8] sm:$0xfe]
        %v2239 = vld [vmem:[#allocation2 + $0x1d0] sm:$0xfe]
        %v2240 = vld [vmem:[#allocation2 + $0x1d8] sm:$0xfe]
        %v2241 = vld [vmem:[#allocation2 + $0x1e0] sm:$0x1]
        %v2242 = vld [vmem:[#allocation2 + $0x1e8] sm:$0x1]
        %v2243 = vld [vmem:[#allocation2 + $0x1f0] sm:$0x1]
        %v2244 = vld [vmem:[#allocation2 + $0x1f8] sm:$0x1]
        %v2245 = vld [vmem:[#allocation2 + $0x200] sm:$0xfe]
        %v2246 = vld [vmem:[#allocation2 + $0x208] sm:$0xfe]
        %v2247 = vld [vmem:[#allocation2 + $0x210] sm:$0xfe]
        %v2248 = vld [vmem:[#allocation2 + $0x218] sm:$0xfe]
        %v2249 = vld [vmem:[#allocation2 + $0x220] sm:$0x1]
        %v2250 = vld [vmem:[#allocation2 + $0x228] sm:$0x1]
        %v2251 = vld [vmem:[#allocation2 + $0x230] sm:$0x1]
        %v2252 = vld [vmem:[#allocation2 + $0x238] sm:$0x1]
        %v2253 = vld [vmem:[#allocation2 + $0x240] sm:$0xfe]
        %v2254 = vld [vmem:[#allocation2 + $0x248] sm:$0xfe]
        %v2255 = vld [vmem:[#allocation2 + $0x250] sm:$0xfe]
        %v2256 = vld [vmem:[#allocation2 + $0x258] sm:$0xfe]
        %v2257 = vld [vmem:[#allocation2 + $0x260] sm:$0x1]
        %v2258 = vld [vmem:[#allocation2 + $0x268] sm:$0x1]
        %v2259 = vld [vmem:[#allocation2 + $0x270] sm:$0x1]
        %v2260 = vld [vmem:[#allocation2 + $0x278] sm:$0x1]
        %vm2325 = vcmask 1046528
        %v2326 = vrot.slane %v2181, 1
        %v2327 = vrot.slane %v2185, 1
        %v2328 = vsel %vm2325, %v2326, %v2327
        %v2329 = vrot.slane %v2182, 1
        %v2330 = vrot.slane %v2186, 1
        %v2331 = vsel %vm2325, %v2329, %v2330
        %v2332 = vrot.slane %v2183, 1
        %v2333 = vrot.slane %v2187, 1
        %v2334 = vsel %vm2325, %v2332, %v2333
        %v2335 = vrot.slane %v2184, 1
        %v2336 = vrot.slane %v2188, 1
        %v2337 = vsel %vm2325, %v2335, %v2336
        %v2338 = vrot.slane %v2189, 1
        %v2339 = vrot.slane %v2193, 1
        %v2340 = vsel %vm2325, %v2338, %v2339
        %v2341 = vrot.slane %v2190, 1
        %v2342 = vrot.slane %v2194, 1
        %v2343 = vsel %vm2325, %v2341, %v2342
        %v2344 = vrot.slane %v2191, 1
        %v2345 = vrot.slane %v2195, 1
        %v2346 = vsel %vm2325, %v2344, %v2345
        %v2347 = vrot.slane %v2192, 1
        %v2348 = vrot.slane %v2196, 1
        %v2349 = vsel %vm2325, %v2347, %v2348
        %v2350 = vrot.slane %v2197, 1
        %v2351 = vrot.slane %v2201, 1
        %v2352 = vsel %vm2325, %v2350, %v2351
        %v2353 = vrot.slane %v2198, 1
        %v2354 = vrot.slane %v2202, 1
        %v2355 = vsel %vm2325, %v2353, %v2354
        %v2356 = vrot.slane %v2199, 1
        %v2357 = vrot.slane %v2203, 1
        %v2358 = vsel %vm2325, %v2356, %v2357
        %v2359 = vrot.slane %v2200, 1
        %v2360 = vrot.slane %v2204, 1
        %v2361 = vsel %vm2325, %v2359, %v2360
        %v2362 = vrot.slane %v2205, 1
        %v2363 = vrot.slane %v2209, 1
        %v2364 = vsel %vm2325, %v2362, %v2363
        %v2365 = vrot.slane %v2206, 1
        %v2366 = vrot.slane %v2210, 1
        %v2367 = vsel %vm2325, %v2365, %v2366
        %v2368 = vrot.slane %v2207, 1
        %v2369 = vrot.slane %v2211, 1
        %v2370 = vsel %vm2325, %v2368, %v2369
        %v2371 = vrot.slane %v2208, 1
        %v2372 = vrot.slane %v2212, 1
        %v2373 = vsel %vm2325, %v2371, %v2372
        %v2374 = vrot.slane %v2213, 1
        %v2375 = vrot.slane %v2217, 1
        %v2376 = vsel %vm2325, %v2374, %v2375
        %v2377 = vrot.slane %v2214, 1
        %v2378 = vrot.slane %v2218, 1
        %v2379 = vsel %vm2325, %v2377, %v2378
        %v2380 = vrot.slane %v2215, 1
        %v2381 = vrot.slane %v2219, 1
        %v2382 = vsel %vm2325, %v2380, %v2381
        %v2383 = vrot.slane %v2216, 1
        %v2384 = vrot.slane %v2220, 1
        %v2385 = vsel %vm2325, %v2383, %v2384
        %v2386 = vrot.slane %v2221, 1
        %v2387 = vrot.slane %v2225, 1
        %v2388 = vsel %vm2325, %v2386, %v2387
        %v2389 = vrot.slane %v2222, 1
        %v2390 = vrot.slane %v2226, 1
        %v2391 = vsel %vm2325, %v2389, %v2390
        %v2392 = vrot.slane %v2223, 1
        %v2393 = vrot.slane %v2227, 1
        %v2394 = vsel %vm2325, %v2392, %v2393
        %v2395 = vrot.slane %v2224, 1
        %v2396 = vrot.slane %v2228, 1
        %v2397 = vsel %vm2325, %v2395, %v2396
        %v2398 = vrot.slane %v2229, 1
        %v2399 = vrot.slane %v2233, 1
        %v2400 = vsel %vm2325, %v2398, %v2399
        %v2401 = vrot.slane %v2230, 1
        %v2402 = vrot.slane %v2234, 1
        %v2403 = vsel %vm2325, %v2401, %v2402
        %v2404 = vrot.slane %v2231, 1
        %v2405 = vrot.slane %v2235, 1
        %v2406 = vsel %vm2325, %v2404, %v2405
        %v2407 = vrot.slane %v2232, 1
        %v2408 = vrot.slane %v2236, 1
        %v2409 = vsel %vm2325, %v2407, %v2408
        %v2410 = vrot.slane %v2237, 1
        %v2411 = vrot.slane %v2241, 1
        %v2412 = vsel %vm2325, %v2410, %v2411
        %v2413 = vrot.slane %v2238, 1
        %v2414 = vrot.slane %v2242, 1
        %v2415 = vsel %vm2325, %v2413, %v2414
        %v2416 = vrot.slane %v2239, 1
        %v2417 = vrot.slane %v2243, 1
        %v2418 = vsel %vm2325, %v2416, %v2417
        %v2419 = vrot.slane %v2240, 1
        %v2420 = vrot.slane %v2244, 1
        %v2421 = vsel %vm2325, %v2419, %v2420
        %s2454 = scalar_lea.vmem [#allocation10], 1024
        %v2455 = vld [vmem:[%s2454] sm:$0xff]
        %v2456 = vld [vmem:[%s2454 + $0x8] sm:$0xff]
        %v2457 = vld [vmem:[%s2454 + $0x10] sm:$0xff]
        %v2458 = vld [vmem:[%s2454 + $0x18] sm:$0xff]
        %v2459 = vld [vmem:[%s2454 + $0x20] sm:$0xff]
        %v2460 = vld [vmem:[%s2454 + $0x28] sm:$0xff]
        %v2461 = vld [vmem:[%s2454 + $0x30] sm:$0xff]
        %v2462 = vld [vmem:[%s2454 + $0x38] sm:$0xff]
        %v2463 = vld [vmem:[%s2454 + $0x40] sm:$0xff]
        %v2464 = vld [vmem:[%s2454 + $0x48] sm:$0xff]
        %v2465 = vld [vmem:[%s2454 + $0x50] sm:$0xff]
        %v2466 = vld [vmem:[%s2454 + $0x58] sm:$0xff]
        %v2467 = vld [vmem:[%s2454 + $0x60] sm:$0xff]
        %v2468 = vld [vmem:[%s2454 + $0x68] sm:$0xff]
        %v2469 = vld [vmem:[%s2454 + $0x70] sm:$0xff]
        %v2470 = vld [vmem:[%s2454 + $0x78] sm:$0xff]
        %v2471 = vld [vmem:[%s2454 + $0x80] sm:$0xff]
        %v2472 = vld [vmem:[%s2454 + $0x88] sm:$0xff]
        %v2473 = vld [vmem:[%s2454 + $0x90] sm:$0xff]
        %v2474 = vld [vmem:[%s2454 + $0x98] sm:$0xff]
        %v2475 = vld [vmem:[%s2454 + $0xa0] sm:$0xff]
        %v2476 = vld [vmem:[%s2454 + $0xa8] sm:$0xff]
        %v2477 = vld [vmem:[%s2454 + $0xb0] sm:$0xff]
        %v2478 = vld [vmem:[%s2454 + $0xb8] sm:$0xff]
        %v2479 = vld [vmem:[%s2454 + $0xc0] sm:$0xff]
        %v2480 = vld [vmem:[%s2454 + $0xc8] sm:$0xff]
        %v2481 = vld [vmem:[%s2454 + $0xd0] sm:$0xff]
        %v2482 = vld [vmem:[%s2454 + $0xd8] sm:$0xff]
        %v2483 = vld [vmem:[%s2454 + $0xe0] sm:$0xff]
        %v2484 = vld [vmem:[%s2454 + $0xe8] sm:$0xff]
        %v2485 = vld [vmem:[%s2454 + $0xf0] sm:$0xff]
        %v2486 = vld [vmem:[%s2454 + $0xf8] sm:$0xff]
        %v2487 = vld [vmem:[%s2454 + $0x100] sm:$0xff]
        %v2488 = vld [vmem:[%s2454 + $0x108] sm:$0xff]
        %v2489 = vld [vmem:[%s2454 + $0x110] sm:$0xff]
        %v2490 = vld [vmem:[%s2454 + $0x118] sm:$0xff]
        %v2491 = vld [vmem:[%s2454 + $0x120] sm:$0xff]
        %v2492 = vld [vmem:[%s2454 + $0x128] sm:$0xff]
        %v2493 = vld [vmem:[%s2454 + $0x130] sm:$0xff]
        %v2494 = vld [vmem:[%s2454 + $0x138] sm:$0xff]
        %v2495 = vld [vmem:[%s2454 + $0x140] sm:$0xff]
        %v2496 = vld [vmem:[%s2454 + $0x148] sm:$0xff]
        %v2497 = vld [vmem:[%s2454 + $0x150] sm:$0xff]
        %v2498 = vld [vmem:[%s2454 + $0x158] sm:$0xff]
        %v2499 = vld [vmem:[%s2454 + $0x160] sm:$0xff]
        %v2500 = vld [vmem:[%s2454 + $0x168] sm:$0xff]
        %v2501 = vld [vmem:[%s2454 + $0x170] sm:$0xff]
        %v2502 = vld [vmem:[%s2454 + $0x178] sm:$0xff]
        %v2503 = vld [vmem:[%s2454 + $0x180] sm:$0xff]
        %v2504 = vld [vmem:[%s2454 + $0x188] sm:$0xff]
        %v2505 = vld [vmem:[%s2454 + $0x190] sm:$0xff]
        %v2506 = vld [vmem:[%s2454 + $0x198] sm:$0xff]
        %v2507 = vld [vmem:[%s2454 + $0x1a0] sm:$0xff]
        %v2508 = vld [vmem:[%s2454 + $0x1a8] sm:$0xff]
        %v2509 = vld [vmem:[%s2454 + $0x1b0] sm:$0xff]
        %v2510 = vld [vmem:[%s2454 + $0x1b8] sm:$0xff]
        %v2511 = vld [vmem:[%s2454 + $0x1c0] sm:$0xff]
        %v2512 = vld [vmem:[%s2454 + $0x1c8] sm:$0xff]
        %v2513 = vld [vmem:[%s2454 + $0x1d0] sm:$0xff]
        %v2514 = vld [vmem:[%s2454 + $0x1d8] sm:$0xff]
        %v2515 = vld [vmem:[%s2454 + $0x1e0] sm:$0xff]
        %v2516 = vld [vmem:[%s2454 + $0x1e8] sm:$0xff]
        %v2517 = vld [vmem:[%s2454 + $0x1f0] sm:$0xff]
        %v2518 = vld [vmem:[%s2454 + $0x1f8] sm:$0xff]
        %v2519 = vld [vmem:[%s2454 + $0x200] sm:$0xff]
        %v2520 = vld [vmem:[%s2454 + $0x208] sm:$0xff]
        %v2521 = vld [vmem:[%s2454 + $0x210] sm:$0xff]
        %v2522 = vld [vmem:[%s2454 + $0x218] sm:$0xff]
        %v2523 = vld [vmem:[%s2454 + $0x220] sm:$0xff]
        %v2524 = vld [vmem:[%s2454 + $0x228] sm:$0xff]
        %v2525 = vld [vmem:[%s2454 + $0x230] sm:$0xff]
        %v2526 = vld [vmem:[%s2454 + $0x238] sm:$0xff]
        %v2527 = vld [vmem:[%s2454 + $0x240] sm:$0xff]
        %v2528 = vld [vmem:[%s2454 + $0x248] sm:$0xff]
        %v2529 = vld [vmem:[%s2454 + $0x250] sm:$0xff]
        %v2530 = vld [vmem:[%s2454 + $0x258] sm:$0xff]
        %v2531 = vld [vmem:[%s2454 + $0x260] sm:$0xff]
        %v2532 = vld [vmem:[%s2454 + $0x268] sm:$0xff]
        %v2533 = vld [vmem:[%s2454 + $0x270] sm:$0xff]
        %v2534 = vld [vmem:[%s2454 + $0x278] sm:$0xff]
        %v2535 = vld [vmem:[%s2454 + $0x280] sm:$0xff]
        %v2536 = vld [vmem:[%s2454 + $0x288] sm:$0xff]
        %v2537 = vld [vmem:[%s2454 + $0x290] sm:$0xff]
        %v2538 = vld [vmem:[%s2454 + $0x298] sm:$0xff]
        %v2539 = vld [vmem:[%s2454 + $0x2a0] sm:$0xff]
        %v2540 = vld [vmem:[%s2454 + $0x2a8] sm:$0xff]
        %v2541 = vld [vmem:[%s2454 + $0x2b0] sm:$0xff]
        %v2542 = vld [vmem:[%s2454 + $0x2b8] sm:$0xff]
        %v2543 = vld [vmem:[%s2454 + $0x2c0] sm:$0xff]
        %v2544 = vld [vmem:[%s2454 + $0x2c8] sm:$0xff]
        %v2545 = vld [vmem:[%s2454 + $0x2d0] sm:$0xff]
        %v2546 = vld [vmem:[%s2454 + $0x2d8] sm:$0xff]
        %v2547 = vld [vmem:[%s2454 + $0x2e0] sm:$0xff]
        %v2548 = vld [vmem:[%s2454 + $0x2e8] sm:$0xff]
        %v2549 = vld [vmem:[%s2454 + $0x2f0] sm:$0xff]
        %v2550 = vld [vmem:[%s2454 + $0x2f8] sm:$0xff]
        %v2551 = vld [vmem:[%s2454 + $0x300] sm:$0xff]
        %v2552 = vld [vmem:[%s2454 + $0x308] sm:$0xff]
        %v2553 = vld [vmem:[%s2454 + $0x310] sm:$0xff]
        %v2554 = vld [vmem:[%s2454 + $0x318] sm:$0xff]
        %v2555 = vld [vmem:[%s2454 + $0x320] sm:$0xff]
        %v2556 = vld [vmem:[%s2454 + $0x328] sm:$0xff]
        %v2557 = vld [vmem:[%s2454 + $0x330] sm:$0xff]
        %v2558 = vld [vmem:[%s2454 + $0x338] sm:$0xff]
        %v2559 = vld [vmem:[%s2454 + $0x340] sm:$0xff]
        %v2560 = vld [vmem:[%s2454 + $0x348] sm:$0xff]
        %v2561 = vld [vmem:[%s2454 + $0x350] sm:$0xff]
        %v2562 = vld [vmem:[%s2454 + $0x358] sm:$0xff]
        %v2563 = vld [vmem:[%s2454 + $0x360] sm:$0xff]
        %v2564 = vld [vmem:[%s2454 + $0x368] sm:$0xff]
        %v2565 = vld [vmem:[%s2454 + $0x370] sm:$0xff]
        %v2566 = vld [vmem:[%s2454 + $0x378] sm:$0xff]
        %v2567 = vld [vmem:[%s2454 + $0x380] sm:$0xff]
        %v2568 = vld [vmem:[%s2454 + $0x388] sm:$0xff]
        %v2569 = vld [vmem:[%s2454 + $0x390] sm:$0xff]
        %v2570 = vld [vmem:[%s2454 + $0x398] sm:$0xff]
        %v2571 = vld [vmem:[%s2454 + $0x3a0] sm:$0xff]
        %v2572 = vld [vmem:[%s2454 + $0x3a8] sm:$0xff]
        %v2573 = vld [vmem:[%s2454 + $0x3b0] sm:$0xff]
        %v2574 = vld [vmem:[%s2454 + $0x3b8] sm:$0xff]
        %v2575 = vld [vmem:[%s2454 + $0x3c0] sm:$0xff]
        %v2576 = vld [vmem:[%s2454 + $0x3c8] sm:$0xff]
        %v2577 = vld [vmem:[%s2454 + $0x3d0] sm:$0xff]
        %v2578 = vld [vmem:[%s2454 + $0x3d8] sm:$0xff]
        %v2579 = vld [vmem:[%s2454 + $0x3e0] sm:$0xff]
        %v2580 = vld [vmem:[%s2454 + $0x3e8] sm:$0xff]
        %v2581 = vld [vmem:[%s2454 + $0x3f0] sm:$0xff]
        %v2582 = vld [vmem:[%s2454 + $0x3f8] sm:$0xff]
        %2583 = vmatprep.subr.mxu0 %v2456
        %2584 = vmatpush1.msra.mxu0 %v2455
        %2585 = vmatprep.subr.mxu0 %v2458
        %2586 = vmatpush1.msra.mxu0 %v2457
        %2587 = vmatprep.subr.mxu0 %v2460
        %2588 = vmatpush1.msra.mxu0 %v2459
        %2589 = vmatprep.subr.mxu0 %v2462
        %2590 = vmatpush1.msra.mxu0 %v2461
        %2591 = vmatprep.subr.mxu0 %v2464
        %2592 = vmatpush1.msra.mxu0 %v2463
        %2593 = vmatprep.subr.mxu0 %v2466
        %2594 = vmatpush1.msra.mxu0 %v2465
        %2595 = vmatprep.subr.mxu0 %v2468
        %2596 = vmatpush1.msra.mxu0 %v2467
        %2597 = vmatprep.subr.mxu0 %v2470
        %2598 = vmatpush1.msra.mxu0 %v2469
        %2599 = vmatprep.subr.mxu0 %v2472
        %2600 = vmatpush1.msra.mxu0 %v2471
        %2601 = vmatprep.subr.mxu0 %v2474
        %2602 = vmatpush1.msra.mxu0 %v2473
        %2603 = vmatprep.subr.mxu0 %v2476
        %2604 = vmatpush1.msra.mxu0 %v2475
        %2605 = vmatprep.subr.mxu0 %v2478
        %2606 = vmatpush1.msra.mxu0 %v2477
        %2607 = vmatprep.subr.mxu0 %v2480
        %2608 = vmatpush1.msra.mxu0 %v2479
        %2609 = vmatprep.subr.mxu0 %v2482
        %2610 = vmatpush1.msra.mxu0 %v2481
        %2611 = vmatprep.subr.mxu0 %v2484
        %2612 = vmatpush1.msra.mxu0 %v2483
        %2613 = vmatprep.subr.mxu0 %v2486
        %2614 = vmatpush1.msra.mxu0 %v2485
        %2615 = vmatprep.subr.mxu0 %v2488
        %2616 = vmatpush1.msra.mxu0 %v2487
        %2617 = vmatprep.subr.mxu0 %v2490
        %2618 = vmatpush1.msra.mxu0 %v2489
        %2619 = vmatprep.subr.mxu0 %v2492
        %2620 = vmatpush1.msra.mxu0 %v2491
        %2621 = vmatprep.subr.mxu0 %v2494
        %2622 = vmatpush1.msra.mxu0 %v2493
        %2623 = vmatprep.subr.mxu0 %v2496
        %2624 = vmatpush1.msra.mxu0 %v2495
        %2625 = vmatprep.subr.mxu0 %v2498
        %2626 = vmatpush1.msra.mxu0 %v2497
        %2627 = vmatprep.subr.mxu0 %v2500
        %2628 = vmatpush1.msra.mxu0 %v2499
        %2629 = vmatprep.subr.mxu0 %v2502
        %2630 = vmatpush1.msra.mxu0 %v2501
        %2631 = vmatprep.subr.mxu0 %v2504
        %2632 = vmatpush1.msra.mxu0 %v2503
        %2633 = vmatprep.subr.mxu0 %v2506
        %2634 = vmatpush1.msra.mxu0 %v2505
        %2635 = vmatprep.subr.mxu0 %v2508
        %2636 = vmatpush1.msra.mxu0 %v2507
        %2637 = vmatprep.subr.mxu0 %v2510
        %2638 = vmatpush1.msra.mxu0 %v2509
        %2639 = vmatprep.subr.mxu0 %v2512
        %2640 = vmatpush1.msra.mxu0 %v2511
        %2641 = vmatprep.subr.mxu0 %v2514
        %2642 = vmatpush1.msra.mxu0 %v2513
        %2643 = vmatprep.subr.mxu0 %v2516
        %2644 = vmatpush1.msra.mxu0 %v2515
        %2645 = vmatprep.subr.mxu0 %v2518
        %2646 = vmatpush1.msra.mxu0 %v2517
        %2647 = vmatprep.mubr.f32.mxu0 %v2331
        %2648 = vmatmul.mubr.f32.gmra.mrb[0].mxu0 %v2328
        %v2649 = vpop.f32.mrb[0].mxu0
        %v2650 = vadd.f32 0.0, %v2649
        %v2651 = vpop.f32.mrb[0].mxu0
        %v2652 = vadd.f32 0.0, %v2651
        %2653 = vmatprep.mubr.f32.mxu0 %v2343
        %2654 = vmatmul.mubr.f32.gmra.mrb[0].mxu0 %v2340
        %v2655 = vpop.f32.mrb[0].mxu0
        %v2656 = vadd.f32 0.0, %v2655
        %v2657 = vpop.f32.mrb[0].mxu0
        %v2658 = vadd.f32 0.0, %v2657
        %2659 = vmatprep.mubr.f32.mxu0 %v2355
        %2660 = vmatmul.mubr.f32.gmra.mrb[0].mxu0 %v2352
        %v2661 = vpop.f32.mrb[0].mxu0
        %v2662 = vadd.f32 0.0, %v2661
        %v2663 = vpop.f32.mrb[0].mxu0
        %v2664 = vadd.f32 0.0, %v2663
        %2665 = vmatprep.mubr.f32.mxu0 %v2367
        %2666 = vmatmul.mubr.f32.gmra.mrb[0].mxu0 %v2364
        %v2667 = vpop.f32.mrb[0].mxu0
        %v2668 = vadd.f32 0.0, %v2667
        %v2669 = vpop.f32.mrb[0].mxu0
        %v2670 = vadd.f32 0.0, %v2669
        %2671 = vmatprep.mubr.f32.mxu0 %v2379
        %2672 = vmatmul.mubr.f32.gmra.mrb[0].mxu0 %v2376
        %v2673 = vpop.f32.mrb[0].mxu0
        %v2674 = vadd.f32 0.0, %v2673
        %v2675 = vpop.f32.mrb[0].mxu0
        %v2676 = vadd.f32 0.0, %v2675
        %2677 = vmatprep.mubr.f32.mxu0 %v2391
        %2678 = vmatmul.mubr.f32.gmra.mrb[0].mxu0 %v2388
        %v2679 = vpop.f32.mrb[0].mxu0
        %v2680 = vadd.f32 0.0, %v2679
        %v2681 = vpop.f32.mrb[0].mxu0
        %v2682 = vadd.f32 0.0, %v2681
        %2683 = vmatprep.mubr.f32.mxu0 %v2403
        %2684 = vmatmul.mubr.f32.gmra.mrb[0].mxu0 %v2400
        %v2685 = vpop.f32.mrb[0].mxu0
        %v2686 = vadd.f32 0.0, %v2685
        %v2687 = vpop.f32.mrb[0].mxu0
        %v2688 = vadd.f32 0.0, %v2687
        %2689 = vmatprep.mubr.f32.mxu0 %v2415
        %2690 = vmatmul.mubr.f32.gmra.mrb[0].mxu0 %v2412
        %v2691 = vpop.f32.mrb[0].mxu0
        %v2692 = vadd.f32 0.0, %v2691
        %v2693 = vpop.f32.mrb[0].mxu0
        %v2694 = vadd.f32 0.0, %v2693
        %2695 = vdwg.mxu0
        %2696 = vmatprep.subr.mxu0 %v2520
        %2697 = vmatpush1.msra.mxu0 %v2519
        %2698 = vmatprep.subr.mxu0 %v2522
        %2699 = vmatpush1.msra.mxu0 %v2521
        %2700 = vmatprep.subr.mxu0 %v2524
        %2701 = vmatpush1.msra.mxu0 %v2523
        %2702 = vmatprep.subr.mxu0 %v2526
        %2703 = vmatpush1.msra.mxu0 %v2525
        %2704 = vmatprep.subr.mxu0 %v2528
        %2705 = vmatpush1.msra.mxu0 %v2527
        %2706 = vmatprep.subr.mxu0 %v2530
        %2707 = vmatpush1.msra.mxu0 %v2529
        %2708 = vmatprep.subr.mxu0 %v2532
        %2709 = vmatpush1.msra.mxu0 %v2531
        %2710 = vmatprep.subr.mxu0 %v2534
        %2711 = vmatpush1.msra.mxu0 %v2533
        %2712 = vmatprep.subr.mxu0 %v2536
        %2713 = vmatpush1.msra.mxu0 %v2535
        %2714 = vmatprep.subr.mxu0 %v2538
        %2715 = vmatpush1.msra.mxu0 %v2537
        %2716 = vmatprep.subr.mxu0 %v2540
        %2717 = vmatpush1.msra.mxu0 %v2539
        %2718 = vmatprep.subr.mxu0 %v2542
        %2719 = vmatpush1.msra.mxu0 %v2541
        %2720 = vmatprep.subr.mxu0 %v2544
        %2721 = vmatpush1.msra.mxu0 %v2543
        %2722 = vmatprep.subr.mxu0 %v2546
        %2723 = vmatpush1.msra.mxu0 %v2545
        %2724 = vmatprep.subr.mxu0 %v2548
        %2725 = vmatpush1.msra.mxu0 %v2547
        %2726 = vmatprep.subr.mxu0 %v2550
        %2727 = vmatpush1.msra.mxu0 %v2549
        %2728 = vmatprep.subr.mxu0 %v2552
        %2729 = vmatpush1.msra.mxu0 %v2551
        %2730 = vmatprep.subr.mxu0 %v2554
        %2731 = vmatpush1.msra.mxu0 %v2553
        %2732 = vmatprep.subr.mxu0 %v2556
        %2733 = vmatpush1.msra.mxu0 %v2555
        %2734 = vmatprep.subr.mxu0 %v2558
        %2735 = vmatpush1.msra.mxu0 %v2557
        %2736 = vmatprep.subr.mxu0 %v2560
        %2737 = vmatpush1.msra.mxu0 %v2559
        %2738 = vmatprep.subr.mxu0 %v2562
        %2739 = vmatpush1.msra.mxu0 %v2561
        %2740 = vmatprep.subr.mxu0 %v2564
        %2741 = vmatpush1.msra.mxu0 %v2563
        %2742 = vmatprep.subr.mxu0 %v2566
        %2743 = vmatpush1.msra.mxu0 %v2565
        %2744 = vmatprep.subr.mxu0 %v2568
        %2745 = vmatpush1.msra.mxu0 %v2567
        %2746 = vmatprep.subr.mxu0 %v2570
        %2747 = vmatpush1.msra.mxu0 %v2569
        %2748 = vmatprep.subr.mxu0 %v2572
        %2749 = vmatpush1.msra.mxu0 %v2571
        %2750 = vmatprep.subr.mxu0 %v2574
        %2751 = vmatpush1.msra.mxu0 %v2573
        %2752 = vmatprep.subr.mxu0 %v2576
        %2753 = vmatpush1.msra.mxu0 %v2575
        %2754 = vmatprep.subr.mxu0 %v2578
        %2755 = vmatpush1.msra.mxu0 %v2577
        %2756 = vmatprep.subr.mxu0 %v2580
        %2757 = vmatpush1.msra.mxu0 %v2579
        %2758 = vmatprep.subr.mxu0 %v2582
        %2759 = vmatpush1.msra.mxu0 %v2581
        %2760 = vmatprep.mubr.f32.mxu0 %v2337
        %2761 = vmatmul.mubr.f32.gmra.mrb[0].mxu0 %v2334
        %v2762 = vpop.f32.mrb[0].mxu0
        %v2763 = vadd.f32 %v2650, %v2762
        %v2764 = vpop.f32.mrb[0].mxu0
        %v2765 = vadd.f32 %v2652, %v2764
        %2766 = vmatprep.mubr.f32.mxu0 %v2349
        %2767 = vmatmul.mubr.f32.gmra.mrb[0].mxu0 %v2346
        %v2768 = vpop.f32.mrb[0].mxu0
        %v2769 = vadd.f32 %v2656, %v2768
        %v2770 = vpop.f32.mrb[0].mxu0
        %v2771 = vadd.f32 %v2658, %v2770
        %2772 = vmatprep.mubr.f32.mxu0 %v2361
        %2773 = vmatmul.mubr.f32.gmra.mrb[0].mxu0 %v2358
        %v2774 = vpop.f32.mrb[0].mxu0
        %v2775 = vadd.f32 %v2662, %v2774
        %v2776 = vpop.f32.mrb[0].mxu0
        %v2777 = vadd.f32 %v2664, %v2776
        %2778 = vmatprep.mubr.f32.mxu0 %v2373
        %2779 = vmatmul.mubr.f32.gmra.mrb[0].mxu0 %v2370
        %v2780 = vpop.f32.mrb[0].mxu0
        %v2781 = vadd.f32 %v2668, %v2780
        %v2782 = vpop.f32.mrb[0].mxu0
        %v2783 = vadd.f32 %v2670, %v2782
        %2784 = vmatprep.mubr.f32.mxu0 %v2385
        %2785 = vmatmul.mubr.f32.gmra.mrb[0].mxu0 %v2382
        %v2786 = vpop.f32.mrb[0].mxu0
        %v2787 = vadd.f32 %v2674, %v2786
        %v2788 = vpop.f32.mrb[0].mxu0
        %v2789 = vadd.f32 %v2676, %v2788
        %2790 = vmatprep.mubr.f32.mxu0 %v2397
        %2791 = vmatmul.mubr.f32.gmra.mrb[0].mxu0 %v2394
        %v2792 = vpop.f32.mrb[0].mxu0
        %v2793 = vadd.f32 %v2680, %v2792
        %v2794 = vpop.f32.mrb[0].mxu0
        %v2795 = vadd.f32 %v2682, %v2794
        %2796 = vmatprep.mubr.f32.mxu0 %v2409
        %2797 = vmatmul.mubr.f32.gmra.mrb[0].mxu0 %v2406
        %v2798 = vpop.f32.mrb[0].mxu0
        %v2799 = vadd.f32 %v2686, %v2798
        %v2800 = vpop.f32.mrb[0].mxu0
        %v2801 = vadd.f32 %v2688, %v2800
        %2802 = vmatprep.mubr.f32.mxu0 %v2421
        %2803 = vmatmul.mubr.f32.gmra.mrb[0].mxu0 %v2418
        %v2804 = vpop.f32.mrb[0].mxu0
        %v2805 = vadd.f32 %v2692, %v2804
        %v2806 = vpop.f32.mrb[0].mxu0
        %v2807 = vadd.f32 %v2694, %v2806
        %2808 = vdwg.mxu0
        %v2809 = vadd.f32 %v2165, %v2763
        %v2810 = vadd.f32 %v2166, %v2765
        %v2811 = vadd.f32 %v2167, %v2769
        %v2812 = vadd.f32 %v2168, %v2771
        %v2813 = vadd.f32 %v2169, %v2775
        %v2814 = vadd.f32 %v2170, %v2777
        %v2815 = vadd.f32 %v2171, %v2781
        %v2816 = vadd.f32 %v2172, %v2783
        %v2817 = vadd.f32 %v2173, %v2787
        %v2818 = vadd.f32 %v2174, %v2789
        %v2819 = vadd.f32 %v2175, %v2793
        %v2820 = vadd.f32 %v2176, %v2795
        %v2821 = vadd.f32 %v2177, %v2799
        %v2822 = vadd.f32 %v2178, %v2801
        %v2823 = vadd.f32 %v2179, %v2805
        %v2824 = vadd.f32 %v2180, %v2807
        %v2833 = vrot.slane %v2245, 1
        %v2834 = vrot.slane %v2249, 1
        %v2835 = vsel %vm2325, %v2833, %v2834
        %v2836 = vrot.slane %v2246, 1
        %v2837 = vrot.slane %v2250, 1
        %v2838 = vsel %vm2325, %v2836, %v2837
        %v2839 = vrot.slane %v2247, 1
        %v2840 = vrot.slane %v2251, 1
        %v2841 = vsel %vm2325, %v2839, %v2840
        %v2842 = vrot.slane %v2248, 1
        %v2843 = vrot.slane %v2252, 1
        %v2844 = vsel %vm2325, %v2842, %v2843
        %s2849 = scalar_lea.vmem [#allocation10], 4096
        %v2850 = vld [vmem:[%s2849] sm:$0xff]
        %v2851 = vld [vmem:[%s2849 + $0x8] sm:$0xff]
        %v2852 = vld [vmem:[%s2849 + $0x10] sm:$0xff]
        %v2853 = vld [vmem:[%s2849 + $0x18] sm:$0xff]
        %v2854 = vld [vmem:[%s2849 + $0x20] sm:$0xff]
        %v2855 = vld [vmem:[%s2849 + $0x28] sm:$0xff]
        %v2856 = vld [vmem:[%s2849 + $0x30] sm:$0xff]
        %v2857 = vld [vmem:[%s2849 + $0x38] sm:$0xff]
        %v2858 = vld [vmem:[%s2849 + $0x40] sm:$0xff]
        %v2859 = vld [vmem:[%s2849 + $0x48] sm:$0xff]
        %v2860 = vld [vmem:[%s2849 + $0x50] sm:$0xff]
        %v2861 = vld [vmem:[%s2849 + $0x58] sm:$0xff]
        %v2862 = vld [vmem:[%s2849 + $0x60] sm:$0xff]
        %v2863 = vld [vmem:[%s2849 + $0x68] sm:$0xff]
        %v2864 = vld [vmem:[%s2849 + $0x70] sm:$0xff]
        %v2865 = vld [vmem:[%s2849 + $0x78] sm:$0xff]
        %v2866 = vld [vmem:[%s2849 + $0x80] sm:$0xff]
        %v2867 = vld [vmem:[%s2849 + $0x88] sm:$0xff]
        %v2868 = vld [vmem:[%s2849 + $0x90] sm:$0xff]
        %v2869 = vld [vmem:[%s2849 + $0x98] sm:$0xff]
        %v2870 = vld [vmem:[%s2849 + $0xa0] sm:$0xff]
        %v2871 = vld [vmem:[%s2849 + $0xa8] sm:$0xff]
        %v2872 = vld [vmem:[%s2849 + $0xb0] sm:$0xff]
        %v2873 = vld [vmem:[%s2849 + $0xb8] sm:$0xff]
        %v2874 = vld [vmem:[%s2849 + $0xc0] sm:$0xff]
        %v2875 = vld [vmem:[%s2849 + $0xc8] sm:$0xff]
        %v2876 = vld [vmem:[%s2849 + $0xd0] sm:$0xff]
        %v2877 = vld [vmem:[%s2849 + $0xd8] sm:$0xff]
        %v2878 = vld [vmem:[%s2849 + $0xe0] sm:$0xff]
        %v2879 = vld [vmem:[%s2849 + $0xe8] sm:$0xff]
        %v2880 = vld [vmem:[%s2849 + $0xf0] sm:$0xff]
        %v2881 = vld [vmem:[%s2849 + $0xf8] sm:$0xff]
        %v2882 = vld [vmem:[%s2849 + $0x100] sm:$0xff]
        %v2883 = vld [vmem:[%s2849 + $0x108] sm:$0xff]
        %v2884 = vld [vmem:[%s2849 + $0x110] sm:$0xff]
        %v2885 = vld [vmem:[%s2849 + $0x118] sm:$0xff]
        %v2886 = vld [vmem:[%s2849 + $0x120] sm:$0xff]
        %v2887 = vld [vmem:[%s2849 + $0x128] sm:$0xff]
        %v2888 = vld [vmem:[%s2849 + $0x130] sm:$0xff]
        %v2889 = vld [vmem:[%s2849 + $0x138] sm:$0xff]
        %v2890 = vld [vmem:[%s2849 + $0x140] sm:$0xff]
        %v2891 = vld [vmem:[%s2849 + $0x148] sm:$0xff]
        %v2892 = vld [vmem:[%s2849 + $0x150] sm:$0xff]
        %v2893 = vld [vmem:[%s2849 + $0x158] sm:$0xff]
        %v2894 = vld [vmem:[%s2849 + $0x160] sm:$0xff]
        %v2895 = vld [vmem:[%s2849 + $0x168] sm:$0xff]
        %v2896 = vld [vmem:[%s2849 + $0x170] sm:$0xff]
        %v2897 = vld [vmem:[%s2849 + $0x178] sm:$0xff]
        %v2898 = vld [vmem:[%s2849 + $0x180] sm:$0xff]
        %v2899 = vld [vmem:[%s2849 + $0x188] sm:$0xff]
        %v2900 = vld [vmem:[%s2849 + $0x190] sm:$0xff]
        %v2901 = vld [vmem:[%s2849 + $0x198] sm:$0xff]
        %v2902 = vld [vmem:[%s2849 + $0x1a0] sm:$0xff]
        %v2903 = vld [vmem:[%s2849 + $0x1a8] sm:$0xff]
        %v2904 = vld [vmem:[%s2849 + $0x1b0] sm:$0xff]
        %v2905 = vld [vmem:[%s2849 + $0x1b8] sm:$0xff]
        %v2906 = vld [vmem:[%s2849 + $0x1c0] sm:$0xff]
        %v2907 = vld [vmem:[%s2849 + $0x1c8] sm:$0xff]
        %v2908 = vld [vmem:[%s2849 + $0x1d0] sm:$0xff]
        %v2909 = vld [vmem:[%s2849 + $0x1d8] sm:$0xff]
        %v2910 = vld [vmem:[%s2849 + $0x1e0] sm:$0xff]
        %v2911 = vld [vmem:[%s2849 + $0x1e8] sm:$0xff]
        %v2912 = vld [vmem:[%s2849 + $0x1f0] sm:$0xff]
        %v2913 = vld [vmem:[%s2849 + $0x1f8] sm:$0xff]
        %v2914 = vld [vmem:[%s2849 + $0x200] sm:$0xff]
        %v2915 = vld [vmem:[%s2849 + $0x208] sm:$0xff]
        %v2916 = vld [vmem:[%s2849 + $0x210] sm:$0xff]
        %v2917 = vld [vmem:[%s2849 + $0x218] sm:$0xff]
        %v2918 = vld [vmem:[%s2849 + $0x220] sm:$0xff]
        %v2919 = vld [vmem:[%s2849 + $0x228] sm:$0xff]
        %v2920 = vld [vmem:[%s2849 + $0x230] sm:$0xff]
        %v2921 = vld [vmem:[%s2849 + $0x238] sm:$0xff]
        %v2922 = vld [vmem:[%s2849 + $0x240] sm:$0xff]
        %v2923 = vld [vmem:[%s2849 + $0x248] sm:$0xff]
        %v2924 = vld [vmem:[%s2849 + $0x250] sm:$0xff]
        %v2925 = vld [vmem:[%s2849 + $0x258] sm:$0xff]
        %v2926 = vld [vmem:[%s2849 + $0x260] sm:$0xff]
        %v2927 = vld [vmem:[%s2849 + $0x268] sm:$0xff]
        %v2928 = vld [vmem:[%s2849 + $0x270] sm:$0xff]
        %v2929 = vld [vmem:[%s2849 + $0x278] sm:$0xff]
        %v2930 = vld [vmem:[%s2849 + $0x280] sm:$0xff]
        %v2931 = vld [vmem:[%s2849 + $0x288] sm:$0xff]
        %v2932 = vld [vmem:[%s2849 + $0x290] sm:$0xff]
        %v2933 = vld [vmem:[%s2849 + $0x298] sm:$0xff]
        %v2934 = vld [vmem:[%s2849 + $0x2a0] sm:$0xff]
        %v2935 = vld [vmem:[%s2849 + $0x2a8] sm:$0xff]
        %v2936 = vld [vmem:[%s2849 + $0x2b0] sm:$0xff]
        %v2937 = vld [vmem:[%s2849 + $0x2b8] sm:$0xff]
        %v2938 = vld [vmem:[%s2849 + $0x2c0] sm:$0xff]
        %v2939 = vld [vmem:[%s2849 + $0x2c8] sm:$0xff]
        %v2940 = vld [vmem:[%s2849 + $0x2d0] sm:$0xff]
        %v2941 = vld [vmem:[%s2849 + $0x2d8] sm:$0xff]
        %v2942 = vld [vmem:[%s2849 + $0x2e0] sm:$0xff]
        %v2943 = vld [vmem:[%s2849 + $0x2e8] sm:$0xff]
        %v2944 = vld [vmem:[%s2849 + $0x2f0] sm:$0xff]
        %v2945 = vld [vmem:[%s2849 + $0x2f8] sm:$0xff]
        %v2946 = vld [vmem:[%s2849 + $0x300] sm:$0xff]
        %v2947 = vld [vmem:[%s2849 + $0x308] sm:$0xff]
        %v2948 = vld [vmem:[%s2849 + $0x310] sm:$0xff]
        %v2949 = vld [vmem:[%s2849 + $0x318] sm:$0xff]
        %v2950 = vld [vmem:[%s2849 + $0x320] sm:$0xff]
        %v2951 = vld [vmem:[%s2849 + $0x328] sm:$0xff]
        %v2952 = vld [vmem:[%s2849 + $0x330] sm:$0xff]
        %v2953 = vld [vmem:[%s2849 + $0x338] sm:$0xff]
        %v2954 = vld [vmem:[%s2849 + $0x340] sm:$0xff]
        %v2955 = vld [vmem:[%s2849 + $0x348] sm:$0xff]
        %v2956 = vld [vmem:[%s2849 + $0x350] sm:$0xff]
        %v2957 = vld [vmem:[%s2849 + $0x358] sm:$0xff]
        %v2958 = vld [vmem:[%s2849 + $0x360] sm:$0xff]
        %v2959 = vld [vmem:[%s2849 + $0x368] sm:$0xff]
        %v2960 = vld [vmem:[%s2849 + $0x370] sm:$0xff]
        %v2961 = vld [vmem:[%s2849 + $0x378] sm:$0xff]
        %v2962 = vld [vmem:[%s2849 + $0x380] sm:$0xff]
        %v2963 = vld [vmem:[%s2849 + $0x388] sm:$0xff]
        %v2964 = vld [vmem:[%s2849 + $0x390] sm:$0xff]
        %v2965 = vld [vmem:[%s2849 + $0x398] sm:$0xff]
        %v2966 = vld [vmem:[%s2849 + $0x3a0] sm:$0xff]
        %v2967 = vld [vmem:[%s2849 + $0x3a8] sm:$0xff]
        %v2968 = vld [vmem:[%s2849 + $0x3b0] sm:$0xff]
        %v2969 = vld [vmem:[%s2849 + $0x3b8] sm:$0xff]
        %v2970 = vld [vmem:[%s2849 + $0x3c0] sm:$0xff]
        %v2971 = vld [vmem:[%s2849 + $0x3c8] sm:$0xff]
        %v2972 = vld [vmem:[%s2849 + $0x3d0] sm:$0xff]
        %v2973 = vld [vmem:[%s2849 + $0x3d8] sm:$0xff]
        %v2974 = vld [vmem:[%s2849 + $0x3e0] sm:$0xff]
        %v2975 = vld [vmem:[%s2849 + $0x3e8] sm:$0xff]
        %v2976 = vld [vmem:[%s2849 + $0x3f0] sm:$0xff]
        %v2977 = vld [vmem:[%s2849 + $0x3f8] sm:$0xff]
        %2978 = vmatprep.subr.mxu0 %v2851
        %2979 = vmatpush1.msra.mxu0 %v2850
        %2980 = vmatprep.subr.mxu0 %v2853
        %2981 = vmatpush1.msra.mxu0 %v2852
        %2982 = vmatprep.subr.mxu0 %v2855
        %2983 = vmatpush1.msra.mxu0 %v2854
        %2984 = vmatprep.subr.mxu0 %v2857
        %2985 = vmatpush1.msra.mxu0 %v2856
        %2986 = vmatprep.subr.mxu0 %v2859
        %2987 = vmatpush1.msra.mxu0 %v2858
        %2988 = vmatprep.subr.mxu0 %v2861
        %2989 = vmatpush1.msra.mxu0 %v2860
        %2990 = vmatprep.subr.mxu0 %v2863
        %2991 = vmatpush1.msra.mxu0 %v2862
        %2992 = vmatprep.subr.mxu0 %v2865
        %2993 = vmatpush1.msra.mxu0 %v2864
        %2994 = vmatprep.subr.mxu0 %v2867
        %2995 = vmatpush1.msra.mxu0 %v2866
        %2996 = vmatprep.subr.mxu0 %v2869
        %2997 = vmatpush1.msra.mxu0 %v2868
        %2998 = vmatprep.subr.mxu0 %v2871
        %2999 = vmatpush1.msra.mxu0 %v2870
        %3000 = vmatprep.subr.mxu0 %v2873
        %3001 = vmatpush1.msra.mxu0 %v2872
        %3002 = vmatprep.subr.mxu0 %v2875
        %3003 = vmatpush1.msra.mxu0 %v2874
        %3004 = vmatprep.subr.mxu0 %v2877
        %3005 = vmatpush1.msra.mxu0 %v2876
        %3006 = vmatprep.subr.mxu0 %v2879
        %3007 = vmatpush1.msra.mxu0 %v2878
        %3008 = vmatprep.subr.mxu0 %v2881
        %3009 = vmatpush1.msra.mxu0 %v2880
        %3010 = vmatprep.subr.mxu0 %v2883
        %3011 = vmatpush1.msra.mxu0 %v2882
        %3012 = vmatprep.subr.mxu0 %v2885
        %3013 = vmatpush1.msra.mxu0 %v2884
        %3014 = vmatprep.subr.mxu0 %v2887
        %3015 = vmatpush1.msra.mxu0 %v2886
        %3016 = vmatprep.subr.mxu0 %v2889
        %3017 = vmatpush1.msra.mxu0 %v2888
        %3018 = vmatprep.subr.mxu0 %v2891
        %3019 = vmatpush1.msra.mxu0 %v2890
        %3020 = vmatprep.subr.mxu0 %v2893
        %3021 = vmatpush1.msra.mxu0 %v2892
        %3022 = vmatprep.subr.mxu0 %v2895
        %3023 = vmatpush1.msra.mxu0 %v2894
        %3024 = vmatprep.subr.mxu0 %v2897
        %3025 = vmatpush1.msra.mxu0 %v2896
        %3026 = vmatprep.subr.mxu0 %v2899
        %3027 = vmatpush1.msra.mxu0 %v2898
        %3028 = vmatprep.subr.mxu0 %v2901
        %3029 = vmatpush1.msra.mxu0 %v2900
        %3030 = vmatprep.subr.mxu0 %v2903
        %3031 = vmatpush1.msra.mxu0 %v2902
        %3032 = vmatprep.subr.mxu0 %v2905
        %3033 = vmatpush1.msra.mxu0 %v2904
        %3034 = vmatprep.subr.mxu0 %v2907
        %3035 = vmatpush1.msra.mxu0 %v2906
        %3036 = vmatprep.subr.mxu0 %v2909
        %3037 = vmatpush1.msra.mxu0 %v2908
        %3038 = vmatprep.subr.mxu0 %v2911
        %3039 = vmatpush1.msra.mxu0 %v2910
        %3040 = vmatprep.subr.mxu0 %v2913
        %3041 = vmatpush1.msra.mxu0 %v2912
        %3042 = vmatprep.mubr.f32.mxu0 %v2343
        %3043 = vmatmul.mubr.f32.gmra.mrb[0].mxu0 %v2340
        %v3044 = vpop.f32.mrb[0].mxu0
        %v3045 = vadd.f32 0.0, %v3044
        %v3046 = vpop.f32.mrb[0].mxu0
        %v3047 = vadd.f32 0.0, %v3046
        %3048 = vmatprep.mubr.f32.mxu0 %v2355
        %3049 = vmatmul.mubr.f32.gmra.mrb[0].mxu0 %v2352
        %v3050 = vpop.f32.mrb[0].mxu0
        %v3051 = vadd.f32 0.0, %v3050
        %v3052 = vpop.f32.mrb[0].mxu0
        %v3053 = vadd.f32 0.0, %v3052
        %3054 = vmatprep.mubr.f32.mxu0 %v2367
        %3055 = vmatmul.mubr.f32.gmra.mrb[0].mxu0 %v2364
        %v3056 = vpop.f32.mrb[0].mxu0
        %v3057 = vadd.f32 0.0, %v3056
        %v3058 = vpop.f32.mrb[0].mxu0
        %v3059 = vadd.f32 0.0, %v3058
        %3060 = vmatprep.mubr.f32.mxu0 %v2379
        %3061 = vmatmul.mubr.f32.gmra.mrb[0].mxu0 %v2376
        %v3062 = vpop.f32.mrb[0].mxu0
        %v3063 = vadd.f32 0.0, %v3062
        %v3064 = vpop.f32.mrb[0].mxu0
        %v3065 = vadd.f32 0.0, %v3064
        %3066 = vmatprep.mubr.f32.mxu0 %v2391
        %3067 = vmatmul.mubr.f32.gmra.mrb[0].mxu0 %v2388
        %v3068 = vpop.f32.mrb[0].mxu0
        %v3069 = vadd.f32 0.0, %v3068
        %v3070 = vpop.f32.mrb[0].mxu0
        %v3071 = vadd.f32 0.0, %v3070
        %3072 = vmatprep.mubr.f32.mxu0 %v2403
        %3073 = vmatmul.mubr.f32.gmra.mrb[0].mxu0 %v2400
        %v3074 = vpop.f32.mrb[0].mxu0
        %v3075 = vadd.f32 0.0, %v3074
        %v3076 = vpop.f32.mrb[0].mxu0
        %v3077 = vadd.f32 0.0, %v3076
        %3078 = vmatprep.mubr.f32.mxu0 %v2415
        %3079 = vmatmul.mubr.f32.gmra.mrb[0].mxu0 %v2412
        %v3080 = vpop.f32.mrb[0].mxu0
        %v3081 = vadd.f32 0.0, %v3080
        %v3082 = vpop.f32.mrb[0].mxu0
        %v3083 = vadd.f32 0.0, %v3082
        %3084 = vmatprep.mubr.f32.mxu0 %v2838
        %3085 = vmatmul.mubr.f32.gmra.mrb[0].mxu0 %v2835
        %v3086 = vpop.f32.mrb[0].mxu0
        %v3087 = vadd.f32 0.0, %v3086
        %v3088 = vpop.f32.mrb[0].mxu0
        %v3089 = vadd.f32 0.0, %v3088
        %3090 = vdwg.mxu0
        %3091 = vmatprep.subr.mxu0 %v2915
        %3092 = vmatpush1.msra.mxu0 %v2914
        %3093 = vmatprep.subr.mxu0 %v2917
        %3094 = vmatpush1.msra.mxu0 %v2916
        %3095 = vmatprep.subr.mxu0 %v2919
        %3096 = vmatpush1.msra.mxu0 %v2918
        %3097 = vmatprep.subr.mxu0 %v2921
        %3098 = vmatpush1.msra.mxu0 %v2920
        %3099 = vmatprep.subr.mxu0 %v2923
        %3100 = vmatpush1.msra.mxu0 %v2922
        %3101 = vmatprep.subr.mxu0 %v2925
        %3102 = vmatpush1.msra.mxu0 %v2924
        %3103 = vmatprep.subr.mxu0 %v2927
        %3104 = vmatpush1.msra.mxu0 %v2926
        %3105 = vmatprep.subr.mxu0 %v2929
        %3106 = vmatpush1.msra.mxu0 %v2928
        %3107 = vmatprep.subr.mxu0 %v2931
        %3108 = vmatpush1.msra.mxu0 %v2930
        %3109 = vmatprep.subr.mxu0 %v2933
        %3110 = vmatpush1.msra.mxu0 %v2932
        %3111 = vmatprep.subr.mxu0 %v2935
        %3112 = vmatpush1.msra.mxu0 %v2934
        %3113 = vmatprep.subr.mxu0 %v2937
        %3114 = vmatpush1.msra.mxu0 %v2936
        %3115 = vmatprep.subr.mxu0 %v2939
        %3116 = vmatpush1.msra.mxu0 %v2938
        %3117 = vmatprep.subr.mxu0 %v2941
        %3118 = vmatpush1.msra.mxu0 %v2940
        %3119 = vmatprep.subr.mxu0 %v2943
        %3120 = vmatpush1.msra.mxu0 %v2942
        %3121 = vmatprep.subr.mxu0 %v2945
        %3122 = vmatpush1.msra.mxu0 %v2944
        %3123 = vmatprep.subr.mxu0 %v2947
        %3124 = vmatpush1.msra.mxu0 %v2946
        %3125 = vmatprep.subr.mxu0 %v2949
        %3126 = vmatpush1.msra.mxu0 %v2948
        %3127 = vmatprep.subr.mxu0 %v2951
        %3128 = vmatpush1.msra.mxu0 %v2950
        %3129 = vmatprep.subr.mxu0 %v2953
        %3130 = vmatpush1.msra.mxu0 %v2952
        %3131 = vmatprep.subr.mxu0 %v2955
        %3132 = vmatpush1.msra.mxu0 %v2954
        %3133 = vmatprep.subr.mxu0 %v2957
        %3134 = vmatpush1.msra.mxu0 %v2956
        %3135 = vmatprep.subr.mxu0 %v2959
        %3136 = vmatpush1.msra.mxu0 %v2958
        %3137 = vmatprep.subr.mxu0 %v2961
        %3138 = vmatpush1.msra.mxu0 %v2960
        %3139 = vmatprep.subr.mxu0 %v2963
        %3140 = vmatpush1.msra.mxu0 %v2962
        %3141 = vmatprep.subr.mxu0 %v2965
        %3142 = vmatpush1.msra.mxu0 %v2964
        %3143 = vmatprep.subr.mxu0 %v2967
        %3144 = vmatpush1.msra.mxu0 %v2966
        %3145 = vmatprep.subr.mxu0 %v2969
        %3146 = vmatpush1.msra.mxu0 %v2968
        %3147 = vmatprep.subr.mxu0 %v2971
        %3148 = vmatpush1.msra.mxu0 %v2970
        %3149 = vmatprep.subr.mxu0 %v2973
        %3150 = vmatpush1.msra.mxu0 %v2972
        %3151 = vmatprep.subr.mxu0 %v2975
        %3152 = vmatpush1.msra.mxu0 %v2974
        %3153 = vmatprep.subr.mxu0 %v2977
        %3154 = vmatpush1.msra.mxu0 %v2976
        %3155 = vmatprep.mubr.f32.mxu0 %v2349
        %3156 = vmatmul.mubr.f32.gmra.mrb[0].mxu0 %v2346
        %v3157 = vpop.f32.mrb[0].mxu0
        %v3158 = vadd.f32 %v3045, %v3157
        %v3159 = vpop.f32.mrb[0].mxu0
        %v3160 = vadd.f32 %v3047, %v3159
        %3161 = vmatprep.mubr.f32.mxu0 %v2361
        %3162 = vmatmul.mubr.f32.gmra.mrb[0].mxu0 %v2358
        %v3163 = vpop.f32.mrb[0].mxu0
        %v3164 = vadd.f32 %v3051, %v3163
        %v3165 = vpop.f32.mrb[0].mxu0
        %v3166 = vadd.f32 %v3053, %v3165
        %3167 = vmatprep.mubr.f32.mxu0 %v2373
        %3168 = vmatmul.mubr.f32.gmra.mrb[0].mxu0 %v2370
        %v3169 = vpop.f32.mrb[0].mxu0
        %v3170 = vadd.f32 %v3057, %v3169
        %v3171 = vpop.f32.mrb[0].mxu0
        %v3172 = vadd.f32 %v3059, %v3171
        %3173 = vmatprep.mubr.f32.mxu0 %v2385
        %3174 = vmatmul.mubr.f32.gmra.mrb[0].mxu0 %v2382
        %v3175 = vpop.f32.mrb[0].mxu0
        %v3176 = vadd.f32 %v3063, %v3175
        %v3177 = vpop.f32.mrb[0].mxu0
        %v3178 = vadd.f32 %v3065, %v3177
        %3179 = vmatprep.mubr.f32.mxu0 %v2397
        %3180 = vmatmul.mubr.f32.gmra.mrb[0].mxu0 %v2394
        %v3181 = vpop.f32.mrb[0].mxu0
        %v3182 = vadd.f32 %v3069, %v3181
        %v3183 = vpop.f32.mrb[0].mxu0
        %v3184 = vadd.f32 %v3071, %v3183
        %3185 = vmatprep.mubr.f32.mxu0 %v2409
        %3186 = vmatmul.mubr.f32.gmra.mrb[0].mxu0 %v2406
        %v3187 = vpop.f32.mrb[0].mxu0
        %v3188 = vadd.f32 %v3075, %v3187
        %v3189 = vpop.f32.mrb[0].mxu0
        %v3190 = vadd.f32 %v3077, %v3189
        %3191 = vmatprep.mubr.f32.mxu0 %v2421
        %3192 = vmatmul.mubr.f32.gmra.mrb[0].mxu0 %v2418
        %v3193 = vpop.f32.mrb[0].mxu0
        %v3194 = vadd.f32 %v3081, %v3193
        %v3195 = vpop.f32.mrb[0].mxu0
        %v3196 = vadd.f32 %v3083, %v3195
        %3197 = vmatprep.mubr.f32.mxu0 %v2844
        %3198 = vmatmul.mubr.f32.gmra.mrb[0].mxu0 %v2841
        %v3199 = vpop.f32.mrb[0].mxu0
        %v3200 = vadd.f32 %v3087, %v3199
        %v3201 = vpop.f32.mrb[0].mxu0
        %v3202 = vadd.f32 %v3089, %v3201
        %3203 = vdwg.mxu0
        %v3204 = vadd.f32 %v2809, %v3158
        %v3205 = vadd.f32 %v2810, %v3160
        %v3206 = vadd.f32 %v2811, %v3164
        %v3207 = vadd.f32 %v2812, %v3166
        %v3208 = vadd.f32 %v2813, %v3170
        %v3209 = vadd.f32 %v2814, %v3172
        %v3210 = vadd.f32 %v2815, %v3176
        %v3211 = vadd.f32 %v2816, %v3178
        %v3212 = vadd.f32 %v2817, %v3182
        %v3213 = vadd.f32 %v2818, %v3184
        %v3214 = vadd.f32 %v2819, %v3188
        %v3215 = vadd.f32 %v2820, %v3190
        %v3216 = vadd.f32 %v2821, %v3194
        %v3217 = vadd.f32 %v2822, %v3196
        %v3218 = vadd.f32 %v2823, %v3200
        %v3219 = vadd.f32 %v2824, %v3202
        %v3228 = vrot.slane %v2253, 1
        %v3229 = vrot.slane %v2257, 1
        %v3230 = vsel %vm2325, %v3228, %v3229
        %v3231 = vrot.slane %v2254, 1
        %v3232 = vrot.slane %v2258, 1
        %v3233 = vsel %vm2325, %v3231, %v3232
        %v3234 = vrot.slane %v2255, 1
        %v3235 = vrot.slane %v2259, 1
        %v3236 = vsel %vm2325, %v3234, %v3235
        %v3237 = vrot.slane %v2256, 1
        %v3238 = vrot.slane %v2260, 1
        %v3239 = vsel %vm2325, %v3237, %v3238
        %s3244 = scalar_lea.vmem [#allocation10], 7168
        %v3245 = vld [vmem:[%s3244] sm:$0xff]
        %v3246 = vld [vmem:[%s3244 + $0x8] sm:$0xff]
        %v3247 = vld [vmem:[%s3244 + $0x10] sm:$0xff]
        %v3248 = vld [vmem:[%s3244 + $0x18] sm:$0xff]
        %v3249 = vld [vmem:[%s3244 + $0x20] sm:$0xff]
        %v3250 = vld [vmem:[%s3244 + $0x28] sm:$0xff]
        %v3251 = vld [vmem:[%s3244 + $0x30] sm:$0xff]
        %v3252 = vld [vmem:[%s3244 + $0x38] sm:$0xff]
        %v3253 = vld [vmem:[%s3244 + $0x40] sm:$0xff]
        %v3254 = vld [vmem:[%s3244 + $0x48] sm:$0xff]
        %v3255 = vld [vmem:[%s3244 + $0x50] sm:$0xff]
        %v3256 = vld [vmem:[%s3244 + $0x58] sm:$0xff]
        %v3257 = vld [vmem:[%s3244 + $0x60] sm:$0xff]
        %v3258 = vld [vmem:[%s3244 + $0x68] sm:$0xff]
        %v3259 = vld [vmem:[%s3244 + $0x70] sm:$0xff]
        %v3260 = vld [vmem:[%s3244 + $0x78] sm:$0xff]
        %v3261 = vld [vmem:[%s3244 + $0x80] sm:$0xff]
        %v3262 = vld [vmem:[%s3244 + $0x88] sm:$0xff]
        %v3263 = vld [vmem:[%s3244 + $0x90] sm:$0xff]
        %v3264 = vld [vmem:[%s3244 + $0x98] sm:$0xff]
        %v3265 = vld [vmem:[%s3244 + $0xa0] sm:$0xff]
        %v3266 = vld [vmem:[%s3244 + $0xa8] sm:$0xff]
        %v3267 = vld [vmem:[%s3244 + $0xb0] sm:$0xff]
        %v3268 = vld [vmem:[%s3244 + $0xb8] sm:$0xff]
        %v3269 = vld [vmem:[%s3244 + $0xc0] sm:$0xff]
        %v3270 = vld [vmem:[%s3244 + $0xc8] sm:$0xff]
        %v3271 = vld [vmem:[%s3244 + $0xd0] sm:$0xff]
        %v3272 = vld [vmem:[%s3244 + $0xd8] sm:$0xff]
        %v3273 = vld [vmem:[%s3244 + $0xe0] sm:$0xff]
        %v3274 = vld [vmem:[%s3244 + $0xe8] sm:$0xff]
        %v3275 = vld [vmem:[%s3244 + $0xf0] sm:$0xff]
        %v3276 = vld [vmem:[%s3244 + $0xf8] sm:$0xff]
        %v3277 = vld [vmem:[%s3244 + $0x100] sm:$0xff]
        %v3278 = vld [vmem:[%s3244 + $0x108] sm:$0xff]
        %v3279 = vld [vmem:[%s3244 + $0x110] sm:$0xff]
        %v3280 = vld [vmem:[%s3244 + $0x118] sm:$0xff]
        %v3281 = vld [vmem:[%s3244 + $0x120] sm:$0xff]
        %v3282 = vld [vmem:[%s3244 + $0x128] sm:$0xff]
        %v3283 = vld [vmem:[%s3244 + $0x130] sm:$0xff]
        %v3284 = vld [vmem:[%s3244 + $0x138] sm:$0xff]
        %v3285 = vld [vmem:[%s3244 + $0x140] sm:$0xff]
        %v3286 = vld [vmem:[%s3244 + $0x148] sm:$0xff]
        %v3287 = vld [vmem:[%s3244 + $0x150] sm:$0xff]
        %v3288 = vld [vmem:[%s3244 + $0x158] sm:$0xff]
        %v3289 = vld [vmem:[%s3244 + $0x160] sm:$0xff]
        %v3290 = vld [vmem:[%s3244 + $0x168] sm:$0xff]
        %v3291 = vld [vmem:[%s3244 + $0x170] sm:$0xff]
        %v3292 = vld [vmem:[%s3244 + $0x178] sm:$0xff]
        %v3293 = vld [vmem:[%s3244 + $0x180] sm:$0xff]
        %v3294 = vld [vmem:[%s3244 + $0x188] sm:$0xff]
        %v3295 = vld [vmem:[%s3244 + $0x190] sm:$0xff]
        %v3296 = vld [vmem:[%s3244 + $0x198] sm:$0xff]
        %v3297 = vld [vmem:[%s3244 + $0x1a0] sm:$0xff]
        %v3298 = vld [vmem:[%s3244 + $0x1a8] sm:$0xff]
        %v3299 = vld [vmem:[%s3244 + $0x1b0] sm:$0xff]
        %v3300 = vld [vmem:[%s3244 + $0x1b8] sm:$0xff]
        %v3301 = vld [vmem:[%s3244 + $0x1c0] sm:$0xff]
        %v3302 = vld [vmem:[%s3244 + $0x1c8] sm:$0xff]
        %v3303 = vld [vmem:[%s3244 + $0x1d0] sm:$0xff]
        %v3304 = vld [vmem:[%s3244 + $0x1d8] sm:$0xff]
        %v3305 = vld [vmem:[%s3244 + $0x1e0] sm:$0xff]
        %v3306 = vld [vmem:[%s3244 + $0x1e8] sm:$0xff]
        %v3307 = vld [vmem:[%s3244 + $0x1f0] sm:$0xff]
        %v3308 = vld [vmem:[%s3244 + $0x1f8] sm:$0xff]
        %v3309 = vld [vmem:[%s3244 + $0x200] sm:$0xff]
        %v3310 = vld [vmem:[%s3244 + $0x208] sm:$0xff]
        %v3311 = vld [vmem:[%s3244 + $0x210] sm:$0xff]
        %v3312 = vld [vmem:[%s3244 + $0x218] sm:$0xff]
        %v3313 = vld [vmem:[%s3244 + $0x220] sm:$0xff]
        %v3314 = vld [vmem:[%s3244 + $0x228] sm:$0xff]
        %v3315 = vld [vmem:[%s3244 + $0x230] sm:$0xff]
        %v3316 = vld [vmem:[%s3244 + $0x238] sm:$0xff]
        %v3317 = vld [vmem:[%s3244 + $0x240] sm:$0xff]
        %v3318 = vld [vmem:[%s3244 + $0x248] sm:$0xff]
        %v3319 = vld [vmem:[%s3244 + $0x250] sm:$0xff]
        %v3320 = vld [vmem:[%s3244 + $0x258] sm:$0xff]
        %v3321 = vld [vmem:[%s3244 + $0x260] sm:$0xff]
        %v3322 = vld [vmem:[%s3244 + $0x268] sm:$0xff]
        %v3323 = vld [vmem:[%s3244 + $0x270] sm:$0xff]
        %v3324 = vld [vmem:[%s3244 + $0x278] sm:$0xff]
        %v3325 = vld [vmem:[%s3244 + $0x280] sm:$0xff]
        %v3326 = vld [vmem:[%s3244 + $0x288] sm:$0xff]
        %v3327 = vld [vmem:[%s3244 + $0x290] sm:$0xff]
        %v3328 = vld [vmem:[%s3244 + $0x298] sm:$0xff]
        %v3329 = vld [vmem:[%s3244 + $0x2a0] sm:$0xff]
        %v3330 = vld [vmem:[%s3244 + $0x2a8] sm:$0xff]
        %v3331 = vld [vmem:[%s3244 + $0x2b0] sm:$0xff]
        %v3332 = vld [vmem:[%s3244 + $0x2b8] sm:$0xff]
        %v3333 = vld [vmem:[%s3244 + $0x2c0] sm:$0xff]
        %v3334 = vld [vmem:[%s3244 + $0x2c8] sm:$0xff]
        %v3335 = vld [vmem:[%s3244 + $0x2d0] sm:$0xff]
        %v3336 = vld [vmem:[%s3244 + $0x2d8] sm:$0xff]
        %v3337 = vld [vmem:[%s3244 + $0x2e0] sm:$0xff]
        %v3338 = vld [vmem:[%s3244 + $0x2e8] sm:$0xff]
        %v3339 = vld [vmem:[%s3244 + $0x2f0] sm:$0xff]
        %v3340 = vld [vmem:[%s3244 + $0x2f8] sm:$0xff]
        %v3341 = vld [vmem:[%s3244 + $0x300] sm:$0xff]
        %v3342 = vld [vmem:[%s3244 + $0x308] sm:$0xff]
        %v3343 = vld [vmem:[%s3244 + $0x310] sm:$0xff]
        %v3344 = vld [vmem:[%s3244 + $0x318] sm:$0xff]
        %v3345 = vld [vmem:[%s3244 + $0x320] sm:$0xff]
        %v3346 = vld [vmem:[%s3244 + $0x328] sm:$0xff]
        %v3347 = vld [vmem:[%s3244 + $0x330] sm:$0xff]
        %v3348 = vld [vmem:[%s3244 + $0x338] sm:$0xff]
        %v3349 = vld [vmem:[%s3244 + $0x340] sm:$0xff]
        %v3350 = vld [vmem:[%s3244 + $0x348] sm:$0xff]
        %v3351 = vld [vmem:[%s3244 + $0x350] sm:$0xff]
        %v3352 = vld [vmem:[%s3244 + $0x358] sm:$0xff]
        %v3353 = vld [vmem:[%s3244 + $0x360] sm:$0xff]
        %v3354 = vld [vmem:[%s3244 + $0x368] sm:$0xff]
        %v3355 = vld [vmem:[%s3244 + $0x370] sm:$0xff]
        %v3356 = vld [vmem:[%s3244 + $0x378] sm:$0xff]
        %v3357 = vld [vmem:[%s3244 + $0x380] sm:$0xff]
        %v3358 = vld [vmem:[%s3244 + $0x388] sm:$0xff]
        %v3359 = vld [vmem:[%s3244 + $0x390] sm:$0xff]
        %v3360 = vld [vmem:[%s3244 + $0x398] sm:$0xff]
        %v3361 = vld [vmem:[%s3244 + $0x3a0] sm:$0xff]
        %v3362 = vld [vmem:[%s3244 + $0x3a8] sm:$0xff]
        %v3363 = vld [vmem:[%s3244 + $0x3b0] sm:$0xff]
        %v3364 = vld [vmem:[%s3244 + $0x3b8] sm:$0xff]
        %v3365 = vld [vmem:[%s3244 + $0x3c0] sm:$0xff]
        %v3366 = vld [vmem:[%s3244 + $0x3c8] sm:$0xff]
        %v3367 = vld [vmem:[%s3244 + $0x3d0] sm:$0xff]
        %v3368 = vld [vmem:[%s3244 + $0x3d8] sm:$0xff]
        %v3369 = vld [vmem:[%s3244 + $0x3e0] sm:$0xff]
        %v3370 = vld [vmem:[%s3244 + $0x3e8] sm:$0xff]
        %v3371 = vld [vmem:[%s3244 + $0x3f0] sm:$0xff]
        %v3372 = vld [vmem:[%s3244 + $0x3f8] sm:$0xff]
        %3373 = vmatprep.subr.mxu0 %v3246
        %3374 = vmatpush1.msra.mxu0 %v3245
        %3375 = vmatprep.subr.mxu0 %v3248
        %3376 = vmatpush1.msra.mxu0 %v3247
        %3377 = vmatprep.subr.mxu0 %v3250
        %3378 = vmatpush1.msra.mxu0 %v3249
        %3379 = vmatprep.subr.mxu0 %v3252
        %3380 = vmatpush1.msra.mxu0 %v3251
        %3381 = vmatprep.subr.mxu0 %v3254
        %3382 = vmatpush1.msra.mxu0 %v3253
        %3383 = vmatprep.subr.mxu0 %v3256
        %3384 = vmatpush1.msra.mxu0 %v3255
        %3385 = vmatprep.subr.mxu0 %v3258
        %3386 = vmatpush1.msra.mxu0 %v3257
        %3387 = vmatprep.subr.mxu0 %v3260
        %3388 = vmatpush1.msra.mxu0 %v3259
        %3389 = vmatprep.subr.mxu0 %v3262
        %3390 = vmatpush1.msra.mxu0 %v3261
        %3391 = vmatprep.subr.mxu0 %v3264
        %3392 = vmatpush1.msra.mxu0 %v3263
        %3393 = vmatprep.subr.mxu0 %v3266
        %3394 = vmatpush1.msra.mxu0 %v3265
        %3395 = vmatprep.subr.mxu0 %v3268
        %3396 = vmatpush1.msra.mxu0 %v3267
        %3397 = vmatprep.subr.mxu0 %v3270
        %3398 = vmatpush1.msra.mxu0 %v3269
        %3399 = vmatprep.subr.mxu0 %v3272
        %3400 = vmatpush1.msra.mxu0 %v3271
        %3401 = vmatprep.subr.mxu0 %v3274
        %3402 = vmatpush1.msra.mxu0 %v3273
        %3403 = vmatprep.subr.mxu0 %v3276
        %3404 = vmatpush1.msra.mxu0 %v3275
        %3405 = vmatprep.subr.mxu0 %v3278
        %3406 = vmatpush1.msra.mxu0 %v3277
        %3407 = vmatprep.subr.mxu0 %v3280
        %3408 = vmatpush1.msra.mxu0 %v3279
        %3409 = vmatprep.subr.mxu0 %v3282
        %3410 = vmatpush1.msra.mxu0 %v3281
        %3411 = vmatprep.subr.mxu0 %v3284
        %3412 = vmatpush1.msra.mxu0 %v3283
        %3413 = vmatprep.subr.mxu0 %v3286
        %3414 = vmatpush1.msra.mxu0 %v3285
        %3415 = vmatprep.subr.mxu0 %v3288
        %3416 = vmatpush1.msra.mxu0 %v3287
        %3417 = vmatprep.subr.mxu0 %v3290
        %3418 = vmatpush1.msra.mxu0 %v3289
        %3419 = vmatprep.subr.mxu0 %v3292
        %3420 = vmatpush1.msra.mxu0 %v3291
        %3421 = vmatprep.subr.mxu0 %v3294
        %3422 = vmatpush1.msra.mxu0 %v3293
        %3423 = vmatprep.subr.mxu0 %v3296
        %3424 = vmatpush1.msra.mxu0 %v3295
        %3425 = vmatprep.subr.mxu0 %v3298
        %3426 = vmatpush1.msra.mxu0 %v3297
        %3427 = vmatprep.subr.mxu0 %v3300
        %3428 = vmatpush1.msra.mxu0 %v3299
        %3429 = vmatprep.subr.mxu0 %v3302
        %3430 = vmatpush1.msra.mxu0 %v3301
        %3431 = vmatprep.subr.mxu0 %v3304
        %3432 = vmatpush1.msra.mxu0 %v3303
        %3433 = vmatprep.subr.mxu0 %v3306
        %3434 = vmatpush1.msra.mxu0 %v3305
        %3435 = vmatprep.subr.mxu0 %v3308
        %3436 = vmatpush1.msra.mxu0 %v3307
        %3437 = vmatprep.mubr.f32.mxu0 %v2355
        %3438 = vmatmul.mubr.f32.gmra.mrb[0].mxu0 %v2352
        %v3439 = vpop.f32.mrb[0].mxu0
        %v3440 = vadd.f32 0.0, %v3439
        %v3441 = vpop.f32.mrb[0].mxu0
        %v3442 = vadd.f32 0.0, %v3441
        %3443 = vmatprep.mubr.f32.mxu0 %v2367
        %3444 = vmatmul.mubr.f32.gmra.mrb[0].mxu0 %v2364
        %v3445 = vpop.f32.mrb[0].mxu0
        %v3446 = vadd.f32 0.0, %v3445
        %v3447 = vpop.f32.mrb[0].mxu0
        %v3448 = vadd.f32 0.0, %v3447
        %3449 = vmatprep.mubr.f32.mxu0 %v2379
        %3450 = vmatmul.mubr.f32.gmra.mrb[0].mxu0 %v2376
        %v3451 = vpop.f32.mrb[0].mxu0
        %v3452 = vadd.f32 0.0, %v3451
        %v3453 = vpop.f32.mrb[0].mxu0
        %v3454 = vadd.f32 0.0, %v3453
        %3455 = vmatprep.mubr.f32.mxu0 %v2391
        %3456 = vmatmul.mubr.f32.gmra.mrb[0].mxu0 %v2388
        %v3457 = vpop.f32.mrb[0].mxu0
        %v3458 = vadd.f32 0.0, %v3457
        %v3459 = vpop.f32.mrb[0].mxu0
        %v3460 = vadd.f32 0.0, %v3459
        %3461 = vmatprep.mubr.f32.mxu0 %v2403
        %3462 = vmatmul.mubr.f32.gmra.mrb[0].mxu0 %v2400
        %v3463 = vpop.f32.mrb[0].mxu0
        %v3464 = vadd.f32 0.0, %v3463
        %v3465 = vpop.f32.mrb[0].mxu0
        %v3466 = vadd.f32 0.0, %v3465
        %3467 = vmatprep.mubr.f32.mxu0 %v2415
        %3468 = vmatmul.mubr.f32.gmra.mrb[0].mxu0 %v2412
        %v3469 = vpop.f32.mrb[0].mxu0
        %v3470 = vadd.f32 0.0, %v3469
        %v3471 = vpop.f32.mrb[0].mxu0
        %v3472 = vadd.f32 0.0, %v3471
        %3473 = vmatprep.mubr.f32.mxu0 %v2838
        %3474 = vmatmul.mubr.f32.gmra.mrb[0].mxu0 %v2835
        %v3475 = vpop.f32.mrb[0].mxu0
        %v3476 = vadd.f32 0.0, %v3475
        %v3477 = vpop.f32.mrb[0].mxu0
        %v3478 = vadd.f32 0.0, %v3477
        %3479 = vmatprep.mubr.f32.mxu0 %v3233
        %3480 = vmatmul.mubr.f32.gmra.mrb[0].mxu0 %v3230
        %v3481 = vpop.f32.mrb[0].mxu0
        %v3482 = vadd.f32 0.0, %v3481
        %v3483 = vpop.f32.mrb[0].mxu0
        %v3484 = vadd.f32 0.0, %v3483
        %3485 = vdwg.mxu0
        %3486 = vmatprep.subr.mxu0 %v3310
        %3487 = vmatpush1.msra.mxu0 %v3309
        %3488 = vmatprep.subr.mxu0 %v3312
        %3489 = vmatpush1.msra.mxu0 %v3311
        %3490 = vmatprep.subr.mxu0 %v3314
        %3491 = vmatpush1.msra.mxu0 %v3313
        %3492 = vmatprep.subr.mxu0 %v3316
        %3493 = vmatpush1.msra.mxu0 %v3315
        %3494 = vmatprep.subr.mxu0 %v3318
        %3495 = vmatpush1.msra.mxu0 %v3317
        %3496 = vmatprep.subr.mxu0 %v3320
        %3497 = vmatpush1.msra.mxu0 %v3319
        %3498 = vmatprep.subr.mxu0 %v3322
        %3499 = vmatpush1.msra.mxu0 %v3321
        %3500 = vmatprep.subr.mxu0 %v3324
        %3501 = vmatpush1.msra.mxu0 %v3323
        %3502 = vmatprep.subr.mxu0 %v3326
        %3503 = vmatpush1.msra.mxu0 %v3325
        %3504 = vmatprep.subr.mxu0 %v3328
        %3505 = vmatpush1.msra.mxu0 %v3327
        %3506 = vmatprep.subr.mxu0 %v3330
        %3507 = vmatpush1.msra.mxu0 %v3329
        %3508 = vmatprep.subr.mxu0 %v3332
        %3509 = vmatpush1.msra.mxu0 %v3331
        %3510 = vmatprep.subr.mxu0 %v3334
        %3511 = vmatpush1.msra.mxu0 %v3333
        %3512 = vmatprep.subr.mxu0 %v3336
        %3513 = vmatpush1.msra.mxu0 %v3335
        %3514 = vmatprep.subr.mxu0 %v3338
        %3515 = vmatpush1.msra.mxu0 %v3337
        %3516 = vmatprep.subr.mxu0 %v3340
        %3517 = vmatpush1.msra.mxu0 %v3339
        %3518 = vmatprep.subr.mxu0 %v3342
        %3519 = vmatpush1.msra.mxu0 %v3341
        %3520 = vmatprep.subr.mxu0 %v3344
        %3521 = vmatpush1.msra.mxu0 %v3343
        %3522 = vmatprep.subr.mxu0 %v3346
        %3523 = vmatpush1.msra.mxu0 %v3345
        %3524 = vmatprep.subr.mxu0 %v3348
        %3525 = vmatpush1.msra.mxu0 %v3347
        %3526 = vmatprep.subr.mxu0 %v3350
        %3527 = vmatpush1.msra.mxu0 %v3349
        %3528 = vmatprep.subr.mxu0 %v3352
        %3529 = vmatpush1.msra.mxu0 %v3351
        %3530 = vmatprep.subr.mxu0 %v3354
        %3531 = vmatpush1.msra.mxu0 %v3353
        %3532 = vmatprep.subr.mxu0 %v3356
        %3533 = vmatpush1.msra.mxu0 %v3355
        %3534 = vmatprep.subr.mxu0 %v3358
        %3535 = vmatpush1.msra.mxu0 %v3357
        %3536 = vmatprep.subr.mxu0 %v3360
        %3537 = vmatpush1.msra.mxu0 %v3359
        %3538 = vmatprep.subr.mxu0 %v3362
        %3539 = vmatpush1.msra.mxu0 %v3361
        %3540 = vmatprep.subr.mxu0 %v3364
        %3541 = vmatpush1.msra.mxu0 %v3363
        %3542 = vmatprep.subr.mxu0 %v3366
        %3543 = vmatpush1.msra.mxu0 %v3365
        %3544 = vmatprep.subr.mxu0 %v3368
        %3545 = vmatpush1.msra.mxu0 %v3367
        %3546 = vmatprep.subr.mxu0 %v3370
        %3547 = vmatpush1.msra.mxu0 %v3369
        %3548 = vmatprep.subr.mxu0 %v3372
        %3549 = vmatpush1.msra.mxu0 %v3371
        %3550 = vmatprep.mubr.f32.mxu0 %v2361
        %3551 = vmatmul.mubr.f32.gmra.mrb[0].mxu0 %v2358
        %v3552 = vpop.f32.mrb[0].mxu0
        %v3553 = vadd.f32 %v3440, %v3552
        %v3554 = vpop.f32.mrb[0].mxu0
        %v3555 = vadd.f32 %v3442, %v3554
        %3556 = vmatprep.mubr.f32.mxu0 %v2373
        %3557 = vmatmul.mubr.f32.gmra.mrb[0].mxu0 %v2370
        %v3558 = vpop.f32.mrb[0].mxu0
        %v3559 = vadd.f32 %v3446, %v3558
        %v3560 = vpop.f32.mrb[0].mxu0
        %v3561 = vadd.f32 %v3448, %v3560
        %3562 = vmatprep.mubr.f32.mxu0 %v2385
        %3563 = vmatmul.mubr.f32.gmra.mrb[0].mxu0 %v2382
        %v3564 = vpop.f32.mrb[0].mxu0
        %v3565 = vadd.f32 %v3452, %v3564
        %v3566 = vpop.f32.mrb[0].mxu0
        %v3567 = vadd.f32 %v3454, %v3566
        %3568 = vmatprep.mubr.f32.mxu0 %v2397
        %3569 = vmatmul.mubr.f32.gmra.mrb[0].mxu0 %v2394
        %v3570 = vpop.f32.mrb[0].mxu0
        %v3571 = vadd.f32 %v3458, %v3570
        %v3572 = vpop.f32.mrb[0].mxu0
        %v3573 = vadd.f32 %v3460, %v3572
        %3574 = vmatprep.mubr.f32.mxu0 %v2409
        %3575 = vmatmul.mubr.f32.gmra.mrb[0].mxu0 %v2406
        %v3576 = vpop.f32.mrb[0].mxu0
        %v3577 = vadd.f32 %v3464, %v3576
        %v3578 = vpop.f32.mrb[0].mxu0
        %v3579 = vadd.f32 %v3466, %v3578
        %3580 = vmatprep.mubr.f32.mxu0 %v2421
        %3581 = vmatmul.mubr.f32.gmra.mrb[0].mxu0 %v2418
        %v3582 = vpop.f32.mrb[0].mxu0
        %v3583 = vadd.f32 %v3470, %v3582
        %v3584 = vpop.f32.mrb[0].mxu0
        %v3585 = vadd.f32 %v3472, %v3584
        %3586 = vmatprep.mubr.f32.mxu0 %v2844
        %3587 = vmatmul.mubr.f32.gmra.mrb[0].mxu0 %v2841
        %v3588 = vpop.f32.mrb[0].mxu0
        %v3589 = vadd.f32 %v3476, %v3588
        %v3590 = vpop.f32.mrb[0].mxu0
        %v3591 = vadd.f32 %v3478, %v3590
        %3592 = vmatprep.mubr.f32.mxu0 %v3239
        %3593 = vmatmul.mubr.f32.gmra.mrb[0].mxu0 %v3236
        %v3594 = vpop.f32.mrb[0].mxu0
        %v3595 = vadd.f32 %v3482, %v3594
        %v3596 = vpop.f32.mrb[0].mxu0
        %v3597 = vadd.f32 %v3484, %v3596
        %3598 = vdwg.mxu0
        %v3599 = vadd.f32 %v3204, %v3553
        %v3600 = vadd.f32 %v3205, %v3555
        %v3601 = vadd.f32 %v3206, %v3559
        %v3602 = vadd.f32 %v3207, %v3561
        %v3603 = vadd.f32 %v3208, %v3565
        %v3604 = vadd.f32 %v3209, %v3567
        %v3605 = vadd.f32 %v3210, %v3571
        %v3606 = vadd.f32 %v3211, %v3573
        %v3607 = vadd.f32 %v3212, %v3577
        %v3608 = vadd.f32 %v3213, %v3579
        %v3609 = vadd.f32 %v3214, %v3583
        %v3610 = vadd.f32 %v3215, %v3585
        %v3611 = vadd.f32 %v3216, %v3589
        %v3612 = vadd.f32 %v3217, %v3591
        %v3613 = vadd.f32 %v3218, %v3595
        %v3614 = vadd.f32 %v3219, %v3597
        %v3615 = vld [vmem:[#allocation2] sm:$0xfc]
        %v3616 = vld [vmem:[#allocation2 + $0x8] sm:$0xfc]
        %v3617 = vld [vmem:[#allocation2 + $0x10] sm:$0xfc]
        %v3618 = vld [vmem:[#allocation2 + $0x18] sm:$0xfc]
        %v3619 = vld [vmem:[#allocation2 + $0x20] sm:$0x3]
        %v3620 = vld [vmem:[#allocation2 + $0x28] sm:$0x3]
        %v3621 = vld [vmem:[#allocation2 + $0x30] sm:$0x3]
        %v3622 = vld [vmem:[#allocation2 + $0x38] sm:$0x3]
        %v3623 = vld [vmem:[#allocation2 + $0x40] sm:$0xfc]
        %v3624 = vld [vmem:[#allocation2 + $0x48] sm:$0xfc]
        %v3625 = vld [vmem:[#allocation2 + $0x50] sm:$0xfc]
        %v3626 = vld [vmem:[#allocation2 + $0x58] sm:$0xfc]
        %v3627 = vld [vmem:[#allocation2 + $0x60] sm:$0x3]
        %v3628 = vld [vmem:[#allocation2 + $0x68] sm:$0x3]
        %v3629 = vld [vmem:[#allocation2 + $0x70] sm:$0x3]
        %v3630 = vld [vmem:[#allocation2 + $0x78] sm:$0x3]
        %v3631 = vld [vmem:[#allocation2 + $0x80] sm:$0xfc]
        %v3632 = vld [vmem:[#allocation2 + $0x88] sm:$0xfc]
        %v3633 = vld [vmem:[#allocation2 + $0x90] sm:$0xfc]
        %v3634 = vld [vmem:[#allocation2 + $0x98] sm:$0xfc]
        %v3635 = vld [vmem:[#allocation2 + $0xa0] sm:$0x3]
        %v3636 = vld [vmem:[#allocation2 + $0xa8] sm:$0x3]
        %v3637 = vld [vmem:[#allocation2 + $0xb0] sm:$0x3]
        %v3638 = vld [vmem:[#allocation2 + $0xb8] sm:$0x3]
        %v3639 = vld [vmem:[#allocation2 + $0xc0] sm:$0xfc]
        %v3640 = vld [vmem:[#allocation2 + $0xc8] sm:$0xfc]
        %v3641 = vld [vmem:[#allocation2 + $0xd0] sm:$0xfc]
        %v3642 = vld [vmem:[#allocation2 + $0xd8] sm:$0xfc]
        %v3643 = vld [vmem:[#allocation2 + $0xe0] sm:$0x3]
        %v3644 = vld [vmem:[#allocation2 + $0xe8] sm:$0x3]
        %v3645 = vld [vmem:[#allocation2 + $0xf0] sm:$0x3]
        %v3646 = vld [vmem:[#allocation2 + $0xf8] sm:$0x3]
        %v3647 = vld [vmem:[#allocation2 + $0x100] sm:$0xfc]
        %v3648 = vld [vmem:[#allocation2 + $0x108] sm:$0xfc]
        %v3649 = vld [vmem:[#allocation2 + $0x110] sm:$0xfc]
        %v3650 = vld [vmem:[#allocation2 + $0x118] sm:$0xfc]
        %v3651 = vld [vmem:[#allocation2 + $0x120] sm:$0x3]
        %v3652 = vld [vmem:[#allocation2 + $0x128] sm:$0x3]
        %v3653 = vld [vmem:[#allocation2 + $0x130] sm:$0x3]
        %v3654 = vld [vmem:[#allocation2 + $0x138] sm:$0x3]
        %v3655 = vld [vmem:[#allocation2 + $0x140] sm:$0xfc]
        %v3656 = vld [vmem:[#allocation2 + $0x148] sm:$0xfc]
        %v3657 = vld [vmem:[#allocation2 + $0x150] sm:$0xfc]
        %v3658 = vld [vmem:[#allocation2 + $0x158] sm:$0xfc]
        %v3659 = vld [vmem:[#allocation2 + $0x160] sm:$0x3]
        %v3660 = vld [vmem:[#allocation2 + $0x168] sm:$0x3]
        %v3661 = vld [vmem:[#allocation2 + $0x170] sm:$0x3]
        %v3662 = vld [vmem:[#allocation2 + $0x178] sm:$0x3]
        %v3663 = vld [vmem:[#allocation2 + $0x180] sm:$0xfc]
        %v3664 = vld [vmem:[#allocation2 + $0x188] sm:$0xfc]
        %v3665 = vld [vmem:[#allocation2 + $0x190] sm:$0xfc]
        %v3666 = vld [vmem:[#allocation2 + $0x198] sm:$0xfc]
        %v3667 = vld [vmem:[#allocation2 + $0x1a0] sm:$0x3]
        %v3668 = vld [vmem:[#allocation2 + $0x1a8] sm:$0x3]
        %v3669 = vld [vmem:[#allocation2 + $0x1b0] sm:$0x3]
        %v3670 = vld [vmem:[#allocation2 + $0x1b8] sm:$0x3]
        %v3671 = vld [vmem:[#allocation2 + $0x1c0] sm:$0xfc]
        %v3672 = vld [vmem:[#allocation2 + $0x1c8] sm:$0xfc]
        %v3673 = vld [vmem:[#allocation2 + $0x1d0] sm:$0xfc]
        %v3674 = vld [vmem:[#allocation2 + $0x1d8] sm:$0xfc]
        %v3675 = vld [vmem:[#allocation2 + $0x1e0] sm:$0x3]
        %v3676 = vld [vmem:[#allocation2 + $0x1e8] sm:$0x3]
        %v3677 = vld [vmem:[#allocation2 + $0x1f0] sm:$0x3]
        %v3678 = vld [vmem:[#allocation2 + $0x1f8] sm:$0x3]
        %v3679 = vld [vmem:[#allocation2 + $0x200] sm:$0xfc]
        %v3680 = vld [vmem:[#allocation2 + $0x208] sm:$0xfc]
        %v3681 = vld [vmem:[#allocation2 + $0x210] sm:$0xfc]
        %v3682 = vld [vmem:[#allocation2 + $0x218] sm:$0xfc]
        %v3683 = vld [vmem:[#allocation2 + $0x220] sm:$0x3]
        %v3684 = vld [vmem:[#allocation2 + $0x228] sm:$0x3]
        %v3685 = vld [vmem:[#allocation2 + $0x230] sm:$0x3]
        %v3686 = vld [vmem:[#allocation2 + $0x238] sm:$0x3]
        %v3687 = vld [vmem:[#allocation2 + $0x240] sm:$0xfc]
        %v3688 = vld [vmem:[#allocation2 + $0x248] sm:$0xfc]
        %v3689 = vld [vmem:[#allocation2 + $0x250] sm:$0xfc]
        %v3690 = vld [vmem:[#allocation2 + $0x258] sm:$0xfc]
        %v3691 = vld [vmem:[#allocation2 + $0x260] sm:$0x3]
        %v3692 = vld [vmem:[#allocation2 + $0x268] sm:$0x3]
        %v3693 = vld [vmem:[#allocation2 + $0x270] sm:$0x3]
        %v3694 = vld [vmem:[#allocation2 + $0x278] sm:$0x3]
        %vm3759 = vcmask 1045504
        %v3760 = vrot.slane %v3615, 2
        %v3761 = vrot.slane %v3619, 2
        %v3762 = vsel %vm3759, %v3760, %v3761
        %v3763 = vrot.slane %v3616, 2
        %v3764 = vrot.slane %v3620, 2
        %v3765 = vsel %vm3759, %v3763, %v3764
        %v3766 = vrot.slane %v3617, 2
        %v3767 = vrot.slane %v3621, 2
        %v3768 = vsel %vm3759, %v3766, %v3767
        %v3769 = vrot.slane %v3618, 2
        %v3770 = vrot.slane %v3622, 2
        %v3771 = vsel %vm3759, %v3769, %v3770
        %v3772 = vrot.slane %v3623, 2
        %v3773 = vrot.slane %v3627, 2
        %v3774 = vsel %vm3759, %v3772, %v3773
        %v3775 = vrot.slane %v3624, 2
        %v3776 = vrot.slane %v3628, 2
        %v3777 = vsel %vm3759, %v3775, %v3776
        %v3778 = vrot.slane %v3625, 2
        %v3779 = vrot.slane %v3629, 2
        %v3780 = vsel %vm3759, %v3778, %v3779
        %v3781 = vrot.slane %v3626, 2
        %v3782 = vrot.slane %v3630, 2
        %v3783 = vsel %vm3759, %v3781, %v3782
        %v3784 = vrot.slane %v3631, 2
        %v3785 = vrot.slane %v3635, 2
        %v3786 = vsel %vm3759, %v3784, %v3785
        %v3787 = vrot.slane %v3632, 2
        %v3788 = vrot.slane %v3636, 2
        %v3789 = vsel %vm3759, %v3787, %v3788
        %v3790 = vrot.slane %v3633, 2
        %v3791 = vrot.slane %v3637, 2
        %v3792 = vsel %vm3759, %v3790, %v3791
        %v3793 = vrot.slane %v3634, 2
        %v3794 = vrot.slane %v3638, 2
        %v3795 = vsel %vm3759, %v3793, %v3794
        %v3796 = vrot.slane %v3639, 2
        %v3797 = vrot.slane %v3643, 2
        %v3798 = vsel %vm3759, %v3796, %v3797
        %v3799 = vrot.slane %v3640, 2
        %v3800 = vrot.slane %v3644, 2
        %v3801 = vsel %vm3759, %v3799, %v3800
        %v3802 = vrot.slane %v3641, 2
        %v3803 = vrot.slane %v3645, 2
        %v3804 = vsel %vm3759, %v3802, %v3803
        %v3805 = vrot.slane %v3642, 2
        %v3806 = vrot.slane %v3646, 2
        %v3807 = vsel %vm3759, %v3805, %v3806
        %v3808 = vrot.slane %v3647, 2
        %v3809 = vrot.slane %v3651, 2
        %v3810 = vsel %vm3759, %v3808, %v3809
        %v3811 = vrot.slane %v3648, 2
        %v3812 = vrot.slane %v3652, 2
        %v3813 = vsel %vm3759, %v3811, %v3812
        %v3814 = vrot.slane %v3649, 2
        %v3815 = vrot.slane %v3653, 2
        %v3816 = vsel %vm3759, %v3814, %v3815
        %v3817 = vrot.slane %v3650, 2
        %v3818 = vrot.slane %v3654, 2
        %v3819 = vsel %vm3759, %v3817, %v3818
        %v3820 = vrot.slane %v3655, 2
        %v3821 = vrot.slane %v3659, 2
        %v3822 = vsel %vm3759, %v3820, %v3821
        %v3823 = vrot.slane %v3656, 2
        %v3824 = vrot.slane %v3660, 2
        %v3825 = vsel %vm3759, %v3823, %v3824
        %v3826 = vrot.slane %v3657, 2
        %v3827 = vrot.slane %v3661, 2
        %v3828 = vsel %vm3759, %v3826, %v3827
        %v3829 = vrot.slane %v3658, 2
        %v3830 = vrot.slane %v3662, 2
        %v3831 = vsel %vm3759, %v3829, %v3830
        %v3832 = vrot.slane %v3663, 2
        %v3833 = vrot.slane %v3667, 2
        %v3834 = vsel %vm3759, %v3832, %v3833
        %v3835 = vrot.slane %v3664, 2
        %v3836 = vrot.slane %v3668, 2
        %v3837 = vsel %vm3759, %v3835, %v3836
        %v3838 = vrot.slane %v3665, 2
        %v3839 = vrot.slane %v3669, 2
        %v3840 = vsel %vm3759, %v3838, %v3839
        %v3841 = vrot.slane %v3666, 2
        %v3842 = vrot.slane %v3670, 2
        %v3843 = vsel %vm3759, %v3841, %v3842
        %v3844 = vrot.slane %v3671, 2
        %v3845 = vrot.slane %v3675, 2
        %v3846 = vsel %vm3759, %v3844, %v3845
        %v3847 = vrot.slane %v3672, 2
        %v3848 = vrot.slane %v3676, 2
        %v3849 = vsel %vm3759, %v3847, %v3848
        %v3850 = vrot.slane %v3673, 2
        %v3851 = vrot.slane %v3677, 2
        %v3852 = vsel %vm3759, %v3850, %v3851
        %v3853 = vrot.slane %v3674, 2
        %v3854 = vrot.slane %v3678, 2
        %v3855 = vsel %vm3759, %v3853, %v3854
        %s3888 = scalar_lea.vmem [#allocation10], 2048
        %v3889 = vld [vmem:[%s3888] sm:$0xff]
        %v3890 = vld [vmem:[%s3888 + $0x8] sm:$0xff]
        %v3891 = vld [vmem:[%s3888 + $0x10] sm:$0xff]
        %v3892 = vld [vmem:[%s3888 + $0x18] sm:$0xff]
        %v3893 = vld [vmem:[%s3888 + $0x20] sm:$0xff]
        %v3894 = vld [vmem:[%s3888 + $0x28] sm:$0xff]
        %v3895 = vld [vmem:[%s3888 + $0x30] sm:$0xff]
        %v3896 = vld [vmem:[%s3888 + $0x38] sm:$0xff]
        %v3897 = vld [vmem:[%s3888 + $0x40] sm:$0xff]
        %v3898 = vld [vmem:[%s3888 + $0x48] sm:$0xff]
        %v3899 = vld [vmem:[%s3888 + $0x50] sm:$0xff]
        %v3900 = vld [vmem:[%s3888 + $0x58] sm:$0xff]
        %v3901 = vld [vmem:[%s3888 + $0x60] sm:$0xff]
        %v3902 = vld [vmem:[%s3888 + $0x68] sm:$0xff]
        %v3903 = vld [vmem:[%s3888 + $0x70] sm:$0xff]
        %v3904 = vld [vmem:[%s3888 + $0x78] sm:$0xff]
        %v3905 = vld [vmem:[%s3888 + $0x80] sm:$0xff]
        %v3906 = vld [vmem:[%s3888 + $0x88] sm:$0xff]
        %v3907 = vld [vmem:[%s3888 + $0x90] sm:$0xff]
        %v3908 = vld [vmem:[%s3888 + $0x98] sm:$0xff]
        %v3909 = vld [vmem:[%s3888 + $0xa0] sm:$0xff]
        %v3910 = vld [vmem:[%s3888 + $0xa8] sm:$0xff]
        %v3911 = vld [vmem:[%s3888 + $0xb0] sm:$0xff]
        %v3912 = vld [vmem:[%s3888 + $0xb8] sm:$0xff]
        %v3913 = vld [vmem:[%s3888 + $0xc0] sm:$0xff]
        %v3914 = vld [vmem:[%s3888 + $0xc8] sm:$0xff]
        %v3915 = vld [vmem:[%s3888 + $0xd0] sm:$0xff]
        %v3916 = vld [vmem:[%s3888 + $0xd8] sm:$0xff]
        %v3917 = vld [vmem:[%s3888 + $0xe0] sm:$0xff]
        %v3918 = vld [vmem:[%s3888 + $0xe8] sm:$0xff]
        %v3919 = vld [vmem:[%s3888 + $0xf0] sm:$0xff]
        %v3920 = vld [vmem:[%s3888 + $0xf8] sm:$0xff]
        %v3921 = vld [vmem:[%s3888 + $0x100] sm:$0xff]
        %v3922 = vld [vmem:[%s3888 + $0x108] sm:$0xff]
        %v3923 = vld [vmem:[%s3888 + $0x110] sm:$0xff]
        %v3924 = vld [vmem:[%s3888 + $0x118] sm:$0xff]
        %v3925 = vld [vmem:[%s3888 + $0x120] sm:$0xff]
        %v3926 = vld [vmem:[%s3888 + $0x128] sm:$0xff]
        %v3927 = vld [vmem:[%s3888 + $0x130] sm:$0xff]
        %v3928 = vld [vmem:[%s3888 + $0x138] sm:$0xff]
        %v3929 = vld [vmem:[%s3888 + $0x140] sm:$0xff]
        %v3930 = vld [vmem:[%s3888 + $0x148] sm:$0xff]
        %v3931 = vld [vmem:[%s3888 + $0x150] sm:$0xff]
        %v3932 = vld [vmem:[%s3888 + $0x158] sm:$0xff]
        %v3933 = vld [vmem:[%s3888 + $0x160] sm:$0xff]
        %v3934 = vld [vmem:[%s3888 + $0x168] sm:$0xff]
        %v3935 = vld [vmem:[%s3888 + $0x170] sm:$0xff]
        %v3936 = vld [vmem:[%s3888 + $0x178] sm:$0xff]
        %v3937 = vld [vmem:[%s3888 + $0x180] sm:$0xff]
        %v3938 = vld [vmem:[%s3888 + $0x188] sm:$0xff]
        %v3939 = vld [vmem:[%s3888 + $0x190] sm:$0xff]
        %v3940 = vld [vmem:[%s3888 + $0x198] sm:$0xff]
        %v3941 = vld [vmem:[%s3888 + $0x1a0] sm:$0xff]
        %v3942 = vld [vmem:[%s3888 + $0x1a8] sm:$0xff]
        %v3943 = vld [vmem:[%s3888 + $0x1b0] sm:$0xff]
        %v3944 = vld [vmem:[%s3888 + $0x1b8] sm:$0xff]
        %v3945 = vld [vmem:[%s3888 + $0x1c0] sm:$0xff]
        %v3946 = vld [vmem:[%s3888 + $0x1c8] sm:$0xff]
        %v3947 = vld [vmem:[%s3888 + $0x1d0] sm:$0xff]
        %v3948 = vld [vmem:[%s3888 + $0x1d8] sm:$0xff]
        %v3949 = vld [vmem:[%s3888 + $0x1e0] sm:$0xff]
        %v3950 = vld [vmem:[%s3888 + $0x1e8] sm:$0xff]
        %v3951 = vld [vmem:[%s3888 + $0x1f0] sm:$0xff]
        %v3952 = vld [vmem:[%s3888 + $0x1f8] sm:$0xff]
        %v3953 = vld [vmem:[%s3888 + $0x200] sm:$0xff]
        %v3954 = vld [vmem:[%s3888 + $0x208] sm:$0xff]
        %v3955 = vld [vmem:[%s3888 + $0x210] sm:$0xff]
        %v3956 = vld [vmem:[%s3888 + $0x218] sm:$0xff]
        %v3957 = vld [vmem:[%s3888 + $0x220] sm:$0xff]
        %v3958 = vld [vmem:[%s3888 + $0x228] sm:$0xff]
        %v3959 = vld [vmem:[%s3888 + $0x230] sm:$0xff]
        %v3960 = vld [vmem:[%s3888 + $0x238] sm:$0xff]
        %v3961 = vld [vmem:[%s3888 + $0x240] sm:$0xff]
        %v3962 = vld [vmem:[%s3888 + $0x248] sm:$0xff]
        %v3963 = vld [vmem:[%s3888 + $0x250] sm:$0xff]
        %v3964 = vld [vmem:[%s3888 + $0x258] sm:$0xff]
        %v3965 = vld [vmem:[%s3888 + $0x260] sm:$0xff]
        %v3966 = vld [vmem:[%s3888 + $0x268] sm:$0xff]
        %v3967 = vld [vmem:[%s3888 + $0x270] sm:$0xff]
        %v3968 = vld [vmem:[%s3888 + $0x278] sm:$0xff]
        %v3969 = vld [vmem:[%s3888 + $0x280] sm:$0xff]
        %v3970 = vld [vmem:[%s3888 + $0x288] sm:$0xff]
        %v3971 = vld [vmem:[%s3888 + $0x290] sm:$0xff]
        %v3972 = vld [vmem:[%s3888 + $0x298] sm:$0xff]
        %v3973 = vld [vmem:[%s3888 + $0x2a0] sm:$0xff]
        %v3974 = vld [vmem:[%s3888 + $0x2a8] sm:$0xff]
        %v3975 = vld [vmem:[%s3888 + $0x2b0] sm:$0xff]
        %v3976 = vld [vmem:[%s3888 + $0x2b8] sm:$0xff]
        %v3977 = vld [vmem:[%s3888 + $0x2c0] sm:$0xff]
        %v3978 = vld [vmem:[%s3888 + $0x2c8] sm:$0xff]
        %v3979 = vld [vmem:[%s3888 + $0x2d0] sm:$0xff]
        %v3980 = vld [vmem:[%s3888 + $0x2d8] sm:$0xff]
        %v3981 = vld [vmem:[%s3888 + $0x2e0] sm:$0xff]
        %v3982 = vld [vmem:[%s3888 + $0x2e8] sm:$0xff]
        %v3983 = vld [vmem:[%s3888 + $0x2f0] sm:$0xff]
        %v3984 = vld [vmem:[%s3888 + $0x2f8] sm:$0xff]
        %v3985 = vld [vmem:[%s3888 + $0x300] sm:$0xff]
        %v3986 = vld [vmem:[%s3888 + $0x308] sm:$0xff]
        %v3987 = vld [vmem:[%s3888 + $0x310] sm:$0xff]
        %v3988 = vld [vmem:[%s3888 + $0x318] sm:$0xff]
        %v3989 = vld [vmem:[%s3888 + $0x320] sm:$0xff]
        %v3990 = vld [vmem:[%s3888 + $0x328] sm:$0xff]
        %v3991 = vld [vmem:[%s3888 + $0x330] sm:$0xff]
        %v3992 = vld [vmem:[%s3888 + $0x338] sm:$0xff]
        %v3993 = vld [vmem:[%s3888 + $0x340] sm:$0xff]
        %v3994 = vld [vmem:[%s3888 + $0x348] sm:$0xff]
        %v3995 = vld [vmem:[%s3888 + $0x350] sm:$0xff]
        %v3996 = vld [vmem:[%s3888 + $0x358] sm:$0xff]
        %v3997 = vld [vmem:[%s3888 + $0x360] sm:$0xff]
        %v3998 = vld [vmem:[%s3888 + $0x368] sm:$0xff]
        %v3999 = vld [vmem:[%s3888 + $0x370] sm:$0xff]
        %v4000 = vld [vmem:[%s3888 + $0x378] sm:$0xff]
        %v4001 = vld [vmem:[%s3888 + $0x380] sm:$0xff]
        %v4002 = vld [vmem:[%s3888 + $0x388] sm:$0xff]
        %v4003 = vld [vmem:[%s3888 + $0x390] sm:$0xff]
        %v4004 = vld [vmem:[%s3888 + $0x398] sm:$0xff]
        %v4005 = vld [vmem:[%s3888 + $0x3a0] sm:$0xff]
        %v4006 = vld [vmem:[%s3888 + $0x3a8] sm:$0xff]
        %v4007 = vld [vmem:[%s3888 + $0x3b0] sm:$0xff]
        %v4008 = vld [vmem:[%s3888 + $0x3b8] sm:$0xff]
        %v4009 = vld [vmem:[%s3888 + $0x3c0] sm:$0xff]
        %v4010 = vld [vmem:[%s3888 + $0x3c8] sm:$0xff]
        %v4011 = vld [vmem:[%s3888 + $0x3d0] sm:$0xff]
        %v4012 = vld [vmem:[%s3888 + $0x3d8] sm:$0xff]
        %v4013 = vld [vmem:[%s3888 + $0x3e0] sm:$0xff]
        %v4014 = vld [vmem:[%s3888 + $0x3e8] sm:$0xff]
        %v4015 = vld [vmem:[%s3888 + $0x3f0] sm:$0xff]
        %v4016 = vld [vmem:[%s3888 + $0x3f8] sm:$0xff]
        %4017 = vmatprep.subr.mxu0 %v3890
        %4018 = vmatpush1.msra.mxu0 %v3889
        %4019 = vmatprep.subr.mxu0 %v3892
        %4020 = vmatpush1.msra.mxu0 %v3891
        %4021 = vmatprep.subr.mxu0 %v3894
        %4022 = vmatpush1.msra.mxu0 %v3893
        %4023 = vmatprep.subr.mxu0 %v3896
        %4024 = vmatpush1.msra.mxu0 %v3895
        %4025 = vmatprep.subr.mxu0 %v3898
        %4026 = vmatpush1.msra.mxu0 %v3897
        %4027 = vmatprep.subr.mxu0 %v3900
        %4028 = vmatpush1.msra.mxu0 %v3899
        %4029 = vmatprep.subr.mxu0 %v3902
        %4030 = vmatpush1.msra.mxu0 %v3901
        %4031 = vmatprep.subr.mxu0 %v3904
        %4032 = vmatpush1.msra.mxu0 %v3903
        %4033 = vmatprep.subr.mxu0 %v3906
        %4034 = vmatpush1.msra.mxu0 %v3905
        %4035 = vmatprep.subr.mxu0 %v3908
        %4036 = vmatpush1.msra.mxu0 %v3907
        %4037 = vmatprep.subr.mxu0 %v3910
        %4038 = vmatpush1.msra.mxu0 %v3909
        %4039 = vmatprep.subr.mxu0 %v3912
        %4040 = vmatpush1.msra.mxu0 %v3911
        %4041 = vmatprep.subr.mxu0 %v3914
        %4042 = vmatpush1.msra.mxu0 %v3913
        %4043 = vmatprep.subr.mxu0 %v3916
        %4044 = vmatpush1.msra.mxu0 %v3915
        %4045 = vmatprep.subr.mxu0 %v3918
        %4046 = vmatpush1.msra.mxu0 %v3917
        %4047 = vmatprep.subr.mxu0 %v3920
        %4048 = vmatpush1.msra.mxu0 %v3919
        %4049 = vmatprep.subr.mxu0 %v3922
        %4050 = vmatpush1.msra.mxu0 %v3921
        %4051 = vmatprep.subr.mxu0 %v3924
        %4052 = vmatpush1.msra.mxu0 %v3923
        %4053 = vmatprep.subr.mxu0 %v3926
        %4054 = vmatpush1.msra.mxu0 %v3925
        %4055 = vmatprep.subr.mxu0 %v3928
        %4056 = vmatpush1.msra.mxu0 %v3927
        %4057 = vmatprep.subr.mxu0 %v3930
        %4058 = vmatpush1.msra.mxu0 %v3929
        %4059 = vmatprep.subr.mxu0 %v3932
        %4060 = vmatpush1.msra.mxu0 %v3931
        %4061 = vmatprep.subr.mxu0 %v3934
        %4062 = vmatpush1.msra.mxu0 %v3933
        %4063 = vmatprep.subr.mxu0 %v3936
        %4064 = vmatpush1.msra.mxu0 %v3935
        %4065 = vmatprep.subr.mxu0 %v3938
        %4066 = vmatpush1.msra.mxu0 %v3937
        %4067 = vmatprep.subr.mxu0 %v3940
        %4068 = vmatpush1.msra.mxu0 %v3939
        %4069 = vmatprep.subr.mxu0 %v3942
        %4070 = vmatpush1.msra.mxu0 %v3941
        %4071 = vmatprep.subr.mxu0 %v3944
        %4072 = vmatpush1.msra.mxu0 %v3943
        %4073 = vmatprep.subr.mxu0 %v3946
        %4074 = vmatpush1.msra.mxu0 %v3945
        %4075 = vmatprep.subr.mxu0 %v3948
        %4076 = vmatpush1.msra.mxu0 %v3947
        %4077 = vmatprep.subr.mxu0 %v3950
        %4078 = vmatpush1.msra.mxu0 %v3949
        %4079 = vmatprep.subr.mxu0 %v3952
        %4080 = vmatpush1.msra.mxu0 %v3951
        %4081 = vmatprep.mubr.f32.mxu0 %v3765
        %4082 = vmatmul.mubr.f32.gmra.mrb[0].mxu0 %v3762
        %v4083 = vpop.f32.mrb[0].mxu0
        %v4084 = vadd.f32 0.0, %v4083
        %v4085 = vpop.f32.mrb[0].mxu0
        %v4086 = vadd.f32 0.0, %v4085
        %4087 = vmatprep.mubr.f32.mxu0 %v3777
        %4088 = vmatmul.mubr.f32.gmra.mrb[0].mxu0 %v3774
        %v4089 = vpop.f32.mrb[0].mxu0
        %v4090 = vadd.f32 0.0, %v4089
        %v4091 = vpop.f32.mrb[0].mxu0
        %v4092 = vadd.f32 0.0, %v4091
        %4093 = vmatprep.mubr.f32.mxu0 %v3789
        %4094 = vmatmul.mubr.f32.gmra.mrb[0].mxu0 %v3786
        %v4095 = vpop.f32.mrb[0].mxu0
        %v4096 = vadd.f32 0.0, %v4095
        %v4097 = vpop.f32.mrb[0].mxu0
        %v4098 = vadd.f32 0.0, %v4097
        %4099 = vmatprep.mubr.f32.mxu0 %v3801
        %4100 = vmatmul.mubr.f32.gmra.mrb[0].mxu0 %v3798
        %v4101 = vpop.f32.mrb[0].mxu0
        %v4102 = vadd.f32 0.0, %v4101
        %v4103 = vpop.f32.mrb[0].mxu0
        %v4104 = vadd.f32 0.0, %v4103
        %4105 = vmatprep.mubr.f32.mxu0 %v3813
        %4106 = vmatmul.mubr.f32.gmra.mrb[0].mxu0 %v3810
        %v4107 = vpop.f32.mrb[0].mxu0
        %v4108 = vadd.f32 0.0, %v4107
        %v4109 = vpop.f32.mrb[0].mxu0
        %v4110 = vadd.f32 0.0, %v4109
        %4111 = vmatprep.mubr.f32.mxu0 %v3825
        %4112 = vmatmul.mubr.f32.gmra.mrb[0].mxu0 %v3822
        %v4113 = vpop.f32.mrb[0].mxu0
        %v4114 = vadd.f32 0.0, %v4113
        %v4115 = vpop.f32.mrb[0].mxu0
        %v4116 = vadd.f32 0.0, %v4115
        %4117 = vmatprep.mubr.f32.mxu0 %v3837
        %4118 = vmatmul.mubr.f32.gmra.mrb[0].mxu0 %v3834
        %v4119 = vpop.f32.mrb[0].mxu0
        %v4120 = vadd.f32 0.0, %v4119
        %v4121 = vpop.f32.mrb[0].mxu0
        %v4122 = vadd.f32 0.0, %v4121
        %4123 = vmatprep.mubr.f32.mxu0 %v3849
        %4124 = vmatmul.mubr.f32.gmra.mrb[0].mxu0 %v3846
        %v4125 = vpop.f32.mrb[0].mxu0
        %v4126 = vadd.f32 0.0, %v4125
        %v4127 = vpop.f32.mrb[0].mxu0
        %v4128 = vadd.f32 0.0, %v4127
        %4129 = vdwg.mxu0
        %4130 = vmatprep.subr.mxu0 %v3954
        %4131 = vmatpush1.msra.mxu0 %v3953
        %4132 = vmatprep.subr.mxu0 %v3956
        %4133 = vmatpush1.msra.mxu0 %v3955
        %4134 = vmatprep.subr.mxu0 %v3958
        %4135 = vmatpush1.msra.mxu0 %v3957
        %4136 = vmatprep.subr.mxu0 %v3960
        %4137 = vmatpush1.msra.mxu0 %v3959
        %4138 = vmatprep.subr.mxu0 %v3962
        %4139 = vmatpush1.msra.mxu0 %v3961
        %4140 = vmatprep.subr.mxu0 %v3964
        %4141 = vmatpush1.msra.mxu0 %v3963
        %4142 = vmatprep.subr.mxu0 %v3966
        %4143 = vmatpush1.msra.mxu0 %v3965
        %4144 = vmatprep.subr.mxu0 %v3968
        %4145 = vmatpush1.msra.mxu0 %v3967
        %4146 = vmatprep.subr.mxu0 %v3970
        %4147 = vmatpush1.msra.mxu0 %v3969
        %4148 = vmatprep.subr.mxu0 %v3972
        %4149 = vmatpush1.msra.mxu0 %v3971
        %4150 = vmatprep.subr.mxu0 %v3974
        %4151 = vmatpush1.msra.mxu0 %v3973
        %4152 = vmatprep.subr.mxu0 %v3976
        %4153 = vmatpush1.msra.mxu0 %v3975
        %4154 = vmatprep.subr.mxu0 %v3978
        %4155 = vmatpush1.msra.mxu0 %v3977
        %4156 = vmatprep.subr.mxu0 %v3980
        %4157 = vmatpush1.msra.mxu0 %v3979
        %4158 = vmatprep.subr.mxu0 %v3982
        %4159 = vmatpush1.msra.mxu0 %v3981
        %4160 = vmatprep.subr.mxu0 %v3984
        %4161 = vmatpush1.msra.mxu0 %v3983
        %4162 = vmatprep.subr.mxu0 %v3986
        %4163 = vmatpush1.msra.mxu0 %v3985
        %4164 = vmatprep.subr.mxu0 %v3988
        %4165 = vmatpush1.msra.mxu0 %v3987
        %4166 = vmatprep.subr.mxu0 %v3990
        %4167 = vmatpush1.msra.mxu0 %v3989
        %4168 = vmatprep.subr.mxu0 %v3992
        %4169 = vmatpush1.msra.mxu0 %v3991
        %4170 = vmatprep.subr.mxu0 %v3994
        %4171 = vmatpush1.msra.mxu0 %v3993
        %4172 = vmatprep.subr.mxu0 %v3996
        %4173 = vmatpush1.msra.mxu0 %v3995
        %4174 = vmatprep.subr.mxu0 %v3998
        %4175 = vmatpush1.msra.mxu0 %v3997
        %4176 = vmatprep.subr.mxu0 %v4000
        %4177 = vmatpush1.msra.mxu0 %v3999
        %4178 = vmatprep.subr.mxu0 %v4002
        %4179 = vmatpush1.msra.mxu0 %v4001
        %4180 = vmatprep.subr.mxu0 %v4004
        %4181 = vmatpush1.msra.mxu0 %v4003
        %4182 = vmatprep.subr.mxu0 %v4006
        %4183 = vmatpush1.msra.mxu0 %v4005
        %4184 = vmatprep.subr.mxu0 %v4008
        %4185 = vmatpush1.msra.mxu0 %v4007
        %4186 = vmatprep.subr.mxu0 %v4010
        %4187 = vmatpush1.msra.mxu0 %v4009
        %4188 = vmatprep.subr.mxu0 %v4012
        %4189 = vmatpush1.msra.mxu0 %v4011
        %4190 = vmatprep.subr.mxu0 %v4014
        %4191 = vmatpush1.msra.mxu0 %v4013
        %4192 = vmatprep.subr.mxu0 %v4016
        %4193 = vmatpush1.msra.mxu0 %v4015
        %4194 = vmatprep.mubr.f32.mxu0 %v3771
        %4195 = vmatmul.mubr.f32.gmra.mrb[0].mxu0 %v3768
        %v4196 = vpop.f32.mrb[0].mxu0
        %v4197 = vadd.f32 %v4084, %v4196
        %v4198 = vpop.f32.mrb[0].mxu0
        %v4199 = vadd.f32 %v4086, %v4198
        %4200 = vmatprep.mubr.f32.mxu0 %v3783
        %4201 = vmatmul.mubr.f32.gmra.mrb[0].mxu0 %v3780
        %v4202 = vpop.f32.mrb[0].mxu0
        %v4203 = vadd.f32 %v4090, %v4202
        %v4204 = vpop.f32.mrb[0].mxu0
        %v4205 = vadd.f32 %v4092, %v4204
        %4206 = vmatprep.mubr.f32.mxu0 %v3795
        %4207 = vmatmul.mubr.f32.gmra.mrb[0].mxu0 %v3792
        %v4208 = vpop.f32.mrb[0].mxu0
        %v4209 = vadd.f32 %v4096, %v4208
        %v4210 = vpop.f32.mrb[0].mxu0
        %v4211 = vadd.f32 %v4098, %v4210
        %4212 = vmatprep.mubr.f32.mxu0 %v3807
        %4213 = vmatmul.mubr.f32.gmra.mrb[0].mxu0 %v3804
        %v4214 = vpop.f32.mrb[0].mxu0
        %v4215 = vadd.f32 %v4102, %v4214
        %v4216 = vpop.f32.mrb[0].mxu0
        %v4217 = vadd.f32 %v4104, %v4216
        %4218 = vmatprep.mubr.f32.mxu0 %v3819
        %4219 = vmatmul.mubr.f32.gmra.mrb[0].mxu0 %v3816
        %v4220 = vpop.f32.mrb[0].mxu0
        %v4221 = vadd.f32 %v4108, %v4220
        %v4222 = vpop.f32.mrb[0].mxu0
        %v4223 = vadd.f32 %v4110, %v4222
        %4224 = vmatprep.mubr.f32.mxu0 %v3831
        %4225 = vmatmul.mubr.f32.gmra.mrb[0].mxu0 %v3828
        %v4226 = vpop.f32.mrb[0].mxu0
        %v4227 = vadd.f32 %v4114, %v4226
        %v4228 = vpop.f32.mrb[0].mxu0
        %v4229 = vadd.f32 %v4116, %v4228
        %4230 = vmatprep.mubr.f32.mxu0 %v3843
        %4231 = vmatmul.mubr.f32.gmra.mrb[0].mxu0 %v3840
        %v4232 = vpop.f32.mrb[0].mxu0
        %v4233 = vadd.f32 %v4120, %v4232
        %v4234 = vpop.f32.mrb[0].mxu0
        %v4235 = vadd.f32 %v4122, %v4234
        %4236 = vmatprep.mubr.f32.mxu0 %v3855
        %4237 = vmatmul.mubr.f32.gmra.mrb[0].mxu0 %v3852
        %v4238 = vpop.f32.mrb[0].mxu0
        %v4239 = vadd.f32 %v4126, %v4238
        %v4240 = vpop.f32.mrb[0].mxu0
        %v4241 = vadd.f32 %v4128, %v4240
        %4242 = vdwg.mxu0
        %v4243 = vadd.f32 %v3599, %v4197
        %v4244 = vadd.f32 %v3600, %v4199
        %v4245 = vadd.f32 %v3601, %v4203
        %v4246 = vadd.f32 %v3602, %v4205
        %v4247 = vadd.f32 %v3603, %v4209
        %v4248 = vadd.f32 %v3604, %v4211
        %v4249 = vadd.f32 %v3605, %v4215
        %v4250 = vadd.f32 %v3606, %v4217
        %v4251 = vadd.f32 %v3607, %v4221
        %v4252 = vadd.f32 %v3608, %v4223
        %v4253 = vadd.f32 %v3609, %v4227
        %v4254 = vadd.f32 %v3610, %v4229
        %v4255 = vadd.f32 %v3611, %v4233
        %v4256 = vadd.f32 %v3612, %v4235
        %v4257 = vadd.f32 %v3613, %v4239
        %v4258 = vadd.f32 %v3614, %v4241
        %v4267 = vrot.slane %v3679, 2
        %v4268 = vrot.slane %v3683, 2
        %v4269 = vsel %vm3759, %v4267, %v4268
        %v4270 = vrot.slane %v3680, 2
        %v4271 = vrot.slane %v3684, 2
        %v4272 = vsel %vm3759, %v4270, %v4271
        %v4273 = vrot.slane %v3681, 2
        %v4274 = vrot.slane %v3685, 2
        %v4275 = vsel %vm3759, %v4273, %v4274
        %v4276 = vrot.slane %v3682, 2
        %v4277 = vrot.slane %v3686, 2
        %v4278 = vsel %vm3759, %v4276, %v4277
        %s4283 = scalar_lea.vmem [#allocation10], 5120
        %v4284 = vld [vmem:[%s4283] sm:$0xff]
        %v4285 = vld [vmem:[%s4283 + $0x8] sm:$0xff]
        %v4286 = vld [vmem:[%s4283 + $0x10] sm:$0xff]
        %v4287 = vld [vmem:[%s4283 + $0x18] sm:$0xff]
        %v4288 = vld [vmem:[%s4283 + $0x20] sm:$0xff]
        %v4289 = vld [vmem:[%s4283 + $0x28] sm:$0xff]
        %v4290 = vld [vmem:[%s4283 + $0x30] sm:$0xff]
        %v4291 = vld [vmem:[%s4283 + $0x38] sm:$0xff]
        %v4292 = vld [vmem:[%s4283 + $0x40] sm:$0xff]
        %v4293 = vld [vmem:[%s4283 + $0x48] sm:$0xff]
        %v4294 = vld [vmem:[%s4283 + $0x50] sm:$0xff]
        %v4295 = vld [vmem:[%s4283 + $0x58] sm:$0xff]
        %v4296 = vld [vmem:[%s4283 + $0x60] sm:$0xff]
        %v4297 = vld [vmem:[%s4283 + $0x68] sm:$0xff]
        %v4298 = vld [vmem:[%s4283 + $0x70] sm:$0xff]
        %v4299 = vld [vmem:[%s4283 + $0x78] sm:$0xff]
        %v4300 = vld [vmem:[%s4283 + $0x80] sm:$0xff]
        %v4301 = vld [vmem:[%s4283 + $0x88] sm:$0xff]
        %v4302 = vld [vmem:[%s4283 + $0x90] sm:$0xff]
        %v4303 = vld [vmem:[%s4283 + $0x98] sm:$0xff]
        %v4304 = vld [vmem:[%s4283 + $0xa0] sm:$0xff]
        %v4305 = vld [vmem:[%s4283 + $0xa8] sm:$0xff]
        %v4306 = vld [vmem:[%s4283 + $0xb0] sm:$0xff]
        %v4307 = vld [vmem:[%s4283 + $0xb8] sm:$0xff]
        %v4308 = vld [vmem:[%s4283 + $0xc0] sm:$0xff]
        %v4309 = vld [vmem:[%s4283 + $0xc8] sm:$0xff]
        %v4310 = vld [vmem:[%s4283 + $0xd0] sm:$0xff]
        %v4311 = vld [vmem:[%s4283 + $0xd8] sm:$0xff]
        %v4312 = vld [vmem:[%s4283 + $0xe0] sm:$0xff]
        %v4313 = vld [vmem:[%s4283 + $0xe8] sm:$0xff]
        %v4314 = vld [vmem:[%s4283 + $0xf0] sm:$0xff]
        %v4315 = vld [vmem:[%s4283 + $0xf8] sm:$0xff]
        %v4316 = vld [vmem:[%s4283 + $0x100] sm:$0xff]
        %v4317 = vld [vmem:[%s4283 + $0x108] sm:$0xff]
        %v4318 = vld [vmem:[%s4283 + $0x110] sm:$0xff]
        %v4319 = vld [vmem:[%s4283 + $0x118] sm:$0xff]
        %v4320 = vld [vmem:[%s4283 + $0x120] sm:$0xff]
        %v4321 = vld [vmem:[%s4283 + $0x128] sm:$0xff]
        %v4322 = vld [vmem:[%s4283 + $0x130] sm:$0xff]
        %v4323 = vld [vmem:[%s4283 + $0x138] sm:$0xff]
        %v4324 = vld [vmem:[%s4283 + $0x140] sm:$0xff]
        %v4325 = vld [vmem:[%s4283 + $0x148] sm:$0xff]
        %v4326 = vld [vmem:[%s4283 + $0x150] sm:$0xff]
        %v4327 = vld [vmem:[%s4283 + $0x158] sm:$0xff]
        %v4328 = vld [vmem:[%s4283 + $0x160] sm:$0xff]
        %v4329 = vld [vmem:[%s4283 + $0x168] sm:$0xff]
        %v4330 = vld [vmem:[%s4283 + $0x170] sm:$0xff]
        %v4331 = vld [vmem:[%s4283 + $0x178] sm:$0xff]
        %v4332 = vld [vmem:[%s4283 + $0x180] sm:$0xff]
        %v4333 = vld [vmem:[%s4283 + $0x188] sm:$0xff]
        %v4334 = vld [vmem:[%s4283 + $0x190] sm:$0xff]
        %v4335 = vld [vmem:[%s4283 + $0x198] sm:$0xff]
        %v4336 = vld [vmem:[%s4283 + $0x1a0] sm:$0xff]
        %v4337 = vld [vmem:[%s4283 + $0x1a8] sm:$0xff]
        %v4338 = vld [vmem:[%s4283 + $0x1b0] sm:$0xff]
        %v4339 = vld [vmem:[%s4283 + $0x1b8] sm:$0xff]
        %v4340 = vld [vmem:[%s4283 + $0x1c0] sm:$0xff]
        %v4341 = vld [vmem:[%s4283 + $0x1c8] sm:$0xff]
        %v4342 = vld [vmem:[%s4283 + $0x1d0] sm:$0xff]
        %v4343 = vld [vmem:[%s4283 + $0x1d8] sm:$0xff]
        %v4344 = vld [vmem:[%s4283 + $0x1e0] sm:$0xff]
        %v4345 = vld [vmem:[%s4283 + $0x1e8] sm:$0xff]
        %v4346 = vld [vmem:[%s4283 + $0x1f0] sm:$0xff]
        %v4347 = vld [vmem:[%s4283 + $0x1f8] sm:$0xff]
        %v4348 = vld [vmem:[%s4283 + $0x200] sm:$0xff]
        %v4349 = vld [vmem:[%s4283 + $0x208] sm:$0xff]
        %v4350 = vld [vmem:[%s4283 + $0x210] sm:$0xff]
        %v4351 = vld [vmem:[%s4283 + $0x218] sm:$0xff]
        %v4352 = vld [vmem:[%s4283 + $0x220] sm:$0xff]
        %v4353 = vld [vmem:[%s4283 + $0x228] sm:$0xff]
        %v4354 = vld [vmem:[%s4283 + $0x230] sm:$0xff]
        %v4355 = vld [vmem:[%s4283 + $0x238] sm:$0xff]
        %v4356 = vld [vmem:[%s4283 + $0x240] sm:$0xff]
        %v4357 = vld [vmem:[%s4283 + $0x248] sm:$0xff]
        %v4358 = vld [vmem:[%s4283 + $0x250] sm:$0xff]
        %v4359 = vld [vmem:[%s4283 + $0x258] sm:$0xff]
        %v4360 = vld [vmem:[%s4283 + $0x260] sm:$0xff]
        %v4361 = vld [vmem:[%s4283 + $0x268] sm:$0xff]
        %v4362 = vld [vmem:[%s4283 + $0x270] sm:$0xff]
        %v4363 = vld [vmem:[%s4283 + $0x278] sm:$0xff]
        %v4364 = vld [vmem:[%s4283 + $0x280] sm:$0xff]
        %v4365 = vld [vmem:[%s4283 + $0x288] sm:$0xff]
        %v4366 = vld [vmem:[%s4283 + $0x290] sm:$0xff]
        %v4367 = vld [vmem:[%s4283 + $0x298] sm:$0xff]
        %v4368 = vld [vmem:[%s4283 + $0x2a0] sm:$0xff]
        %v4369 = vld [vmem:[%s4283 + $0x2a8] sm:$0xff]
        %v4370 = vld [vmem:[%s4283 + $0x2b0] sm:$0xff]
        %v4371 = vld [vmem:[%s4283 + $0x2b8] sm:$0xff]
        %v4372 = vld [vmem:[%s4283 + $0x2c0] sm:$0xff]
        %v4373 = vld [vmem:[%s4283 + $0x2c8] sm:$0xff]
        %v4374 = vld [vmem:[%s4283 + $0x2d0] sm:$0xff]
        %v4375 = vld [vmem:[%s4283 + $0x2d8] sm:$0xff]
        %v4376 = vld [vmem:[%s4283 + $0x2e0] sm:$0xff]
        %v4377 = vld [vmem:[%s4283 + $0x2e8] sm:$0xff]
        %v4378 = vld [vmem:[%s4283 + $0x2f0] sm:$0xff]
        %v4379 = vld [vmem:[%s4283 + $0x2f8] sm:$0xff]
        %v4380 = vld [vmem:[%s4283 + $0x300] sm:$0xff]
        %v4381 = vld [vmem:[%s4283 + $0x308] sm:$0xff]
        %v4382 = vld [vmem:[%s4283 + $0x310] sm:$0xff]
        %v4383 = vld [vmem:[%s4283 + $0x318] sm:$0xff]
        %v4384 = vld [vmem:[%s4283 + $0x320] sm:$0xff]
        %v4385 = vld [vmem:[%s4283 + $0x328] sm:$0xff]
        %v4386 = vld [vmem:[%s4283 + $0x330] sm:$0xff]
        %v4387 = vld [vmem:[%s4283 + $0x338] sm:$0xff]
        %v4388 = vld [vmem:[%s4283 + $0x340] sm:$0xff]
        %v4389 = vld [vmem:[%s4283 + $0x348] sm:$0xff]
        %v4390 = vld [vmem:[%s4283 + $0x350] sm:$0xff]
        %v4391 = vld [vmem:[%s4283 + $0x358] sm:$0xff]
        %v4392 = vld [vmem:[%s4283 + $0x360] sm:$0xff]
        %v4393 = vld [vmem:[%s4283 + $0x368] sm:$0xff]
        %v4394 = vld [vmem:[%s4283 + $0x370] sm:$0xff]
        %v4395 = vld [vmem:[%s4283 + $0x378] sm:$0xff]
        %v4396 = vld [vmem:[%s4283 + $0x380] sm:$0xff]
        %v4397 = vld [vmem:[%s4283 + $0x388] sm:$0xff]
        %v4398 = vld [vmem:[%s4283 + $0x390] sm:$0xff]
        %v4399 = vld [vmem:[%s4283 + $0x398] sm:$0xff]
        %v4400 = vld [vmem:[%s4283 + $0x3a0] sm:$0xff]
        %v4401 = vld [vmem:[%s4283 + $0x3a8] sm:$0xff]
        %v4402 = vld [vmem:[%s4283 + $0x3b0] sm:$0xff]
        %v4403 = vld [vmem:[%s4283 + $0x3b8] sm:$0xff]
        %v4404 = vld [vmem:[%s4283 + $0x3c0] sm:$0xff]
        %v4405 = vld [vmem:[%s4283 + $0x3c8] sm:$0xff]
        %v4406 = vld [vmem:[%s4283 + $0x3d0] sm:$0xff]
        %v4407 = vld [vmem:[%s4283 + $0x3d8] sm:$0xff]
        %v4408 = vld [vmem:[%s4283 + $0x3e0] sm:$0xff]
        %v4409 = vld [vmem:[%s4283 + $0x3e8] sm:$0xff]
        %v4410 = vld [vmem:[%s4283 + $0x3f0] sm:$0xff]
        %v4411 = vld [vmem:[%s4283 + $0x3f8] sm:$0xff]
        %4412 = vmatprep.subr.mxu0 %v4285
        %4413 = vmatpush1.msra.mxu0 %v4284
        %4414 = vmatprep.subr.mxu0 %v4287
        %4415 = vmatpush1.msra.mxu0 %v4286
        %4416 = vmatprep.subr.mxu0 %v4289
        %4417 = vmatpush1.msra.mxu0 %v4288
        %4418 = vmatprep.subr.mxu0 %v4291
        %4419 = vmatpush1.msra.mxu0 %v4290
        %4420 = vmatprep.subr.mxu0 %v4293
        %4421 = vmatpush1.msra.mxu0 %v4292
        %4422 = vmatprep.subr.mxu0 %v4295
        %4423 = vmatpush1.msra.mxu0 %v4294
        %4424 = vmatprep.subr.mxu0 %v4297
        %4425 = vmatpush1.msra.mxu0 %v4296
        %4426 = vmatprep.subr.mxu0 %v4299
        %4427 = vmatpush1.msra.mxu0 %v4298
        %4428 = vmatprep.subr.mxu0 %v4301
        %4429 = vmatpush1.msra.mxu0 %v4300
        %4430 = vmatprep.subr.mxu0 %v4303
        %4431 = vmatpush1.msra.mxu0 %v4302
        %4432 = vmatprep.subr.mxu0 %v4305
        %4433 = vmatpush1.msra.mxu0 %v4304
        %4434 = vmatprep.subr.mxu0 %v4307
        %4435 = vmatpush1.msra.mxu0 %v4306
        %4436 = vmatprep.subr.mxu0 %v4309
        %4437 = vmatpush1.msra.mxu0 %v4308
        %4438 = vmatprep.subr.mxu0 %v4311
        %4439 = vmatpush1.msra.mxu0 %v4310
        %4440 = vmatprep.subr.mxu0 %v4313
        %4441 = vmatpush1.msra.mxu0 %v4312
        %4442 = vmatprep.subr.mxu0 %v4315
        %4443 = vmatpush1.msra.mxu0 %v4314
        %4444 = vmatprep.subr.mxu0 %v4317
        %4445 = vmatpush1.msra.mxu0 %v4316
        %4446 = vmatprep.subr.mxu0 %v4319
        %4447 = vmatpush1.msra.mxu0 %v4318
        %4448 = vmatprep.subr.mxu0 %v4321
        %4449 = vmatpush1.msra.mxu0 %v4320
        %4450 = vmatprep.subr.mxu0 %v4323
        %4451 = vmatpush1.msra.mxu0 %v4322
        %4452 = vmatprep.subr.mxu0 %v4325
        %4453 = vmatpush1.msra.mxu0 %v4324
        %4454 = vmatprep.subr.mxu0 %v4327
        %4455 = vmatpush1.msra.mxu0 %v4326
        %4456 = vmatprep.subr.mxu0 %v4329
        %4457 = vmatpush1.msra.mxu0 %v4328
        %4458 = vmatprep.subr.mxu0 %v4331
        %4459 = vmatpush1.msra.mxu0 %v4330
        %4460 = vmatprep.subr.mxu0 %v4333
        %4461 = vmatpush1.msra.mxu0 %v4332
        %4462 = vmatprep.subr.mxu0 %v4335
        %4463 = vmatpush1.msra.mxu0 %v4334
        %4464 = vmatprep.subr.mxu0 %v4337
        %4465 = vmatpush1.msra.mxu0 %v4336
        %4466 = vmatprep.subr.mxu0 %v4339
        %4467 = vmatpush1.msra.mxu0 %v4338
        %4468 = vmatprep.subr.mxu0 %v4341
        %4469 = vmatpush1.msra.mxu0 %v4340
        %4470 = vmatprep.subr.mxu0 %v4343
        %4471 = vmatpush1.msra.mxu0 %v4342
        %4472 = vmatprep.subr.mxu0 %v4345
        %4473 = vmatpush1.msra.mxu0 %v4344
        %4474 = vmatprep.subr.mxu0 %v4347
        %4475 = vmatpush1.msra.mxu0 %v4346
        %4476 = vmatprep.mubr.f32.mxu0 %v3777
        %4477 = vmatmul.mubr.f32.gmra.mrb[0].mxu0 %v3774
        %v4478 = vpop.f32.mrb[0].mxu0
        %v4479 = vadd.f32 0.0, %v4478
        %v4480 = vpop.f32.mrb[0].mxu0
        %v4481 = vadd.f32 0.0, %v4480
        %4482 = vmatprep.mubr.f32.mxu0 %v3789
        %4483 = vmatmul.mubr.f32.gmra.mrb[0].mxu0 %v3786
        %v4484 = vpop.f32.mrb[0].mxu0
        %v4485 = vadd.f32 0.0, %v4484
        %v4486 = vpop.f32.mrb[0].mxu0
        %v4487 = vadd.f32 0.0, %v4486
        %4488 = vmatprep.mubr.f32.mxu0 %v3801
        %4489 = vmatmul.mubr.f32.gmra.mrb[0].mxu0 %v3798
        %v4490 = vpop.f32.mrb[0].mxu0
        %v4491 = vadd.f32 0.0, %v4490
        %v4492 = vpop.f32.mrb[0].mxu0
        %v4493 = vadd.f32 0.0, %v4492
        %4494 = vmatprep.mubr.f32.mxu0 %v3813
        %4495 = vmatmul.mubr.f32.gmra.mrb[0].mxu0 %v3810
        %v4496 = vpop.f32.mrb[0].mxu0
        %v4497 = vadd.f32 0.0, %v4496
        %v4498 = vpop.f32.mrb[0].mxu0
        %v4499 = vadd.f32 0.0, %v4498
        %4500 = vmatprep.mubr.f32.mxu0 %v3825
        %4501 = vmatmul.mubr.f32.gmra.mrb[0].mxu0 %v3822
        %v4502 = vpop.f32.mrb[0].mxu0
        %v4503 = vadd.f32 0.0, %v4502
        %v4504 = vpop.f32.mrb[0].mxu0
        %v4505 = vadd.f32 0.0, %v4504
        %4506 = vmatprep.mubr.f32.mxu0 %v3837
        %4507 = vmatmul.mubr.f32.gmra.mrb[0].mxu0 %v3834
        %v4508 = vpop.f32.mrb[0].mxu0
        %v4509 = vadd.f32 0.0, %v4508
        %v4510 = vpop.f32.mrb[0].mxu0
        %v4511 = vadd.f32 0.0, %v4510
        %4512 = vmatprep.mubr.f32.mxu0 %v3849
        %4513 = vmatmul.mubr.f32.gmra.mrb[0].mxu0 %v3846
        %v4514 = vpop.f32.mrb[0].mxu0
        %v4515 = vadd.f32 0.0, %v4514
        %v4516 = vpop.f32.mrb[0].mxu0
        %v4517 = vadd.f32 0.0, %v4516
        %4518 = vmatprep.mubr.f32.mxu0 %v4272
        %4519 = vmatmul.mubr.f32.gmra.mrb[0].mxu0 %v4269
        %v4520 = vpop.f32.mrb[0].mxu0
        %v4521 = vadd.f32 0.0, %v4520
        %v4522 = vpop.f32.mrb[0].mxu0
        %v4523 = vadd.f32 0.0, %v4522
        %4524 = vdwg.mxu0
        %4525 = vmatprep.subr.mxu0 %v4349
        %4526 = vmatpush1.msra.mxu0 %v4348
        %4527 = vmatprep.subr.mxu0 %v4351
        %4528 = vmatpush1.msra.mxu0 %v4350
        %4529 = vmatprep.subr.mxu0 %v4353
        %4530 = vmatpush1.msra.mxu0 %v4352
        %4531 = vmatprep.subr.mxu0 %v4355
        %4532 = vmatpush1.msra.mxu0 %v4354
        %4533 = vmatprep.subr.mxu0 %v4357
        %4534 = vmatpush1.msra.mxu0 %v4356
        %4535 = vmatprep.subr.mxu0 %v4359
        %4536 = vmatpush1.msra.mxu0 %v4358
        %4537 = vmatprep.subr.mxu0 %v4361
        %4538 = vmatpush1.msra.mxu0 %v4360
        %4539 = vmatprep.subr.mxu0 %v4363
        %4540 = vmatpush1.msra.mxu0 %v4362
        %4541 = vmatprep.subr.mxu0 %v4365
        %4542 = vmatpush1.msra.mxu0 %v4364
        %4543 = vmatprep.subr.mxu0 %v4367
        %4544 = vmatpush1.msra.mxu0 %v4366
        %4545 = vmatprep.subr.mxu0 %v4369
        %4546 = vmatpush1.msra.mxu0 %v4368
        %4547 = vmatprep.subr.mxu0 %v4371
        %4548 = vmatpush1.msra.mxu0 %v4370
        %4549 = vmatprep.subr.mxu0 %v4373
        %4550 = vmatpush1.msra.mxu0 %v4372
        %4551 = vmatprep.subr.mxu0 %v4375
        %4552 = vmatpush1.msra.mxu0 %v4374
        %4553 = vmatprep.subr.mxu0 %v4377
        %4554 = vmatpush1.msra.mxu0 %v4376
        %4555 = vmatprep.subr.mxu0 %v4379
        %4556 = vmatpush1.msra.mxu0 %v4378
        %4557 = vmatprep.subr.mxu0 %v4381
        %4558 = vmatpush1.msra.mxu0 %v4380
        %4559 = vmatprep.subr.mxu0 %v4383
        %4560 = vmatpush1.msra.mxu0 %v4382
        %4561 = vmatprep.subr.mxu0 %v4385
        %4562 = vmatpush1.msra.mxu0 %v4384
        %4563 = vmatprep.subr.mxu0 %v4387
        %4564 = vmatpush1.msra.mxu0 %v4386
        %4565 = vmatprep.subr.mxu0 %v4389
        %4566 = vmatpush1.msra.mxu0 %v4388
        %4567 = vmatprep.subr.mxu0 %v4391
        %4568 = vmatpush1.msra.mxu0 %v4390
        %4569 = vmatprep.subr.mxu0 %v4393
        %4570 = vmatpush1.msra.mxu0 %v4392
        %4571 = vmatprep.subr.mxu0 %v4395
        %4572 = vmatpush1.msra.mxu0 %v4394
        %4573 = vmatprep.subr.mxu0 %v4397
        %4574 = vmatpush1.msra.mxu0 %v4396
        %4575 = vmatprep.subr.mxu0 %v4399
        %4576 = vmatpush1.msra.mxu0 %v4398
        %4577 = vmatprep.subr.mxu0 %v4401
        %4578 = vmatpush1.msra.mxu0 %v4400
        %4579 = vmatprep.subr.mxu0 %v4403
        %4580 = vmatpush1.msra.mxu0 %v4402
        %4581 = vmatprep.subr.mxu0 %v4405
        %4582 = vmatpush1.msra.mxu0 %v4404
        %4583 = vmatprep.subr.mxu0 %v4407
        %4584 = vmatpush1.msra.mxu0 %v4406
        %4585 = vmatprep.subr.mxu0 %v4409
        %4586 = vmatpush1.msra.mxu0 %v4408
        %4587 = vmatprep.subr.mxu0 %v4411
        %4588 = vmatpush1.msra.mxu0 %v4410
        %4589 = vmatprep.mubr.f32.mxu0 %v3783
        %4590 = vmatmul.mubr.f32.gmra.mrb[0].mxu0 %v3780
        %v4591 = vpop.f32.mrb[0].mxu0
        %v4592 = vadd.f32 %v4479, %v4591
        %v4593 = vpop.f32.mrb[0].mxu0
        %v4594 = vadd.f32 %v4481, %v4593
        %4595 = vmatprep.mubr.f32.mxu0 %v3795
        %4596 = vmatmul.mubr.f32.gmra.mrb[0].mxu0 %v3792
        %v4597 = vpop.f32.mrb[0].mxu0
        %v4598 = vadd.f32 %v4485, %v4597
        %v4599 = vpop.f32.mrb[0].mxu0
        %v4600 = vadd.f32 %v4487, %v4599
        %4601 = vmatprep.mubr.f32.mxu0 %v3807
        %4602 = vmatmul.mubr.f32.gmra.mrb[0].mxu0 %v3804
        %v4603 = vpop.f32.mrb[0].mxu0
        %v4604 = vadd.f32 %v4491, %v4603
        %v4605 = vpop.f32.mrb[0].mxu0
        %v4606 = vadd.f32 %v4493, %v4605
        %4607 = vmatprep.mubr.f32.mxu0 %v3819
        %4608 = vmatmul.mubr.f32.gmra.mrb[0].mxu0 %v3816
        %v4609 = vpop.f32.mrb[0].mxu0
        %v4610 = vadd.f32 %v4497, %v4609
        %v4611 = vpop.f32.mrb[0].mxu0
        %v4612 = vadd.f32 %v4499, %v4611
        %4613 = vmatprep.mubr.f32.mxu0 %v3831
        %4614 = vmatmul.mubr.f32.gmra.mrb[0].mxu0 %v3828
        %v4615 = vpop.f32.mrb[0].mxu0
        %v4616 = vadd.f32 %v4503, %v4615
        %v4617 = vpop.f32.mrb[0].mxu0
        %v4618 = vadd.f32 %v4505, %v4617
        %4619 = vmatprep.mubr.f32.mxu0 %v3843
        %4620 = vmatmul.mubr.f32.gmra.mrb[0].mxu0 %v3840
        %v4621 = vpop.f32.mrb[0].mxu0
        %v4622 = vadd.f32 %v4509, %v4621
        %v4623 = vpop.f32.mrb[0].mxu0
        %v4624 = vadd.f32 %v4511, %v4623
        %4625 = vmatprep.mubr.f32.mxu0 %v3855
        %4626 = vmatmul.mubr.f32.gmra.mrb[0].mxu0 %v3852
        %v4627 = vpop.f32.mrb[0].mxu0
        %v4628 = vadd.f32 %v4515, %v4627
        %v4629 = vpop.f32.mrb[0].mxu0
        %v4630 = vadd.f32 %v4517, %v4629
        %4631 = vmatprep.mubr.f32.mxu0 %v4278
        %4632 = vmatmul.mubr.f32.gmra.mrb[0].mxu0 %v4275
        %v4633 = vpop.f32.mrb[0].mxu0
        %v4634 = vadd.f32 %v4521, %v4633
        %v4635 = vpop.f32.mrb[0].mxu0
        %v4636 = vadd.f32 %v4523, %v4635
        %4637 = vdwg.mxu0
        %v4638 = vadd.f32 %v4243, %v4592
        %v4639 = vadd.f32 %v4244, %v4594
        %v4640 = vadd.f32 %v4245, %v4598
        %v4641 = vadd.f32 %v4246, %v4600
        %v4642 = vadd.f32 %v4247, %v4604
        %v4643 = vadd.f32 %v4248, %v4606
        %v4644 = vadd.f32 %v4249, %v4610
        %v4645 = vadd.f32 %v4250, %v4612
        %v4646 = vadd.f32 %v4251, %v4616
        %v4647 = vadd.f32 %v4252, %v4618
        %v4648 = vadd.f32 %v4253, %v4622
        %v4649 = vadd.f32 %v4254, %v4624
        %v4650 = vadd.f32 %v4255, %v4628
        %v4651 = vadd.f32 %v4256, %v4630
        %v4652 = vadd.f32 %v4257, %v4634
        %v4653 = vadd.f32 %v4258, %v4636
        %v4662 = vrot.slane %v3687, 2
        %v4663 = vrot.slane %v3691, 2
        %v4664 = vsel %vm3759, %v4662, %v4663
        %v4665 = vrot.slane %v3688, 2
        %v4666 = vrot.slane %v3692, 2
        %v4667 = vsel %vm3759, %v4665, %v4666
        %v4668 = vrot.slane %v3689, 2
        %v4669 = vrot.slane %v3693, 2
        %v4670 = vsel %vm3759, %v4668, %v4669
        %v4671 = vrot.slane %v3690, 2
        %v4672 = vrot.slane %v3694, 2
        %v4673 = vsel %vm3759, %v4671, %v4672
        %s4678 = scalar_lea.vmem [#allocation10], 8192
        %v4679 = vld [vmem:[%s4678] sm:$0xff]
        %v4680 = vld [vmem:[%s4678 + $0x8] sm:$0xff]
        %v4681 = vld [vmem:[%s4678 + $0x10] sm:$0xff]
        %v4682 = vld [vmem:[%s4678 + $0x18] sm:$0xff]
        %v4683 = vld [vmem:[%s4678 + $0x20] sm:$0xff]
        %v4684 = vld [vmem:[%s4678 + $0x28] sm:$0xff]
        %v4685 = vld [vmem:[%s4678 + $0x30] sm:$0xff]
        %v4686 = vld [vmem:[%s4678 + $0x38] sm:$0xff]
        %v4687 = vld [vmem:[%s4678 + $0x40] sm:$0xff]
        %v4688 = vld [vmem:[%s4678 + $0x48] sm:$0xff]
        %v4689 = vld [vmem:[%s4678 + $0x50] sm:$0xff]
        %v4690 = vld [vmem:[%s4678 + $0x58] sm:$0xff]
        %v4691 = vld [vmem:[%s4678 + $0x60] sm:$0xff]
        %v4692 = vld [vmem:[%s4678 + $0x68] sm:$0xff]
        %v4693 = vld [vmem:[%s4678 + $0x70] sm:$0xff]
        %v4694 = vld [vmem:[%s4678 + $0x78] sm:$0xff]
        %v4695 = vld [vmem:[%s4678 + $0x80] sm:$0xff]
        %v4696 = vld [vmem:[%s4678 + $0x88] sm:$0xff]
        %v4697 = vld [vmem:[%s4678 + $0x90] sm:$0xff]
        %v4698 = vld [vmem:[%s4678 + $0x98] sm:$0xff]
        %v4699 = vld [vmem:[%s4678 + $0xa0] sm:$0xff]
        %v4700 = vld [vmem:[%s4678 + $0xa8] sm:$0xff]
        %v4701 = vld [vmem:[%s4678 + $0xb0] sm:$0xff]
        %v4702 = vld [vmem:[%s4678 + $0xb8] sm:$0xff]
        %v4703 = vld [vmem:[%s4678 + $0xc0] sm:$0xff]
        %v4704 = vld [vmem:[%s4678 + $0xc8] sm:$0xff]
        %v4705 = vld [vmem:[%s4678 + $0xd0] sm:$0xff]
        %v4706 = vld [vmem:[%s4678 + $0xd8] sm:$0xff]
        %v4707 = vld [vmem:[%s4678 + $0xe0] sm:$0xff]
        %v4708 = vld [vmem:[%s4678 + $0xe8] sm:$0xff]
        %v4709 = vld [vmem:[%s4678 + $0xf0] sm:$0xff]
        %v4710 = vld [vmem:[%s4678 + $0xf8] sm:$0xff]
        %v4711 = vld [vmem:[%s4678 + $0x100] sm:$0xff]
        %v4712 = vld [vmem:[%s4678 + $0x108] sm:$0xff]
        %v4713 = vld [vmem:[%s4678 + $0x110] sm:$0xff]
        %v4714 = vld [vmem:[%s4678 + $0x118] sm:$0xff]
        %v4715 = vld [vmem:[%s4678 + $0x120] sm:$0xff]
        %v4716 = vld [vmem:[%s4678 + $0x128] sm:$0xff]
        %v4717 = vld [vmem:[%s4678 + $0x130] sm:$0xff]
        %v4718 = vld [vmem:[%s4678 + $0x138] sm:$0xff]
        %v4719 = vld [vmem:[%s4678 + $0x140] sm:$0xff]
        %v4720 = vld [vmem:[%s4678 + $0x148] sm:$0xff]
        %v4721 = vld [vmem:[%s4678 + $0x150] sm:$0xff]
        %v4722 = vld [vmem:[%s4678 + $0x158] sm:$0xff]
        %v4723 = vld [vmem:[%s4678 + $0x160] sm:$0xff]
        %v4724 = vld [vmem:[%s4678 + $0x168] sm:$0xff]
        %v4725 = vld [vmem:[%s4678 + $0x170] sm:$0xff]
        %v4726 = vld [vmem:[%s4678 + $0x178] sm:$0xff]
        %v4727 = vld [vmem:[%s4678 + $0x180] sm:$0xff]
        %v4728 = vld [vmem:[%s4678 + $0x188] sm:$0xff]
        %v4729 = vld [vmem:[%s4678 + $0x190] sm:$0xff]
        %v4730 = vld [vmem:[%s4678 + $0x198] sm:$0xff]
        %v4731 = vld [vmem:[%s4678 + $0x1a0] sm:$0xff]
        %v4732 = vld [vmem:[%s4678 + $0x1a8] sm:$0xff]
        %v4733 = vld [vmem:[%s4678 + $0x1b0] sm:$0xff]
        %v4734 = vld [vmem:[%s4678 + $0x1b8] sm:$0xff]
        %v4735 = vld [vmem:[%s4678 + $0x1c0] sm:$0xff]
        %v4736 = vld [vmem:[%s4678 + $0x1c8] sm:$0xff]
        %v4737 = vld [vmem:[%s4678 + $0x1d0] sm:$0xff]
        %v4738 = vld [vmem:[%s4678 + $0x1d8] sm:$0xff]
        %v4739 = vld [vmem:[%s4678 + $0x1e0] sm:$0xff]
        %v4740 = vld [vmem:[%s4678 + $0x1e8] sm:$0xff]
        %v4741 = vld [vmem:[%s4678 + $0x1f0] sm:$0xff]
        %v4742 = vld [vmem:[%s4678 + $0x1f8] sm:$0xff]
        %v4743 = vld [vmem:[%s4678 + $0x200] sm:$0xff]
        %v4744 = vld [vmem:[%s4678 + $0x208] sm:$0xff]
        %v4745 = vld [vmem:[%s4678 + $0x210] sm:$0xff]
        %v4746 = vld [vmem:[%s4678 + $0x218] sm:$0xff]
        %v4747 = vld [vmem:[%s4678 + $0x220] sm:$0xff]
        %v4748 = vld [vmem:[%s4678 + $0x228] sm:$0xff]
        %v4749 = vld [vmem:[%s4678 + $0x230] sm:$0xff]
        %v4750 = vld [vmem:[%s4678 + $0x238] sm:$0xff]
        %v4751 = vld [vmem:[%s4678 + $0x240] sm:$0xff]
        %v4752 = vld [vmem:[%s4678 + $0x248] sm:$0xff]
        %v4753 = vld [vmem:[%s4678 + $0x250] sm:$0xff]
        %v4754 = vld [vmem:[%s4678 + $0x258] sm:$0xff]
        %v4755 = vld [vmem:[%s4678 + $0x260] sm:$0xff]
        %v4756 = vld [vmem:[%s4678 + $0x268] sm:$0xff]
        %v4757 = vld [vmem:[%s4678 + $0x270] sm:$0xff]
        %v4758 = vld [vmem:[%s4678 + $0x278] sm:$0xff]
        %v4759 = vld [vmem:[%s4678 + $0x280] sm:$0xff]
        %v4760 = vld [vmem:[%s4678 + $0x288] sm:$0xff]
        %v4761 = vld [vmem:[%s4678 + $0x290] sm:$0xff]
        %v4762 = vld [vmem:[%s4678 + $0x298] sm:$0xff]
        %v4763 = vld [vmem:[%s4678 + $0x2a0] sm:$0xff]
        %v4764 = vld [vmem:[%s4678 + $0x2a8] sm:$0xff]
        %v4765 = vld [vmem:[%s4678 + $0x2b0] sm:$0xff]
        %v4766 = vld [vmem:[%s4678 + $0x2b8] sm:$0xff]
        %v4767 = vld [vmem:[%s4678 + $0x2c0] sm:$0xff]
        %v4768 = vld [vmem:[%s4678 + $0x2c8] sm:$0xff]
        %v4769 = vld [vmem:[%s4678 + $0x2d0] sm:$0xff]
        %v4770 = vld [vmem:[%s4678 + $0x2d8] sm:$0xff]
        %v4771 = vld [vmem:[%s4678 + $0x2e0] sm:$0xff]
        %v4772 = vld [vmem:[%s4678 + $0x2e8] sm:$0xff]
        %v4773 = vld [vmem:[%s4678 + $0x2f0] sm:$0xff]
        %v4774 = vld [vmem:[%s4678 + $0x2f8] sm:$0xff]
        %v4775 = vld [vmem:[%s4678 + $0x300] sm:$0xff]
        %v4776 = vld [vmem:[%s4678 + $0x308] sm:$0xff]
        %v4777 = vld [vmem:[%s4678 + $0x310] sm:$0xff]
        %v4778 = vld [vmem:[%s4678 + $0x318] sm:$0xff]
        %v4779 = vld [vmem:[%s4678 + $0x320] sm:$0xff]
        %v4780 = vld [vmem:[%s4678 + $0x328] sm:$0xff]
        %v4781 = vld [vmem:[%s4678 + $0x330] sm:$0xff]
        %v4782 = vld [vmem:[%s4678 + $0x338] sm:$0xff]
        %v4783 = vld [vmem:[%s4678 + $0x340] sm:$0xff]
        %v4784 = vld [vmem:[%s4678 + $0x348] sm:$0xff]
        %v4785 = vld [vmem:[%s4678 + $0x350] sm:$0xff]
        %v4786 = vld [vmem:[%s4678 + $0x358] sm:$0xff]
        %v4787 = vld [vmem:[%s4678 + $0x360] sm:$0xff]
        %v4788 = vld [vmem:[%s4678 + $0x368] sm:$0xff]
        %v4789 = vld [vmem:[%s4678 + $0x370] sm:$0xff]
        %v4790 = vld [vmem:[%s4678 + $0x378] sm:$0xff]
        %v4791 = vld [vmem:[%s4678 + $0x380] sm:$0xff]
        %v4792 = vld [vmem:[%s4678 + $0x388] sm:$0xff]
        %v4793 = vld [vmem:[%s4678 + $0x390] sm:$0xff]
        %v4794 = vld [vmem:[%s4678 + $0x398] sm:$0xff]
        %v4795 = vld [vmem:[%s4678 + $0x3a0] sm:$0xff]
        %v4796 = vld [vmem:[%s4678 + $0x3a8] sm:$0xff]
        %v4797 = vld [vmem:[%s4678 + $0x3b0] sm:$0xff]
        %v4798 = vld [vmem:[%s4678 + $0x3b8] sm:$0xff]
        %v4799 = vld [vmem:[%s4678 + $0x3c0] sm:$0xff]
        %v4800 = vld [vmem:[%s4678 + $0x3c8] sm:$0xff]
        %v4801 = vld [vmem:[%s4678 + $0x3d0] sm:$0xff]
        %v4802 = vld [vmem:[%s4678 + $0x3d8] sm:$0xff]
        %v4803 = vld [vmem:[%s4678 + $0x3e0] sm:$0xff]
        %v4804 = vld [vmem:[%s4678 + $0x3e8] sm:$0xff]
        %v4805 = vld [vmem:[%s4678 + $0x3f0] sm:$0xff]
        %v4806 = vld [vmem:[%s4678 + $0x3f8] sm:$0xff]
        %4807 = vmatprep.subr.mxu0 %v4680
        %4808 = vmatpush1.msra.mxu0 %v4679
        %4809 = vmatprep.subr.mxu0 %v4682
        %4810 = vmatpush1.msra.mxu0 %v4681
        %4811 = vmatprep.subr.mxu0 %v4684
        %4812 = vmatpush1.msra.mxu0 %v4683
        %4813 = vmatprep.subr.mxu0 %v4686
        %4814 = vmatpush1.msra.mxu0 %v4685
        %4815 = vmatprep.subr.mxu0 %v4688
        %4816 = vmatpush1.msra.mxu0 %v4687
        %4817 = vmatprep.subr.mxu0 %v4690
        %4818 = vmatpush1.msra.mxu0 %v4689
        %4819 = vmatprep.subr.mxu0 %v4692
        %4820 = vmatpush1.msra.mxu0 %v4691
        %4821 = vmatprep.subr.mxu0 %v4694
        %4822 = vmatpush1.msra.mxu0 %v4693
        %4823 = vmatprep.subr.mxu0 %v4696
        %4824 = vmatpush1.msra.mxu0 %v4695
        %4825 = vmatprep.subr.mxu0 %v4698
        %4826 = vmatpush1.msra.mxu0 %v4697
        %4827 = vmatprep.subr.mxu0 %v4700
        %4828 = vmatpush1.msra.mxu0 %v4699
        %4829 = vmatprep.subr.mxu0 %v4702
        %4830 = vmatpush1.msra.mxu0 %v4701
        %4831 = vmatprep.subr.mxu0 %v4704
        %4832 = vmatpush1.msra.mxu0 %v4703
        %4833 = vmatprep.subr.mxu0 %v4706
        %4834 = vmatpush1.msra.mxu0 %v4705
        %4835 = vmatprep.subr.mxu0 %v4708
        %4836 = vmatpush1.msra.mxu0 %v4707
        %4837 = vmatprep.subr.mxu0 %v4710
        %4838 = vmatpush1.msra.mxu0 %v4709
        %4839 = vmatprep.subr.mxu0 %v4712
        %4840 = vmatpush1.msra.mxu0 %v4711
        %4841 = vmatprep.subr.mxu0 %v4714
        %4842 = vmatpush1.msra.mxu0 %v4713
        %4843 = vmatprep.subr.mxu0 %v4716
        %4844 = vmatpush1.msra.mxu0 %v4715
        %4845 = vmatprep.subr.mxu0 %v4718
        %4846 = vmatpush1.msra.mxu0 %v4717
        %4847 = vmatprep.subr.mxu0 %v4720
        %4848 = vmatpush1.msra.mxu0 %v4719
        %4849 = vmatprep.subr.mxu0 %v4722
        %4850 = vmatpush1.msra.mxu0 %v4721
        %4851 = vmatprep.subr.mxu0 %v4724
        %4852 = vmatpush1.msra.mxu0 %v4723
        %4853 = vmatprep.subr.mxu0 %v4726
        %4854 = vmatpush1.msra.mxu0 %v4725
        %4855 = vmatprep.subr.mxu0 %v4728
        %4856 = vmatpush1.msra.mxu0 %v4727
        %4857 = vmatprep.subr.mxu0 %v4730
        %4858 = vmatpush1.msra.mxu0 %v4729
        %4859 = vmatprep.subr.mxu0 %v4732
        %4860 = vmatpush1.msra.mxu0 %v4731
        %4861 = vmatprep.subr.mxu0 %v4734
        %4862 = vmatpush1.msra.mxu0 %v4733
        %4863 = vmatprep.subr.mxu0 %v4736
        %4864 = vmatpush1.msra.mxu0 %v4735
        %4865 = vmatprep.subr.mxu0 %v4738
        %4866 = vmatpush1.msra.mxu0 %v4737
        %4867 = vmatprep.subr.mxu0 %v4740
        %4868 = vmatpush1.msra.mxu0 %v4739
        %4869 = vmatprep.subr.mxu0 %v4742
        %4870 = vmatpush1.msra.mxu0 %v4741
        %4871 = vmatprep.mubr.f32.mxu0 %v3789
        %4872 = vmatmul.mubr.f32.gmra.mrb[0].mxu0 %v3786
        %v4873 = vpop.f32.mrb[0].mxu0
        %v4874 = vadd.f32 0.0, %v4873
        %v4875 = vpop.f32.mrb[0].mxu0
        %v4876 = vadd.f32 0.0, %v4875
        %4877 = vmatprep.mubr.f32.mxu0 %v3801
        %4878 = vmatmul.mubr.f32.gmra.mrb[0].mxu0 %v3798
        %v4879 = vpop.f32.mrb[0].mxu0
        %v4880 = vadd.f32 0.0, %v4879
        %v4881 = vpop.f32.mrb[0].mxu0
        %v4882 = vadd.f32 0.0, %v4881
        %4883 = vmatprep.mubr.f32.mxu0 %v3813
        %4884 = vmatmul.mubr.f32.gmra.mrb[0].mxu0 %v3810
        %v4885 = vpop.f32.mrb[0].mxu0
        %v4886 = vadd.f32 0.0, %v4885
        %v4887 = vpop.f32.mrb[0].mxu0
        %v4888 = vadd.f32 0.0, %v4887
        %4889 = vmatprep.mubr.f32.mxu0 %v3825
        %4890 = vmatmul.mubr.f32.gmra.mrb[0].mxu0 %v3822
        %v4891 = vpop.f32.mrb[0].mxu0
        %v4892 = vadd.f32 0.0, %v4891
        %v4893 = vpop.f32.mrb[0].mxu0
        %v4894 = vadd.f32 0.0, %v4893
        %4895 = vmatprep.mubr.f32.mxu0 %v3837
        %4896 = vmatmul.mubr.f32.gmra.mrb[0].mxu0 %v3834
        %v4897 = vpop.f32.mrb[0].mxu0
        %v4898 = vadd.f32 0.0, %v4897
        %v4899 = vpop.f32.mrb[0].mxu0
        %v4900 = vadd.f32 0.0, %v4899
        %4901 = vmatprep.mubr.f32.mxu0 %v3849
        %4902 = vmatmul.mubr.f32.gmra.mrb[0].mxu0 %v3846
        %v4903 = vpop.f32.mrb[0].mxu0
        %v4904 = vadd.f32 0.0, %v4903
        %v4905 = vpop.f32.mrb[0].mxu0
        %v4906 = vadd.f32 0.0, %v4905
        %4907 = vmatprep.mubr.f32.mxu0 %v4272
        %4908 = vmatmul.mubr.f32.gmra.mrb[0].mxu0 %v4269
        %v4909 = vpop.f32.mrb[0].mxu0
        %v4910 = vadd.f32 0.0, %v4909
        %v4911 = vpop.f32.mrb[0].mxu0
        %v4912 = vadd.f32 0.0, %v4911
        %4913 = vmatprep.mubr.f32.mxu0 %v4667
        %4914 = vmatmul.mubr.f32.gmra.mrb[0].mxu0 %v4664
        %v4915 = vpop.f32.mrb[0].mxu0
        %v4916 = vadd.f32 0.0, %v4915
        %v4917 = vpop.f32.mrb[0].mxu0
        %v4918 = vadd.f32 0.0, %v4917
        %4919 = vdwg.mxu0
        %4920 = vmatprep.subr.mxu0 %v4744
        %4921 = vmatpush1.msra.mxu0 %v4743
        %4922 = vmatprep.subr.mxu0 %v4746
        %4923 = vmatpush1.msra.mxu0 %v4745
        %4924 = vmatprep.subr.mxu0 %v4748
        %4925 = vmatpush1.msra.mxu0 %v4747
        %4926 = vmatprep.subr.mxu0 %v4750
        %4927 = vmatpush1.msra.mxu0 %v4749
        %4928 = vmatprep.subr.mxu0 %v4752
        %4929 = vmatpush1.msra.mxu0 %v4751
        %4930 = vmatprep.subr.mxu0 %v4754
        %4931 = vmatpush1.msra.mxu0 %v4753
        %4932 = vmatprep.subr.mxu0 %v4756
        %4933 = vmatpush1.msra.mxu0 %v4755
        %4934 = vmatprep.subr.mxu0 %v4758
        %4935 = vmatpush1.msra.mxu0 %v4757
        %4936 = vmatprep.subr.mxu0 %v4760
        %4937 = vmatpush1.msra.mxu0 %v4759
        %4938 = vmatprep.subr.mxu0 %v4762
        %4939 = vmatpush1.msra.mxu0 %v4761
        %4940 = vmatprep.subr.mxu0 %v4764
        %4941 = vmatpush1.msra.mxu0 %v4763
        %4942 = vmatprep.subr.mxu0 %v4766
        %4943 = vmatpush1.msra.mxu0 %v4765
        %4944 = vmatprep.subr.mxu0 %v4768
        %4945 = vmatpush1.msra.mxu0 %v4767
        %4946 = vmatprep.subr.mxu0 %v4770
        %4947 = vmatpush1.msra.mxu0 %v4769
        %4948 = vmatprep.subr.mxu0 %v4772
        %4949 = vmatpush1.msra.mxu0 %v4771
        %4950 = vmatprep.subr.mxu0 %v4774
        %4951 = vmatpush1.msra.mxu0 %v4773
        %4952 = vmatprep.subr.mxu0 %v4776
        %4953 = vmatpush1.msra.mxu0 %v4775
        %4954 = vmatprep.subr.mxu0 %v4778
        %4955 = vmatpush1.msra.mxu0 %v4777
        %4956 = vmatprep.subr.mxu0 %v4780
        %4957 = vmatpush1.msra.mxu0 %v4779
        %4958 = vmatprep.subr.mxu0 %v4782
        %4959 = vmatpush1.msra.mxu0 %v4781
        %4960 = vmatprep.subr.mxu0 %v4784
        %4961 = vmatpush1.msra.mxu0 %v4783
        %4962 = vmatprep.subr.mxu0 %v4786
        %4963 = vmatpush1.msra.mxu0 %v4785
        %4964 = vmatprep.subr.mxu0 %v4788
        %4965 = vmatpush1.msra.mxu0 %v4787
        %4966 = vmatprep.subr.mxu0 %v4790
        %4967 = vmatpush1.msra.mxu0 %v4789
        %4968 = vmatprep.subr.mxu0 %v4792
        %4969 = vmatpush1.msra.mxu0 %v4791
        %4970 = vmatprep.subr.mxu0 %v4794
        %4971 = vmatpush1.msra.mxu0 %v4793
        %4972 = vmatprep.subr.mxu0 %v4796
        %4973 = vmatpush1.msra.mxu0 %v4795
        %4974 = vmatprep.subr.mxu0 %v4798
        %4975 = vmatpush1.msra.mxu0 %v4797
        %4976 = vmatprep.subr.mxu0 %v4800
        %4977 = vmatpush1.msra.mxu0 %v4799
        %4978 = vmatprep.subr.mxu0 %v4802
        %4979 = vmatpush1.msra.mxu0 %v4801
        %4980 = vmatprep.subr.mxu0 %v4804
        %4981 = vmatpush1.msra.mxu0 %v4803
        %4982 = vmatprep.subr.mxu0 %v4806
        %4983 = vmatpush1.msra.mxu0 %v4805
        %4984 = vmatprep.mubr.f32.mxu0 %v3795
        %4985 = vmatmul.mubr.f32.gmra.mrb[0].mxu0 %v3792
        %v4986 = vpop.f32.mrb[0].mxu0
        %v4987 = vadd.f32 %v4874, %v4986
        %v4988 = vpop.f32.mrb[0].mxu0
        %v4989 = vadd.f32 %v4876, %v4988
        %4990 = vmatprep.mubr.f32.mxu0 %v3807
        %4991 = vmatmul.mubr.f32.gmra.mrb[0].mxu0 %v3804
        %v4992 = vpop.f32.mrb[0].mxu0
        %v4993 = vadd.f32 %v4880, %v4992
        %v4994 = vpop.f32.mrb[0].mxu0
        %v4995 = vadd.f32 %v4882, %v4994
        %4996 = vmatprep.mubr.f32.mxu0 %v3819
        %4997 = vmatmul.mubr.f32.gmra.mrb[0].mxu0 %v3816
        %v4998 = vpop.f32.mrb[0].mxu0
        %v4999 = vadd.f32 %v4886, %v4998
        %v5000 = vpop.f32.mrb[0].mxu0
        %v5001 = vadd.f32 %v4888, %v5000
        %5002 = vmatprep.mubr.f32.mxu0 %v3831
        %5003 = vmatmul.mubr.f32.gmra.mrb[0].mxu0 %v3828
        %v5004 = vpop.f32.mrb[0].mxu0
        %v5005 = vadd.f32 %v4892, %v5004
        %v5006 = vpop.f32.mrb[0].mxu0
        %v5007 = vadd.f32 %v4894, %v5006
        %5008 = vmatprep.mubr.f32.mxu0 %v3843
        %5009 = vmatmul.mubr.f32.gmra.mrb[0].mxu0 %v3840
        %v5010 = vpop.f32.mrb[0].mxu0
        %v5011 = vadd.f32 %v4898, %v5010
        %v5012 = vpop.f32.mrb[0].mxu0
        %v5013 = vadd.f32 %v4900, %v5012
        %5014 = vmatprep.mubr.f32.mxu0 %v3855
        %5015 = vmatmul.mubr.f32.gmra.mrb[0].mxu0 %v3852
        %v5016 = vpop.f32.mrb[0].mxu0
        %v5017 = vadd.f32 %v4904, %v5016
        %v5018 = vpop.f32.mrb[0].mxu0
        %v5019 = vadd.f32 %v4906, %v5018
        %5020 = vmatprep.mubr.f32.mxu0 %v4278
        %5021 = vmatmul.mubr.f32.gmra.mrb[0].mxu0 %v4275
        %v5022 = vpop.f32.mrb[0].mxu0
        %v5023 = vadd.f32 %v4910, %v5022
        %v5024 = vpop.f32.mrb[0].mxu0
        %v5025 = vadd.f32 %v4912, %v5024
        %5026 = vmatprep.mubr.f32.mxu0 %v4673
        %5027 = vmatmul.mubr.f32.gmra.mrb[0].mxu0 %v4670
        %v5028 = vpop.f32.mrb[0].mxu0
        %v5029 = vadd.f32 %v4916, %v5028
        %v5030 = vpop.f32.mrb[0].mxu0
        %v5031 = vadd.f32 %v4918, %v5030
        %5032 = vdwg.mxu0
        %v5033 = vadd.f32 %v4638, %v4987
        %v5034 = vadd.f32 %v4639, %v4989
        %v5035 = vadd.f32 %v4640, %v4993
        %v5036 = vadd.f32 %v4641, %v4995
        %v5037 = vadd.f32 %v4642, %v4999
        %v5038 = vadd.f32 %v4643, %v5001
        %v5039 = vadd.f32 %v4644, %v5005
        %v5040 = vadd.f32 %v4645, %v5007
        %v5041 = vadd.f32 %v4646, %v5011
        %v5042 = vadd.f32 %v4647, %v5013
        %v5043 = vadd.f32 %v4648, %v5017
        %v5044 = vadd.f32 %v4649, %v5019
        %v5045 = vadd.f32 %v4650, %v5023
        %v5046 = vadd.f32 %v4651, %v5025
        %v5047 = vadd.f32 %v4652, %v5029
        %v5048 = vadd.f32 %v4653, %v5031
        %v5049 = vmax.f32 %v5033, 0.0
        %v5050 = vmax.f32 %v5034, 0.0
        %v5051 = vmax.f32 %v5035, 0.0
        %v5052 = vmax.f32 %v5036, 0.0
        %v5053 = vmax.f32 %v5037, 0.0
        %v5054 = vmax.f32 %v5038, 0.0
        %v5055 = vmax.f32 %v5039, 0.0
        %v5056 = vmax.f32 %v5040, 0.0
        %v5057 = vmax.f32 %v5041, 0.0
        %v5058 = vmax.f32 %v5042, 0.0
        %v5059 = vmax.f32 %v5043, 0.0
        %v5060 = vmax.f32 %v5044, 0.0
        %v5061 = vmax.f32 %v5045, 0.0
        %v5062 = vmax.f32 %v5046, 0.0
        %v5063 = vmax.f32 %v5047, 0.0
        %v5064 = vmax.f32 %v5048, 0.0
        %v5081 = vrot.slane %v5049, 7
        %v5082 = vrot.slane %v5050, 7
        %v5083 = vrot.slane %v5051, 7
        %v5084 = vrot.slane %v5052, 7
        %v5085 = vrot.slane %v5053, 7
        %v5086 = vrot.slane %v5054, 7
        %v5087 = vrot.slane %v5055, 7
        %v5088 = vrot.slane %v5056, 7
        %v5089 = vrot.slane %v5057, 7
        %v5090 = vrot.slane %v5058, 7
        %v5091 = vrot.slane %v5059, 7
        %v5092 = vrot.slane %v5060, 7
        %v5093 = vrot.slane %v5061, 7
        %v5094 = vrot.slane %v5062, 7
        %v5095 = vrot.slane %v5063, 7
        %v5096 = vrot.slane %v5064, 7
        %s5113 = scalar_lea.vmem [#allocation3], 32
        %5114 = vst [vmem:[%s5113] sm:$0xfe] %v5081
        %5115 = vst [vmem:[%s5113 + $0x8] sm:$0xfe] %v5082
        %5116 = vst [vmem:[%s5113 + $0x10] sm:$0x1] %v5081
        %5117 = vst [vmem:[%s5113 + $0x18] sm:$0x1] %v5082
        %5118 = vst [vmem:[%s5113 + $0x20] sm:$0xfe] %v5083
        %5119 = vst [vmem:[%s5113 + $0x28] sm:$0xfe] %v5084
        %5120 = vst [vmem:[%s5113 + $0x30] sm:$0x1] %v5083
        %5121 = vst [vmem:[%s5113 + $0x38] sm:$0x1] %v5084
        %5122 = vst [vmem:[%s5113 + $0x40] sm:$0xfe] %v5085
        %5123 = vst [vmem:[%s5113 + $0x48] sm:$0xfe] %v5086
        %5124 = vst [vmem:[%s5113 + $0x50] sm:$0x1] %v5085
        %5125 = vst [vmem:[%s5113 + $0x58] sm:$0x1] %v5086
        %5126 = vst [vmem:[%s5113 + $0x60] sm:$0xfe] %v5087
        %5127 = vst [vmem:[%s5113 + $0x68] sm:$0xfe] %v5088
        %5128 = vst [vmem:[%s5113 + $0x70] sm:$0x1] %v5087
        %5129 = vst [vmem:[%s5113 + $0x78] sm:$0x1] %v5088
        %5130 = vst [vmem:[%s5113 + $0x80] sm:$0xfe] %v5089
        %5131 = vst [vmem:[%s5113 + $0x88] sm:$0xfe] %v5090
        %5132 = vst [vmem:[%s5113 + $0x90] sm:$0x1] %v5089
        %5133 = vst [vmem:[%s5113 + $0x98] sm:$0x1] %v5090
        %5134 = vst [vmem:[%s5113 + $0xa0] sm:$0xfe] %v5091
        %5135 = vst [vmem:[%s5113 + $0xa8] sm:$0xfe] %v5092
        %5136 = vst [vmem:[%s5113 + $0xb0] sm:$0x1] %v5091
        %5137 = vst [vmem:[%s5113 + $0xb8] sm:$0x1] %v5092
        %5138 = vst [vmem:[%s5113 + $0xc0] sm:$0xfe] %v5093
        %5139 = vst [vmem:[%s5113 + $0xc8] sm:$0xfe] %v5094
        %5140 = vst [vmem:[%s5113 + $0xd0] sm:$0x1] %v5093
        %5141 = vst [vmem:[%s5113 + $0xd8] sm:$0x1] %v5094
        %5142 = vst [vmem:[%s5113 + $0xe0] sm:$0xfe] %v5095
        %5143 = vst [vmem:[%s5113 + $0xe8] sm:$0xfe] %v5096
        %5144 = vst [vmem:[%s5113 + $0xf0] sm:$0x1] %v5095
        %5145 = vst [vmem:[%s5113 + $0xf8] sm:$0x1] %v5096
        %v5146 = vld [vmem:[#allocation15] sm:$0x3]
        %v5148 = vlaneseq
        %v5149 = vshrl.u32 %v5148, 7
        %v5150 = vsub.s32 0, %v5149
        %v5151 = vrot.slane %v5146, %v5150
        %v5152 = vlaneseq
        %v5153 = vshrl.u32 %v5152, 7
        %v5154 = vsub.s32 1, %v5153
        %v5155 = vrot.slane %v5146, %v5154
        %v5158 = vld [vmem:[#allocation3] sm:$0xff]
        %v5159 = vld [vmem:[#allocation3 + $0x8] sm:$0xff]
        %v5160 = vld [vmem:[#allocation3 + $0x20] sm:$0xff]
        %v5161 = vld [vmem:[#allocation3 + $0x28] sm:$0xff]
        %v5162 = vld [vmem:[#allocation3 + $0x40] sm:$0xff]
        %v5163 = vld [vmem:[#allocation3 + $0x48] sm:$0xff]
        %v5164 = vld [vmem:[#allocation3 + $0x60] sm:$0xff]
        %v5165 = vld [vmem:[#allocation3 + $0x68] sm:$0xff]
        %v5166 = vld [vmem:[#allocation3 + $0x80] sm:$0xff]
        %v5167 = vld [vmem:[#allocation3 + $0x88] sm:$0xff]
        %v5168 = vld [vmem:[#allocation3 + $0xa0] sm:$0xff]
        %v5169 = vld [vmem:[#allocation3 + $0xa8] sm:$0xff]
        %v5170 = vld [vmem:[#allocation3 + $0xc0] sm:$0xff]
        %v5171 = vld [vmem:[#allocation3 + $0xc8] sm:$0xff]
        %v5172 = vld [vmem:[#allocation3 + $0xe0] sm:$0xff]
        %v5173 = vld [vmem:[#allocation3 + $0xe8] sm:$0xff]
        %v5174 = vld [vmem:[#allocation3 + $0x100] sm:$0xff]
        %v5175 = vld [vmem:[#allocation3 + $0x108] sm:$0xff]
        %v5176 = vld [vmem:[#allocation3 + $0x120] sm:$0xff]
        %v5177 = vld [vmem:[#allocation3 + $0x128] sm:$0xff]
        %v5178 = vld [vmem:[#allocation13] sm:$0xff]
        %v5179 = vld [vmem:[#allocation13 + $0x8] sm:$0xff]
        %v5180 = vld [vmem:[#allocation13 + $0x10] sm:$0xff]
        %v5181 = vld [vmem:[#allocation13 + $0x18] sm:$0xff]
        %v5182 = vld [vmem:[#allocation13 + $0x20] sm:$0xff]
        %v5183 = vld [vmem:[#allocation13 + $0x28] sm:$0xff]
        %v5184 = vld [vmem:[#allocation13 + $0x30] sm:$0xff]
        %v5185 = vld [vmem:[#allocation13 + $0x38] sm:$0xff]
        %v5186 = vld [vmem:[#allocation13 + $0x40] sm:$0xff]
        %v5187 = vld [vmem:[#allocation13 + $0x48] sm:$0xff]
        %v5188 = vld [vmem:[#allocation13 + $0x50] sm:$0xff]
        %v5189 = vld [vmem:[#allocation13 + $0x58] sm:$0xff]
        %v5190 = vld [vmem:[#allocation13 + $0x60] sm:$0xff]
        %v5191 = vld [vmem:[#allocation13 + $0x68] sm:$0xff]
        %v5192 = vld [vmem:[#allocation13 + $0x70] sm:$0xff]
        %v5193 = vld [vmem:[#allocation13 + $0x78] sm:$0xff]
        %v5194 = vld [vmem:[#allocation13 + $0x80] sm:$0xff]
        %v5195 = vld [vmem:[#allocation13 + $0x88] sm:$0xff]
        %v5196 = vld [vmem:[#allocation13 + $0x90] sm:$0xff]
        %v5197 = vld [vmem:[#allocation13 + $0x98] sm:$0xff]
        %v5198 = vld [vmem:[#allocation13 + $0xa0] sm:$0xff]
        %v5199 = vld [vmem:[#allocation13 + $0xa8] sm:$0xff]
        %v5200 = vld [vmem:[#allocation13 + $0xb0] sm:$0xff]
        %v5201 = vld [vmem:[#allocation13 + $0xb8] sm:$0xff]
        %v5202 = vld [vmem:[#allocation13 + $0xc0] sm:$0xff]
        %v5203 = vld [vmem:[#allocation13 + $0xc8] sm:$0xff]
        %v5204 = vld [vmem:[#allocation13 + $0xd0] sm:$0xff]
        %v5205 = vld [vmem:[#allocation13 + $0xd8] sm:$0xff]
        %v5206 = vld [vmem:[#allocation13 + $0xe0] sm:$0xff]
        %v5207 = vld [vmem:[#allocation13 + $0xe8] sm:$0xff]
        %v5208 = vld [vmem:[#allocation13 + $0xf0] sm:$0xff]
        %v5209 = vld [vmem:[#allocation13 + $0xf8] sm:$0xff]
        %v5210 = vld [vmem:[#allocation13 + $0x100] sm:$0xff]
        %v5211 = vld [vmem:[#allocation13 + $0x108] sm:$0xff]
        %v5212 = vld [vmem:[#allocation13 + $0x110] sm:$0xff]
        %v5213 = vld [vmem:[#allocation13 + $0x118] sm:$0xff]
        %v5214 = vld [vmem:[#allocation13 + $0x120] sm:$0xff]
        %v5215 = vld [vmem:[#allocation13 + $0x128] sm:$0xff]
        %v5216 = vld [vmem:[#allocation13 + $0x130] sm:$0xff]
        %v5217 = vld [vmem:[#allocation13 + $0x138] sm:$0xff]
        %v5218 = vld [vmem:[#allocation13 + $0x140] sm:$0xff]
        %v5219 = vld [vmem:[#allocation13 + $0x148] sm:$0xff]
        %v5220 = vld [vmem:[#allocation13 + $0x150] sm:$0xff]
        %v5221 = vld [vmem:[#allocation13 + $0x158] sm:$0xff]
        %v5222 = vld [vmem:[#allocation13 + $0x160] sm:$0xff]
        %v5223 = vld [vmem:[#allocation13 + $0x168] sm:$0xff]
        %v5224 = vld [vmem:[#allocation13 + $0x170] sm:$0xff]
        %v5225 = vld [vmem:[#allocation13 + $0x178] sm:$0xff]
        %v5226 = vld [vmem:[#allocation13 + $0x180] sm:$0xff]
        %v5227 = vld [vmem:[#allocation13 + $0x188] sm:$0xff]
        %v5228 = vld [vmem:[#allocation13 + $0x190] sm:$0xff]
        %v5229 = vld [vmem:[#allocation13 + $0x198] sm:$0xff]
        %v5230 = vld [vmem:[#allocation13 + $0x1a0] sm:$0xff]
        %v5231 = vld [vmem:[#allocation13 + $0x1a8] sm:$0xff]
        %v5232 = vld [vmem:[#allocation13 + $0x1b0] sm:$0xff]
        %v5233 = vld [vmem:[#allocation13 + $0x1b8] sm:$0xff]
        %v5234 = vld [vmem:[#allocation13 + $0x1c0] sm:$0xff]
        %v5235 = vld [vmem:[#allocation13 + $0x1c8] sm:$0xff]
        %v5236 = vld [vmem:[#allocation13 + $0x1d0] sm:$0xff]
        %v5237 = vld [vmem:[#allocation13 + $0x1d8] sm:$0xff]
        %v5238 = vld [vmem:[#allocation13 + $0x1e0] sm:$0xff]
        %v5239 = vld [vmem:[#allocation13 + $0x1e8] sm:$0xff]
        %v5240 = vld [vmem:[#allocation13 + $0x1f0] sm:$0xff]
        %v5241 = vld [vmem:[#allocation13 + $0x1f8] sm:$0xff]
        %5242 = vmatprep.subr.mxu0 %v5179
        %5243 = vmatpush1.msra.mxu0 %v5178
        %5244 = vmatprep.subr.mxu0 %v5181
        %5245 = vmatpush1.msra.mxu0 %v5180
        %5246 = vmatprep.subr.mxu0 %v5183
        %5247 = vmatpush1.msra.mxu0 %v5182
        %5248 = vmatprep.subr.mxu0 %v5185
        %5249 = vmatpush1.msra.mxu0 %v5184
        %5250 = vmatprep.subr.mxu0 %v5187
        %5251 = vmatpush1.msra.mxu0 %v5186
        %5252 = vmatprep.subr.mxu0 %v5189
        %5253 = vmatpush1.msra.mxu0 %v5188
        %5254 = vmatprep.subr.mxu0 %v5191
        %5255 = vmatpush1.msra.mxu0 %v5190
        %5256 = vmatprep.subr.mxu0 %v5193
        %5257 = vmatpush1.msra.mxu0 %v5192
        %5258 = vmatprep.subr.mxu0 %v5195
        %5259 = vmatpush1.msra.mxu0 %v5194
        %5260 = vmatprep.subr.mxu0 %v5197
        %5261 = vmatpush1.msra.mxu0 %v5196
        %5262 = vmatprep.subr.mxu0 %v5199
        %5263 = vmatpush1.msra.mxu0 %v5198
        %5264 = vmatprep.subr.mxu0 %v5201
        %5265 = vmatpush1.msra.mxu0 %v5200
        %5266 = vmatprep.subr.mxu0 %v5203
        %5267 = vmatpush1.msra.mxu0 %v5202
        %5268 = vmatprep.subr.mxu0 %v5205
        %5269 = vmatpush1.msra.mxu0 %v5204
        %5270 = vmatprep.subr.mxu0 %v5207
        %5271 = vmatpush1.msra.mxu0 %v5206
        %5272 = vmatprep.subr.mxu0 %v5209
        %5273 = vmatpush1.msra.mxu0 %v5208
        %5274 = vmatprep.subr.mxu0 %v5211
        %5275 = vmatpush1.msra.mxu0 %v5210
        %5276 = vmatprep.subr.mxu0 %v5213
        %5277 = vmatpush1.msra.mxu0 %v5212
        %5278 = vmatprep.subr.mxu0 %v5215
        %5279 = vmatpush1.msra.mxu0 %v5214
        %5280 = vmatprep.subr.mxu0 %v5217
        %5281 = vmatpush1.msra.mxu0 %v5216
        %5282 = vmatprep.subr.mxu0 %v5219
        %5283 = vmatpush1.msra.mxu0 %v5218
        %5284 = vmatprep.subr.mxu0 %v5221
        %5285 = vmatpush1.msra.mxu0 %v5220
        %5286 = vmatprep.subr.mxu0 %v5223
        %5287 = vmatpush1.msra.mxu0 %v5222
        %5288 = vmatprep.subr.mxu0 %v5225
        %5289 = vmatpush1.msra.mxu0 %v5224
        %5290 = vmatprep.subr.mxu0 %v5227
        %5291 = vmatpush1.msra.mxu0 %v5226
        %5292 = vmatprep.subr.mxu0 %v5229
        %5293 = vmatpush1.msra.mxu0 %v5228
        %5294 = vmatprep.subr.mxu0 %v5231
        %5295 = vmatpush1.msra.mxu0 %v5230
        %5296 = vmatprep.subr.mxu0 %v5233
        %5297 = vmatpush1.msra.mxu0 %v5232
        %5298 = vmatprep.subr.mxu0 %v5235
        %5299 = vmatpush1.msra.mxu0 %v5234
        %5300 = vmatprep.subr.mxu0 %v5237
        %5301 = vmatpush1.msra.mxu0 %v5236
        %5302 = vmatprep.subr.mxu0 %v5239
        %5303 = vmatpush1.msra.mxu0 %v5238
        %5304 = vmatprep.subr.mxu0 %v5241
        %5305 = vmatpush1.msra.mxu0 %v5240
        %5306 = vmatprep.mubr.f32.mxu0 %v5159
        %5307 = vmatmul.mubr.f32.gmra.mrb[0].mxu0 %v5158
        %v5308 = vpop.f32.mrb[0].mxu0
        %v5309 = vadd.f32 0.0, %v5308
        %v5310 = vpop.f32.mrb[0].mxu0
        %v5311 = vadd.f32 0.0, %v5310
        %5312 = vmatprep.mubr.f32.mxu0 %v5161
        %5313 = vmatmul.mubr.f32.gmra.mrb[0].mxu0 %v5160
        %v5314 = vpop.f32.mrb[0].mxu0
        %v5315 = vadd.f32 0.0, %v5314
        %v5316 = vpop.f32.mrb[0].mxu0
        %v5317 = vadd.f32 0.0, %v5316
        %5318 = vmatprep.mubr.f32.mxu0 %v5163
        %5319 = vmatmul.mubr.f32.gmra.mrb[0].mxu0 %v5162
        %v5320 = vpop.f32.mrb[0].mxu0
        %v5321 = vadd.f32 0.0, %v5320
        %v5322 = vpop.f32.mrb[0].mxu0
        %v5323 = vadd.f32 0.0, %v5322
        %5324 = vmatprep.mubr.f32.mxu0 %v5165
        %5325 = vmatmul.mubr.f32.gmra.mrb[0].mxu0 %v5164
        %v5326 = vpop.f32.mrb[0].mxu0
        %v5327 = vadd.f32 0.0, %v5326
        %v5328 = vpop.f32.mrb[0].mxu0
        %v5329 = vadd.f32 0.0, %v5328
        %5330 = vmatprep.mubr.f32.mxu0 %v5167
        %5331 = vmatmul.mubr.f32.gmra.mrb[0].mxu0 %v5166
        %v5332 = vpop.f32.mrb[0].mxu0
        %v5333 = vadd.f32 0.0, %v5332
        %v5334 = vpop.f32.mrb[0].mxu0
        %v5335 = vadd.f32 0.0, %v5334
        %5336 = vmatprep.mubr.f32.mxu0 %v5169
        %5337 = vmatmul.mubr.f32.gmra.mrb[0].mxu0 %v5168
        %v5338 = vpop.f32.mrb[0].mxu0
        %v5339 = vadd.f32 0.0, %v5338
        %v5340 = vpop.f32.mrb[0].mxu0
        %v5341 = vadd.f32 0.0, %v5340
        %5342 = vmatprep.mubr.f32.mxu0 %v5171
        %5343 = vmatmul.mubr.f32.gmra.mrb[0].mxu0 %v5170
        %v5344 = vpop.f32.mrb[0].mxu0
        %v5345 = vadd.f32 0.0, %v5344
        %v5346 = vpop.f32.mrb[0].mxu0
        %v5347 = vadd.f32 0.0, %v5346
        %5348 = vmatprep.mubr.f32.mxu0 %v5173
        %5349 = vmatmul.mubr.f32.gmra.mrb[0].mxu0 %v5172
        %v5350 = vpop.f32.mrb[0].mxu0
        %v5351 = vadd.f32 0.0, %v5350
        %v5352 = vpop.f32.mrb[0].mxu0
        %v5353 = vadd.f32 0.0, %v5352
        %5354 = vdwg.mxu0
        %v5355 = vadd.f32 %v5151, %v5309
        %v5356 = vadd.f32 %v5155, %v5311
        %v5357 = vadd.f32 %v5151, %v5315
        %v5358 = vadd.f32 %v5155, %v5317
        %v5359 = vadd.f32 %v5151, %v5321
        %v5360 = vadd.f32 %v5155, %v5323
        %v5361 = vadd.f32 %v5151, %v5327
        %v5362 = vadd.f32 %v5155, %v5329
        %v5363 = vadd.f32 %v5151, %v5333
        %v5364 = vadd.f32 %v5155, %v5335
        %v5365 = vadd.f32 %v5151, %v5339
        %v5366 = vadd.f32 %v5155, %v5341
        %v5367 = vadd.f32 %v5151, %v5345
        %v5368 = vadd.f32 %v5155, %v5347
        %v5369 = vadd.f32 %v5151, %v5351
        %v5370 = vadd.f32 %v5155, %v5353
        %s5371 = scalar_lea.vmem [#allocation13], 1536
        %v5372 = vld [vmem:[%s5371] sm:$0xff]
        %v5373 = vld [vmem:[%s5371 + $0x8] sm:$0xff]
        %v5374 = vld [vmem:[%s5371 + $0x10] sm:$0xff]
        %v5375 = vld [vmem:[%s5371 + $0x18] sm:$0xff]
        %v5376 = vld [vmem:[%s5371 + $0x20] sm:$0xff]
        %v5377 = vld [vmem:[%s5371 + $0x28] sm:$0xff]
        %v5378 = vld [vmem:[%s5371 + $0x30] sm:$0xff]
        %v5379 = vld [vmem:[%s5371 + $0x38] sm:$0xff]
        %v5380 = vld [vmem:[%s5371 + $0x40] sm:$0xff]
        %v5381 = vld [vmem:[%s5371 + $0x48] sm:$0xff]
        %v5382 = vld [vmem:[%s5371 + $0x50] sm:$0xff]
        %v5383 = vld [vmem:[%s5371 + $0x58] sm:$0xff]
        %v5384 = vld [vmem:[%s5371 + $0x60] sm:$0xff]
        %v5385 = vld [vmem:[%s5371 + $0x68] sm:$0xff]
        %v5386 = vld [vmem:[%s5371 + $0x70] sm:$0xff]
        %v5387 = vld [vmem:[%s5371 + $0x78] sm:$0xff]
        %v5388 = vld [vmem:[%s5371 + $0x80] sm:$0xff]
        %v5389 = vld [vmem:[%s5371 + $0x88] sm:$0xff]
        %v5390 = vld [vmem:[%s5371 + $0x90] sm:$0xff]
        %v5391 = vld [vmem:[%s5371 + $0x98] sm:$0xff]
        %v5392 = vld [vmem:[%s5371 + $0xa0] sm:$0xff]
        %v5393 = vld [vmem:[%s5371 + $0xa8] sm:$0xff]
        %v5394 = vld [vmem:[%s5371 + $0xb0] sm:$0xff]
        %v5395 = vld [vmem:[%s5371 + $0xb8] sm:$0xff]
        %v5396 = vld [vmem:[%s5371 + $0xc0] sm:$0xff]
        %v5397 = vld [vmem:[%s5371 + $0xc8] sm:$0xff]
        %v5398 = vld [vmem:[%s5371 + $0xd0] sm:$0xff]
        %v5399 = vld [vmem:[%s5371 + $0xd8] sm:$0xff]
        %v5400 = vld [vmem:[%s5371 + $0xe0] sm:$0xff]
        %v5401 = vld [vmem:[%s5371 + $0xe8] sm:$0xff]
        %v5402 = vld [vmem:[%s5371 + $0xf0] sm:$0xff]
        %v5403 = vld [vmem:[%s5371 + $0xf8] sm:$0xff]
        %v5404 = vld [vmem:[%s5371 + $0x100] sm:$0xff]
        %v5405 = vld [vmem:[%s5371 + $0x108] sm:$0xff]
        %v5406 = vld [vmem:[%s5371 + $0x110] sm:$0xff]
        %v5407 = vld [vmem:[%s5371 + $0x118] sm:$0xff]
        %v5408 = vld [vmem:[%s5371 + $0x120] sm:$0xff]
        %v5409 = vld [vmem:[%s5371 + $0x128] sm:$0xff]
        %v5410 = vld [vmem:[%s5371 + $0x130] sm:$0xff]
        %v5411 = vld [vmem:[%s5371 + $0x138] sm:$0xff]
        %v5412 = vld [vmem:[%s5371 + $0x140] sm:$0xff]
        %v5413 = vld [vmem:[%s5371 + $0x148] sm:$0xff]
        %v5414 = vld [vmem:[%s5371 + $0x150] sm:$0xff]
        %v5415 = vld [vmem:[%s5371 + $0x158] sm:$0xff]
        %v5416 = vld [vmem:[%s5371 + $0x160] sm:$0xff]
        %v5417 = vld [vmem:[%s5371 + $0x168] sm:$0xff]
        %v5418 = vld [vmem:[%s5371 + $0x170] sm:$0xff]
        %v5419 = vld [vmem:[%s5371 + $0x178] sm:$0xff]
        %v5420 = vld [vmem:[%s5371 + $0x180] sm:$0xff]
        %v5421 = vld [vmem:[%s5371 + $0x188] sm:$0xff]
        %v5422 = vld [vmem:[%s5371 + $0x190] sm:$0xff]
        %v5423 = vld [vmem:[%s5371 + $0x198] sm:$0xff]
        %v5424 = vld [vmem:[%s5371 + $0x1a0] sm:$0xff]
        %v5425 = vld [vmem:[%s5371 + $0x1a8] sm:$0xff]
        %v5426 = vld [vmem:[%s5371 + $0x1b0] sm:$0xff]
        %v5427 = vld [vmem:[%s5371 + $0x1b8] sm:$0xff]
        %v5428 = vld [vmem:[%s5371 + $0x1c0] sm:$0xff]
        %v5429 = vld [vmem:[%s5371 + $0x1c8] sm:$0xff]
        %v5430 = vld [vmem:[%s5371 + $0x1d0] sm:$0xff]
        %v5431 = vld [vmem:[%s5371 + $0x1d8] sm:$0xff]
        %v5432 = vld [vmem:[%s5371 + $0x1e0] sm:$0xff]
        %v5433 = vld [vmem:[%s5371 + $0x1e8] sm:$0xff]
        %v5434 = vld [vmem:[%s5371 + $0x1f0] sm:$0xff]
        %v5435 = vld [vmem:[%s5371 + $0x1f8] sm:$0xff]
        %5436 = vmatprep.subr.mxu0 %v5373
        %5437 = vmatpush1.msra.mxu0 %v5372
        %5438 = vmatprep.subr.mxu0 %v5375
        %5439 = vmatpush1.msra.mxu0 %v5374
        %5440 = vmatprep.subr.mxu0 %v5377
        %5441 = vmatpush1.msra.mxu0 %v5376
        %5442 = vmatprep.subr.mxu0 %v5379
        %5443 = vmatpush1.msra.mxu0 %v5378
        %5444 = vmatprep.subr.mxu0 %v5381
        %5445 = vmatpush1.msra.mxu0 %v5380
        %5446 = vmatprep.subr.mxu0 %v5383
        %5447 = vmatpush1.msra.mxu0 %v5382
        %5448 = vmatprep.subr.mxu0 %v5385
        %5449 = vmatpush1.msra.mxu0 %v5384
        %5450 = vmatprep.subr.mxu0 %v5387
        %5451 = vmatpush1.msra.mxu0 %v5386
        %5452 = vmatprep.subr.mxu0 %v5389
        %5453 = vmatpush1.msra.mxu0 %v5388
        %5454 = vmatprep.subr.mxu0 %v5391
        %5455 = vmatpush1.msra.mxu0 %v5390
        %5456 = vmatprep.subr.mxu0 %v5393
        %5457 = vmatpush1.msra.mxu0 %v5392
        %5458 = vmatprep.subr.mxu0 %v5395
        %5459 = vmatpush1.msra.mxu0 %v5394
        %5460 = vmatprep.subr.mxu0 %v5397
        %5461 = vmatpush1.msra.mxu0 %v5396
        %5462 = vmatprep.subr.mxu0 %v5399
        %5463 = vmatpush1.msra.mxu0 %v5398
        %5464 = vmatprep.subr.mxu0 %v5401
        %5465 = vmatpush1.msra.mxu0 %v5400
        %5466 = vmatprep.subr.mxu0 %v5403
        %5467 = vmatpush1.msra.mxu0 %v5402
        %5468 = vmatprep.subr.mxu0 %v5405
        %5469 = vmatpush1.msra.mxu0 %v5404
        %5470 = vmatprep.subr.mxu0 %v5407
        %5471 = vmatpush1.msra.mxu0 %v5406
        %5472 = vmatprep.subr.mxu0 %v5409
        %5473 = vmatpush1.msra.mxu0 %v5408
        %5474 = vmatprep.subr.mxu0 %v5411
        %5475 = vmatpush1.msra.mxu0 %v5410
        %5476 = vmatprep.subr.mxu0 %v5413
        %5477 = vmatpush1.msra.mxu0 %v5412
        %5478 = vmatprep.subr.mxu0 %v5415
        %5479 = vmatpush1.msra.mxu0 %v5414
        %5480 = vmatprep.subr.mxu0 %v5417
        %5481 = vmatpush1.msra.mxu0 %v5416
        %5482 = vmatprep.subr.mxu0 %v5419
        %5483 = vmatpush1.msra.mxu0 %v5418
        %5484 = vmatprep.subr.mxu0 %v5421
        %5485 = vmatpush1.msra.mxu0 %v5420
        %5486 = vmatprep.subr.mxu0 %v5423
        %5487 = vmatpush1.msra.mxu0 %v5422
        %5488 = vmatprep.subr.mxu0 %v5425
        %5489 = vmatpush1.msra.mxu0 %v5424
        %5490 = vmatprep.subr.mxu0 %v5427
        %5491 = vmatpush1.msra.mxu0 %v5426
        %5492 = vmatprep.subr.mxu0 %v5429
        %5493 = vmatpush1.msra.mxu0 %v5428
        %5494 = vmatprep.subr.mxu0 %v5431
        %5495 = vmatpush1.msra.mxu0 %v5430
        %5496 = vmatprep.subr.mxu0 %v5433
        %5497 = vmatpush1.msra.mxu0 %v5432
        %5498 = vmatprep.subr.mxu0 %v5435
        %5499 = vmatpush1.msra.mxu0 %v5434
        %5500 = vmatprep.mubr.f32.mxu0 %v5161
        %5501 = vmatmul.mubr.f32.gmra.mrb[0].mxu0 %v5160
        %v5502 = vpop.f32.mrb[0].mxu0
        %v5503 = vadd.f32 0.0, %v5502
        %v5504 = vpop.f32.mrb[0].mxu0
        %v5505 = vadd.f32 0.0, %v5504
        %5506 = vmatprep.mubr.f32.mxu0 %v5163
        %5507 = vmatmul.mubr.f32.gmra.mrb[0].mxu0 %v5162
        %v5508 = vpop.f32.mrb[0].mxu0
        %v5509 = vadd.f32 0.0, %v5508
        %v5510 = vpop.f32.mrb[0].mxu0
        %v5511 = vadd.f32 0.0, %v5510
        %5512 = vmatprep.mubr.f32.mxu0 %v5165
        %5513 = vmatmul.mubr.f32.gmra.mrb[0].mxu0 %v5164
        %v5514 = vpop.f32.mrb[0].mxu0
        %v5515 = vadd.f32 0.0, %v5514
        %v5516 = vpop.f32.mrb[0].mxu0
        %v5517 = vadd.f32 0.0, %v5516
        %5518 = vmatprep.mubr.f32.mxu0 %v5167
        %5519 = vmatmul.mubr.f32.gmra.mrb[0].mxu0 %v5166
        %v5520 = vpop.f32.mrb[0].mxu0
        %v5521 = vadd.f32 0.0, %v5520
        %v5522 = vpop.f32.mrb[0].mxu0
        %v5523 = vadd.f32 0.0, %v5522
        %5524 = vmatprep.mubr.f32.mxu0 %v5169
        %5525 = vmatmul.mubr.f32.gmra.mrb[0].mxu0 %v5168
        %v5526 = vpop.f32.mrb[0].mxu0
        %v5527 = vadd.f32 0.0, %v5526
        %v5528 = vpop.f32.mrb[0].mxu0
        %v5529 = vadd.f32 0.0, %v5528
        %5530 = vmatprep.mubr.f32.mxu0 %v5171
        %5531 = vmatmul.mubr.f32.gmra.mrb[0].mxu0 %v5170
        %v5532 = vpop.f32.mrb[0].mxu0
        %v5533 = vadd.f32 0.0, %v5532
        %v5534 = vpop.f32.mrb[0].mxu0
        %v5535 = vadd.f32 0.0, %v5534
        %5536 = vmatprep.mubr.f32.mxu0 %v5173
        %5537 = vmatmul.mubr.f32.gmra.mrb[0].mxu0 %v5172
        %v5538 = vpop.f32.mrb[0].mxu0
        %v5539 = vadd.f32 0.0, %v5538
        %v5540 = vpop.f32.mrb[0].mxu0
        %v5541 = vadd.f32 0.0, %v5540
        %5542 = vmatprep.mubr.f32.mxu0 %v5175
        %5543 = vmatmul.mubr.f32.gmra.mrb[0].mxu0 %v5174
        %v5544 = vpop.f32.mrb[0].mxu0
        %v5545 = vadd.f32 0.0, %v5544
        %v5546 = vpop.f32.mrb[0].mxu0
        %v5547 = vadd.f32 0.0, %v5546
        %5548 = vdwg.mxu0
        %v5549 = vadd.f32 %v5355, %v5503
        %v5550 = vadd.f32 %v5356, %v5505
        %v5551 = vadd.f32 %v5357, %v5509
        %v5552 = vadd.f32 %v5358, %v5511
        %v5553 = vadd.f32 %v5359, %v5515
        %v5554 = vadd.f32 %v5360, %v5517
        %v5555 = vadd.f32 %v5361, %v5521
        %v5556 = vadd.f32 %v5362, %v5523
        %v5557 = vadd.f32 %v5363, %v5527
        %v5558 = vadd.f32 %v5364, %v5529
        %v5559 = vadd.f32 %v5365, %v5533
        %v5560 = vadd.f32 %v5366, %v5535
        %v5561 = vadd.f32 %v5367, %v5539
        %v5562 = vadd.f32 %v5368, %v5541
        %v5563 = vadd.f32 %v5369, %v5545
        %v5564 = vadd.f32 %v5370, %v5547
        %s5565 = scalar_lea.vmem [#allocation13], 3072
        %v5566 = vld [vmem:[%s5565] sm:$0xff]
        %v5567 = vld [vmem:[%s5565 + $0x8] sm:$0xff]
        %v5568 = vld [vmem:[%s5565 + $0x10] sm:$0xff]
        %v5569 = vld [vmem:[%s5565 + $0x18] sm:$0xff]
        %v5570 = vld [vmem:[%s5565 + $0x20] sm:$0xff]
        %v5571 = vld [vmem:[%s5565 + $0x28] sm:$0xff]
        %v5572 = vld [vmem:[%s5565 + $0x30] sm:$0xff]
        %v5573 = vld [vmem:[%s5565 + $0x38] sm:$0xff]
        %v5574 = vld [vmem:[%s5565 + $0x40] sm:$0xff]
        %v5575 = vld [vmem:[%s5565 + $0x48] sm:$0xff]
        %v5576 = vld [vmem:[%s5565 + $0x50] sm:$0xff]
        %v5577 = vld [vmem:[%s5565 + $0x58] sm:$0xff]
        %v5578 = vld [vmem:[%s5565 + $0x60] sm:$0xff]
        %v5579 = vld [vmem:[%s5565 + $0x68] sm:$0xff]
        %v5580 = vld [vmem:[%s5565 + $0x70] sm:$0xff]
        %v5581 = vld [vmem:[%s5565 + $0x78] sm:$0xff]
        %v5582 = vld [vmem:[%s5565 + $0x80] sm:$0xff]
        %v5583 = vld [vmem:[%s5565 + $0x88] sm:$0xff]
        %v5584 = vld [vmem:[%s5565 + $0x90] sm:$0xff]
        %v5585 = vld [vmem:[%s5565 + $0x98] sm:$0xff]
        %v5586 = vld [vmem:[%s5565 + $0xa0] sm:$0xff]
        %v5587 = vld [vmem:[%s5565 + $0xa8] sm:$0xff]
        %v5588 = vld [vmem:[%s5565 + $0xb0] sm:$0xff]
        %v5589 = vld [vmem:[%s5565 + $0xb8] sm:$0xff]
        %v5590 = vld [vmem:[%s5565 + $0xc0] sm:$0xff]
        %v5591 = vld [vmem:[%s5565 + $0xc8] sm:$0xff]
        %v5592 = vld [vmem:[%s5565 + $0xd0] sm:$0xff]
        %v5593 = vld [vmem:[%s5565 + $0xd8] sm:$0xff]
        %v5594 = vld [vmem:[%s5565 + $0xe0] sm:$0xff]
        %v5595 = vld [vmem:[%s5565 + $0xe8] sm:$0xff]
        %v5596 = vld [vmem:[%s5565 + $0xf0] sm:$0xff]
        %v5597 = vld [vmem:[%s5565 + $0xf8] sm:$0xff]
        %v5598 = vld [vmem:[%s5565 + $0x100] sm:$0xff]
        %v5599 = vld [vmem:[%s5565 + $0x108] sm:$0xff]
        %v5600 = vld [vmem:[%s5565 + $0x110] sm:$0xff]
        %v5601 = vld [vmem:[%s5565 + $0x118] sm:$0xff]
        %v5602 = vld [vmem:[%s5565 + $0x120] sm:$0xff]
        %v5603 = vld [vmem:[%s5565 + $0x128] sm:$0xff]
        %v5604 = vld [vmem:[%s5565 + $0x130] sm:$0xff]
        %v5605 = vld [vmem:[%s5565 + $0x138] sm:$0xff]
        %v5606 = vld [vmem:[%s5565 + $0x140] sm:$0xff]
        %v5607 = vld [vmem:[%s5565 + $0x148] sm:$0xff]
        %v5608 = vld [vmem:[%s5565 + $0x150] sm:$0xff]
        %v5609 = vld [vmem:[%s5565 + $0x158] sm:$0xff]
        %v5610 = vld [vmem:[%s5565 + $0x160] sm:$0xff]
        %v5611 = vld [vmem:[%s5565 + $0x168] sm:$0xff]
        %v5612 = vld [vmem:[%s5565 + $0x170] sm:$0xff]
        %v5613 = vld [vmem:[%s5565 + $0x178] sm:$0xff]
        %v5614 = vld [vmem:[%s5565 + $0x180] sm:$0xff]
        %v5615 = vld [vmem:[%s5565 + $0x188] sm:$0xff]
        %v5616 = vld [vmem:[%s5565 + $0x190] sm:$0xff]
        %v5617 = vld [vmem:[%s5565 + $0x198] sm:$0xff]
        %v5618 = vld [vmem:[%s5565 + $0x1a0] sm:$0xff]
        %v5619 = vld [vmem:[%s5565 + $0x1a8] sm:$0xff]
        %v5620 = vld [vmem:[%s5565 + $0x1b0] sm:$0xff]
        %v5621 = vld [vmem:[%s5565 + $0x1b8] sm:$0xff]
        %v5622 = vld [vmem:[%s5565 + $0x1c0] sm:$0xff]
        %v5623 = vld [vmem:[%s5565 + $0x1c8] sm:$0xff]
        %v5624 = vld [vmem:[%s5565 + $0x1d0] sm:$0xff]
        %v5625 = vld [vmem:[%s5565 + $0x1d8] sm:$0xff]
        %v5626 = vld [vmem:[%s5565 + $0x1e0] sm:$0xff]
        %v5627 = vld [vmem:[%s5565 + $0x1e8] sm:$0xff]
        %v5628 = vld [vmem:[%s5565 + $0x1f0] sm:$0xff]
        %v5629 = vld [vmem:[%s5565 + $0x1f8] sm:$0xff]
        %5630 = vmatprep.subr.mxu0 %v5567
        %5631 = vmatpush1.msra.mxu0 %v5566
        %5632 = vmatprep.subr.mxu0 %v5569
        %5633 = vmatpush1.msra.mxu0 %v5568
        %5634 = vmatprep.subr.mxu0 %v5571
        %5635 = vmatpush1.msra.mxu0 %v5570
        %5636 = vmatprep.subr.mxu0 %v5573
        %5637 = vmatpush1.msra.mxu0 %v5572
        %5638 = vmatprep.subr.mxu0 %v5575
        %5639 = vmatpush1.msra.mxu0 %v5574
        %5640 = vmatprep.subr.mxu0 %v5577
        %5641 = vmatpush1.msra.mxu0 %v5576
        %5642 = vmatprep.subr.mxu0 %v5579
        %5643 = vmatpush1.msra.mxu0 %v5578
        %5644 = vmatprep.subr.mxu0 %v5581
        %5645 = vmatpush1.msra.mxu0 %v5580
        %5646 = vmatprep.subr.mxu0 %v5583
        %5647 = vmatpush1.msra.mxu0 %v5582
        %5648 = vmatprep.subr.mxu0 %v5585
        %5649 = vmatpush1.msra.mxu0 %v5584
        %5650 = vmatprep.subr.mxu0 %v5587
        %5651 = vmatpush1.msra.mxu0 %v5586
        %5652 = vmatprep.subr.mxu0 %v5589
        %5653 = vmatpush1.msra.mxu0 %v5588
        %5654 = vmatprep.subr.mxu0 %v5591
        %5655 = vmatpush1.msra.mxu0 %v5590
        %5656 = vmatprep.subr.mxu0 %v5593
        %5657 = vmatpush1.msra.mxu0 %v5592
        %5658 = vmatprep.subr.mxu0 %v5595
        %5659 = vmatpush1.msra.mxu0 %v5594
        %5660 = vmatprep.subr.mxu0 %v5597
        %5661 = vmatpush1.msra.mxu0 %v5596
        %5662 = vmatprep.subr.mxu0 %v5599
        %5663 = vmatpush1.msra.mxu0 %v5598
        %5664 = vmatprep.subr.mxu0 %v5601
        %5665 = vmatpush1.msra.mxu0 %v5600
        %5666 = vmatprep.subr.mxu0 %v5603
        %5667 = vmatpush1.msra.mxu0 %v5602
        %5668 = vmatprep.subr.mxu0 %v5605
        %5669 = vmatpush1.msra.mxu0 %v5604
        %5670 = vmatprep.subr.mxu0 %v5607
        %5671 = vmatpush1.msra.mxu0 %v5606
        %5672 = vmatprep.subr.mxu0 %v5609
        %5673 = vmatpush1.msra.mxu0 %v5608
        %5674 = vmatprep.subr.mxu0 %v5611
        %5675 = vmatpush1.msra.mxu0 %v5610
        %5676 = vmatprep.subr.mxu0 %v5613
        %5677 = vmatpush1.msra.mxu0 %v5612
        %5678 = vmatprep.subr.mxu0 %v5615
        %5679 = vmatpush1.msra.mxu0 %v5614
        %5680 = vmatprep.subr.mxu0 %v5617
        %5681 = vmatpush1.msra.mxu0 %v5616
        %5682 = vmatprep.subr.mxu0 %v5619
        %5683 = vmatpush1.msra.mxu0 %v5618
        %5684 = vmatprep.subr.mxu0 %v5621
        %5685 = vmatpush1.msra.mxu0 %v5620
        %5686 = vmatprep.subr.mxu0 %v5623
        %5687 = vmatpush1.msra.mxu0 %v5622
        %5688 = vmatprep.subr.mxu0 %v5625
        %5689 = vmatpush1.msra.mxu0 %v5624
        %5690 = vmatprep.subr.mxu0 %v5627
        %5691 = vmatpush1.msra.mxu0 %v5626
        %5692 = vmatprep.subr.mxu0 %v5629
        %5693 = vmatpush1.msra.mxu0 %v5628
        %5694 = vmatprep.mubr.f32.mxu0 %v5163
        %5695 = vmatmul.mubr.f32.gmra.mrb[0].mxu0 %v5162
        %v5696 = vpop.f32.mrb[0].mxu0
        %v5697 = vadd.f32 0.0, %v5696
        %v5698 = vpop.f32.mrb[0].mxu0
        %v5699 = vadd.f32 0.0, %v5698
        %5700 = vmatprep.mubr.f32.mxu0 %v5165
        %5701 = vmatmul.mubr.f32.gmra.mrb[0].mxu0 %v5164
        %v5702 = vpop.f32.mrb[0].mxu0
        %v5703 = vadd.f32 0.0, %v5702
        %v5704 = vpop.f32.mrb[0].mxu0
        %v5705 = vadd.f32 0.0, %v5704
        %5706 = vmatprep.mubr.f32.mxu0 %v5167
        %5707 = vmatmul.mubr.f32.gmra.mrb[0].mxu0 %v5166
        %v5708 = vpop.f32.mrb[0].mxu0
        %v5709 = vadd.f32 0.0, %v5708
        %v5710 = vpop.f32.mrb[0].mxu0
        %v5711 = vadd.f32 0.0, %v5710
        %5712 = vmatprep.mubr.f32.mxu0 %v5169
        %5713 = vmatmul.mubr.f32.gmra.mrb[0].mxu0 %v5168
        %v5714 = vpop.f32.mrb[0].mxu0
        %v5715 = vadd.f32 0.0, %v5714
        %v5716 = vpop.f32.mrb[0].mxu0
        %v5717 = vadd.f32 0.0, %v5716
        %5718 = vmatprep.mubr.f32.mxu0 %v5171
        %5719 = vmatmul.mubr.f32.gmra.mrb[0].mxu0 %v5170
        %v5720 = vpop.f32.mrb[0].mxu0
        %v5721 = vadd.f32 0.0, %v5720
        %v5722 = vpop.f32.mrb[0].mxu0
        %v5723 = vadd.f32 0.0, %v5722
        %5724 = vmatprep.mubr.f32.mxu0 %v5173
        %5725 = vmatmul.mubr.f32.gmra.mrb[0].mxu0 %v5172
        %v5726 = vpop.f32.mrb[0].mxu0
        %v5727 = vadd.f32 0.0, %v5726
        %v5728 = vpop.f32.mrb[0].mxu0
        %v5729 = vadd.f32 0.0, %v5728
        %5730 = vmatprep.mubr.f32.mxu0 %v5175
        %5731 = vmatmul.mubr.f32.gmra.mrb[0].mxu0 %v5174
        %v5732 = vpop.f32.mrb[0].mxu0
        %v5733 = vadd.f32 0.0, %v5732
        %v5734 = vpop.f32.mrb[0].mxu0
        %v5735 = vadd.f32 0.0, %v5734
        %5736 = vmatprep.mubr.f32.mxu0 %v5177
        %5737 = vmatmul.mubr.f32.gmra.mrb[0].mxu0 %v5176
        %v5738 = vpop.f32.mrb[0].mxu0
        %v5739 = vadd.f32 0.0, %v5738
        %v5740 = vpop.f32.mrb[0].mxu0
        %v5741 = vadd.f32 0.0, %v5740
        %5742 = vdwg.mxu0
        %v5743 = vadd.f32 %v5549, %v5697
        %v5744 = vadd.f32 %v5550, %v5699
        %v5745 = vadd.f32 %v5551, %v5703
        %v5746 = vadd.f32 %v5552, %v5705
        %v5747 = vadd.f32 %v5553, %v5709
        %v5748 = vadd.f32 %v5554, %v5711
        %v5749 = vadd.f32 %v5555, %v5715
        %v5750 = vadd.f32 %v5556, %v5717
        %v5751 = vadd.f32 %v5557, %v5721
        %v5752 = vadd.f32 %v5558, %v5723
        %v5753 = vadd.f32 %v5559, %v5727
        %v5754 = vadd.f32 %v5560, %v5729
        %v5755 = vadd.f32 %v5561, %v5733
        %v5756 = vadd.f32 %v5562, %v5735
        %v5757 = vadd.f32 %v5563, %v5739
        %v5758 = vadd.f32 %v5564, %v5741
        %v5759 = vld [vmem:[#allocation3] sm:$0xfe]
        %v5760 = vld [vmem:[#allocation3 + $0x8] sm:$0xfe]
        %v5761 = vld [vmem:[#allocation3 + $0x10] sm:$0x1]
        %v5762 = vld [vmem:[#allocation3 + $0x18] sm:$0x1]
        %v5763 = vld [vmem:[#allocation3 + $0x20] sm:$0xfe]
        %v5764 = vld [vmem:[#allocation3 + $0x28] sm:$0xfe]
        %v5765 = vld [vmem:[#allocation3 + $0x30] sm:$0x1]
        %v5766 = vld [vmem:[#allocation3 + $0x38] sm:$0x1]
        %v5767 = vld [vmem:[#allocation3 + $0x40] sm:$0xfe]
        %v5768 = vld [vmem:[#allocation3 + $0x48] sm:$0xfe]
        %v5769 = vld [vmem:[#allocation3 + $0x50] sm:$0x1]
        %v5770 = vld [vmem:[#allocation3 + $0x58] sm:$0x1]
        %v5771 = vld [vmem:[#allocation3 + $0x60] sm:$0xfe]
        %v5772 = vld [vmem:[#allocation3 + $0x68] sm:$0xfe]
        %v5773 = vld [vmem:[#allocation3 + $0x70] sm:$0x1]
        %v5774 = vld [vmem:[#allocation3 + $0x78] sm:$0x1]
        %v5775 = vld [vmem:[#allocation3 + $0x80] sm:$0xfe]
        %v5776 = vld [vmem:[#allocation3 + $0x88] sm:$0xfe]
        %v5777 = vld [vmem:[#allocation3 + $0x90] sm:$0x1]
        %v5778 = vld [vmem:[#allocation3 + $0x98] sm:$0x1]
        %v5779 = vld [vmem:[#allocation3 + $0xa0] sm:$0xfe]
        %v5780 = vld [vmem:[#allocation3 + $0xa8] sm:$0xfe]
        %v5781 = vld [vmem:[#allocation3 + $0xb0] sm:$0x1]
        %v5782 = vld [vmem:[#allocation3 + $0xb8] sm:$0x1]
        %v5783 = vld [vmem:[#allocation3 + $0xc0] sm:$0xfe]
        %v5784 = vld [vmem:[#allocation3 + $0xc8] sm:$0xfe]
        %v5785 = vld [vmem:[#allocation3 + $0xd0] sm:$0x1]
        %v5786 = vld [vmem:[#allocation3 + $0xd8] sm:$0x1]
        %v5787 = vld [vmem:[#allocation3 + $0xe0] sm:$0xfe]
        %v5788 = vld [vmem:[#allocation3 + $0xe8] sm:$0xfe]
        %v5789 = vld [vmem:[#allocation3 + $0xf0] sm:$0x1]
        %v5790 = vld [vmem:[#allocation3 + $0xf8] sm:$0x1]
        %v5791 = vld [vmem:[#allocation3 + $0x100] sm:$0xfe]
        %v5792 = vld [vmem:[#allocation3 + $0x108] sm:$0xfe]
        %v5793 = vld [vmem:[#allocation3 + $0x110] sm:$0x1]
        %v5794 = vld [vmem:[#allocation3 + $0x118] sm:$0x1]
        %v5795 = vld [vmem:[#allocation3 + $0x120] sm:$0xfe]
        %v5796 = vld [vmem:[#allocation3 + $0x128] sm:$0xfe]
        %v5797 = vld [vmem:[#allocation3 + $0x130] sm:$0x1]
        %v5798 = vld [vmem:[#allocation3 + $0x138] sm:$0x1]
        %v5831 = vrot.slane %v5759, 1
        %v5832 = vrot.slane %v5761, 1
        %v5833 = vsel %vm2325, %v5831, %v5832
        %v5834 = vrot.slane %v5760, 1
        %v5835 = vrot.slane %v5762, 1
        %v5836 = vsel %vm2325, %v5834, %v5835
        %v5837 = vrot.slane %v5763, 1
        %v5838 = vrot.slane %v5765, 1
        %v5839 = vsel %vm2325, %v5837, %v5838
        %v5840 = vrot.slane %v5764, 1
        %v5841 = vrot.slane %v5766, 1
        %v5842 = vsel %vm2325, %v5840, %v5841
        %v5843 = vrot.slane %v5767, 1
        %v5844 = vrot.slane %v5769, 1
        %v5845 = vsel %vm2325, %v5843, %v5844
        %v5846 = vrot.slane %v5768, 1
        %v5847 = vrot.slane %v5770, 1
        %v5848 = vsel %vm2325, %v5846, %v5847
        %v5849 = vrot.slane %v5771, 1
        %v5850 = vrot.slane %v5773, 1
        %v5851 = vsel %vm2325, %v5849, %v5850
        %v5852 = vrot.slane %v5772, 1
        %v5853 = vrot.slane %v5774, 1
        %v5854 = vsel %vm2325, %v5852, %v5853
        %v5855 = vrot.slane %v5775, 1
        %v5856 = vrot.slane %v5777, 1
        %v5857 = vsel %vm2325, %v5855, %v5856
        %v5858 = vrot.slane %v5776, 1
        %v5859 = vrot.slane %v5778, 1
        %v5860 = vsel %vm2325, %v5858, %v5859
        %v5861 = vrot.slane %v5779, 1
        %v5862 = vrot.slane %v5781, 1
        %v5863 = vsel %vm2325, %v5861, %v5862
        %v5864 = vrot.slane %v5780, 1
        %v5865 = vrot.slane %v5782, 1
        %v5866 = vsel %vm2325, %v5864, %v5865
        %v5867 = vrot.slane %v5783, 1
        %v5868 = vrot.slane %v5785, 1
        %v5869 = vsel %vm2325, %v5867, %v5868
        %v5870 = vrot.slane %v5784, 1
        %v5871 = vrot.slane %v5786, 1
        %v5872 = vsel %vm2325, %v5870, %v5871
        %v5873 = vrot.slane %v5787, 1
        %v5874 = vrot.slane %v5789, 1
        %v5875 = vsel %vm2325, %v5873, %v5874
        %v5876 = vrot.slane %v5788, 1
        %v5877 = vrot.slane %v5790, 1
        %v5878 = vsel %vm2325, %v5876, %v5877
        %s5895 = scalar_lea.vmem [#allocation13], 512
        %v5896 = vld [vmem:[%s5895] sm:$0xff]
        %v5897 = vld [vmem:[%s5895 + $0x8] sm:$0xff]
        %v5898 = vld [vmem:[%s5895 + $0x10] sm:$0xff]
        %v5899 = vld [vmem:[%s5895 + $0x18] sm:$0xff]
        %v5900 = vld [vmem:[%s5895 + $0x20] sm:$0xff]
        %v5901 = vld [vmem:[%s5895 + $0x28] sm:$0xff]
        %v5902 = vld [vmem:[%s5895 + $0x30] sm:$0xff]
        %v5903 = vld [vmem:[%s5895 + $0x38] sm:$0xff]
        %v5904 = vld [vmem:[%s5895 + $0x40] sm:$0xff]
        %v5905 = vld [vmem:[%s5895 + $0x48] sm:$0xff]
        %v5906 = vld [vmem:[%s5895 + $0x50] sm:$0xff]
        %v5907 = vld [vmem:[%s5895 + $0x58] sm:$0xff]
        %v5908 = vld [vmem:[%s5895 + $0x60] sm:$0xff]
        %v5909 = vld [vmem:[%s5895 + $0x68] sm:$0xff]
        %v5910 = vld [vmem:[%s5895 + $0x70] sm:$0xff]
        %v5911 = vld [vmem:[%s5895 + $0x78] sm:$0xff]
        %v5912 = vld [vmem:[%s5895 + $0x80] sm:$0xff]
        %v5913 = vld [vmem:[%s5895 + $0x88] sm:$0xff]
        %v5914 = vld [vmem:[%s5895 + $0x90] sm:$0xff]
        %v5915 = vld [vmem:[%s5895 + $0x98] sm:$0xff]
        %v5916 = vld [vmem:[%s5895 + $0xa0] sm:$0xff]
        %v5917 = vld [vmem:[%s5895 + $0xa8] sm:$0xff]
        %v5918 = vld [vmem:[%s5895 + $0xb0] sm:$0xff]
        %v5919 = vld [vmem:[%s5895 + $0xb8] sm:$0xff]
        %v5920 = vld [vmem:[%s5895 + $0xc0] sm:$0xff]
        %v5921 = vld [vmem:[%s5895 + $0xc8] sm:$0xff]
        %v5922 = vld [vmem:[%s5895 + $0xd0] sm:$0xff]
        %v5923 = vld [vmem:[%s5895 + $0xd8] sm:$0xff]
        %v5924 = vld [vmem:[%s5895 + $0xe0] sm:$0xff]
        %v5925 = vld [vmem:[%s5895 + $0xe8] sm:$0xff]
        %v5926 = vld [vmem:[%s5895 + $0xf0] sm:$0xff]
        %v5927 = vld [vmem:[%s5895 + $0xf8] sm:$0xff]
        %v5928 = vld [vmem:[%s5895 + $0x100] sm:$0xff]
        %v5929 = vld [vmem:[%s5895 + $0x108] sm:$0xff]
        %v5930 = vld [vmem:[%s5895 + $0x110] sm:$0xff]
        %v5931 = vld [vmem:[%s5895 + $0x118] sm:$0xff]
        %v5932 = vld [vmem:[%s5895 + $0x120] sm:$0xff]
        %v5933 = vld [vmem:[%s5895 + $0x128] sm:$0xff]
        %v5934 = vld [vmem:[%s5895 + $0x130] sm:$0xff]
        %v5935 = vld [vmem:[%s5895 + $0x138] sm:$0xff]
        %v5936 = vld [vmem:[%s5895 + $0x140] sm:$0xff]
        %v5937 = vld [vmem:[%s5895 + $0x148] sm:$0xff]
        %v5938 = vld [vmem:[%s5895 + $0x150] sm:$0xff]
        %v5939 = vld [vmem:[%s5895 + $0x158] sm:$0xff]
        %v5940 = vld [vmem:[%s5895 + $0x160] sm:$0xff]
        %v5941 = vld [vmem:[%s5895 + $0x168] sm:$0xff]
        %v5942 = vld [vmem:[%s5895 + $0x170] sm:$0xff]
        %v5943 = vld [vmem:[%s5895 + $0x178] sm:$0xff]
        %v5944 = vld [vmem:[%s5895 + $0x180] sm:$0xff]
        %v5945 = vld [vmem:[%s5895 + $0x188] sm:$0xff]
        %v5946 = vld [vmem:[%s5895 + $0x190] sm:$0xff]
        %v5947 = vld [vmem:[%s5895 + $0x198] sm:$0xff]
        %v5948 = vld [vmem:[%s5895 + $0x1a0] sm:$0xff]
        %v5949 = vld [vmem:[%s5895 + $0x1a8] sm:$0xff]
        %v5950 = vld [vmem:[%s5895 + $0x1b0] sm:$0xff]
        %v5951 = vld [vmem:[%s5895 + $0x1b8] sm:$0xff]
        %v5952 = vld [vmem:[%s5895 + $0x1c0] sm:$0xff]
        %v5953 = vld [vmem:[%s5895 + $0x1c8] sm:$0xff]
        %v5954 = vld [vmem:[%s5895 + $0x1d0] sm:$0xff]
        %v5955 = vld [vmem:[%s5895 + $0x1d8] sm:$0xff]
        %v5956 = vld [vmem:[%s5895 + $0x1e0] sm:$0xff]
        %v5957 = vld [vmem:[%s5895 + $0x1e8] sm:$0xff]
        %v5958 = vld [vmem:[%s5895 + $0x1f0] sm:$0xff]
        %v5959 = vld [vmem:[%s5895 + $0x1f8] sm:$0xff]
        %5960 = vmatprep.subr.mxu0 %v5897
        %5961 = vmatpush1.msra.mxu0 %v5896
        %5962 = vmatprep.subr.mxu0 %v5899
        %5963 = vmatpush1.msra.mxu0 %v5898
        %5964 = vmatprep.subr.mxu0 %v5901
        %5965 = vmatpush1.msra.mxu0 %v5900
        %5966 = vmatprep.subr.mxu0 %v5903
        %5967 = vmatpush1.msra.mxu0 %v5902
        %5968 = vmatprep.subr.mxu0 %v5905
        %5969 = vmatpush1.msra.mxu0 %v5904
        %5970 = vmatprep.subr.mxu0 %v5907
        %5971 = vmatpush1.msra.mxu0 %v5906
        %5972 = vmatprep.subr.mxu0 %v5909
        %5973 = vmatpush1.msra.mxu0 %v5908
        %5974 = vmatprep.subr.mxu0 %v5911
        %5975 = vmatpush1.msra.mxu0 %v5910
        %5976 = vmatprep.subr.mxu0 %v5913
        %5977 = vmatpush1.msra.mxu0 %v5912
        %5978 = vmatprep.subr.mxu0 %v5915
        %5979 = vmatpush1.msra.mxu0 %v5914
        %5980 = vmatprep.subr.mxu0 %v5917
        %5981 = vmatpush1.msra.mxu0 %v5916
        %5982 = vmatprep.subr.mxu0 %v5919
        %5983 = vmatpush1.msra.mxu0 %v5918
        %5984 = vmatprep.subr.mxu0 %v5921
        %5985 = vmatpush1.msra.mxu0 %v5920
        %5986 = vmatprep.subr.mxu0 %v5923
        %5987 = vmatpush1.msra.mxu0 %v5922
        %5988 = vmatprep.subr.mxu0 %v5925
        %5989 = vmatpush1.msra.mxu0 %v5924
        %5990 = vmatprep.subr.mxu0 %v5927
        %5991 = vmatpush1.msra.mxu0 %v5926
        %5992 = vmatprep.subr.mxu0 %v5929
        %5993 = vmatpush1.msra.mxu0 %v5928
        %5994 = vmatprep.subr.mxu0 %v5931
        %5995 = vmatpush1.msra.mxu0 %v5930
        %5996 = vmatprep.subr.mxu0 %v5933
        %5997 = vmatpush1.msra.mxu0 %v5932
        %5998 = vmatprep.subr.mxu0 %v5935
        %5999 = vmatpush1.msra.mxu0 %v5934
        %6000 = vmatprep.subr.mxu0 %v5937
        %6001 = vmatpush1.msra.mxu0 %v5936
        %6002 = vmatprep.subr.mxu0 %v5939
        %6003 = vmatpush1.msra.mxu0 %v5938
        %6004 = vmatprep.subr.mxu0 %v5941
        %6005 = vmatpush1.msra.mxu0 %v5940
        %6006 = vmatprep.subr.mxu0 %v5943
        %6007 = vmatpush1.msra.mxu0 %v5942
        %6008 = vmatprep.subr.mxu0 %v5945
        %6009 = vmatpush1.msra.mxu0 %v5944
        %6010 = vmatprep.subr.mxu0 %v5947
        %6011 = vmatpush1.msra.mxu0 %v5946
        %6012 = vmatprep.subr.mxu0 %v5949
        %6013 = vmatpush1.msra.mxu0 %v5948
        %6014 = vmatprep.subr.mxu0 %v5951
        %6015 = vmatpush1.msra.mxu0 %v5950
        %6016 = vmatprep.subr.mxu0 %v5953
        %6017 = vmatpush1.msra.mxu0 %v5952
        %6018 = vmatprep.subr.mxu0 %v5955
        %6019 = vmatpush1.msra.mxu0 %v5954
        %6020 = vmatprep.subr.mxu0 %v5957
        %6021 = vmatpush1.msra.mxu0 %v5956
        %6022 = vmatprep.subr.mxu0 %v5959
        %6023 = vmatpush1.msra.mxu0 %v5958
        %6024 = vmatprep.mubr.f32.mxu0 %v5836
        %6025 = vmatmul.mubr.f32.gmra.mrb[0].mxu0 %v5833
        %v6026 = vpop.f32.mrb[0].mxu0
        %v6027 = vadd.f32 0.0, %v6026
        %v6028 = vpop.f32.mrb[0].mxu0
        %v6029 = vadd.f32 0.0, %v6028
        %6030 = vmatprep.mubr.f32.mxu0 %v5842
        %6031 = vmatmul.mubr.f32.gmra.mrb[0].mxu0 %v5839
        %v6032 = vpop.f32.mrb[0].mxu0
        %v6033 = vadd.f32 0.0, %v6032
        %v6034 = vpop.f32.mrb[0].mxu0
        %v6035 = vadd.f32 0.0, %v6034
        %6036 = vmatprep.mubr.f32.mxu0 %v5848
        %6037 = vmatmul.mubr.f32.gmra.mrb[0].mxu0 %v5845
        %v6038 = vpop.f32.mrb[0].mxu0
        %v6039 = vadd.f32 0.0, %v6038
        %v6040 = vpop.f32.mrb[0].mxu0
        %v6041 = vadd.f32 0.0, %v6040
        %6042 = vmatprep.mubr.f32.mxu0 %v5854
        %6043 = vmatmul.mubr.f32.gmra.mrb[0].mxu0 %v5851
        %v6044 = vpop.f32.mrb[0].mxu0
        %v6045 = vadd.f32 0.0, %v6044
        %v6046 = vpop.f32.mrb[0].mxu0
        %v6047 = vadd.f32 0.0, %v6046
        %6048 = vmatprep.mubr.f32.mxu0 %v5860
        %6049 = vmatmul.mubr.f32.gmra.mrb[0].mxu0 %v5857
        %v6050 = vpop.f32.mrb[0].mxu0
        %v6051 = vadd.f32 0.0, %v6050
        %v6052 = vpop.f32.mrb[0].mxu0
        %v6053 = vadd.f32 0.0, %v6052
        %6054 = vmatprep.mubr.f32.mxu0 %v5866
        %6055 = vmatmul.mubr.f32.gmra.mrb[0].mxu0 %v5863
        %v6056 = vpop.f32.mrb[0].mxu0
        %v6057 = vadd.f32 0.0, %v6056
        %v6058 = vpop.f32.mrb[0].mxu0
        %v6059 = vadd.f32 0.0, %v6058
        %6060 = vmatprep.mubr.f32.mxu0 %v5872
        %6061 = vmatmul.mubr.f32.gmra.mrb[0].mxu0 %v5869
        %v6062 = vpop.f32.mrb[0].mxu0
        %v6063 = vadd.f32 0.0, %v6062
        %v6064 = vpop.f32.mrb[0].mxu0
        %v6065 = vadd.f32 0.0, %v6064
        %6066 = vmatprep.mubr.f32.mxu0 %v5878
        %6067 = vmatmul.mubr.f32.gmra.mrb[0].mxu0 %v5875
        %v6068 = vpop.f32.mrb[0].mxu0
        %v6069 = vadd.f32 0.0, %v6068
        %v6070 = vpop.f32.mrb[0].mxu0
        %v6071 = vadd.f32 0.0, %v6070
        %6072 = vdwg.mxu0
        %v6073 = vadd.f32 %v5743, %v6027
        %v6074 = vadd.f32 %v5744, %v6029
        %v6075 = vadd.f32 %v5745, %v6033
        %v6076 = vadd.f32 %v5746, %v6035
        %v6077 = vadd.f32 %v5747, %v6039
        %v6078 = vadd.f32 %v5748, %v6041
        %v6079 = vadd.f32 %v5749, %v6045
        %v6080 = vadd.f32 %v5750, %v6047
        %v6081 = vadd.f32 %v5751, %v6051
        %v6082 = vadd.f32 %v5752, %v6053
        %v6083 = vadd.f32 %v5753, %v6057
        %v6084 = vadd.f32 %v5754, %v6059
        %v6085 = vadd.f32 %v5755, %v6063
        %v6086 = vadd.f32 %v5756, %v6065
        %v6087 = vadd.f32 %v5757, %v6069
        %v6088 = vadd.f32 %v5758, %v6071
        %v6093 = vrot.slane %v5791, 1
        %v6094 = vrot.slane %v5793, 1
        %v6095 = vsel %vm2325, %v6093, %v6094
        %v6096 = vrot.slane %v5792, 1
        %v6097 = vrot.slane %v5794, 1
        %v6098 = vsel %vm2325, %v6096, %v6097
        %s6101 = scalar_lea.vmem [#allocation13], 2048
        %v6102 = vld [vmem:[%s6101] sm:$0xff]
        %v6103 = vld [vmem:[%s6101 + $0x8] sm:$0xff]
        %v6104 = vld [vmem:[%s6101 + $0x10] sm:$0xff]
        %v6105 = vld [vmem:[%s6101 + $0x18] sm:$0xff]
        %v6106 = vld [vmem:[%s6101 + $0x20] sm:$0xff]
        %v6107 = vld [vmem:[%s6101 + $0x28] sm:$0xff]
        %v6108 = vld [vmem:[%s6101 + $0x30] sm:$0xff]
        %v6109 = vld [vmem:[%s6101 + $0x38] sm:$0xff]
        %v6110 = vld [vmem:[%s6101 + $0x40] sm:$0xff]
        %v6111 = vld [vmem:[%s6101 + $0x48] sm:$0xff]
        %v6112 = vld [vmem:[%s6101 + $0x50] sm:$0xff]
        %v6113 = vld [vmem:[%s6101 + $0x58] sm:$0xff]
        %v6114 = vld [vmem:[%s6101 + $0x60] sm:$0xff]
        %v6115 = vld [vmem:[%s6101 + $0x68] sm:$0xff]
        %v6116 = vld [vmem:[%s6101 + $0x70] sm:$0xff]
        %v6117 = vld [vmem:[%s6101 + $0x78] sm:$0xff]
        %v6118 = vld [vmem:[%s6101 + $0x80] sm:$0xff]
        %v6119 = vld [vmem:[%s6101 + $0x88] sm:$0xff]
        %v6120 = vld [vmem:[%s6101 + $0x90] sm:$0xff]
        %v6121 = vld [vmem:[%s6101 + $0x98] sm:$0xff]
        %v6122 = vld [vmem:[%s6101 + $0xa0] sm:$0xff]
        %v6123 = vld [vmem:[%s6101 + $0xa8] sm:$0xff]
        %v6124 = vld [vmem:[%s6101 + $0xb0] sm:$0xff]
        %v6125 = vld [vmem:[%s6101 + $0xb8] sm:$0xff]
        %v6126 = vld [vmem:[%s6101 + $0xc0] sm:$0xff]
        %v6127 = vld [vmem:[%s6101 + $0xc8] sm:$0xff]
        %v6128 = vld [vmem:[%s6101 + $0xd0] sm:$0xff]
        %v6129 = vld [vmem:[%s6101 + $0xd8] sm:$0xff]
        %v6130 = vld [vmem:[%s6101 + $0xe0] sm:$0xff]
        %v6131 = vld [vmem:[%s6101 + $0xe8] sm:$0xff]
        %v6132 = vld [vmem:[%s6101 + $0xf0] sm:$0xff]
        %v6133 = vld [vmem:[%s6101 + $0xf8] sm:$0xff]
        %v6134 = vld [vmem:[%s6101 + $0x100] sm:$0xff]
        %v6135 = vld [vmem:[%s6101 + $0x108] sm:$0xff]
        %v6136 = vld [vmem:[%s6101 + $0x110] sm:$0xff]
        %v6137 = vld [vmem:[%s6101 + $0x118] sm:$0xff]
        %v6138 = vld [vmem:[%s6101 + $0x120] sm:$0xff]
        %v6139 = vld [vmem:[%s6101 + $0x128] sm:$0xff]
        %v6140 = vld [vmem:[%s6101 + $0x130] sm:$0xff]
        %v6141 = vld [vmem:[%s6101 + $0x138] sm:$0xff]
        %v6142 = vld [vmem:[%s6101 + $0x140] sm:$0xff]
        %v6143 = vld [vmem:[%s6101 + $0x148] sm:$0xff]
        %v6144 = vld [vmem:[%s6101 + $0x150] sm:$0xff]
        %v6145 = vld [vmem:[%s6101 + $0x158] sm:$0xff]
        %v6146 = vld [vmem:[%s6101 + $0x160] sm:$0xff]
        %v6147 = vld [vmem:[%s6101 + $0x168] sm:$0xff]
        %v6148 = vld [vmem:[%s6101 + $0x170] sm:$0xff]
        %v6149 = vld [vmem:[%s6101 + $0x178] sm:$0xff]
        %v6150 = vld [vmem:[%s6101 + $0x180] sm:$0xff]
        %v6151 = vld [vmem:[%s6101 + $0x188] sm:$0xff]
        %v6152 = vld [vmem:[%s6101 + $0x190] sm:$0xff]
        %v6153 = vld [vmem:[%s6101 + $0x198] sm:$0xff]
        %v6154 = vld [vmem:[%s6101 + $0x1a0] sm:$0xff]
        %v6155 = vld [vmem:[%s6101 + $0x1a8] sm:$0xff]
        %v6156 = vld [vmem:[%s6101 + $0x1b0] sm:$0xff]
        %v6157 = vld [vmem:[%s6101 + $0x1b8] sm:$0xff]
        %v6158 = vld [vmem:[%s6101 + $0x1c0] sm:$0xff]
        %v6159 = vld [vmem:[%s6101 + $0x1c8] sm:$0xff]
        %v6160 = vld [vmem:[%s6101 + $0x1d0] sm:$0xff]
        %v6161 = vld [vmem:[%s6101 + $0x1d8] sm:$0xff]
        %v6162 = vld [vmem:[%s6101 + $0x1e0] sm:$0xff]
        %v6163 = vld [vmem:[%s6101 + $0x1e8] sm:$0xff]
        %v6164 = vld [vmem:[%s6101 + $0x1f0] sm:$0xff]
        %v6165 = vld [vmem:[%s6101 + $0x1f8] sm:$0xff]
        %6166 = vmatprep.subr.mxu0 %v6103
        %6167 = vmatpush1.msra.mxu0 %v6102
        %6168 = vmatprep.subr.mxu0 %v6105
        %6169 = vmatpush1.msra.mxu0 %v6104
        %6170 = vmatprep.subr.mxu0 %v6107
        %6171 = vmatpush1.msra.mxu0 %v6106
        %6172 = vmatprep.subr.mxu0 %v6109
        %6173 = vmatpush1.msra.mxu0 %v6108
        %6174 = vmatprep.subr.mxu0 %v6111
        %6175 = vmatpush1.msra.mxu0 %v6110
        %6176 = vmatprep.subr.mxu0 %v6113
        %6177 = vmatpush1.msra.mxu0 %v6112
        %6178 = vmatprep.subr.mxu0 %v6115
        %6179 = vmatpush1.msra.mxu0 %v6114
        %6180 = vmatprep.subr.mxu0 %v6117
        %6181 = vmatpush1.msra.mxu0 %v6116
        %6182 = vmatprep.subr.mxu0 %v6119
        %6183 = vmatpush1.msra.mxu0 %v6118
        %6184 = vmatprep.subr.mxu0 %v6121
        %6185 = vmatpush1.msra.mxu0 %v6120
        %6186 = vmatprep.subr.mxu0 %v6123
        %6187 = vmatpush1.msra.mxu0 %v6122
        %6188 = vmatprep.subr.mxu0 %v6125
        %6189 = vmatpush1.msra.mxu0 %v6124
        %6190 = vmatprep.subr.mxu0 %v6127
        %6191 = vmatpush1.msra.mxu0 %v6126
        %6192 = vmatprep.subr.mxu0 %v6129
        %6193 = vmatpush1.msra.mxu0 %v6128
        %6194 = vmatprep.subr.mxu0 %v6131
        %6195 = vmatpush1.msra.mxu0 %v6130
        %6196 = vmatprep.subr.mxu0 %v6133
        %6197 = vmatpush1.msra.mxu0 %v6132
        %6198 = vmatprep.subr.mxu0 %v6135
        %6199 = vmatpush1.msra.mxu0 %v6134
        %6200 = vmatprep.subr.mxu0 %v6137
        %6201 = vmatpush1.msra.mxu0 %v6136
        %6202 = vmatprep.subr.mxu0 %v6139
        %6203 = vmatpush1.msra.mxu0 %v6138
        %6204 = vmatprep.subr.mxu0 %v6141
        %6205 = vmatpush1.msra.mxu0 %v6140
        %6206 = vmatprep.subr.mxu0 %v6143
        %6207 = vmatpush1.msra.mxu0 %v6142
        %6208 = vmatprep.subr.mxu0 %v6145
        %6209 = vmatpush1.msra.mxu0 %v6144
        %6210 = vmatprep.subr.mxu0 %v6147
        %6211 = vmatpush1.msra.mxu0 %v6146
        %6212 = vmatprep.subr.mxu0 %v6149
        %6213 = vmatpush1.msra.mxu0 %v6148
        %6214 = vmatprep.subr.mxu0 %v6151
        %6215 = vmatpush1.msra.mxu0 %v6150
        %6216 = vmatprep.subr.mxu0 %v6153
        %6217 = vmatpush1.msra.mxu0 %v6152
        %6218 = vmatprep.subr.mxu0 %v6155
        %6219 = vmatpush1.msra.mxu0 %v6154
        %6220 = vmatprep.subr.mxu0 %v6157
        %6221 = vmatpush1.msra.mxu0 %v6156
        %6222 = vmatprep.subr.mxu0 %v6159
        %6223 = vmatpush1.msra.mxu0 %v6158
        %6224 = vmatprep.subr.mxu0 %v6161
        %6225 = vmatpush1.msra.mxu0 %v6160
        %6226 = vmatprep.subr.mxu0 %v6163
        %6227 = vmatpush1.msra.mxu0 %v6162
        %6228 = vmatprep.subr.mxu0 %v6165
        %6229 = vmatpush1.msra.mxu0 %v6164
        %6230 = vmatprep.mubr.f32.mxu0 %v5842
        %6231 = vmatmul.mubr.f32.gmra.mrb[0].mxu0 %v5839
        %v6232 = vpop.f32.mrb[0].mxu0
        %v6233 = vadd.f32 0.0, %v6232
        %v6234 = vpop.f32.mrb[0].mxu0
        %v6235 = vadd.f32 0.0, %v6234
        %6236 = vmatprep.mubr.f32.mxu0 %v5848
        %6237 = vmatmul.mubr.f32.gmra.mrb[0].mxu0 %v5845
        %v6238 = vpop.f32.mrb[0].mxu0
        %v6239 = vadd.f32 0.0, %v6238
        %v6240 = vpop.f32.mrb[0].mxu0
        %v6241 = vadd.f32 0.0, %v6240
        %6242 = vmatprep.mubr.f32.mxu0 %v5854
        %6243 = vmatmul.mubr.f32.gmra.mrb[0].mxu0 %v5851
        %v6244 = vpop.f32.mrb[0].mxu0
        %v6245 = vadd.f32 0.0, %v6244
        %v6246 = vpop.f32.mrb[0].mxu0
        %v6247 = vadd.f32 0.0, %v6246
        %6248 = vmatprep.mubr.f32.mxu0 %v5860
        %6249 = vmatmul.mubr.f32.gmra.mrb[0].mxu0 %v5857
        %v6250 = vpop.f32.mrb[0].mxu0
        %v6251 = vadd.f32 0.0, %v6250
        %v6252 = vpop.f32.mrb[0].mxu0
        %v6253 = vadd.f32 0.0, %v6252
        %6254 = vmatprep.mubr.f32.mxu0 %v5866
        %6255 = vmatmul.mubr.f32.gmra.mrb[0].mxu0 %v5863
        %v6256 = vpop.f32.mrb[0].mxu0
        %v6257 = vadd.f32 0.0, %v6256
        %v6258 = vpop.f32.mrb[0].mxu0
        %v6259 = vadd.f32 0.0, %v6258
        %6260 = vmatprep.mubr.f32.mxu0 %v5872
        %6261 = vmatmul.mubr.f32.gmra.mrb[0].mxu0 %v5869
        %v6262 = vpop.f32.mrb[0].mxu0
        %v6263 = vadd.f32 0.0, %v6262
        %v6264 = vpop.f32.mrb[0].mxu0
        %v6265 = vadd.f32 0.0, %v6264
        %6266 = vmatprep.mubr.f32.mxu0 %v5878
        %6267 = vmatmul.mubr.f32.gmra.mrb[0].mxu0 %v5875
        %v6268 = vpop.f32.mrb[0].mxu0
        %v6269 = vadd.f32 0.0, %v6268
        %v6270 = vpop.f32.mrb[0].mxu0
        %v6271 = vadd.f32 0.0, %v6270
        %6272 = vmatprep.mubr.f32.mxu0 %v6098
        %6273 = vmatmul.mubr.f32.gmra.mrb[0].mxu0 %v6095
        %v6274 = vpop.f32.mrb[0].mxu0
        %v6275 = vadd.f32 0.0, %v6274
        %v6276 = vpop.f32.mrb[0].mxu0
        %v6277 = vadd.f32 0.0, %v6276
        %6278 = vdwg.mxu0
        %v6279 = vadd.f32 %v6073, %v6233
        %v6280 = vadd.f32 %v6074, %v6235
        %v6281 = vadd.f32 %v6075, %v6239
        %v6282 = vadd.f32 %v6076, %v6241
        %v6283 = vadd.f32 %v6077, %v6245
        %v6284 = vadd.f32 %v6078, %v6247
        %v6285 = vadd.f32 %v6079, %v6251
        %v6286 = vadd.f32 %v6080, %v6253
        %v6287 = vadd.f32 %v6081, %v6257
        %v6288 = vadd.f32 %v6082, %v6259
        %v6289 = vadd.f32 %v6083, %v6263
        %v6290 = vadd.f32 %v6084, %v6265
        %v6291 = vadd.f32 %v6085, %v6269
        %v6292 = vadd.f32 %v6086, %v6271
        %v6293 = vadd.f32 %v6087, %v6275
        %v6294 = vadd.f32 %v6088, %v6277
        %v6299 = vrot.slane %v5795, 1
        %v6300 = vrot.slane %v5797, 1
        %v6301 = vsel %vm2325, %v6299, %v6300
        %v6302 = vrot.slane %v5796, 1
        %v6303 = vrot.slane %v5798, 1
        %v6304 = vsel %vm2325, %v6302, %v6303
        %s6307 = scalar_lea.vmem [#allocation13], 3584
        %v6308 = vld [vmem:[%s6307] sm:$0xff]
        %v6309 = vld [vmem:[%s6307 + $0x8] sm:$0xff]
        %v6310 = vld [vmem:[%s6307 + $0x10] sm:$0xff]
        %v6311 = vld [vmem:[%s6307 + $0x18] sm:$0xff]
        %v6312 = vld [vmem:[%s6307 + $0x20] sm:$0xff]
        %v6313 = vld [vmem:[%s6307 + $0x28] sm:$0xff]
        %v6314 = vld [vmem:[%s6307 + $0x30] sm:$0xff]
        %v6315 = vld [vmem:[%s6307 + $0x38] sm:$0xff]
        %v6316 = vld [vmem:[%s6307 + $0x40] sm:$0xff]
        %v6317 = vld [vmem:[%s6307 + $0x48] sm:$0xff]
        %v6318 = vld [vmem:[%s6307 + $0x50] sm:$0xff]
        %v6319 = vld [vmem:[%s6307 + $0x58] sm:$0xff]
        %v6320 = vld [vmem:[%s6307 + $0x60] sm:$0xff]
        %v6321 = vld [vmem:[%s6307 + $0x68] sm:$0xff]
        %v6322 = vld [vmem:[%s6307 + $0x70] sm:$0xff]
        %v6323 = vld [vmem:[%s6307 + $0x78] sm:$0xff]
        %v6324 = vld [vmem:[%s6307 + $0x80] sm:$0xff]
        %v6325 = vld [vmem:[%s6307 + $0x88] sm:$0xff]
        %v6326 = vld [vmem:[%s6307 + $0x90] sm:$0xff]
        %v6327 = vld [vmem:[%s6307 + $0x98] sm:$0xff]
        %v6328 = vld [vmem:[%s6307 + $0xa0] sm:$0xff]
        %v6329 = vld [vmem:[%s6307 + $0xa8] sm:$0xff]
        %v6330 = vld [vmem:[%s6307 + $0xb0] sm:$0xff]
        %v6331 = vld [vmem:[%s6307 + $0xb8] sm:$0xff]
        %v6332 = vld [vmem:[%s6307 + $0xc0] sm:$0xff]
        %v6333 = vld [vmem:[%s6307 + $0xc8] sm:$0xff]
        %v6334 = vld [vmem:[%s6307 + $0xd0] sm:$0xff]
        %v6335 = vld [vmem:[%s6307 + $0xd8] sm:$0xff]
        %v6336 = vld [vmem:[%s6307 + $0xe0] sm:$0xff]
        %v6337 = vld [vmem:[%s6307 + $0xe8] sm:$0xff]
        %v6338 = vld [vmem:[%s6307 + $0xf0] sm:$0xff]
        %v6339 = vld [vmem:[%s6307 + $0xf8] sm:$0xff]
        %v6340 = vld [vmem:[%s6307 + $0x100] sm:$0xff]
        %v6341 = vld [vmem:[%s6307 + $0x108] sm:$0xff]
        %v6342 = vld [vmem:[%s6307 + $0x110] sm:$0xff]
        %v6343 = vld [vmem:[%s6307 + $0x118] sm:$0xff]
        %v6344 = vld [vmem:[%s6307 + $0x120] sm:$0xff]
        %v6345 = vld [vmem:[%s6307 + $0x128] sm:$0xff]
        %v6346 = vld [vmem:[%s6307 + $0x130] sm:$0xff]
        %v6347 = vld [vmem:[%s6307 + $0x138] sm:$0xff]
        %v6348 = vld [vmem:[%s6307 + $0x140] sm:$0xff]
        %v6349 = vld [vmem:[%s6307 + $0x148] sm:$0xff]
        %v6350 = vld [vmem:[%s6307 + $0x150] sm:$0xff]
        %v6351 = vld [vmem:[%s6307 + $0x158] sm:$0xff]
        %v6352 = vld [vmem:[%s6307 + $0x160] sm:$0xff]
        %v6353 = vld [vmem:[%s6307 + $0x168] sm:$0xff]
        %v6354 = vld [vmem:[%s6307 + $0x170] sm:$0xff]
        %v6355 = vld [vmem:[%s6307 + $0x178] sm:$0xff]
        %v6356 = vld [vmem:[%s6307 + $0x180] sm:$0xff]
        %v6357 = vld [vmem:[%s6307 + $0x188] sm:$0xff]
        %v6358 = vld [vmem:[%s6307 + $0x190] sm:$0xff]
        %v6359 = vld [vmem:[%s6307 + $0x198] sm:$0xff]
        %v6360 = vld [vmem:[%s6307 + $0x1a0] sm:$0xff]
        %v6361 = vld [vmem:[%s6307 + $0x1a8] sm:$0xff]
        %v6362 = vld [vmem:[%s6307 + $0x1b0] sm:$0xff]
        %v6363 = vld [vmem:[%s6307 + $0x1b8] sm:$0xff]
        %v6364 = vld [vmem:[%s6307 + $0x1c0] sm:$0xff]
        %v6365 = vld [vmem:[%s6307 + $0x1c8] sm:$0xff]
        %v6366 = vld [vmem:[%s6307 + $0x1d0] sm:$0xff]
        %v6367 = vld [vmem:[%s6307 + $0x1d8] sm:$0xff]
        %v6368 = vld [vmem:[%s6307 + $0x1e0] sm:$0xff]
        %v6369 = vld [vmem:[%s6307 + $0x1e8] sm:$0xff]
        %v6370 = vld [vmem:[%s6307 + $0x1f0] sm:$0xff]
        %v6371 = vld [vmem:[%s6307 + $0x1f8] sm:$0xff]
        %6372 = vmatprep.subr.mxu0 %v6309
        %6373 = vmatpush1.msra.mxu0 %v6308
        %6374 = vmatprep.subr.mxu0 %v6311
        %6375 = vmatpush1.msra.mxu0 %v6310
        %6376 = vmatprep.subr.mxu0 %v6313
        %6377 = vmatpush1.msra.mxu0 %v6312
        %6378 = vmatprep.subr.mxu0 %v6315
        %6379 = vmatpush1.msra.mxu0 %v6314
        %6380 = vmatprep.subr.mxu0 %v6317
        %6381 = vmatpush1.msra.mxu0 %v6316
        %6382 = vmatprep.subr.mxu0 %v6319
        %6383 = vmatpush1.msra.mxu0 %v6318
        %6384 = vmatprep.subr.mxu0 %v6321
        %6385 = vmatpush1.msra.mxu0 %v6320
        %6386 = vmatprep.subr.mxu0 %v6323
        %6387 = vmatpush1.msra.mxu0 %v6322
        %6388 = vmatprep.subr.mxu0 %v6325
        %6389 = vmatpush1.msra.mxu0 %v6324
        %6390 = vmatprep.subr.mxu0 %v6327
        %6391 = vmatpush1.msra.mxu0 %v6326
        %6392 = vmatprep.subr.mxu0 %v6329
        %6393 = vmatpush1.msra.mxu0 %v6328
        %6394 = vmatprep.subr.mxu0 %v6331
        %6395 = vmatpush1.msra.mxu0 %v6330
        %6396 = vmatprep.subr.mxu0 %v6333
        %6397 = vmatpush1.msra.mxu0 %v6332
        %6398 = vmatprep.subr.mxu0 %v6335
        %6399 = vmatpush1.msra.mxu0 %v6334
        %6400 = vmatprep.subr.mxu0 %v6337
        %6401 = vmatpush1.msra.mxu0 %v6336
        %6402 = vmatprep.subr.mxu0 %v6339
        %6403 = vmatpush1.msra.mxu0 %v6338
        %6404 = vmatprep.subr.mxu0 %v6341
        %6405 = vmatpush1.msra.mxu0 %v6340
        %6406 = vmatprep.subr.mxu0 %v6343
        %6407 = vmatpush1.msra.mxu0 %v6342
        %6408 = vmatprep.subr.mxu0 %v6345
        %6409 = vmatpush1.msra.mxu0 %v6344
        %6410 = vmatprep.subr.mxu0 %v6347
        %6411 = vmatpush1.msra.mxu0 %v6346
        %6412 = vmatprep.subr.mxu0 %v6349
        %6413 = vmatpush1.msra.mxu0 %v6348
        %6414 = vmatprep.subr.mxu0 %v6351
        %6415 = vmatpush1.msra.mxu0 %v6350
        %6416 = vmatprep.subr.mxu0 %v6353
        %6417 = vmatpush1.msra.mxu0 %v6352
        %6418 = vmatprep.subr.mxu0 %v6355
        %6419 = vmatpush1.msra.mxu0 %v6354
        %6420 = vmatprep.subr.mxu0 %v6357
        %6421 = vmatpush1.msra.mxu0 %v6356
        %6422 = vmatprep.subr.mxu0 %v6359
        %6423 = vmatpush1.msra.mxu0 %v6358
        %6424 = vmatprep.subr.mxu0 %v6361
        %6425 = vmatpush1.msra.mxu0 %v6360
        %6426 = vmatprep.subr.mxu0 %v6363
        %6427 = vmatpush1.msra.mxu0 %v6362
        %6428 = vmatprep.subr.mxu0 %v6365
        %6429 = vmatpush1.msra.mxu0 %v6364
        %6430 = vmatprep.subr.mxu0 %v6367
        %6431 = vmatpush1.msra.mxu0 %v6366
        %6432 = vmatprep.subr.mxu0 %v6369
        %6433 = vmatpush1.msra.mxu0 %v6368
        %6434 = vmatprep.subr.mxu0 %v6371
        %6435 = vmatpush1.msra.mxu0 %v6370
        %6436 = vmatprep.mubr.f32.mxu0 %v5848
        %6437 = vmatmul.mubr.f32.gmra.mrb[0].mxu0 %v5845
        %v6438 = vpop.f32.mrb[0].mxu0
        %v6439 = vadd.f32 0.0, %v6438
        %v6440 = vpop.f32.mrb[0].mxu0
        %v6441 = vadd.f32 0.0, %v6440
        %6442 = vmatprep.mubr.f32.mxu0 %v5854
        %6443 = vmatmul.mubr.f32.gmra.mrb[0].mxu0 %v5851
        %v6444 = vpop.f32.mrb[0].mxu0
        %v6445 = vadd.f32 0.0, %v6444
        %v6446 = vpop.f32.mrb[0].mxu0
        %v6447 = vadd.f32 0.0, %v6446
        %6448 = vmatprep.mubr.f32.mxu0 %v5860
        %6449 = vmatmul.mubr.f32.gmra.mrb[0].mxu0 %v5857
        %v6450 = vpop.f32.mrb[0].mxu0
        %v6451 = vadd.f32 0.0, %v6450
        %v6452 = vpop.f32.mrb[0].mxu0
        %v6453 = vadd.f32 0.0, %v6452
        %6454 = vmatprep.mubr.f32.mxu0 %v5866
        %6455 = vmatmul.mubr.f32.gmra.mrb[0].mxu0 %v5863
        %v6456 = vpop.f32.mrb[0].mxu0
        %v6457 = vadd.f32 0.0, %v6456
        %v6458 = vpop.f32.mrb[0].mxu0
        %v6459 = vadd.f32 0.0, %v6458
        %6460 = vmatprep.mubr.f32.mxu0 %v5872
        %6461 = vmatmul.mubr.f32.gmra.mrb[0].mxu0 %v5869
        %v6462 = vpop.f32.mrb[0].mxu0
        %v6463 = vadd.f32 0.0, %v6462
        %v6464 = vpop.f32.mrb[0].mxu0
        %v6465 = vadd.f32 0.0, %v6464
        %6466 = vmatprep.mubr.f32.mxu0 %v5878
        %6467 = vmatmul.mubr.f32.gmra.mrb[0].mxu0 %v5875
        %v6468 = vpop.f32.mrb[0].mxu0
        %v6469 = vadd.f32 0.0, %v6468
        %v6470 = vpop.f32.mrb[0].mxu0
        %v6471 = vadd.f32 0.0, %v6470
        %6472 = vmatprep.mubr.f32.mxu0 %v6098
        %6473 = vmatmul.mubr.f32.gmra.mrb[0].mxu0 %v6095
        %v6474 = vpop.f32.mrb[0].mxu0
        %v6475 = vadd.f32 0.0, %v6474
        %v6476 = vpop.f32.mrb[0].mxu0
        %v6477 = vadd.f32 0.0, %v6476
        %6478 = vmatprep.mubr.f32.mxu0 %v6304
        %6479 = vmatmul.mubr.f32.gmra.mrb[0].mxu0 %v6301
        %v6480 = vpop.f32.mrb[0].mxu0
        %v6481 = vadd.f32 0.0, %v6480
        %v6482 = vpop.f32.mrb[0].mxu0
        %v6483 = vadd.f32 0.0, %v6482
        %6484 = vdwg.mxu0
        %v6485 = vadd.f32 %v6279, %v6439
        %v6486 = vadd.f32 %v6280, %v6441
        %v6487 = vadd.f32 %v6281, %v6445
        %v6488 = vadd.f32 %v6282, %v6447
        %v6489 = vadd.f32 %v6283, %v6451
        %v6490 = vadd.f32 %v6284, %v6453
        %v6491 = vadd.f32 %v6285, %v6457
        %v6492 = vadd.f32 %v6286, %v6459
        %v6493 = vadd.f32 %v6287, %v6463
        %v6494 = vadd.f32 %v6288, %v6465
        %v6495 = vadd.f32 %v6289, %v6469
        %v6496 = vadd.f32 %v6290, %v6471
        %v6497 = vadd.f32 %v6291, %v6475
        %v6498 = vadd.f32 %v6292, %v6477
        %v6499 = vadd.f32 %v6293, %v6481
        %v6500 = vadd.f32 %v6294, %v6483
        %v6501 = vld [vmem:[#allocation3] sm:$0xfc]
        %v6502 = vld [vmem:[#allocation3 + $0x8] sm:$0xfc]
        %v6503 = vld [vmem:[#allocation3 + $0x10] sm:$0x3]
        %v6504 = vld [vmem:[#allocation3 + $0x18] sm:$0x3]
        %v6505 = vld [vmem:[#allocation3 + $0x20] sm:$0xfc]
        %v6506 = vld [vmem:[#allocation3 + $0x28] sm:$0xfc]
        %v6507 = vld [vmem:[#allocation3 + $0x30] sm:$0x3]
        %v6508 = vld [vmem:[#allocation3 + $0x38] sm:$0x3]
        %v6509 = vld [vmem:[#allocation3 + $0x40] sm:$0xfc]
        %v6510 = vld [vmem:[#allocation3 + $0x48] sm:$0xfc]
        %v6511 = vld [vmem:[#allocation3 + $0x50] sm:$0x3]
        %v6512 = vld [vmem:[#allocation3 + $0x58] sm:$0x3]
        %v6513 = vld [vmem:[#allocation3 + $0x60] sm:$0xfc]
        %v6514 = vld [vmem:[#allocation3 + $0x68] sm:$0xfc]
        %v6515 = vld [vmem:[#allocation3 + $0x70] sm:$0x3]
        %v6516 = vld [vmem:[#allocation3 + $0x78] sm:$0x3]
        %v6517 = vld [vmem:[#allocation3 + $0x80] sm:$0xfc]
        %v6518 = vld [vmem:[#allocation3 + $0x88] sm:$0xfc]
        %v6519 = vld [vmem:[#allocation3 + $0x90] sm:$0x3]
        %v6520 = vld [vmem:[#allocation3 + $0x98] sm:$0x3]
        %v6521 = vld [vmem:[#allocation3 + $0xa0] sm:$0xfc]
        %v6522 = vld [vmem:[#allocation3 + $0xa8] sm:$0xfc]
        %v6523 = vld [vmem:[#allocation3 + $0xb0] sm:$0x3]
        %v6524 = vld [vmem:[#allocation3 + $0xb8] sm:$0x3]
        %v6525 = vld [vmem:[#allocation3 + $0xc0] sm:$0xfc]
        %v6526 = vld [vmem:[#allocation3 + $0xc8] sm:$0xfc]
        %v6527 = vld [vmem:[#allocation3 + $0xd0] sm:$0x3]
        %v6528 = vld [vmem:[#allocation3 + $0xd8] sm:$0x3]
        %v6529 = vld [vmem:[#allocation3 + $0xe0] sm:$0xfc]
        %v6530 = vld [vmem:[#allocation3 + $0xe8] sm:$0xfc]
        %v6531 = vld [vmem:[#allocation3 + $0xf0] sm:$0x3]
        %v6532 = vld [vmem:[#allocation3 + $0xf8] sm:$0x3]
        %v6533 = vld [vmem:[#allocation3 + $0x100] sm:$0xfc]
        %v6534 = vld [vmem:[#allocation3 + $0x108] sm:$0xfc]
        %v6535 = vld [vmem:[#allocation3 + $0x110] sm:$0x3]
        %v6536 = vld [vmem:[#allocation3 + $0x118] sm:$0x3]
        %v6537 = vld [vmem:[#allocation3 + $0x120] sm:$0xfc]
        %v6538 = vld [vmem:[#allocation3 + $0x128] sm:$0xfc]
        %v6539 = vld [vmem:[#allocation3 + $0x130] sm:$0x3]
        %v6540 = vld [vmem:[#allocation3 + $0x138] sm:$0x3]
        %v6573 = vrot.slane %v6501, 2
        %v6574 = vrot.slane %v6503, 2
        %v6575 = vsel %vm3759, %v6573, %v6574
        %v6576 = vrot.slane %v6502, 2
        %v6577 = vrot.slane %v6504, 2
        %v6578 = vsel %vm3759, %v6576, %v6577
        %v6579 = vrot.slane %v6505, 2
        %v6580 = vrot.slane %v6507, 2
        %v6581 = vsel %vm3759, %v6579, %v6580
        %v6582 = vrot.slane %v6506, 2
        %v6583 = vrot.slane %v6508, 2
        %v6584 = vsel %vm3759, %v6582, %v6583
        %v6585 = vrot.slane %v6509, 2
        %v6586 = vrot.slane %v6511, 2
        %v6587 = vsel %vm3759, %v6585, %v6586
        %v6588 = vrot.slane %v6510, 2
        %v6589 = vrot.slane %v6512, 2
        %v6590 = vsel %vm3759, %v6588, %v6589
        %v6591 = vrot.slane %v6513, 2
        %v6592 = vrot.slane %v6515, 2
        %v6593 = vsel %vm3759, %v6591, %v6592
        %v6594 = vrot.slane %v6514, 2
        %v6595 = vrot.slane %v6516, 2
        %v6596 = vsel %vm3759, %v6594, %v6595
        %v6597 = vrot.slane %v6517, 2
        %v6598 = vrot.slane %v6519, 2
        %v6599 = vsel %vm3759, %v6597, %v6598
        %v6600 = vrot.slane %v6518, 2
        %v6601 = vrot.slane %v6520, 2
        %v6602 = vsel %vm3759, %v6600, %v6601
        %v6603 = vrot.slane %v6521, 2
        %v6604 = vrot.slane %v6523, 2
        %v6605 = vsel %vm3759, %v6603, %v6604
        %v6606 = vrot.slane %v6522, 2
        %v6607 = vrot.slane %v6524, 2
        %v6608 = vsel %vm3759, %v6606, %v6607
        %v6609 = vrot.slane %v6525, 2
        %v6610 = vrot.slane %v6527, 2
        %v6611 = vsel %vm3759, %v6609, %v6610
        %v6612 = vrot.slane %v6526, 2
        %v6613 = vrot.slane %v6528, 2
        %v6614 = vsel %vm3759, %v6612, %v6613
        %v6615 = vrot.slane %v6529, 2
        %v6616 = vrot.slane %v6531, 2
        %v6617 = vsel %vm3759, %v6615, %v6616
        %v6618 = vrot.slane %v6530, 2
        %v6619 = vrot.slane %v6532, 2
        %v6620 = vsel %vm3759, %v6618, %v6619
        %s6637 = scalar_lea.vmem [#allocation13], 1024
        %v6638 = vld [vmem:[%s6637] sm:$0xff]
        %v6639 = vld [vmem:[%s6637 + $0x8] sm:$0xff]
        %v6640 = vld [vmem:[%s6637 + $0x10] sm:$0xff]
        %v6641 = vld [vmem:[%s6637 + $0x18] sm:$0xff]
        %v6642 = vld [vmem:[%s6637 + $0x20] sm:$0xff]
        %v6643 = vld [vmem:[%s6637 + $0x28] sm:$0xff]
        %v6644 = vld [vmem:[%s6637 + $0x30] sm:$0xff]
        %v6645 = vld [vmem:[%s6637 + $0x38] sm:$0xff]
        %v6646 = vld [vmem:[%s6637 + $0x40] sm:$0xff]
        %v6647 = vld [vmem:[%s6637 + $0x48] sm:$0xff]
        %v6648 = vld [vmem:[%s6637 + $0x50] sm:$0xff]
        %v6649 = vld [vmem:[%s6637 + $0x58] sm:$0xff]
        %v6650 = vld [vmem:[%s6637 + $0x60] sm:$0xff]
        %v6651 = vld [vmem:[%s6637 + $0x68] sm:$0xff]
        %v6652 = vld [vmem:[%s6637 + $0x70] sm:$0xff]
        %v6653 = vld [vmem:[%s6637 + $0x78] sm:$0xff]
        %v6654 = vld [vmem:[%s6637 + $0x80] sm:$0xff]
        %v6655 = vld [vmem:[%s6637 + $0x88] sm:$0xff]
        %v6656 = vld [vmem:[%s6637 + $0x90] sm:$0xff]
        %v6657 = vld [vmem:[%s6637 + $0x98] sm:$0xff]
        %v6658 = vld [vmem:[%s6637 + $0xa0] sm:$0xff]
        %v6659 = vld [vmem:[%s6637 + $0xa8] sm:$0xff]
        %v6660 = vld [vmem:[%s6637 + $0xb0] sm:$0xff]
        %v6661 = vld [vmem:[%s6637 + $0xb8] sm:$0xff]
        %v6662 = vld [vmem:[%s6637 + $0xc0] sm:$0xff]
        %v6663 = vld [vmem:[%s6637 + $0xc8] sm:$0xff]
        %v6664 = vld [vmem:[%s6637 + $0xd0] sm:$0xff]
        %v6665 = vld [vmem:[%s6637 + $0xd8] sm:$0xff]
        %v6666 = vld [vmem:[%s6637 + $0xe0] sm:$0xff]
        %v6667 = vld [vmem:[%s6637 + $0xe8] sm:$0xff]
        %v6668 = vld [vmem:[%s6637 + $0xf0] sm:$0xff]
        %v6669 = vld [vmem:[%s6637 + $0xf8] sm:$0xff]
        %v6670 = vld [vmem:[%s6637 + $0x100] sm:$0xff]
        %v6671 = vld [vmem:[%s6637 + $0x108] sm:$0xff]
        %v6672 = vld [vmem:[%s6637 + $0x110] sm:$0xff]
        %v6673 = vld [vmem:[%s6637 + $0x118] sm:$0xff]
        %v6674 = vld [vmem:[%s6637 + $0x120] sm:$0xff]
        %v6675 = vld [vmem:[%s6637 + $0x128] sm:$0xff]
        %v6676 = vld [vmem:[%s6637 + $0x130] sm:$0xff]
        %v6677 = vld [vmem:[%s6637 + $0x138] sm:$0xff]
        %v6678 = vld [vmem:[%s6637 + $0x140] sm:$0xff]
        %v6679 = vld [vmem:[%s6637 + $0x148] sm:$0xff]
        %v6680 = vld [vmem:[%s6637 + $0x150] sm:$0xff]
        %v6681 = vld [vmem:[%s6637 + $0x158] sm:$0xff]
        %v6682 = vld [vmem:[%s6637 + $0x160] sm:$0xff]
        %v6683 = vld [vmem:[%s6637 + $0x168] sm:$0xff]
        %v6684 = vld [vmem:[%s6637 + $0x170] sm:$0xff]
        %v6685 = vld [vmem:[%s6637 + $0x178] sm:$0xff]
        %v6686 = vld [vmem:[%s6637 + $0x180] sm:$0xff]
        %v6687 = vld [vmem:[%s6637 + $0x188] sm:$0xff]
        %v6688 = vld [vmem:[%s6637 + $0x190] sm:$0xff]
        %v6689 = vld [vmem:[%s6637 + $0x198] sm:$0xff]
        %v6690 = vld [vmem:[%s6637 + $0x1a0] sm:$0xff]
        %v6691 = vld [vmem:[%s6637 + $0x1a8] sm:$0xff]
        %v6692 = vld [vmem:[%s6637 + $0x1b0] sm:$0xff]
        %v6693 = vld [vmem:[%s6637 + $0x1b8] sm:$0xff]
        %v6694 = vld [vmem:[%s6637 + $0x1c0] sm:$0xff]
        %v6695 = vld [vmem:[%s6637 + $0x1c8] sm:$0xff]
        %v6696 = vld [vmem:[%s6637 + $0x1d0] sm:$0xff]
        %v6697 = vld [vmem:[%s6637 + $0x1d8] sm:$0xff]
        %v6698 = vld [vmem:[%s6637 + $0x1e0] sm:$0xff]
        %v6699 = vld [vmem:[%s6637 + $0x1e8] sm:$0xff]
        %v6700 = vld [vmem:[%s6637 + $0x1f0] sm:$0xff]
        %v6701 = vld [vmem:[%s6637 + $0x1f8] sm:$0xff]
        %6702 = vmatprep.subr.mxu0 %v6639
        %6703 = vmatpush1.msra.mxu0 %v6638
        %6704 = vmatprep.subr.mxu0 %v6641
        %6705 = vmatpush1.msra.mxu0 %v6640
        %6706 = vmatprep.subr.mxu0 %v6643
        %6707 = vmatpush1.msra.mxu0 %v6642
        %6708 = vmatprep.subr.mxu0 %v6645
        %6709 = vmatpush1.msra.mxu0 %v6644
        %6710 = vmatprep.subr.mxu0 %v6647
        %6711 = vmatpush1.msra.mxu0 %v6646
        %6712 = vmatprep.subr.mxu0 %v6649
        %6713 = vmatpush1.msra.mxu0 %v6648
        %6714 = vmatprep.subr.mxu0 %v6651
        %6715 = vmatpush1.msra.mxu0 %v6650
        %6716 = vmatprep.subr.mxu0 %v6653
        %6717 = vmatpush1.msra.mxu0 %v6652
        %6718 = vmatprep.subr.mxu0 %v6655
        %6719 = vmatpush1.msra.mxu0 %v6654
        %6720 = vmatprep.subr.mxu0 %v6657
        %6721 = vmatpush1.msra.mxu0 %v6656
        %6722 = vmatprep.subr.mxu0 %v6659
        %6723 = vmatpush1.msra.mxu0 %v6658
        %6724 = vmatprep.subr.mxu0 %v6661
        %6725 = vmatpush1.msra.mxu0 %v6660
        %6726 = vmatprep.subr.mxu0 %v6663
        %6727 = vmatpush1.msra.mxu0 %v6662
        %6728 = vmatprep.subr.mxu0 %v6665
        %6729 = vmatpush1.msra.mxu0 %v6664
        %6730 = vmatprep.subr.mxu0 %v6667
        %6731 = vmatpush1.msra.mxu0 %v6666
        %6732 = vmatprep.subr.mxu0 %v6669
        %6733 = vmatpush1.msra.mxu0 %v6668
        %6734 = vmatprep.subr.mxu0 %v6671
        %6735 = vmatpush1.msra.mxu0 %v6670
        %6736 = vmatprep.subr.mxu0 %v6673
        %6737 = vmatpush1.msra.mxu0 %v6672
        %6738 = vmatprep.subr.mxu0 %v6675
        %6739 = vmatpush1.msra.mxu0 %v6674
        %6740 = vmatprep.subr.mxu0 %v6677
        %6741 = vmatpush1.msra.mxu0 %v6676
        %6742 = vmatprep.subr.mxu0 %v6679
        %6743 = vmatpush1.msra.mxu0 %v6678
        %6744 = vmatprep.subr.mxu0 %v6681
        %6745 = vmatpush1.msra.mxu0 %v6680
        %6746 = vmatprep.subr.mxu0 %v6683
        %6747 = vmatpush1.msra.mxu0 %v6682
        %6748 = vmatprep.subr.mxu0 %v6685
        %6749 = vmatpush1.msra.mxu0 %v6684
        %6750 = vmatprep.subr.mxu0 %v6687
        %6751 = vmatpush1.msra.mxu0 %v6686
        %6752 = vmatprep.subr.mxu0 %v6689
        %6753 = vmatpush1.msra.mxu0 %v6688
        %6754 = vmatprep.subr.mxu0 %v6691
        %6755 = vmatpush1.msra.mxu0 %v6690
        %6756 = vmatprep.subr.mxu0 %v6693
        %6757 = vmatpush1.msra.mxu0 %v6692
        %6758 = vmatprep.subr.mxu0 %v6695
        %6759 = vmatpush1.msra.mxu0 %v6694
        %6760 = vmatprep.subr.mxu0 %v6697
        %6761 = vmatpush1.msra.mxu0 %v6696
        %6762 = vmatprep.subr.mxu0 %v6699
        %6763 = vmatpush1.msra.mxu0 %v6698
        %6764 = vmatprep.subr.mxu0 %v6701
        %6765 = vmatpush1.msra.mxu0 %v6700
        %6766 = vmatprep.mubr.f32.mxu0 %v6578
        %6767 = vmatmul.mubr.f32.gmra.mrb[0].mxu0 %v6575
        %v6768 = vpop.f32.mrb[0].mxu0
        %v6769 = vadd.f32 0.0, %v6768
        %v6770 = vpop.f32.mrb[0].mxu0
        %v6771 = vadd.f32 0.0, %v6770
        %6772 = vmatprep.mubr.f32.mxu0 %v6584
        %6773 = vmatmul.mubr.f32.gmra.mrb[0].mxu0 %v6581
        %v6774 = vpop.f32.mrb[0].mxu0
        %v6775 = vadd.f32 0.0, %v6774
        %v6776 = vpop.f32.mrb[0].mxu0
        %v6777 = vadd.f32 0.0, %v6776
        %6778 = vmatprep.mubr.f32.mxu0 %v6590
        %6779 = vmatmul.mubr.f32.gmra.mrb[0].mxu0 %v6587
        %v6780 = vpop.f32.mrb[0].mxu0
        %v6781 = vadd.f32 0.0, %v6780
        %v6782 = vpop.f32.mrb[0].mxu0
        %v6783 = vadd.f32 0.0, %v6782
        %6784 = vmatprep.mubr.f32.mxu0 %v6596
        %6785 = vmatmul.mubr.f32.gmra.mrb[0].mxu0 %v6593
        %v6786 = vpop.f32.mrb[0].mxu0
        %v6787 = vadd.f32 0.0, %v6786
        %v6788 = vpop.f32.mrb[0].mxu0
        %v6789 = vadd.f32 0.0, %v6788
        %6790 = vmatprep.mubr.f32.mxu0 %v6602
        %6791 = vmatmul.mubr.f32.gmra.mrb[0].mxu0 %v6599
        %v6792 = vpop.f32.mrb[0].mxu0
        %v6793 = vadd.f32 0.0, %v6792
        %v6794 = vpop.f32.mrb[0].mxu0
        %v6795 = vadd.f32 0.0, %v6794
        %6796 = vmatprep.mubr.f32.mxu0 %v6608
        %6797 = vmatmul.mubr.f32.gmra.mrb[0].mxu0 %v6605
        %v6798 = vpop.f32.mrb[0].mxu0
        %v6799 = vadd.f32 0.0, %v6798
        %v6800 = vpop.f32.mrb[0].mxu0
        %v6801 = vadd.f32 0.0, %v6800
        %6802 = vmatprep.mubr.f32.mxu0 %v6614
        %6803 = vmatmul.mubr.f32.gmra.mrb[0].mxu0 %v6611
        %v6804 = vpop.f32.mrb[0].mxu0
        %v6805 = vadd.f32 0.0, %v6804
        %v6806 = vpop.f32.mrb[0].mxu0
        %v6807 = vadd.f32 0.0, %v6806
        %6808 = vmatprep.mubr.f32.mxu0 %v6620
        %6809 = vmatmul.mubr.f32.gmra.mrb[0].mxu0 %v6617
        %v6810 = vpop.f32.mrb[0].mxu0
        %v6811 = vadd.f32 0.0, %v6810
        %v6812 = vpop.f32.mrb[0].mxu0
        %v6813 = vadd.f32 0.0, %v6812
        %6814 = vdwg.mxu0
        %v6815 = vadd.f32 %v6485, %v6769
        %v6816 = vadd.f32 %v6486, %v6771
        %v6817 = vadd.f32 %v6487, %v6775
        %v6818 = vadd.f32 %v6488, %v6777
        %v6819 = vadd.f32 %v6489, %v6781
        %v6820 = vadd.f32 %v6490, %v6783
        %v6821 = vadd.f32 %v6491, %v6787
        %v6822 = vadd.f32 %v6492, %v6789
        %v6823 = vadd.f32 %v6493, %v6793
        %v6824 = vadd.f32 %v6494, %v6795
        %v6825 = vadd.f32 %v6495, %v6799
        %v6826 = vadd.f32 %v6496, %v6801
        %v6827 = vadd.f32 %v6497, %v6805
        %v6828 = vadd.f32 %v6498, %v6807
        %v6829 = vadd.f32 %v6499, %v6811
        %v6830 = vadd.f32 %v6500, %v6813
        %v6835 = vrot.slane %v6533, 2
        %v6836 = vrot.slane %v6535, 2
        %v6837 = vsel %vm3759, %v6835, %v6836
        %v6838 = vrot.slane %v6534, 2
        %v6839 = vrot.slane %v6536, 2
        %v6840 = vsel %vm3759, %v6838, %v6839
        %s6843 = scalar_lea.vmem [#allocation13], 2560
        %v6844 = vld [vmem:[%s6843] sm:$0xff]
        %v6845 = vld [vmem:[%s6843 + $0x8] sm:$0xff]
        %v6846 = vld [vmem:[%s6843 + $0x10] sm:$0xff]
        %v6847 = vld [vmem:[%s6843 + $0x18] sm:$0xff]
        %v6848 = vld [vmem:[%s6843 + $0x20] sm:$0xff]
        %v6849 = vld [vmem:[%s6843 + $0x28] sm:$0xff]
        %v6850 = vld [vmem:[%s6843 + $0x30] sm:$0xff]
        %v6851 = vld [vmem:[%s6843 + $0x38] sm:$0xff]
        %v6852 = vld [vmem:[%s6843 + $0x40] sm:$0xff]
        %v6853 = vld [vmem:[%s6843 + $0x48] sm:$0xff]
        %v6854 = vld [vmem:[%s6843 + $0x50] sm:$0xff]
        %v6855 = vld [vmem:[%s6843 + $0x58] sm:$0xff]
        %v6856 = vld [vmem:[%s6843 + $0x60] sm:$0xff]
        %v6857 = vld [vmem:[%s6843 + $0x68] sm:$0xff]
        %v6858 = vld [vmem:[%s6843 + $0x70] sm:$0xff]
        %v6859 = vld [vmem:[%s6843 + $0x78] sm:$0xff]
        %v6860 = vld [vmem:[%s6843 + $0x80] sm:$0xff]
        %v6861 = vld [vmem:[%s6843 + $0x88] sm:$0xff]
        %v6862 = vld [vmem:[%s6843 + $0x90] sm:$0xff]
        %v6863 = vld [vmem:[%s6843 + $0x98] sm:$0xff]
        %v6864 = vld [vmem:[%s6843 + $0xa0] sm:$0xff]
        %v6865 = vld [vmem:[%s6843 + $0xa8] sm:$0xff]
        %v6866 = vld [vmem:[%s6843 + $0xb0] sm:$0xff]
        %v6867 = vld [vmem:[%s6843 + $0xb8] sm:$0xff]
        %v6868 = vld [vmem:[%s6843 + $0xc0] sm:$0xff]
        %v6869 = vld [vmem:[%s6843 + $0xc8] sm:$0xff]
        %v6870 = vld [vmem:[%s6843 + $0xd0] sm:$0xff]
        %v6871 = vld [vmem:[%s6843 + $0xd8] sm:$0xff]
        %v6872 = vld [vmem:[%s6843 + $0xe0] sm:$0xff]
        %v6873 = vld [vmem:[%s6843 + $0xe8] sm:$0xff]
        %v6874 = vld [vmem:[%s6843 + $0xf0] sm:$0xff]
        %v6875 = vld [vmem:[%s6843 + $0xf8] sm:$0xff]
        %v6876 = vld [vmem:[%s6843 + $0x100] sm:$0xff]
        %v6877 = vld [vmem:[%s6843 + $0x108] sm:$0xff]
        %v6878 = vld [vmem:[%s6843 + $0x110] sm:$0xff]
        %v6879 = vld [vmem:[%s6843 + $0x118] sm:$0xff]
        %v6880 = vld [vmem:[%s6843 + $0x120] sm:$0xff]
        %v6881 = vld [vmem:[%s6843 + $0x128] sm:$0xff]
        %v6882 = vld [vmem:[%s6843 + $0x130] sm:$0xff]
        %v6883 = vld [vmem:[%s6843 + $0x138] sm:$0xff]
        %v6884 = vld [vmem:[%s6843 + $0x140] sm:$0xff]
        %v6885 = vld [vmem:[%s6843 + $0x148] sm:$0xff]
        %v6886 = vld [vmem:[%s6843 + $0x150] sm:$0xff]
        %v6887 = vld [vmem:[%s6843 + $0x158] sm:$0xff]
        %v6888 = vld [vmem:[%s6843 + $0x160] sm:$0xff]
        %v6889 = vld [vmem:[%s6843 + $0x168] sm:$0xff]
        %v6890 = vld [vmem:[%s6843 + $0x170] sm:$0xff]
        %v6891 = vld [vmem:[%s6843 + $0x178] sm:$0xff]
        %v6892 = vld [vmem:[%s6843 + $0x180] sm:$0xff]
        %v6893 = vld [vmem:[%s6843 + $0x188] sm:$0xff]
        %v6894 = vld [vmem:[%s6843 + $0x190] sm:$0xff]
        %v6895 = vld [vmem:[%s6843 + $0x198] sm:$0xff]
        %v6896 = vld [vmem:[%s6843 + $0x1a0] sm:$0xff]
        %v6897 = vld [vmem:[%s6843 + $0x1a8] sm:$0xff]
        %v6898 = vld [vmem:[%s6843 + $0x1b0] sm:$0xff]
        %v6899 = vld [vmem:[%s6843 + $0x1b8] sm:$0xff]
        %v6900 = vld [vmem:[%s6843 + $0x1c0] sm:$0xff]
        %v6901 = vld [vmem:[%s6843 + $0x1c8] sm:$0xff]
        %v6902 = vld [vmem:[%s6843 + $0x1d0] sm:$0xff]
        %v6903 = vld [vmem:[%s6843 + $0x1d8] sm:$0xff]
        %v6904 = vld [vmem:[%s6843 + $0x1e0] sm:$0xff]
        %v6905 = vld [vmem:[%s6843 + $0x1e8] sm:$0xff]
        %v6906 = vld [vmem:[%s6843 + $0x1f0] sm:$0xff]
        %v6907 = vld [vmem:[%s6843 + $0x1f8] sm:$0xff]
        %6908 = vmatprep.subr.mxu0 %v6845
        %6909 = vmatpush1.msra.mxu0 %v6844
        %6910 = vmatprep.subr.mxu0 %v6847
        %6911 = vmatpush1.msra.mxu0 %v6846
        %6912 = vmatprep.subr.mxu0 %v6849
        %6913 = vmatpush1.msra.mxu0 %v6848
        %6914 = vmatprep.subr.mxu0 %v6851
        %6915 = vmatpush1.msra.mxu0 %v6850
        %6916 = vmatprep.subr.mxu0 %v6853
        %6917 = vmatpush1.msra.mxu0 %v6852
        %6918 = vmatprep.subr.mxu0 %v6855
        %6919 = vmatpush1.msra.mxu0 %v6854
        %6920 = vmatprep.subr.mxu0 %v6857
        %6921 = vmatpush1.msra.mxu0 %v6856
        %6922 = vmatprep.subr.mxu0 %v6859
        %6923 = vmatpush1.msra.mxu0 %v6858
        %6924 = vmatprep.subr.mxu0 %v6861
        %6925 = vmatpush1.msra.mxu0 %v6860
        %6926 = vmatprep.subr.mxu0 %v6863
        %6927 = vmatpush1.msra.mxu0 %v6862
        %6928 = vmatprep.subr.mxu0 %v6865
        %6929 = vmatpush1.msra.mxu0 %v6864
        %6930 = vmatprep.subr.mxu0 %v6867
        %6931 = vmatpush1.msra.mxu0 %v6866
        %6932 = vmatprep.subr.mxu0 %v6869
        %6933 = vmatpush1.msra.mxu0 %v6868
        %6934 = vmatprep.subr.mxu0 %v6871
        %6935 = vmatpush1.msra.mxu0 %v6870
        %6936 = vmatprep.subr.mxu0 %v6873
        %6937 = vmatpush1.msra.mxu0 %v6872
        %6938 = vmatprep.subr.mxu0 %v6875
        %6939 = vmatpush1.msra.mxu0 %v6874
        %6940 = vmatprep.subr.mxu0 %v6877
        %6941 = vmatpush1.msra.mxu0 %v6876
        %6942 = vmatprep.subr.mxu0 %v6879
        %6943 = vmatpush1.msra.mxu0 %v6878
        %6944 = vmatprep.subr.mxu0 %v6881
        %6945 = vmatpush1.msra.mxu0 %v6880
        %6946 = vmatprep.subr.mxu0 %v6883
        %6947 = vmatpush1.msra.mxu0 %v6882
        %6948 = vmatprep.subr.mxu0 %v6885
        %6949 = vmatpush1.msra.mxu0 %v6884
        %6950 = vmatprep.subr.mxu0 %v6887
        %6951 = vmatpush1.msra.mxu0 %v6886
        %6952 = vmatprep.subr.mxu0 %v6889
        %6953 = vmatpush1.msra.mxu0 %v6888
        %6954 = vmatprep.subr.mxu0 %v6891
        %6955 = vmatpush1.msra.mxu0 %v6890
        %6956 = vmatprep.subr.mxu0 %v6893
        %6957 = vmatpush1.msra.mxu0 %v6892
        %6958 = vmatprep.subr.mxu0 %v6895
        %6959 = vmatpush1.msra.mxu0 %v6894
        %6960 = vmatprep.subr.mxu0 %v6897
        %6961 = vmatpush1.msra.mxu0 %v6896
        %6962 = vmatprep.subr.mxu0 %v6899
        %6963 = vmatpush1.msra.mxu0 %v6898
        %6964 = vmatprep.subr.mxu0 %v6901
        %6965 = vmatpush1.msra.mxu0 %v6900
        %6966 = vmatprep.subr.mxu0 %v6903
        %6967 = vmatpush1.msra.mxu0 %v6902
        %6968 = vmatprep.subr.mxu0 %v6905
        %6969 = vmatpush1.msra.mxu0 %v6904
        %6970 = vmatprep.subr.mxu0 %v6907
        %6971 = vmatpush1.msra.mxu0 %v6906
        %6972 = vmatprep.mubr.f32.mxu0 %v6584
        %6973 = vmatmul.mubr.f32.gmra.mrb[0].mxu0 %v6581
        %v6974 = vpop.f32.mrb[0].mxu0
        %v6975 = vadd.f32 0.0, %v6974
        %v6976 = vpop.f32.mrb[0].mxu0
        %v6977 = vadd.f32 0.0, %v6976
        %6978 = vmatprep.mubr.f32.mxu0 %v6590
        %6979 = vmatmul.mubr.f32.gmra.mrb[0].mxu0 %v6587
        %v6980 = vpop.f32.mrb[0].mxu0
        %v6981 = vadd.f32 0.0, %v6980
        %v6982 = vpop.f32.mrb[0].mxu0
        %v6983 = vadd.f32 0.0, %v6982
        %6984 = vmatprep.mubr.f32.mxu0 %v6596
        %6985 = vmatmul.mubr.f32.gmra.mrb[0].mxu0 %v6593
        %v6986 = vpop.f32.mrb[0].mxu0
        %v6987 = vadd.f32 0.0, %v6986
        %v6988 = vpop.f32.mrb[0].mxu0
        %v6989 = vadd.f32 0.0, %v6988
        %6990 = vmatprep.mubr.f32.mxu0 %v6602
        %6991 = vmatmul.mubr.f32.gmra.mrb[0].mxu0 %v6599
        %v6992 = vpop.f32.mrb[0].mxu0
        %v6993 = vadd.f32 0.0, %v6992
        %v6994 = vpop.f32.mrb[0].mxu0
        %v6995 = vadd.f32 0.0, %v6994
        %6996 = vmatprep.mubr.f32.mxu0 %v6608
        %6997 = vmatmul.mubr.f32.gmra.mrb[0].mxu0 %v6605
        %v6998 = vpop.f32.mrb[0].mxu0
        %v6999 = vadd.f32 0.0, %v6998
        %v7000 = vpop.f32.mrb[0].mxu0
        %v7001 = vadd.f32 0.0, %v7000
        %7002 = vmatprep.mubr.f32.mxu0 %v6614
        %7003 = vmatmul.mubr.f32.gmra.mrb[0].mxu0 %v6611
        %v7004 = vpop.f32.mrb[0].mxu0
        %v7005 = vadd.f32 0.0, %v7004
        %v7006 = vpop.f32.mrb[0].mxu0
        %v7007 = vadd.f32 0.0, %v7006
        %7008 = vmatprep.mubr.f32.mxu0 %v6620
        %7009 = vmatmul.mubr.f32.gmra.mrb[0].mxu0 %v6617
        %v7010 = vpop.f32.mrb[0].mxu0
        %v7011 = vadd.f32 0.0, %v7010
        %v7012 = vpop.f32.mrb[0].mxu0
        %v7013 = vadd.f32 0.0, %v7012
        %7014 = vmatprep.mubr.f32.mxu0 %v6840
        %7015 = vmatmul.mubr.f32.gmra.mrb[0].mxu0 %v6837
        %v7016 = vpop.f32.mrb[0].mxu0
        %v7017 = vadd.f32 0.0, %v7016
        %v7018 = vpop.f32.mrb[0].mxu0
        %v7019 = vadd.f32 0.0, %v7018
        %7020 = vdwg.mxu0
        %v7021 = vadd.f32 %v6815, %v6975
        %v7022 = vadd.f32 %v6816, %v6977
        %v7023 = vadd.f32 %v6817, %v6981
        %v7024 = vadd.f32 %v6818, %v6983
        %v7025 = vadd.f32 %v6819, %v6987
        %v7026 = vadd.f32 %v6820, %v6989
        %v7027 = vadd.f32 %v6821, %v6993
        %v7028 = vadd.f32 %v6822, %v6995
        %v7029 = vadd.f32 %v6823, %v6999
        %v7030 = vadd.f32 %v6824, %v7001
        %v7031 = vadd.f32 %v6825, %v7005
        %v7032 = vadd.f32 %v6826, %v7007
        %v7033 = vadd.f32 %v6827, %v7011
        %v7034 = vadd.f32 %v6828, %v7013
        %v7035 = vadd.f32 %v6829, %v7017
        %v7036 = vadd.f32 %v6830, %v7019
        %v7041 = vrot.slane %v6537, 2
        %v7042 = vrot.slane %v6539, 2
        %v7043 = vsel %vm3759, %v7041, %v7042
        %v7044 = vrot.slane %v6538, 2
        %v7045 = vrot.slane %v6540, 2
        %v7046 = vsel %vm3759, %v7044, %v7045
        %s7049 = scalar_lea.vmem [#allocation13], 4096
        %v7050 = vld [vmem:[%s7049] sm:$0xff]
        %v7051 = vld [vmem:[%s7049 + $0x8] sm:$0xff]
        %v7052 = vld [vmem:[%s7049 + $0x10] sm:$0xff]
        %v7053 = vld [vmem:[%s7049 + $0x18] sm:$0xff]
        %v7054 = vld [vmem:[%s7049 + $0x20] sm:$0xff]
        %v7055 = vld [vmem:[%s7049 + $0x28] sm:$0xff]
        %v7056 = vld [vmem:[%s7049 + $0x30] sm:$0xff]
        %v7057 = vld [vmem:[%s7049 + $0x38] sm:$0xff]
        %v7058 = vld [vmem:[%s7049 + $0x40] sm:$0xff]
        %v7059 = vld [vmem:[%s7049 + $0x48] sm:$0xff]
        %v7060 = vld [vmem:[%s7049 + $0x50] sm:$0xff]
        %v7061 = vld [vmem:[%s7049 + $0x58] sm:$0xff]
        %v7062 = vld [vmem:[%s7049 + $0x60] sm:$0xff]
        %v7063 = vld [vmem:[%s7049 + $0x68] sm:$0xff]
        %v7064 = vld [vmem:[%s7049 + $0x70] sm:$0xff]
        %v7065 = vld [vmem:[%s7049 + $0x78] sm:$0xff]
        %v7066 = vld [vmem:[%s7049 + $0x80] sm:$0xff]
        %v7067 = vld [vmem:[%s7049 + $0x88] sm:$0xff]
        %v7068 = vld [vmem:[%s7049 + $0x90] sm:$0xff]
        %v7069 = vld [vmem:[%s7049 + $0x98] sm:$0xff]
        %v7070 = vld [vmem:[%s7049 + $0xa0] sm:$0xff]
        %v7071 = vld [vmem:[%s7049 + $0xa8] sm:$0xff]
        %v7072 = vld [vmem:[%s7049 + $0xb0] sm:$0xff]
        %v7073 = vld [vmem:[%s7049 + $0xb8] sm:$0xff]
        %v7074 = vld [vmem:[%s7049 + $0xc0] sm:$0xff]
        %v7075 = vld [vmem:[%s7049 + $0xc8] sm:$0xff]
        %v7076 = vld [vmem:[%s7049 + $0xd0] sm:$0xff]
        %v7077 = vld [vmem:[%s7049 + $0xd8] sm:$0xff]
        %v7078 = vld [vmem:[%s7049 + $0xe0] sm:$0xff]
        %v7079 = vld [vmem:[%s7049 + $0xe8] sm:$0xff]
        %v7080 = vld [vmem:[%s7049 + $0xf0] sm:$0xff]
        %v7081 = vld [vmem:[%s7049 + $0xf8] sm:$0xff]
        %v7082 = vld [vmem:[%s7049 + $0x100] sm:$0xff]
        %v7083 = vld [vmem:[%s7049 + $0x108] sm:$0xff]
        %v7084 = vld [vmem:[%s7049 + $0x110] sm:$0xff]
        %v7085 = vld [vmem:[%s7049 + $0x118] sm:$0xff]
        %v7086 = vld [vmem:[%s7049 + $0x120] sm:$0xff]
        %v7087 = vld [vmem:[%s7049 + $0x128] sm:$0xff]
        %v7088 = vld [vmem:[%s7049 + $0x130] sm:$0xff]
        %v7089 = vld [vmem:[%s7049 + $0x138] sm:$0xff]
        %v7090 = vld [vmem:[%s7049 + $0x140] sm:$0xff]
        %v7091 = vld [vmem:[%s7049 + $0x148] sm:$0xff]
        %v7092 = vld [vmem:[%s7049 + $0x150] sm:$0xff]
        %v7093 = vld [vmem:[%s7049 + $0x158] sm:$0xff]
        %v7094 = vld [vmem:[%s7049 + $0x160] sm:$0xff]
        %v7095 = vld [vmem:[%s7049 + $0x168] sm:$0xff]
        %v7096 = vld [vmem:[%s7049 + $0x170] sm:$0xff]
        %v7097 = vld [vmem:[%s7049 + $0x178] sm:$0xff]
        %v7098 = vld [vmem:[%s7049 + $0x180] sm:$0xff]
        %v7099 = vld [vmem:[%s7049 + $0x188] sm:$0xff]
        %v7100 = vld [vmem:[%s7049 + $0x190] sm:$0xff]
        %v7101 = vld [vmem:[%s7049 + $0x198] sm:$0xff]
        %v7102 = vld [vmem:[%s7049 + $0x1a0] sm:$0xff]
        %v7103 = vld [vmem:[%s7049 + $0x1a8] sm:$0xff]
        %v7104 = vld [vmem:[%s7049 + $0x1b0] sm:$0xff]
        %v7105 = vld [vmem:[%s7049 + $0x1b8] sm:$0xff]
        %v7106 = vld [vmem:[%s7049 + $0x1c0] sm:$0xff]
        %v7107 = vld [vmem:[%s7049 + $0x1c8] sm:$0xff]
        %v7108 = vld [vmem:[%s7049 + $0x1d0] sm:$0xff]
        %v7109 = vld [vmem:[%s7049 + $0x1d8] sm:$0xff]
        %v7110 = vld [vmem:[%s7049 + $0x1e0] sm:$0xff]
        %v7111 = vld [vmem:[%s7049 + $0x1e8] sm:$0xff]
        %v7112 = vld [vmem:[%s7049 + $0x1f0] sm:$0xff]
        %v7113 = vld [vmem:[%s7049 + $0x1f8] sm:$0xff]
        %7114 = vmatprep.subr.mxu0 %v7051
        %7115 = vmatpush1.msra.mxu0 %v7050
        %7116 = vmatprep.subr.mxu0 %v7053
        %7117 = vmatpush1.msra.mxu0 %v7052
        %7118 = vmatprep.subr.mxu0 %v7055
        %7119 = vmatpush1.msra.mxu0 %v7054
        %7120 = vmatprep.subr.mxu0 %v7057
        %7121 = vmatpush1.msra.mxu0 %v7056
        %7122 = vmatprep.subr.mxu0 %v7059
        %7123 = vmatpush1.msra.mxu0 %v7058
        %7124 = vmatprep.subr.mxu0 %v7061
        %7125 = vmatpush1.msra.mxu0 %v7060
        %7126 = vmatprep.subr.mxu0 %v7063
        %7127 = vmatpush1.msra.mxu0 %v7062
        %7128 = vmatprep.subr.mxu0 %v7065
        %7129 = vmatpush1.msra.mxu0 %v7064
        %7130 = vmatprep.subr.mxu0 %v7067
        %7131 = vmatpush1.msra.mxu0 %v7066
        %7132 = vmatprep.subr.mxu0 %v7069
        %7133 = vmatpush1.msra.mxu0 %v7068
        %7134 = vmatprep.subr.mxu0 %v7071
        %7135 = vmatpush1.msra.mxu0 %v7070
        %7136 = vmatprep.subr.mxu0 %v7073
        %7137 = vmatpush1.msra.mxu0 %v7072
        %7138 = vmatprep.subr.mxu0 %v7075
        %7139 = vmatpush1.msra.mxu0 %v7074
        %7140 = vmatprep.subr.mxu0 %v7077
        %7141 = vmatpush1.msra.mxu0 %v7076
        %7142 = vmatprep.subr.mxu0 %v7079
        %7143 = vmatpush1.msra.mxu0 %v7078
        %7144 = vmatprep.subr.mxu0 %v7081
        %7145 = vmatpush1.msra.mxu0 %v7080
        %7146 = vmatprep.subr.mxu0 %v7083
        %7147 = vmatpush1.msra.mxu0 %v7082
        %7148 = vmatprep.subr.mxu0 %v7085
        %7149 = vmatpush1.msra.mxu0 %v7084
        %7150 = vmatprep.subr.mxu0 %v7087
        %7151 = vmatpush1.msra.mxu0 %v7086
        %7152 = vmatprep.subr.mxu0 %v7089
        %7153 = vmatpush1.msra.mxu0 %v7088
        %7154 = vmatprep.subr.mxu0 %v7091
        %7155 = vmatpush1.msra.mxu0 %v7090
        %7156 = vmatprep.subr.mxu0 %v7093
        %7157 = vmatpush1.msra.mxu0 %v7092
        %7158 = vmatprep.subr.mxu0 %v7095
        %7159 = vmatpush1.msra.mxu0 %v7094
        %7160 = vmatprep.subr.mxu0 %v7097
        %7161 = vmatpush1.msra.mxu0 %v7096
        %7162 = vmatprep.subr.mxu0 %v7099
        %7163 = vmatpush1.msra.mxu0 %v7098
        %7164 = vmatprep.subr.mxu0 %v7101
        %7165 = vmatpush1.msra.mxu0 %v7100
        %7166 = vmatprep.subr.mxu0 %v7103
        %7167 = vmatpush1.msra.mxu0 %v7102
        %7168 = vmatprep.subr.mxu0 %v7105
        %7169 = vmatpush1.msra.mxu0 %v7104
        %7170 = vmatprep.subr.mxu0 %v7107
        %7171 = vmatpush1.msra.mxu0 %v7106
        %7172 = vmatprep.subr.mxu0 %v7109
        %7173 = vmatpush1.msra.mxu0 %v7108
        %7174 = vmatprep.subr.mxu0 %v7111
        %7175 = vmatpush1.msra.mxu0 %v7110
        %7176 = vmatprep.subr.mxu0 %v7113
        %7177 = vmatpush1.msra.mxu0 %v7112
        %7178 = vmatprep.mubr.f32.mxu0 %v6590
        %7179 = vmatmul.mubr.f32.gmra.mrb[0].mxu0 %v6587
        %v7180 = vpop.f32.mrb[0].mxu0
        %v7181 = vadd.f32 0.0, %v7180
        %v7182 = vpop.f32.mrb[0].mxu0
        %v7183 = vadd.f32 0.0, %v7182
        %7184 = vmatprep.mubr.f32.mxu0 %v6596
        %7185 = vmatmul.mubr.f32.gmra.mrb[0].mxu0 %v6593
        %v7186 = vpop.f32.mrb[0].mxu0
        %v7187 = vadd.f32 0.0, %v7186
        %v7188 = vpop.f32.mrb[0].mxu0
        %v7189 = vadd.f32 0.0, %v7188
        %7190 = vmatprep.mubr.f32.mxu0 %v6602
        %7191 = vmatmul.mubr.f32.gmra.mrb[0].mxu0 %v6599
        %v7192 = vpop.f32.mrb[0].mxu0
        %v7193 = vadd.f32 0.0, %v7192
        %v7194 = vpop.f32.mrb[0].mxu0
        %v7195 = vadd.f32 0.0, %v7194
        %7196 = vmatprep.mubr.f32.mxu0 %v6608
        %7197 = vmatmul.mubr.f32.gmra.mrb[0].mxu0 %v6605
        %v7198 = vpop.f32.mrb[0].mxu0
        %v7199 = vadd.f32 0.0, %v7198
        %v7200 = vpop.f32.mrb[0].mxu0
        %v7201 = vadd.f32 0.0, %v7200
        %7202 = vmatprep.mubr.f32.mxu0 %v6614
        %7203 = vmatmul.mubr.f32.gmra.mrb[0].mxu0 %v6611
        %v7204 = vpop.f32.mrb[0].mxu0
        %v7205 = vadd.f32 0.0, %v7204
        %v7206 = vpop.f32.mrb[0].mxu0
        %v7207 = vadd.f32 0.0, %v7206
        %7208 = vmatprep.mubr.f32.mxu0 %v6620
        %7209 = vmatmul.mubr.f32.gmra.mrb[0].mxu0 %v6617
        %v7210 = vpop.f32.mrb[0].mxu0
        %v7211 = vadd.f32 0.0, %v7210
        %v7212 = vpop.f32.mrb[0].mxu0
        %v7213 = vadd.f32 0.0, %v7212
        %7214 = vmatprep.mubr.f32.mxu0 %v6840
        %7215 = vmatmul.mubr.f32.gmra.mrb[0].mxu0 %v6837
        %v7216 = vpop.f32.mrb[0].mxu0
        %v7217 = vadd.f32 0.0, %v7216
        %v7218 = vpop.f32.mrb[0].mxu0
        %v7219 = vadd.f32 0.0, %v7218
        %7220 = vmatprep.mubr.f32.mxu0 %v7046
        %7221 = vmatmul.mubr.f32.gmra.mrb[0].mxu0 %v7043
        %v7222 = vpop.f32.mrb[0].mxu0
        %v7223 = vadd.f32 0.0, %v7222
        %v7224 = vpop.f32.mrb[0].mxu0
        %v7225 = vadd.f32 0.0, %v7224
        %7226 = vdwg.mxu0
        %v7227 = vadd.f32 %v7021, %v7181
        %v7228 = vadd.f32 %v7022, %v7183
        %v7229 = vadd.f32 %v7023, %v7187
        %v7230 = vadd.f32 %v7024, %v7189
        %v7231 = vadd.f32 %v7025, %v7193
        %v7232 = vadd.f32 %v7026, %v7195
        %v7233 = vadd.f32 %v7027, %v7199
        %v7234 = vadd.f32 %v7028, %v7201
        %v7235 = vadd.f32 %v7029, %v7205
        %v7236 = vadd.f32 %v7030, %v7207
        %v7237 = vadd.f32 %v7031, %v7211
        %v7238 = vadd.f32 %v7032, %v7213
        %v7239 = vadd.f32 %v7033, %v7217
        %v7240 = vadd.f32 %v7034, %v7219
        %v7241 = vadd.f32 %v7035, %v7223
        %v7242 = vadd.f32 %v7036, %v7225
        %v7243 = vmax.f32 %v7227, 0.0
        %v7244 = vmax.f32 %v7228, 0.0
        %v7245 = vmax.f32 %v7229, 0.0
        %v7246 = vmax.f32 %v7230, 0.0
        %v7247 = vmax.f32 %v7231, 0.0
        %v7248 = vmax.f32 %v7232, 0.0
        %v7249 = vmax.f32 %v7233, 0.0
        %v7250 = vmax.f32 %v7234, 0.0
        %v7251 = vmax.f32 %v7235, 0.0
        %v7252 = vmax.f32 %v7236, 0.0
        %v7253 = vmax.f32 %v7237, 0.0
        %v7254 = vmax.f32 %v7238, 0.0
        %v7255 = vmax.f32 %v7239, 0.0
        %v7256 = vmax.f32 %v7240, 0.0
        %v7257 = vmax.f32 %v7241, 0.0
        %v7258 = vmax.f32 %v7242, 0.0
        %v7259 = vadd.f32 %v7243, %v7245
        %v7260 = vadd.f32 %v7259, %v7247
        %v7261 = vadd.f32 %v7260, %v7249
        %v7262 = vadd.f32 %v7261, %v7251
        %v7263 = vadd.f32 %v7262, %v7253
        %v7264 = vadd.f32 %v7263, %v7255
        %v7265 = vadd.f32 %v7264, %v7257
        %v7266 = vrot.slane %v7265, 4
        %v7267 = vadd.f32 %v7265, %v7266
        %v7268 = vrot.slane %v7267, 2
        %v7269 = vadd.f32 %v7267, %v7268
        %v7270 = vrot.slane %v7269, 1
        %v7271 = vadd.f32 %v7269, %v7270
        %v7272 = vadd.f32 %v7244, %v7246
        %v7273 = vadd.f32 %v7272, %v7248
        %v7274 = vadd.f32 %v7273, %v7250
        %v7275 = vadd.f32 %v7274, %v7252
        %v7276 = vadd.f32 %v7275, %v7254
        %v7277 = vadd.f32 %v7276, %v7256
        %v7278 = vadd.f32 %v7277, %v7258
        %v7279 = vrot.slane %v7278, 4
        %v7280 = vadd.f32 %v7278, %v7279
        %v7281 = vrot.slane %v7280, 2
        %v7282 = vadd.f32 %v7280, %v7281
        %v7283 = vrot.slane %v7282, 1
        %v7284 = vadd.f32 %v7282, %v7283
        %v7285 = vrcp.pop 64.0
        %v7286 = vmul.f32 %v7271, %v7285
        %v7287 = vmul.f32 %v7284, %v7285
        %v7288 = vld [vmem:[#allocation16] sm:$0xff]
        %v7289 = vld [vmem:[#allocation16 + $0x8] sm:$0xff]
        %v7290 = vld [vmem:[#allocation16 + $0x10] sm:$0xff]
        %v7291 = vld [vmem:[#allocation16 + $0x18] sm:$0xff]
        %v7292 = vld [vmem:[#allocation16 + $0x20] sm:$0xff]
        %v7293 = vld [vmem:[#allocation16 + $0x28] sm:$0xff]
        %v7294 = vld [vmem:[#allocation16 + $0x30] sm:$0xff]
        %v7295 = vld [vmem:[#allocation16 + $0x38] sm:$0xff]
        %v7296 = vld [vmem:[#allocation16 + $0x40] sm:$0xff]
        %v7297 = vld [vmem:[#allocation16 + $0x48] sm:$0xff]
        %v7298 = vld [vmem:[#allocation16 + $0x50] sm:$0xff]
        %v7299 = vld [vmem:[#allocation16 + $0x58] sm:$0xff]
        %v7300 = vld [vmem:[#allocation16 + $0x60] sm:$0xff]
        %v7301 = vld [vmem:[#allocation16 + $0x68] sm:$0xff]
        %v7302 = vld [vmem:[#allocation16 + $0x70] sm:$0xff]
        %v7303 = vld [vmem:[#allocation16 + $0x78] sm:$0xff]
        %v7304 = vld [vmem:[#allocation16 + $0x80] sm:$0xff]
        %v7305 = vld [vmem:[#allocation16 + $0x88] sm:$0xff]
        %v7306 = vld [vmem:[#allocation16 + $0x90] sm:$0xff]
        %v7307 = vld [vmem:[#allocation16 + $0x98] sm:$0xff]
        %v7308 = vld [vmem:[#allocation16 + $0xa0] sm:$0xff]
        %v7309 = vld [vmem:[#allocation16 + $0xa8] sm:$0xff]
        %v7310 = vld [vmem:[#allocation16 + $0xb0] sm:$0xff]
        %v7311 = vld [vmem:[#allocation16 + $0xb8] sm:$0xff]
        %v7312 = vld [vmem:[#allocation16 + $0xc0] sm:$0xff]
        %v7313 = vld [vmem:[#allocation16 + $0xc8] sm:$0xff]
        %v7314 = vld [vmem:[#allocation16 + $0xd0] sm:$0xff]
        %v7315 = vld [vmem:[#allocation16 + $0xd8] sm:$0xff]
        %v7316 = vld [vmem:[#allocation16 + $0xe0] sm:$0xff]
        %v7317 = vld [vmem:[#allocation16 + $0xe8] sm:$0xff]
        %v7318 = vld [vmem:[#allocation16 + $0xf0] sm:$0xff]
        %v7319 = vld [vmem:[#allocation16 + $0xf8] sm:$0xff]
        %v7320 = vld [vmem:[#allocation18] sm:$0x1]
        %7321 = vmatprep.subr.mxu0 0.0
        %7322 = vmatpush1.msra.mxu0 %v7288
        %7323 = vmatprep.subr.mxu0 0.0
        %7324 = vmatpush1.msra.mxu0 %v7289
        %7325 = vmatprep.subr.mxu0 0.0
        %7326 = vmatpush1.msra.mxu0 %v7290
        %7327 = vmatprep.subr.mxu0 0.0
        %7328 = vmatpush1.msra.mxu0 %v7291
        %7329 = vmatprep.subr.mxu0 0.0
        %7330 = vmatpush1.msra.mxu0 %v7292
        %7331 = vmatprep.subr.mxu0 0.0
        %7332 = vmatpush1.msra.mxu0 %v7293
        %7333 = vmatprep.subr.mxu0 0.0
        %7334 = vmatpush1.msra.mxu0 %v7294
        %7335 = vmatprep.subr.mxu0 0.0
        %7336 = vmatpush1.msra.mxu0 %v7295
        %7337 = vmatprep.subr.mxu0 0.0
        %7338 = vmatpush1.msra.mxu0 %v7296
        %7339 = vmatprep.subr.mxu0 0.0
        %7340 = vmatpush1.msra.mxu0 %v7297
        %7341 = vmatprep.subr.mxu0 0.0
        %7342 = vmatpush1.msra.mxu0 %v7298
        %7343 = vmatprep.subr.mxu0 0.0
        %7344 = vmatpush1.msra.mxu0 %v7299
        %7345 = vmatprep.subr.mxu0 0.0
        %7346 = vmatpush1.msra.mxu0 %v7300
        %7347 = vmatprep.subr.mxu0 0.0
        %7348 = vmatpush1.msra.mxu0 %v7301
        %7349 = vmatprep.subr.mxu0 0.0
        %7350 = vmatpush1.msra.mxu0 %v7302
        %7351 = vmatprep.subr.mxu0 0.0
        %7352 = vmatpush1.msra.mxu0 %v7303
        %7353 = vmatprep.subr.mxu0 0.0
        %7354 = vmatpush1.msra.mxu0 %v7304
        %7355 = vmatprep.subr.mxu0 0.0
        %7356 = vmatpush1.msra.mxu0 %v7305
        %7357 = vmatprep.subr.mxu0 0.0
        %7358 = vmatpush1.msra.mxu0 %v7306
        %7359 = vmatprep.subr.mxu0 0.0
        %7360 = vmatpush1.msra.mxu0 %v7307
        %7361 = vmatprep.subr.mxu0 0.0
        %7362 = vmatpush1.msra.mxu0 %v7308
        %7363 = vmatprep.subr.mxu0 0.0
        %7364 = vmatpush1.msra.mxu0 %v7309
        %7365 = vmatprep.subr.mxu0 0.0
        %7366 = vmatpush1.msra.mxu0 %v7310
        %7367 = vmatprep.subr.mxu0 0.0
        %7368 = vmatpush1.msra.mxu0 %v7311
        %7369 = vmatprep.subr.mxu0 0.0
        %7370 = vmatpush1.msra.mxu0 %v7312
        %7371 = vmatprep.subr.mxu0 0.0
        %7372 = vmatpush1.msra.mxu0 %v7313
        %7373 = vmatprep.subr.mxu0 0.0
        %7374 = vmatpush1.msra.mxu0 %v7314
        %7375 = vmatprep.subr.mxu0 0.0
        %7376 = vmatpush1.msra.mxu0 %v7315
        %7377 = vmatprep.subr.mxu0 0.0
        %7378 = vmatpush1.msra.mxu0 %v7316
        %7379 = vmatprep.subr.mxu0 0.0
        %7380 = vmatpush1.msra.mxu0 %v7317
        %7381 = vmatprep.subr.mxu0 0.0
        %7382 = vmatpush1.msra.mxu0 %v7318
        %7383 = vmatprep.subr.mxu0 0.0
        %7384 = vmatpush1.msra.mxu0 %v7319
        %7385 = vmatprep.mubr.f32.mxu0 %v7287
        %7386 = vmatmul.mubr.f32.gmra.mrb[0].mxu0 %v7286
        %v7387 = vpop.f32.mrb[0].mxu0
        %v7388 = vadd.f32 %v7320, %v7387
        %v7389 = vpop.f32.mrb[0].mxu0
        %7390 = vdwg.mxu0
        %v7391 = vmul.f32 %v7388, 0.01
        %vm7392 = vcmask 90112
        %7393 = vst.msk [vmem:[%s457] sm:$0x1] %vm7392, %v7391
        %s7394 = sand.u32 %s232, 1
        %s7395 = scalar_lea.sflag [#allocation6], %s7394
        %s7396 = sand.u32 %s232, 1
        %s7397 = scalar_lea.vmem [#allocation19], %s7396
        // Predicated region
        $region93: #{tpu_custom_call.1} parent=55 // pred_check
          %p7398 = pneg %p242
        $region94: #{tpu_custom_call.1} parent=55 // pred_check_branch
          %7400 = sbr.rel (%p7398) target = $region96
        $region95: #{tpu_custom_call.1} parent=55 // pred_region
          %s7402 = ssub.s32 16, 16
          %7403 = vsyncadd %s7395, %s7402
          %s7404 = smul.addr %s30, 16
          %s7405 = scalar_lea.hbm %s9, %s7404
          %s7407 = sshll.u32 %s7397, 4
          %s7408 = int_to_ptr.vmem [resolvable:$true] %s7407
          %7410 = dma.vmem_to_hbm [thread:$0]  %s7408, 16, %s7405, %s7395
        $region96: #{tpu_custom_call.1} parent=55 // pred_fallthru
          _
      $region56: #{tpu_custom_call.1} parent=5 // pred_fallthru
        _
      %p7411 = scmp.le.s32.totalorder 2, %s25
      // Predicated region
      $region97: #{tpu_custom_call.1} parent=5 // pred_check
        %p7412 = pneg %p7411
      $region98: #{tpu_custom_call.1} parent=5 // pred_check_branch
        %7414 = sbr.rel (%p7412) target = $region100
      $region99: #{tpu_custom_call.1} parent=5 // pred_region
        %s7415 = ssub.s32 %s25, 2
        // Predicated region
        $region101: #{tpu_custom_call.1} parent=99 // pred_check
          %p7416 = pneg %p248
        $region102: #{tpu_custom_call.1} parent=99 // pred_check_branch
          %7418 = sbr.rel (%p7416) target = $region104
        $region103: #{tpu_custom_call.1} parent=99 // pred_region
          %s7419 = sand.u32 %s233, 1
          %s7420 = scalar_lea.sflag [#allocation6], %s7419
          %s7421 = sand.u32 %s233, 1
          %s7422 = scalar_lea.vmem [#allocation19], %s7421
          %7423 = dma.done %s7420, 16
        $region104: #{tpu_custom_call.1} parent=99 // pred_fallthru
          _
      $region100: #{tpu_custom_call.1} parent=5 // pred_fallthru
        _
    $region6: #{tpu_custom_call.1} parent=1 // loop_footer
      %s29 = sadd.s32 1, %s25
    $region7: #{tpu_custom_call.1} parent=1 // loop_footer_branch
      %24 = sbr.rel target = $region3
    $region8: #{tpu_custom_call.1} parent=1 // loop_exit
      _
    %7424 = vsyncpa [#allocation5], 1
    %s7425 = scalar_lea.sflag [#allocation5], 1
    %7426 = vsyncpa %s7425, 1
    %7427 = vsyncpa [#allocation8], 1
    %7428 = vsyncpa [#allocation11], 1
    %7429 = vsyncpa [#allocation14], 1
    %7430 = vsyncpa [#allocation17], 1
    %7431 = vsyncpa [#allocation6], 1
    %s7432 = scalar_lea.sflag [#allocation6], 1
    %7433 = vsyncpa %s7432, 1

</llo_original>
